<compile_context>
chip_gen: v7x
topology: tpu7x:2x2x1
jax: 0.10.0
libtpu: 0.0.40
codegen_flags: <defaults>
</compile_context>

<pallas_src>
import jax
import jax.numpy as jnp
from jax import lax
from jax.experimental import pallas as pl
from jax.experimental.pallas import tpu as pltpu

IN_DIM = 16 * 12 * 12   # 2304
H1, H2, H3 = 512, 256, 128
LN_EPS = 1e-5
TILE_B_MAX = 512        # rows per grid step (multiple of 128); fits v7x VMEM

_INV_SQRT2 = 0.7071067811865476


def _gelu_exact(x):
    # PyTorch nn.GELU() default (approximate='none'): x * 0.5 * (1 + erf(x/sqrt(2)))
    return x * 0.5 * (1.0 + lax.erf(x * _INV_SQRT2))


def _layernorm(x, gamma, beta):
    # LayerNorm over last dim, biased variance, eps=1e-5 (PyTorch default).
    mean = jnp.mean(x, axis=-1, keepdims=True)
    centered = x - mean
    var = jnp.mean(centered * centered, axis=-1, keepdims=True)
    inv = lax.rsqrt(var + LN_EPS)
    return centered * inv * gamma + beta


def critic_kernel(x_ref,
                  w1_ref, g1_ref, b1_ref,
                  w2_ref, g2_ref, b2_ref,
                  w3_ref, g3_ref, b3_ref,
                  w4_ref, b4_ref,
                  o_ref):
    # DMA the raw (f32 or bf16) activation tile once; cast on the VPU here
    # (rides under MXU slack) instead of paying an extra wrapper-side pass.
    x = x_ref[...].astype(jnp.bfloat16)                        # (TB, 2304)

    # Block 1: Linear(2304 -> 512, no bias) + GELU + LayerNorm(512)
    h = jnp.dot(x, w1_ref[...], preferred_element_type=jnp.float32)
    h = _layernorm(_gelu_exact(h), g1_ref[...], b1_ref[...])

    # Block 2: Linear(512 -> 256, no bias) + GELU + LayerNorm(256)
    h = jnp.dot(h.astype(jnp.bfloat16), w2_ref[...],
                preferred_element_type=jnp.float32)
    h = _layernorm(_gelu_exact(h), g2_ref[...], b2_ref[...])

    # Block 3: Linear(256 -> 128, no bias) + GELU + LayerNorm(128)
    h = jnp.dot(h.astype(jnp.bfloat16), w3_ref[...],
                preferred_element_type=jnp.float32)
    h = _layernorm(_gelu_exact(h), g3_ref[...], b3_ref[...])   # (TB, 128) f32

    # Head: Linear(128 -> 1) with bias, bf16 operands / f32 accumulation.
    # Computed as (1,128) @ (TB,128)^T so the per-tile result is a lane-dense
    # (1, TB) row (avoids lane-width-1 masked stores and M=1 f32 MXU passes).
    out = lax.dot_general(w4_ref[...], h.astype(jnp.bfloat16),
                          (((1,), (1,)), ((), ())),
                          preferred_element_type=jnp.float32)  # (1, TB)
    o_ref[...] = (out + b4_ref[0, 0]).astype(o_ref.dtype)


def _tiling(B):
    """Pick (tile_rows, padded_batch, n_tiles).

    Tile is a multiple of 128 rows, at most TILE_B_MAX, dividing the padded
    batch evenly.  When the batch spans >= 2 blocks we keep >= 2 grid steps so
    the 'parallel' axis can feed both v7x TensorCores (no-op on v5e/v6e)."""
    nblk = (max(B, 1) + 127) // 128
    k_best = 1
    for k in range(1, TILE_B_MAX // 128 + 1):
        if nblk % k == 0 and (nblk // k >= 2 or nblk < 2):
            k_best = k
    tile = 128 * k_best
    return tile, 128 * nblk, nblk // k_best


def prepare_params(params):
    """One-time bf16 cast of the matmul weights (hoist out of the per-call
    path so each forward does not pay an extra HBM read+write of ~7 MB of
    weights).  LayerNorm params and the head bias stay f32."""
    (w1, g1, b1, w2, g2, b2, w3, g3, b3, w4, b4) = params
    c = lambda w: w.astype(jnp.bfloat16)
    return (c(w1), g1, b1, c(w2), g2, b2, c(w3), g3, b3, c(w4), b4)


def critic_forward(img, params):
    """img: [B, 16, 12, 12] float32 or bfloat16 (NCHW). Returns [B, 1] float32.

    Pass params through `prepare_params` once; the defensive .astype(bf16)
    below is then a no-op."""
    B = img.shape[0]
    x = img.reshape(B, -1)     # same element order as torch .view(B, -1)

    (w1, g1, b1, w2, g2, b2, w3, g3, b3, w4, b4) = params
    w1 = w1.astype(jnp.bfloat16)
    w2 = w2.astype(jnp.bfloat16)
    w3 = w3.astype(jnp.bfloat16)
    w4 = w4.astype(jnp.bfloat16)

    tile_b, b_pad, n_tiles = _tiling(B)
    if b_pad != B:
        # Zero rows are benign: LN of an all-zero row stays finite, every op
        # is row-independent, and padded outputs are sliced off below.
        # TODO(synk): handle the ragged last tile in-kernel (B as SMEM scalar
        # + row mask) to avoid this extra HBM pass for non-aligned batches.
        x = jnp.pad(x, ((0, b_pad - B), (0, 0)))

    const = lambda i: (0, 0)

    flops = 2 * b_pad * (IN_DIM * H1 + H1 * H2 + H2 * H3 + H3)
    transcendentals = b_pad * (H1 + H2 + H3)           # erf per activation
    bytes_accessed = (
        x.size * x.dtype.itemsize
        + (w1.size + w2.size + w3.size + w4.size) * 2
        + (g1.size + b1.size + g2.size + b2.size + g3.size + b3.size
           + b4.size) * 4
        + b_pad * 4)

    out_row = pl.pallas_call(
        critic_kernel,
        out_shape=jax.ShapeDtypeStruct((1, b_pad), jnp.float32),
        grid=(n_tiles,),
        in_specs=[
            # x batch tile (f32 straight from HBM; cast to bf16 in-kernel).
            # v6e note: add pipeline_mode=pl.Buffered(3) here if xprof shows
            # the x DMA exposed.
            pl.BlockSpec((tile_b, IN_DIM), lambda i: (i, 0)),
            pl.BlockSpec((IN_DIM, H1), const),                  # w1 (VMEM-resident)
            pl.BlockSpec((1, H1), const),                       # ln1 gamma
            pl.BlockSpec((1, H1), const),                       # ln1 beta
            pl.BlockSpec((H1, H2), const),                      # w2
            pl.BlockSpec((1, H2), const),                       # ln2 gamma
            pl.BlockSpec((1, H2), const),                       # ln2 beta
            pl.BlockSpec((H2, H3), const),                      # w3
            pl.BlockSpec((1, H3), const),                       # ln3 gamma
            pl.BlockSpec((1, H3), const),                       # ln3 beta
            pl.BlockSpec((1, H3), const),                       # w4 row (bf16)
            pl.BlockSpec((1, 1), const,
                         memory_space=pltpu.MemorySpace.SMEM),  # b4 scalar
        ],
        out_specs=pl.BlockSpec((1, tile_b), lambda i: (0, i)),  # lane-dense row
        compiler_params=pltpu.CompilerParams(
            dimension_semantics=("parallel",),
            vmem_limit_bytes=48 * 1024 * 1024),
        cost_estimate=pl.CostEstimate(flops=flops,
                                      transcendentals=transcendentals,
                                      bytes_accessed=bytes_accessed),
    )(x, w1, g1, b1, w2, g2, b2, w3, g3, b3, w4, b4)

    return out_row[:, :B].reshape(B, 1)


def init_params(key):
    """Deterministic synthetic init (f32). Linear weights stored transposed:
    (in, out); the head weight is a (1, 128) row, its bias (1, 1)."""
    ks = jax.random.split(key, 5)

    def lin(k, fan_in, fan_out):
        bound = 1.0 / jnp.sqrt(float(fan_in))
        return jax.random.uniform(k, (fan_in, fan_out), jnp.float32, -bound, bound)

    w1 = lin(ks[0], IN_DIM, H1)
    w2 = lin(ks[1], H1, H2)
    w3 = lin(ks[2], H2, H3)
    b = 1.0 / jnp.sqrt(float(H3))
    w4 = jax.random.uniform(ks[3], (1, H3), jnp.float32, -b, b)
    b4 = jax.random.uniform(ks[4], (1, 1), jnp.float32, -b, b)

    g1, b1 = jnp.ones((1, H1), jnp.float32), jnp.zeros((1, H1), jnp.float32)
    g2, b2 = jnp.ones((1, H2), jnp.float32), jnp.zeros((1, H2), jnp.float32)
    g3, b3 = jnp.ones((1, H3), jnp.float32), jnp.zeros((1, H3), jnp.float32)

    return (w1, g1, b1, w2, g2, b2, w3, g3, b3, w4, b4)


def critic_reference(img, params, match_kernel_precision=True):
    """Pure-JAX reference. With match_kernel_precision=True it mirrors the
    kernel's bf16 matmul inputs (f32 accumulation); otherwise full f32."""
    (w1, g1, b1, w2, g2, b2, w3, g3, b3, w4, b4) = params
    x = img.reshape(img.shape[0], -1)

    def mm(a, w):
        if match_kernel_precision:
            a = a.astype(jnp.bfloat16)
            w = w.astype(jnp.bfloat16)
        else:
            a = a.astype(jnp.float32)
            w = w.astype(jnp.float32)
        return jnp.dot(a, w, preferred_element_type=jnp.float32)

    h = _layernorm(_gelu_exact(mm(x, w1)), g1, b1)
    h = _layernorm(_gelu_exact(mm(h, w2)), g2, b2)
    h = _layernorm(_gelu_exact(mm(h, w3)), g3, b3)
    return mm(h, w4.T) + b4


if __name__ == "__main__":
    key = jax.random.PRNGKey(0)
    k_img, k_par = jax.random.split(key)

    B = 2
    img = jax.random.normal(k_img, (B, 16, 12, 12), jnp.float32)
    params_f32 = init_params(k_par)
    params = prepare_params(params_f32)        # one-time bf16 weight cast

    out = jax.block_until_ready(critic_forward(img, params))
    assert out.shape == (B, 1), out.shape

    # Tight check vs. a reference that mirrors the kernel's bf16 matmul inputs.
    ref_bf16 = critic_reference(img, params, match_kernel_precision=True)
    assert jnp.allclose(out, ref_bf16, atol=2e-3, rtol=2e-3), (out, ref_bf16)

    # Loose check vs. the pure-f32 reference (drift only from bf16 rounding).
    ref_f32 = critic_reference(img, params_f32, match_kernel_precision=False)
    assert jnp.allclose(out, ref_f32, atol=5e-2, rtol=5e-2), (out, ref_f32)

    print("KERNEL_OK")
</pallas_src>

<mosaic_0001>
module attributes {stable_mosaic.version = 11 : i64} {
  func.func @critic_kernel(%arg0: i32, %arg1: memref<128x2304xf32, #tpu.memory_space<vmem>>, %arg2: memref<2304x512xbf16, #tpu.memory_space<vmem>>, %arg3: memref<1x512xf32, #tpu.memory_space<vmem>>, %arg4: memref<1x512xf32, #tpu.memory_space<vmem>>, %arg5: memref<512x256xbf16, #tpu.memory_space<vmem>>, %arg6: memref<1x256xf32, #tpu.memory_space<vmem>>, %arg7: memref<1x256xf32, #tpu.memory_space<vmem>>, %arg8: memref<256x128xbf16, #tpu.memory_space<vmem>>, %arg9: memref<1x128xf32, #tpu.memory_space<vmem>>, %arg10: memref<1x128xf32, #tpu.memory_space<vmem>>, %arg11: memref<1x128xbf16, #tpu.memory_space<vmem>>, %arg12: memref<1x1xf32, #tpu.memory_space<smem>>, %arg13: memref<1x128xf32, #tpu.memory_space<vmem>>) attributes {dimension_semantics = [#tpu.dimension_semantics<parallel>], iteration_bounds = array<i64: 1>, scalar_prefetch = 0 : i64, scratch_operands = 0 : i64, tpu.core_type = #tpu.core_type<tc>, window_params = [{transform_indices = @transform_0, window_bounds = array<i64: 128, 2304>}, {pipeline_mode = #tpu.pipeline_mode<synchronous>, transform_indices = @transform_1, window_bounds = array<i64: 2304, 512>}, {pipeline_mode = #tpu.pipeline_mode<synchronous>, transform_indices = @transform_2, window_bounds = array<i64: 1, 512>}, {pipeline_mode = #tpu.pipeline_mode<synchronous>, transform_indices = @transform_3, window_bounds = array<i64: 1, 512>}, {pipeline_mode = #tpu.pipeline_mode<synchronous>, transform_indices = @transform_4, window_bounds = array<i64: 512, 256>}, {pipeline_mode = #tpu.pipeline_mode<synchronous>, transform_indices = @transform_5, window_bounds = array<i64: 1, 256>}, {pipeline_mode = #tpu.pipeline_mode<synchronous>, transform_indices = @transform_6, window_bounds = array<i64: 1, 256>}, {pipeline_mode = #tpu.pipeline_mode<synchronous>, transform_indices = @transform_7, window_bounds = array<i64: 256, 128>}, {pipeline_mode = #tpu.pipeline_mode<synchronous>, transform_indices = @transform_8, window_bounds = array<i64: 1, 128>}, {pipeline_mode = #tpu.pipeline_mode<synchronous>, transform_indices = @transform_9, window_bounds = array<i64: 1, 128>}, {pipeline_mode = #tpu.pipeline_mode<synchronous>, transform_indices = @transform_10, window_bounds = array<i64: 1, 128>}, {transform_indices = @transform_11, window_bounds = array<i64: 1, 1>}, {transform_indices = @transform_12, window_bounds = array<i64: 1, 128>}]} {
    %c0 = arith.constant 0 : index
    %c0_0 = arith.constant 0 : index
    %0 = vector.load %arg1[%c0, %c0_0] : memref<128x2304xf32, #tpu.memory_space<vmem>>, vector<128x2304xf32>
    %1 = arith.truncf %0 : vector<128x2304xf32> to vector<128x2304xbf16>
    %c0_1 = arith.constant 0 : index
    %c0_2 = arith.constant 0 : index
    %2 = vector.load %arg2[%c0_1, %c0_2] : memref<2304x512xbf16, #tpu.memory_space<vmem>>, vector<2304x512xbf16>
    %cst = arith.constant dense<0.000000e+00> : vector<128x512xf32>
    %3 = tpu.matmul %1, %2, %cst {dimension_numbers = #tpu.dot_dimension_numbers<[1], [0], [0], [1], [0, 0, 1, 1], [], []>} : vector<128x2304xbf16>, vector<2304x512xbf16>, vector<128x512xf32> -> vector<128x512xf32>
    %cst_3 = arith.constant 5.000000e-01 : f32
    %4 = vector.broadcast %cst_3 : f32 to vector<128x512xf32>
    %5 = arith.mulf %3, %4 : vector<128x512xf32>
    %cst_4 = arith.constant 0.707106769 : f32
    %6 = vector.broadcast %cst_4 : f32 to vector<128x512xf32>
    %7 = arith.mulf %3, %6 : vector<128x512xf32>
    %8 = math.erf %7 : vector<128x512xf32>
    %cst_5 = arith.constant 1.000000e+00 : f32
    %9 = vector.broadcast %cst_5 : f32 to vector<128x512xf32>
    %10 = arith.addf %9, %8 : vector<128x512xf32>
    %11 = arith.mulf %5, %10 : vector<128x512xf32>
    %c0_6 = arith.constant 0 : index
    %c0_7 = arith.constant 0 : index
    %12 = vector.load %arg3[%c0_6, %c0_7] : memref<1x512xf32, #tpu.memory_space<vmem>>, vector<1x512xf32>
    %c0_8 = arith.constant 0 : index
    %c0_9 = arith.constant 0 : index
    %13 = vector.load %arg4[%c0_8, %c0_9] : memref<1x512xf32, #tpu.memory_space<vmem>>, vector<1x512xf32>
    %cst_10 = arith.constant dense<0.000000e+00> : vector<128xf32>
    %14 = vector.multi_reduction <add>, %11, %cst_10 [1] : vector<128x512xf32> to vector<128xf32>
    %15 = vector.shape_cast %14 : vector<128xf32> to vector<128x1xf32>
    %cst_11 = arith.constant 5.120000e+02 : f32
    %16 = vector.broadcast %cst_11 : f32 to vector<128x1xf32>
    %17 = arith.divf %15, %16 : vector<128x1xf32>
    %18 = vector.broadcast %17 : vector<128x1xf32> to vector<128x512xf32>
    %19 = arith.subf %11, %18 : vector<128x512xf32>
    %20 = arith.mulf %19, %19 : vector<128x512xf32>
    %cst_12 = arith.constant dense<0.000000e+00> : vector<128xf32>
    %21 = vector.multi_reduction <add>, %20, %cst_12 [1] : vector<128x512xf32> to vector<128xf32>
    %22 = vector.shape_cast %21 : vector<128xf32> to vector<128x1xf32>
    %cst_13 = arith.constant 5.120000e+02 : f32
    %23 = vector.broadcast %cst_13 : f32 to vector<128x1xf32>
    %24 = arith.divf %22, %23 : vector<128x1xf32>
    %cst_14 = arith.constant 9.99999974E-6 : f32
    %25 = vector.broadcast %cst_14 : f32 to vector<128x1xf32>
    %26 = arith.addf %24, %25 : vector<128x1xf32>
    %27 = math.rsqrt %26 : vector<128x1xf32>
    %28 = vector.broadcast %27 : vector<128x1xf32> to vector<128x512xf32>
    %29 = arith.mulf %19, %28 : vector<128x512xf32>
    %30 = vector.broadcast %12 : vector<1x512xf32> to vector<128x512xf32>
    %31 = arith.mulf %29, %30 : vector<128x512xf32>
    %32 = vector.broadcast %13 : vector<1x512xf32> to vector<128x512xf32>
    %33 = arith.addf %31, %32 : vector<128x512xf32>
    %34 = arith.truncf %33 : vector<128x512xf32> to vector<128x512xbf16>
    %c0_15 = arith.constant 0 : index
    %c0_16 = arith.constant 0 : index
    %35 = vector.load %arg5[%c0_15, %c0_16] : memref<512x256xbf16, #tpu.memory_space<vmem>>, vector<512x256xbf16>
    %cst_17 = arith.constant dense<0.000000e+00> : vector<128x256xf32>
    %36 = tpu.matmul %34, %35, %cst_17 {dimension_numbers = #tpu.dot_dimension_numbers<[1], [0], [0], [1], [0, 0, 1, 1], [], []>} : vector<128x512xbf16>, vector<512x256xbf16>, vector<128x256xf32> -> vector<128x256xf32>
    %cst_18 = arith.constant 5.000000e-01 : f32
    %37 = vector.broadcast %cst_18 : f32 to vector<128x256xf32>
    %38 = arith.mulf %36, %37 : vector<128x256xf32>
    %cst_19 = arith.constant 0.707106769 : f32
    %39 = vector.broadcast %cst_19 : f32 to vector<128x256xf32>
    %40 = arith.mulf %36, %39 : vector<128x256xf32>
    %41 = math.erf %40 : vector<128x256xf32>
    %cst_20 = arith.constant 1.000000e+00 : f32
    %42 = vector.broadcast %cst_20 : f32 to vector<128x256xf32>
    %43 = arith.addf %42, %41 : vector<128x256xf32>
    %44 = arith.mulf %38, %43 : vector<128x256xf32>
    %c0_21 = arith.constant 0 : index
    %c0_22 = arith.constant 0 : index
    %45 = vector.load %arg6[%c0_21, %c0_22] : memref<1x256xf32, #tpu.memory_space<vmem>>, vector<1x256xf32>
    %c0_23 = arith.constant 0 : index
    %c0_24 = arith.constant 0 : index
    %46 = vector.load %arg7[%c0_23, %c0_24] : memref<1x256xf32, #tpu.memory_space<vmem>>, vector<1x256xf32>
    %cst_25 = arith.constant dense<0.000000e+00> : vector<128xf32>
    %47 = vector.multi_reduction <add>, %44, %cst_25 [1] : vector<128x256xf32> to vector<128xf32>
    %48 = vector.shape_cast %47 : vector<128xf32> to vector<128x1xf32>
    %cst_26 = arith.constant 2.560000e+02 : f32
    %49 = vector.broadcast %cst_26 : f32 to vector<128x1xf32>
    %50 = arith.divf %48, %49 : vector<128x1xf32>
    %51 = vector.broadcast %50 : vector<128x1xf32> to vector<128x256xf32>
    %52 = arith.subf %44, %51 : vector<128x256xf32>
    %53 = arith.mulf %52, %52 : vector<128x256xf32>
    %cst_27 = arith.constant dense<0.000000e+00> : vector<128xf32>
    %54 = vector.multi_reduction <add>, %53, %cst_27 [1] : vector<128x256xf32> to vector<128xf32>
    %55 = vector.shape_cast %54 : vector<128xf32> to vector<128x1xf32>
    %cst_28 = arith.constant 2.560000e+02 : f32
    %56 = vector.broadcast %cst_28 : f32 to vector<128x1xf32>
    %57 = arith.divf %55, %56 : vector<128x1xf32>
    %cst_29 = arith.constant 9.99999974E-6 : f32
    %58 = vector.broadcast %cst_29 : f32 to vector<128x1xf32>
    %59 = arith.addf %57, %58 : vector<128x1xf32>
    %60 = math.rsqrt %59 : vector<128x1xf32>
    %61 = vector.broadcast %60 : vector<128x1xf32> to vector<128x256xf32>
    %62 = arith.mulf %52, %61 : vector<128x256xf32>
    %63 = vector.broadcast %45 : vector<1x256xf32> to vector<128x256xf32>
    %64 = arith.mulf %62, %63 : vector<128x256xf32>
    %65 = vector.broadcast %46 : vector<1x256xf32> to vector<128x256xf32>
    %66 = arith.addf %64, %65 : vector<128x256xf32>
    %67 = arith.truncf %66 : vector<128x256xf32> to vector<128x256xbf16>
    %c0_30 = arith.constant 0 : index
    %c0_31 = arith.constant 0 : index
    %68 = vector.load %arg8[%c0_30, %c0_31] : memref<256x128xbf16, #tpu.memory_space<vmem>>, vector<256x128xbf16>
    %cst_32 = arith.constant dense<0.000000e+00> : vector<128x128xf32>
    %69 = tpu.matmul %67, %68, %cst_32 {dimension_numbers = #tpu.dot_dimension_numbers<[1], [0], [0], [1], [0, 0, 1, 1], [], []>} : vector<128x256xbf16>, vector<256x128xbf16>, vector<128x128xf32> -> vector<128x128xf32>
    %cst_33 = arith.constant 5.000000e-01 : f32
    %70 = vector.broadcast %cst_33 : f32 to vector<128x128xf32>
    %71 = arith.mulf %69, %70 : vector<128x128xf32>
    %cst_34 = arith.constant 0.707106769 : f32
    %72 = vector.broadcast %cst_34 : f32 to vector<128x128xf32>
    %73 = arith.mulf %69, %72 : vector<128x128xf32>
    %74 = math.erf %73 : vector<128x128xf32>
    %cst_35 = arith.constant 1.000000e+00 : f32
    %75 = vector.broadcast %cst_35 : f32 to vector<128x128xf32>
    %76 = arith.addf %75, %74 : vector<128x128xf32>
    %77 = arith.mulf %71, %76 : vector<128x128xf32>
    %c0_36 = arith.constant 0 : index
    %c0_37 = arith.constant 0 : index
    %78 = vector.load %arg9[%c0_36, %c0_37] : memref<1x128xf32, #tpu.memory_space<vmem>>, vector<1x128xf32>
    %c0_38 = arith.constant 0 : index
    %c0_39 = arith.constant 0 : index
    %79 = vector.load %arg10[%c0_38, %c0_39] : memref<1x128xf32, #tpu.memory_space<vmem>>, vector<1x128xf32>
    %cst_40 = arith.constant dense<0.000000e+00> : vector<128xf32>
    %80 = vector.multi_reduction <add>, %77, %cst_40 [1] : vector<128x128xf32> to vector<128xf32>
    %81 = vector.shape_cast %80 : vector<128xf32> to vector<128x1xf32>
    %cst_41 = arith.constant 1.280000e+02 : f32
    %82 = vector.broadcast %cst_41 : f32 to vector<128x1xf32>
    %83 = arith.divf %81, %82 : vector<128x1xf32>
    %84 = vector.broadcast %83 : vector<128x1xf32> to vector<128x128xf32>
    %85 = arith.subf %77, %84 : vector<128x128xf32>
    %86 = arith.mulf %85, %85 : vector<128x128xf32>
    %cst_42 = arith.constant dense<0.000000e+00> : vector<128xf32>
    %87 = vector.multi_reduction <add>, %86, %cst_42 [1] : vector<128x128xf32> to vector<128xf32>
    %88 = vector.shape_cast %87 : vector<128xf32> to vector<128x1xf32>
    %cst_43 = arith.constant 1.280000e+02 : f32
    %89 = vector.broadcast %cst_43 : f32 to vector<128x1xf32>
    %90 = arith.divf %88, %89 : vector<128x1xf32>
    %cst_44 = arith.constant 9.99999974E-6 : f32
    %91 = vector.broadcast %cst_44 : f32 to vector<128x1xf32>
    %92 = arith.addf %90, %91 : vector<128x1xf32>
    %93 = math.rsqrt %92 : vector<128x1xf32>
    %94 = vector.broadcast %93 : vector<128x1xf32> to vector<128x128xf32>
    %95 = arith.mulf %85, %94 : vector<128x128xf32>
    %96 = vector.broadcast %78 : vector<1x128xf32> to vector<128x128xf32>
    %97 = arith.mulf %95, %96 : vector<128x128xf32>
    %98 = vector.broadcast %79 : vector<1x128xf32> to vector<128x128xf32>
    %99 = arith.addf %97, %98 : vector<128x128xf32>
    %c0_45 = arith.constant 0 : index
    %c0_46 = arith.constant 0 : index
    %100 = vector.load %arg11[%c0_45, %c0_46] : memref<1x128xbf16, #tpu.memory_space<vmem>>, vector<1x128xbf16>
    %101 = arith.truncf %99 : vector<128x128xf32> to vector<128x128xbf16>
    %cst_47 = arith.constant dense<0.000000e+00> : vector<1x128xf32>
    %102 = tpu.matmul %100, %101, %cst_47 {dimension_numbers = #tpu.dot_dimension_numbers<[1], [1], [0], [0], [0, 0, 1, 0], [], []>} : vector<1x128xbf16>, vector<128x128xbf16>, vector<1x128xf32> -> vector<1x128xf32>
    %c0_48 = arith.constant 0 : index
    %c0_49 = arith.constant 0 : index
    %103 = memref.load %arg12[%c0_48, %c0_49] : memref<1x1xf32, #tpu.memory_space<smem>>
    %104 = vector.broadcast %103 : f32 to vector<1x128xf32>
    %105 = arith.addf %102, %104 : vector<1x128xf32>
    %c0_50 = arith.constant 0 : index
    %c0_51 = arith.constant 0 : index
    %106 = vector.load %arg13[%c0_50, %c0_51] : memref<1x128xf32, #tpu.memory_space<vmem>>, vector<1x128xf32>
    tpu.vector_store %arg13[%c0_50, %c0_51], %105 {strides = array<i32>} : memref<1x128xf32, #tpu.memory_space<vmem>>, vector<1x128xf32>,
    return
  }
  func.func @transform_0(%arg0: i32) -> (i32, i32) {
    %c0_i32 = arith.constant 0 : i32
    %c0_i32_0 = arith.constant 0 : i32
    return %arg0, %c0_i32 : i32, i32
  }
  func.func @transform_1(%arg0: i32) -> (i32, i32) {
    %c0_i32 = arith.constant 0 : i32
    %c0_i32_0 = arith.constant 0 : i32
    %c0_i32_1 = arith.constant 0 : i32
    return %c0_i32, %c0_i32_0 : i32, i32
  }
  func.func @transform_2(%arg0: i32) -> (i32, i32) {
    %c0_i32 = arith.constant 0 : i32
    %c0_i32_0 = arith.constant 0 : i32
    %c0_i32_1 = arith.constant 0 : i32
    return %c0_i32, %c0_i32_0 : i32, i32
  }
  func.func @transform_3(%arg0: i32) -> (i32, i32) {
    %c0_i32 = arith.constant 0 : i32
    %c0_i32_0 = arith.constant 0 : i32
    %c0_i32_1 = arith.constant 0 : i32
    return %c0_i32, %c0_i32_0 : i32, i32
  }
  func.func @transform_4(%arg0: i32) -> (i32, i32) {
    %c0_i32 = arith.constant 0 : i32
    %c0_i32_0 = arith.constant 0 : i32
    %c0_i32_1 = arith.constant 0 : i32
    return %c0_i32, %c0_i32_0 : i32, i32
  }
  func.func @transform_5(%arg0: i32) -> (i32, i32) {
    %c0_i32 = arith.constant 0 : i32
    %c0_i32_0 = arith.constant 0 : i32
    %c0_i32_1 = arith.constant 0 : i32
    return %c0_i32, %c0_i32_0 : i32, i32
  }
  func.func @transform_6(%arg0: i32) -> (i32, i32) {
    %c0_i32 = arith.constant 0 : i32
    %c0_i32_0 = arith.constant 0 : i32
    %c0_i32_1 = arith.constant 0 : i32
    return %c0_i32, %c0_i32_0 : i32, i32
  }
  func.func @transform_7(%arg0: i32) -> (i32, i32) {
    %c0_i32 = arith.constant 0 : i32
    %c0_i32_0 = arith.constant 0 : i32
    %c0_i32_1 = arith.constant 0 : i32
    return %c0_i32, %c0_i32_0 : i32, i32
  }
  func.func @transform_8(%arg0: i32) -> (i32, i32) {
    %c0_i32 = arith.constant 0 : i32
    %c0_i32_0 = arith.constant 0 : i32
    %c0_i32_1 = arith.constant 0 : i32
    return %c0_i32, %c0_i32_0 : i32, i32
  }
  func.func @transform_9(%arg0: i32) -> (i32, i32) {
    %c0_i32 = arith.constant 0 : i32
    %c0_i32_0 = arith.constant 0 : i32
    %c0_i32_1 = arith.constant 0 : i32
    return %c0_i32, %c0_i32_0 : i32, i32
  }
  func.func @transform_10(%arg0: i32) -> (i32, i32) {
    %c0_i32 = arith.constant 0 : i32
    %c0_i32_0 = arith.constant 0 : i32
    %c0_i32_1 = arith.constant 0 : i32
    return %c0_i32, %c0_i32_0 : i32, i32
  }
  func.func @transform_11(%arg0: i32) -> (i32, i32) {
    %c0_i32 = arith.constant 0 : i32
    %c0_i32_0 = arith.constant 0 : i32
    %c0_i32_1 = arith.constant 0 : i32
    return %c0_i32, %c0_i32_0 : i32, i32
  }
  func.func @transform_12(%arg0: i32) -> (i32, i32) {
    %c0_i32 = arith.constant 0 : i32
    %c0_i32_0 = arith.constant 0 : i32
    return %c0_i32, %arg0 : i32, i32
  }
}

</mosaic_0001>

<llo_original>
// kernel: tpu_custom_call.1
$region0: #{tpu_custom_call.1}
  #allocation0 [shape = 'u32[]', space=smem, size = 0x4, offset = 0x4, fixed_abs, tag = 'smem constant byte address 0x4 - core index']
  #allocation1 [shape = 'u32[144,128]{1,0:T(1,128)}', space=vmem, size = 0x12000, scoped, tag = 'internal scratch']
  #allocation2 [shape = 'f32[1,1]{1,0:T(1,128)S(6)}', space=smem, size = 0x200, scoped, tag = 'scoped memory for tpu_custom_call.1']
  %s0 = inlined_call_operand.hbm [shape: f32[128,2304], index: 0, kind: input, shape index: {}]
  %s1 = inlined_call_operand.hbm [shape: bf16[2304,512], index: 1, kind: input, shape index: {}]
  %s2 = inlined_call_operand.hbm [shape: f32[1,512], index: 2, kind: input, shape index: {}]
  %s3 = inlined_call_operand.hbm [shape: f32[1,512], index: 3, kind: input, shape index: {}]
  %s4 = inlined_call_operand.hbm [shape: bf16[512,256], index: 4, kind: input, shape index: {}]
  %s5 = inlined_call_operand.hbm [shape: f32[1,256], index: 5, kind: input, shape index: {}]
  %s6 = inlined_call_operand.hbm [shape: f32[1,256], index: 6, kind: input, shape index: {}]
  %s7 = inlined_call_operand.hbm [shape: bf16[256,128], index: 7, kind: input, shape index: {}]
  %s8 = inlined_call_operand.hbm [shape: f32[1,128], index: 8, kind: input, shape index: {}]
  %s9 = inlined_call_operand.hbm [shape: f32[1,128], index: 9, kind: input, shape index: {}]
  %s10 = inlined_call_operand.hbm [shape: bf16[1,128], index: 10, kind: input, shape index: {}]
  %s11 = inlined_call_operand.<no memory space> [shape: f32[1,1], index: 11, kind: input, shape index: {}]
  %s12 = inlined_call_operand.hbm [shape: f32[1,128], index: 12, kind: output, shape index: {}]
  %s13 = sld [smem:[#allocation0]]
  $region102: #{tpu_custom_call.1} parent=0
    _
  %s15 = ssub.s32 1, %s13
  %s16 = scalar_select 0, %s15, %s13
  %17 = sst [smem:[#allocation2]] %s11
  $region1: #{tpu_custom_call.1} parent=0
    #allocation3 [shape = 'u8[1179648]{0}', space=vmem, size = 0x120000, scoped, tag = 'input window, operand 0, single buffered']
    #allocation4 [shape = 's32[1]{0}', space=sflag, size = 0x4, scoped, tag = 'scoped memory for tpu_custom_call.1']
    #allocation5 [shape = 's32[1]{0}', space=sflag, size = 0x4, scoped, tag = 'scoped memory for tpu_custom_call.1']
    #allocation6 [shape = 'u8[2359296]{0}', space=vmem, size = 0x240000, scoped, tag = 'input window, operand 1, single buffered']
    #allocation7 [shape = 's32[1]{0}', space=sflag, size = 0x4, scoped, tag = 'scoped memory for tpu_custom_call.1']
    #allocation8 [shape = 'u8[2048]{0}', space=vmem, size = 0x800, scoped, tag = 'input window, operand 2, single buffered']
    #allocation9 [shape = 'u8[2048]{0}', space=vmem, size = 0x800, scoped, tag = 'input window, operand 3, single buffered']
    #allocation10 [shape = 's32[1]{0}', space=sflag, size = 0x4, scoped, tag = 'scoped memory for tpu_custom_call.1']
    #allocation11 [shape = 'u8[262144]{0}', space=vmem, size = 0x40000, scoped, tag = 'input window, operand 4, single buffered']
    #allocation12 [shape = 'u8[1024]{0}', space=vmem, size = 0x400, scoped, tag = 'input window, operand 5, single buffered']
    #allocation13 [shape = 's32[1]{0}', space=sflag, size = 0x4, scoped, tag = 'scoped memory for tpu_custom_call.1']
    #allocation14 [shape = 'u8[1024]{0}', space=vmem, size = 0x400, scoped, tag = 'input window, operand 6, single buffered']
    #allocation15 [shape = 'u8[65536]{0}', space=vmem, size = 0x10000, scoped, tag = 'input window, operand 7, single buffered']
    #allocation16 [shape = 's32[1]{0}', space=sflag, size = 0x4, scoped, tag = 'scoped memory for tpu_custom_call.1']
    #allocation17 [shape = 'u8[512]{0}', space=vmem, size = 0x400, scoped, tag = 'input window, operand 8, single buffered']
    #allocation18 [shape = 'u8[512]{0}', space=vmem, size = 0x400, scoped, tag = 'input window, operand 9, single buffered']
    #allocation19 [shape = 's32[1]{0}', space=sflag, size = 0x4, scoped, tag = 'scoped memory for tpu_custom_call.1']
    #allocation20 [shape = 'u8[512]{0}', space=vmem, size = 0x400, scoped, tag = 'input window, operand 10, single buffered']
    #allocation21 [shape = 'u8[512]{0}', space=vmem, size = 0x400, scoped, tag = 'output window, operand 0, single buffered']
    %18 = vsyncpa [#allocation4], 0
    %19 = vsyncpa [#allocation7], 0
    %20 = vsyncpa [#allocation10], 0
    %21 = vsyncpa [#allocation13], 0
    %22 = vsyncpa [#allocation16], 0
    %23 = vsyncpa [#allocation19], 0
    %24 = vsyncpa [#allocation5], 0
    // Predicated region
    $region2: #{tpu_custom_call.1} parent=1 // pred_check
      _
    $region3: #{tpu_custom_call.1} parent=1 // pred_check_branch
      %26 = sbr.rel (0) target = $region5
    $region4: #{tpu_custom_call.1} parent=1 // pred_region
      %s28 = ssub.s32 36864, 36864
      %29 = vsyncadd [#allocation4], %s28
      %s30 = sshll.u32 [#allocation3], 4
      %s31 = int_to_ptr.vmem [resolvable:$true] %s30
      %36 = dma.hbm_to_vmem [thread:$0]  %s0, 36864, %s31, [#allocation4], 2304, 2304, 144
    $region5: #{tpu_custom_call.1} parent=1 // pred_fallthru
      _
    // Predicated region
    $region6: #{tpu_custom_call.1} parent=1 // pred_check
      _
    $region7: #{tpu_custom_call.1} parent=1 // pred_check_branch
      %38 = sbr.rel (0) target = $region9
    $region8: #{tpu_custom_call.1} parent=1 // pred_region
      %s40 = ssub.s32 73728, 73728
      %41 = vsyncadd [#allocation7], %s40
      %s42 = sshll.u32 [#allocation6], 4
      %s43 = int_to_ptr.vmem [resolvable:$true] %s42
      %48 = dma.hbm_to_vmem [thread:$0]  %s1, 73728, %s43, [#allocation7], 256, 256, 16
    $region9: #{tpu_custom_call.1} parent=1 // pred_fallthru
      _
    // Predicated region
    $region10: #{tpu_custom_call.1} parent=1 // pred_check
      _
    $region11: #{tpu_custom_call.1} parent=1 // pred_check_branch
      %50 = sbr.rel (0) target = $region13
    $region12: #{tpu_custom_call.1} parent=1 // pred_region
      %s52 = ssub.s32 64, 64
      %53 = vsyncadd [#allocation7], %s52
      %s55 = sshll.u32 [#allocation8], 4
      %s56 = int_to_ptr.vmem [resolvable:$true] %s55
      %58 = dma.hbm_to_vmem [thread:$0]  %s2, 64, %s56, [#allocation7]
    $region13: #{tpu_custom_call.1} parent=1 // pred_fallthru
      _
    // Predicated region
    $region14: #{tpu_custom_call.1} parent=1 // pred_check
      _
    $region15: #{tpu_custom_call.1} parent=1 // pred_check_branch
      %60 = sbr.rel (0) target = $region17
    $region16: #{tpu_custom_call.1} parent=1 // pred_region
      %s62 = ssub.s32 64, 64
      %63 = vsyncadd [#allocation10], %s62
      %s65 = sshll.u32 [#allocation9], 4
      %s66 = int_to_ptr.vmem [resolvable:$true] %s65
      %68 = dma.hbm_to_vmem [thread:$0]  %s3, 64, %s66, [#allocation10]
    $region17: #{tpu_custom_call.1} parent=1 // pred_fallthru
      _
    // Predicated region
    $region18: #{tpu_custom_call.1} parent=1 // pred_check
      _
    $region19: #{tpu_custom_call.1} parent=1 // pred_check_branch
      %70 = sbr.rel (0) target = $region21
    $region20: #{tpu_custom_call.1} parent=1 // pred_region
      %s72 = ssub.s32 8192, 8192
      %73 = vsyncadd [#allocation10], %s72
      %s74 = sshll.u32 [#allocation11], 4
      %s75 = int_to_ptr.vmem [resolvable:$true] %s74
      %80 = dma.hbm_to_vmem [thread:$0]  %s4, 8192, %s75, [#allocation10], 128, 128, 8
    $region21: #{tpu_custom_call.1} parent=1 // pred_fallthru
      _
    // Predicated region
    $region22: #{tpu_custom_call.1} parent=1 // pred_check
      _
    $region23: #{tpu_custom_call.1} parent=1 // pred_check_branch
      %82 = sbr.rel (0) target = $region25
    $region24: #{tpu_custom_call.1} parent=1 // pred_region
      %s84 = ssub.s32 32, 32
      %85 = vsyncadd [#allocation13], %s84
      %s87 = sshll.u32 [#allocation12], 4
      %s88 = int_to_ptr.vmem [resolvable:$true] %s87
      %90 = dma.hbm_to_vmem [thread:$0]  %s5, 32, %s88, [#allocation13]
    $region25: #{tpu_custom_call.1} parent=1 // pred_fallthru
      _
    // Predicated region
    $region26: #{tpu_custom_call.1} parent=1 // pred_check
      _
    $region27: #{tpu_custom_call.1} parent=1 // pred_check_branch
      %92 = sbr.rel (0) target = $region29
    $region28: #{tpu_custom_call.1} parent=1 // pred_region
      %s94 = ssub.s32 32, 32
      %95 = vsyncadd [#allocation13], %s94
      %s97 = sshll.u32 [#allocation14], 4
      %s98 = int_to_ptr.vmem [resolvable:$true] %s97
      %100 = dma.hbm_to_vmem [thread:$0]  %s6, 32, %s98, [#allocation13]
    $region29: #{tpu_custom_call.1} parent=1 // pred_fallthru
      _
    // Predicated region
    $region30: #{tpu_custom_call.1} parent=1 // pred_check
      _
    $region31: #{tpu_custom_call.1} parent=1 // pred_check_branch
      %102 = sbr.rel (0) target = $region33
    $region32: #{tpu_custom_call.1} parent=1 // pred_region
      %s104 = ssub.s32 2048, 2048
      %105 = vsyncadd [#allocation16], %s104
      %s106 = sshll.u32 [#allocation15], 4
      %s107 = int_to_ptr.vmem [resolvable:$true] %s106
      %112 = dma.hbm_to_vmem [thread:$0]  %s7, 2048, %s107, [#allocation16], 64, 64, 4
    $region33: #{tpu_custom_call.1} parent=1 // pred_fallthru
      _
    // Predicated region
    $region34: #{tpu_custom_call.1} parent=1 // pred_check
      _
    $region35: #{tpu_custom_call.1} parent=1 // pred_check_branch
      %114 = sbr.rel (0) target = $region37
    $region36: #{tpu_custom_call.1} parent=1 // pred_region
      %s116 = ssub.s32 16, 16
      %117 = vsyncadd [#allocation16], %s116
      %s119 = sshll.u32 [#allocation17], 4
      %s120 = int_to_ptr.vmem [resolvable:$true] %s119
      %122 = dma.hbm_to_vmem [thread:$0]  %s8, 16, %s120, [#allocation16]
    $region37: #{tpu_custom_call.1} parent=1 // pred_fallthru
      _
    // Predicated region
    $region38: #{tpu_custom_call.1} parent=1 // pred_check
      _
    $region39: #{tpu_custom_call.1} parent=1 // pred_check_branch
      %124 = sbr.rel (0) target = $region41
    $region40: #{tpu_custom_call.1} parent=1 // pred_region
      %s126 = ssub.s32 16, 16
      %127 = vsyncadd [#allocation19], %s126
      %s129 = sshll.u32 [#allocation18], 4
      %s130 = int_to_ptr.vmem [resolvable:$true] %s129
      %132 = dma.hbm_to_vmem [thread:$0]  %s9, 16, %s130, [#allocation19]
    $region41: #{tpu_custom_call.1} parent=1 // pred_fallthru
      _
    // Predicated region
    $region42: #{tpu_custom_call.1} parent=1 // pred_check
      _
    $region43: #{tpu_custom_call.1} parent=1 // pred_check_branch
      %134 = sbr.rel (0) target = $region45
    $region44: #{tpu_custom_call.1} parent=1 // pred_region
      %s136 = ssub.s32 16, 16
      %137 = vsyncadd [#allocation19], %s136
      %s139 = sshll.u32 [#allocation20], 4
      %s140 = int_to_ptr.vmem [resolvable:$true] %s139
      %142 = dma.hbm_to_vmem [thread:$0]  %s10, 16, %s140, [#allocation19]
    $region45: #{tpu_custom_call.1} parent=1 // pred_fallthru
      _
    // Predicated region
    $region46: #{tpu_custom_call.1} parent=1 // pred_check
      _
    $region47: #{tpu_custom_call.1} parent=1 // pred_check_branch
      %144 = sbr.rel (0) target = $region49
    $region48: #{tpu_custom_call.1} parent=1 // pred_region
      _
    $region49: #{tpu_custom_call.1} parent=1 // pred_fallthru
      _
    // Predicated region
    $region50: #{tpu_custom_call.1} parent=1 // pred_check
      _
    $region51: #{tpu_custom_call.1} parent=1 // pred_check_branch
      %146 = sbr.rel (0) target = $region53
    $region52: #{tpu_custom_call.1} parent=1 // pred_region
      %147 = dma.done [#allocation4], 36864
    $region53: #{tpu_custom_call.1} parent=1 // pred_fallthru
      _
    // Predicated region
    $region54: #{tpu_custom_call.1} parent=1 // pred_check
      _
    $region55: #{tpu_custom_call.1} parent=1 // pred_check_branch
      %149 = sbr.rel (0) target = $region57
    $region56: #{tpu_custom_call.1} parent=1 // pred_region
      %150 = dma.done [#allocation7], 73728
    $region57: #{tpu_custom_call.1} parent=1 // pred_fallthru
      _
    // Predicated region
    $region58: #{tpu_custom_call.1} parent=1 // pred_check
      _
    $region59: #{tpu_custom_call.1} parent=1 // pred_check_branch
      %152 = sbr.rel (0) target = $region61
    $region60: #{tpu_custom_call.1} parent=1 // pred_region
      %153 = dma.done [#allocation7], 64
    $region61: #{tpu_custom_call.1} parent=1 // pred_fallthru
      _
    // Predicated region
    $region62: #{tpu_custom_call.1} parent=1 // pred_check
      _
    $region63: #{tpu_custom_call.1} parent=1 // pred_check_branch
      %155 = sbr.rel (0) target = $region65
    $region64: #{tpu_custom_call.1} parent=1 // pred_region
      %156 = dma.done [#allocation10], 64
    $region65: #{tpu_custom_call.1} parent=1 // pred_fallthru
      _
    // Predicated region
    $region66: #{tpu_custom_call.1} parent=1 // pred_check
      _
    $region67: #{tpu_custom_call.1} parent=1 // pred_check_branch
      %158 = sbr.rel (0) target = $region69
    $region68: #{tpu_custom_call.1} parent=1 // pred_region
      %159 = dma.done [#allocation10], 8192
    $region69: #{tpu_custom_call.1} parent=1 // pred_fallthru
      _
    // Predicated region
    $region70: #{tpu_custom_call.1} parent=1 // pred_check
      _
    $region71: #{tpu_custom_call.1} parent=1 // pred_check_branch
      %161 = sbr.rel (0) target = $region73
    $region72: #{tpu_custom_call.1} parent=1 // pred_region
      %162 = dma.done [#allocation13], 32
    $region73: #{tpu_custom_call.1} parent=1 // pred_fallthru
      _
    // Predicated region
    $region74: #{tpu_custom_call.1} parent=1 // pred_check
      _
    $region75: #{tpu_custom_call.1} parent=1 // pred_check_branch
      %164 = sbr.rel (0) target = $region77
    $region76: #{tpu_custom_call.1} parent=1 // pred_region
      %165 = dma.done [#allocation13], 32
    $region77: #{tpu_custom_call.1} parent=1 // pred_fallthru
      _
    // Predicated region
    $region78: #{tpu_custom_call.1} parent=1 // pred_check
      _
    $region79: #{tpu_custom_call.1} parent=1 // pred_check_branch
      %167 = sbr.rel (0) target = $region81
    $region80: #{tpu_custom_call.1} parent=1 // pred_region
      %168 = dma.done [#allocation16], 2048
    $region81: #{tpu_custom_call.1} parent=1 // pred_fallthru
      _
    // Predicated region
    $region82: #{tpu_custom_call.1} parent=1 // pred_check
      _
    $region83: #{tpu_custom_call.1} parent=1 // pred_check_branch
      %170 = sbr.rel (0) target = $region85
    $region84: #{tpu_custom_call.1} parent=1 // pred_region
      %171 = dma.done [#allocation16], 16
    $region85: #{tpu_custom_call.1} parent=1 // pred_fallthru
      _
    // Predicated region
    $region86: #{tpu_custom_call.1} parent=1 // pred_check
      _
    $region87: #{tpu_custom_call.1} parent=1 // pred_check_branch
      %173 = sbr.rel (0) target = $region89
    $region88: #{tpu_custom_call.1} parent=1 // pred_region
      %174 = dma.done [#allocation19], 16
    $region89: #{tpu_custom_call.1} parent=1 // pred_fallthru
      _
    // Predicated region
    $region90: #{tpu_custom_call.1} parent=1 // pred_check
      _
    $region91: #{tpu_custom_call.1} parent=1 // pred_check_branch
      %176 = sbr.rel (0) target = $region93
    $region92: #{tpu_custom_call.1} parent=1 // pred_region
      %177 = dma.done [#allocation19], 16
    $region93: #{tpu_custom_call.1} parent=1 // pred_fallthru
      _
    %v179 = vld [vmem:[#allocation3] sm:$0xff]
    %v180 = vld [vmem:[#allocation3 + $0x8] sm:$0xff]
    %v181 = vld [vmem:[#allocation3 + $0x10] sm:$0xff]
    %v182 = vld [vmem:[#allocation3 + $0x18] sm:$0xff]
    %v183 = vld [vmem:[#allocation3 + $0x20] sm:$0xff]
    %v184 = vld [vmem:[#allocation3 + $0x28] sm:$0xff]
    %v185 = vld [vmem:[#allocation3 + $0x30] sm:$0xff]
    %v186 = vld [vmem:[#allocation3 + $0x38] sm:$0xff]
    %v187 = vld [vmem:[#allocation3 + $0x40] sm:$0xff]
    %v188 = vld [vmem:[#allocation3 + $0x48] sm:$0xff]
    %v189 = vld [vmem:[#allocation3 + $0x50] sm:$0xff]
    %v190 = vld [vmem:[#allocation3 + $0x58] sm:$0xff]
    %v191 = vld [vmem:[#allocation3 + $0x60] sm:$0xff]
    %v192 = vld [vmem:[#allocation3 + $0x68] sm:$0xff]
    %v193 = vld [vmem:[#allocation3 + $0x70] sm:$0xff]
    %v194 = vld [vmem:[#allocation3 + $0x78] sm:$0xff]
    %v195 = vld [vmem:[#allocation3 + $0x80] sm:$0xff]
    %v196 = vld [vmem:[#allocation3 + $0x88] sm:$0xff]
    %v197 = vld [vmem:[#allocation3 + $0x90] sm:$0xff]
    %v198 = vld [vmem:[#allocation3 + $0x98] sm:$0xff]
    %v199 = vld [vmem:[#allocation3 + $0xa0] sm:$0xff]
    %v200 = vld [vmem:[#allocation3 + $0xa8] sm:$0xff]
    %v201 = vld [vmem:[#allocation3 + $0xb0] sm:$0xff]
    %v202 = vld [vmem:[#allocation3 + $0xb8] sm:$0xff]
    %v203 = vld [vmem:[#allocation3 + $0xc0] sm:$0xff]
    %v204 = vld [vmem:[#allocation3 + $0xc8] sm:$0xff]
    %v205 = vld [vmem:[#allocation3 + $0xd0] sm:$0xff]
    %v206 = vld [vmem:[#allocation3 + $0xd8] sm:$0xff]
    %v207 = vld [vmem:[#allocation3 + $0xe0] sm:$0xff]
    %v208 = vld [vmem:[#allocation3 + $0xe8] sm:$0xff]
    %v209 = vld [vmem:[#allocation3 + $0xf0] sm:$0xff]
    %v210 = vld [vmem:[#allocation3 + $0xf8] sm:$0xff]
    %v211 = vld [vmem:[#allocation3 + $0x100] sm:$0xff]
    %v212 = vld [vmem:[#allocation3 + $0x108] sm:$0xff]
    %v213 = vld [vmem:[#allocation3 + $0x110] sm:$0xff]
    %v214 = vld [vmem:[#allocation3 + $0x118] sm:$0xff]
    %v215 = vld [vmem:[#allocation3 + $0x120] sm:$0xff]
    %v216 = vld [vmem:[#allocation3 + $0x128] sm:$0xff]
    %v217 = vld [vmem:[#allocation3 + $0x130] sm:$0xff]
    %v218 = vld [vmem:[#allocation3 + $0x138] sm:$0xff]
    %v219 = vld [vmem:[#allocation3 + $0x140] sm:$0xff]
    %v220 = vld [vmem:[#allocation3 + $0x148] sm:$0xff]
    %v221 = vld [vmem:[#allocation3 + $0x150] sm:$0xff]
    %v222 = vld [vmem:[#allocation3 + $0x158] sm:$0xff]
    %v223 = vld [vmem:[#allocation3 + $0x160] sm:$0xff]
    %v224 = vld [vmem:[#allocation3 + $0x168] sm:$0xff]
    %v225 = vld [vmem:[#allocation3 + $0x170] sm:$0xff]
    %v226 = vld [vmem:[#allocation3 + $0x178] sm:$0xff]
    %v227 = vld [vmem:[#allocation3 + $0x180] sm:$0xff]
    %v228 = vld [vmem:[#allocation3 + $0x188] sm:$0xff]
    %v229 = vld [vmem:[#allocation3 + $0x190] sm:$0xff]
    %v230 = vld [vmem:[#allocation3 + $0x198] sm:$0xff]
    %v231 = vld [vmem:[#allocation3 + $0x1a0] sm:$0xff]
    %v232 = vld [vmem:[#allocation3 + $0x1a8] sm:$0xff]
    %v233 = vld [vmem:[#allocation3 + $0x1b0] sm:$0xff]
    %v234 = vld [vmem:[#allocation3 + $0x1b8] sm:$0xff]
    %v235 = vld [vmem:[#allocation3 + $0x1c0] sm:$0xff]
    %v236 = vld [vmem:[#allocation3 + $0x1c8] sm:$0xff]
    %v237 = vld [vmem:[#allocation3 + $0x1d0] sm:$0xff]
    %v238 = vld [vmem:[#allocation3 + $0x1d8] sm:$0xff]
    %v239 = vld [vmem:[#allocation3 + $0x1e0] sm:$0xff]
    %v240 = vld [vmem:[#allocation3 + $0x1e8] sm:$0xff]
    %v241 = vld [vmem:[#allocation3 + $0x1f0] sm:$0xff]
    %v242 = vld [vmem:[#allocation3 + $0x1f8] sm:$0xff]
    %v243 = vld [vmem:[#allocation3 + $0x200] sm:$0xff]
    %v244 = vld [vmem:[#allocation3 + $0x208] sm:$0xff]
    %v245 = vld [vmem:[#allocation3 + $0x210] sm:$0xff]
    %v246 = vld [vmem:[#allocation3 + $0x218] sm:$0xff]
    %v247 = vld [vmem:[#allocation3 + $0x220] sm:$0xff]
    %v248 = vld [vmem:[#allocation3 + $0x228] sm:$0xff]
    %v249 = vld [vmem:[#allocation3 + $0x230] sm:$0xff]
    %v250 = vld [vmem:[#allocation3 + $0x238] sm:$0xff]
    %v251 = vld [vmem:[#allocation3 + $0x240] sm:$0xff]
    %v252 = vld [vmem:[#allocation3 + $0x248] sm:$0xff]
    %v253 = vld [vmem:[#allocation3 + $0x250] sm:$0xff]
    %v254 = vld [vmem:[#allocation3 + $0x258] sm:$0xff]
    %v255 = vld [vmem:[#allocation3 + $0x260] sm:$0xff]
    %v256 = vld [vmem:[#allocation3 + $0x268] sm:$0xff]
    %v257 = vld [vmem:[#allocation3 + $0x270] sm:$0xff]
    %v258 = vld [vmem:[#allocation3 + $0x278] sm:$0xff]
    %v259 = vld [vmem:[#allocation3 + $0x280] sm:$0xff]
    %v260 = vld [vmem:[#allocation3 + $0x288] sm:$0xff]
    %v261 = vld [vmem:[#allocation3 + $0x290] sm:$0xff]
    %v262 = vld [vmem:[#allocation3 + $0x298] sm:$0xff]
    %v263 = vld [vmem:[#allocation3 + $0x2a0] sm:$0xff]
    %v264 = vld [vmem:[#allocation3 + $0x2a8] sm:$0xff]
    %v265 = vld [vmem:[#allocation3 + $0x2b0] sm:$0xff]
    %v266 = vld [vmem:[#allocation3 + $0x2b8] sm:$0xff]
    %v267 = vld [vmem:[#allocation3 + $0x2c0] sm:$0xff]
    %v268 = vld [vmem:[#allocation3 + $0x2c8] sm:$0xff]
    %v269 = vld [vmem:[#allocation3 + $0x2d0] sm:$0xff]
    %v270 = vld [vmem:[#allocation3 + $0x2d8] sm:$0xff]
    %v271 = vld [vmem:[#allocation3 + $0x2e0] sm:$0xff]
    %v272 = vld [vmem:[#allocation3 + $0x2e8] sm:$0xff]
    %v273 = vld [vmem:[#allocation3 + $0x2f0] sm:$0xff]
    %v274 = vld [vmem:[#allocation3 + $0x2f8] sm:$0xff]
    %v275 = vld [vmem:[#allocation3 + $0x300] sm:$0xff]
    %v276 = vld [vmem:[#allocation3 + $0x308] sm:$0xff]
    %v277 = vld [vmem:[#allocation3 + $0x310] sm:$0xff]
    %v278 = vld [vmem:[#allocation3 + $0x318] sm:$0xff]
    %v279 = vld [vmem:[#allocation3 + $0x320] sm:$0xff]
    %v280 = vld [vmem:[#allocation3 + $0x328] sm:$0xff]
    %v281 = vld [vmem:[#allocation3 + $0x330] sm:$0xff]
    %v282 = vld [vmem:[#allocation3 + $0x338] sm:$0xff]
    %v283 = vld [vmem:[#allocation3 + $0x340] sm:$0xff]
    %v284 = vld [vmem:[#allocation3 + $0x348] sm:$0xff]
    %v285 = vld [vmem:[#allocation3 + $0x350] sm:$0xff]
    %v286 = vld [vmem:[#allocation3 + $0x358] sm:$0xff]
    %v287 = vld [vmem:[#allocation3 + $0x360] sm:$0xff]
    %v288 = vld [vmem:[#allocation3 + $0x368] sm:$0xff]
    %v289 = vld [vmem:[#allocation3 + $0x370] sm:$0xff]
    %v290 = vld [vmem:[#allocation3 + $0x378] sm:$0xff]
    %v291 = vld [vmem:[#allocation3 + $0x380] sm:$0xff]
    %v292 = vld [vmem:[#allocation3 + $0x388] sm:$0xff]
    %v293 = vld [vmem:[#allocation3 + $0x390] sm:$0xff]
    %v294 = vld [vmem:[#allocation3 + $0x398] sm:$0xff]
    %v295 = vld [vmem:[#allocation3 + $0x3a0] sm:$0xff]
    %v296 = vld [vmem:[#allocation3 + $0x3a8] sm:$0xff]
    %v297 = vld [vmem:[#allocation3 + $0x3b0] sm:$0xff]
    %v298 = vld [vmem:[#allocation3 + $0x3b8] sm:$0xff]
    %v299 = vld [vmem:[#allocation3 + $0x3c0] sm:$0xff]
    %v300 = vld [vmem:[#allocation3 + $0x3c8] sm:$0xff]
    %v301 = vld [vmem:[#allocation3 + $0x3d0] sm:$0xff]
    %v302 = vld [vmem:[#allocation3 + $0x3d8] sm:$0xff]
    %v303 = vld [vmem:[#allocation3 + $0x3e0] sm:$0xff]
    %v304 = vld [vmem:[#allocation3 + $0x3e8] sm:$0xff]
    %v305 = vld [vmem:[#allocation3 + $0x3f0] sm:$0xff]
    %v306 = vld [vmem:[#allocation3 + $0x3f8] sm:$0xff]
    %v307 = vld [vmem:[#allocation3 + $0x400] sm:$0xff]
    %v308 = vld [vmem:[#allocation3 + $0x408] sm:$0xff]
    %v309 = vld [vmem:[#allocation3 + $0x410] sm:$0xff]
    %v310 = vld [vmem:[#allocation3 + $0x418] sm:$0xff]
    %v311 = vld [vmem:[#allocation3 + $0x420] sm:$0xff]
    %v312 = vld [vmem:[#allocation3 + $0x428] sm:$0xff]
    %v313 = vld [vmem:[#allocation3 + $0x430] sm:$0xff]
    %v314 = vld [vmem:[#allocation3 + $0x438] sm:$0xff]
    %v315 = vld [vmem:[#allocation3 + $0x440] sm:$0xff]
    %v316 = vld [vmem:[#allocation3 + $0x448] sm:$0xff]
    %v317 = vld [vmem:[#allocation3 + $0x450] sm:$0xff]
    %v318 = vld [vmem:[#allocation3 + $0x458] sm:$0xff]
    %v319 = vld [vmem:[#allocation3 + $0x460] sm:$0xff]
    %v320 = vld [vmem:[#allocation3 + $0x468] sm:$0xff]
    %v321 = vld [vmem:[#allocation3 + $0x470] sm:$0xff]
    %v322 = vld [vmem:[#allocation3 + $0x478] sm:$0xff]
    %v323 = vld [vmem:[#allocation3 + $0x480] sm:$0xff]
    %v324 = vld [vmem:[#allocation3 + $0x488] sm:$0xff]
    %v325 = vld [vmem:[#allocation3 + $0x490] sm:$0xff]
    %v326 = vld [vmem:[#allocation3 + $0x498] sm:$0xff]
    %v327 = vld [vmem:[#allocation3 + $0x4a0] sm:$0xff]
    %v328 = vld [vmem:[#allocation3 + $0x4a8] sm:$0xff]
    %v329 = vld [vmem:[#allocation3 + $0x4b0] sm:$0xff]
    %v330 = vld [vmem:[#allocation3 + $0x4b8] sm:$0xff]
    %v331 = vld [vmem:[#allocation3 + $0x4c0] sm:$0xff]
    %v332 = vld [vmem:[#allocation3 + $0x4c8] sm:$0xff]
    %v333 = vld [vmem:[#allocation3 + $0x4d0] sm:$0xff]
    %v334 = vld [vmem:[#allocation3 + $0x4d8] sm:$0xff]
    %v335 = vld [vmem:[#allocation3 + $0x4e0] sm:$0xff]
    %v336 = vld [vmem:[#allocation3 + $0x4e8] sm:$0xff]
    %v337 = vld [vmem:[#allocation3 + $0x4f0] sm:$0xff]
    %v338 = vld [vmem:[#allocation3 + $0x4f8] sm:$0xff]
    %v339 = vld [vmem:[#allocation3 + $0x500] sm:$0xff]
    %v340 = vld [vmem:[#allocation3 + $0x508] sm:$0xff]
    %v341 = vld [vmem:[#allocation3 + $0x510] sm:$0xff]
    %v342 = vld [vmem:[#allocation3 + $0x518] sm:$0xff]
    %v343 = vld [vmem:[#allocation3 + $0x520] sm:$0xff]
    %v344 = vld [vmem:[#allocation3 + $0x528] sm:$0xff]
    %v345 = vld [vmem:[#allocation3 + $0x530] sm:$0xff]
    %v346 = vld [vmem:[#allocation3 + $0x538] sm:$0xff]
    %v347 = vld [vmem:[#allocation3 + $0x540] sm:$0xff]
    %v348 = vld [vmem:[#allocation3 + $0x548] sm:$0xff]
    %v349 = vld [vmem:[#allocation3 + $0x550] sm:$0xff]
    %v350 = vld [vmem:[#allocation3 + $0x558] sm:$0xff]
    %v351 = vld [vmem:[#allocation3 + $0x560] sm:$0xff]
    %v352 = vld [vmem:[#allocation3 + $0x568] sm:$0xff]
    %v353 = vld [vmem:[#allocation3 + $0x570] sm:$0xff]
    %v354 = vld [vmem:[#allocation3 + $0x578] sm:$0xff]
    %v355 = vld [vmem:[#allocation3 + $0x580] sm:$0xff]
    %v356 = vld [vmem:[#allocation3 + $0x588] sm:$0xff]
    %v357 = vld [vmem:[#allocation3 + $0x590] sm:$0xff]
    %v358 = vld [vmem:[#allocation3 + $0x598] sm:$0xff]
    %v359 = vld [vmem:[#allocation3 + $0x5a0] sm:$0xff]
    %v360 = vld [vmem:[#allocation3 + $0x5a8] sm:$0xff]
    %v361 = vld [vmem:[#allocation3 + $0x5b0] sm:$0xff]
    %v362 = vld [vmem:[#allocation3 + $0x5b8] sm:$0xff]
    %v363 = vld [vmem:[#allocation3 + $0x5c0] sm:$0xff]
    %v364 = vld [vmem:[#allocation3 + $0x5c8] sm:$0xff]
    %v365 = vld [vmem:[#allocation3 + $0x5d0] sm:$0xff]
    %v366 = vld [vmem:[#allocation3 + $0x5d8] sm:$0xff]
    %v367 = vld [vmem:[#allocation3 + $0x5e0] sm:$0xff]
    %v368 = vld [vmem:[#allocation3 + $0x5e8] sm:$0xff]
    %v369 = vld [vmem:[#allocation3 + $0x5f0] sm:$0xff]
    %v370 = vld [vmem:[#allocation3 + $0x5f8] sm:$0xff]
    %v371 = vld [vmem:[#allocation3 + $0x600] sm:$0xff]
    %v372 = vld [vmem:[#allocation3 + $0x608] sm:$0xff]
    %v373 = vld [vmem:[#allocation3 + $0x610] sm:$0xff]
    %v374 = vld [vmem:[#allocation3 + $0x618] sm:$0xff]
    %v375 = vld [vmem:[#allocation3 + $0x620] sm:$0xff]
    %v376 = vld [vmem:[#allocation3 + $0x628] sm:$0xff]
    %v377 = vld [vmem:[#allocation3 + $0x630] sm:$0xff]
    %v378 = vld [vmem:[#allocation3 + $0x638] sm:$0xff]
    %v379 = vld [vmem:[#allocation3 + $0x640] sm:$0xff]
    %v380 = vld [vmem:[#allocation3 + $0x648] sm:$0xff]
    %v381 = vld [vmem:[#allocation3 + $0x650] sm:$0xff]
    %v382 = vld [vmem:[#allocation3 + $0x658] sm:$0xff]
    %v383 = vld [vmem:[#allocation3 + $0x660] sm:$0xff]
    %v384 = vld [vmem:[#allocation3 + $0x668] sm:$0xff]
    %v385 = vld [vmem:[#allocation3 + $0x670] sm:$0xff]
    %v386 = vld [vmem:[#allocation3 + $0x678] sm:$0xff]
    %v387 = vld [vmem:[#allocation3 + $0x680] sm:$0xff]
    %v388 = vld [vmem:[#allocation3 + $0x688] sm:$0xff]
    %v389 = vld [vmem:[#allocation3 + $0x690] sm:$0xff]
    %v390 = vld [vmem:[#allocation3 + $0x698] sm:$0xff]
    %v391 = vld [vmem:[#allocation3 + $0x6a0] sm:$0xff]
    %v392 = vld [vmem:[#allocation3 + $0x6a8] sm:$0xff]
    %v393 = vld [vmem:[#allocation3 + $0x6b0] sm:$0xff]
    %v394 = vld [vmem:[#allocation3 + $0x6b8] sm:$0xff]
    %v395 = vld [vmem:[#allocation3 + $0x6c0] sm:$0xff]
    %v396 = vld [vmem:[#allocation3 + $0x6c8] sm:$0xff]
    %v397 = vld [vmem:[#allocation3 + $0x6d0] sm:$0xff]
    %v398 = vld [vmem:[#allocation3 + $0x6d8] sm:$0xff]
    %v399 = vld [vmem:[#allocation3 + $0x6e0] sm:$0xff]
    %v400 = vld [vmem:[#allocation3 + $0x6e8] sm:$0xff]
    %v401 = vld [vmem:[#allocation3 + $0x6f0] sm:$0xff]
    %v402 = vld [vmem:[#allocation3 + $0x6f8] sm:$0xff]
    %v403 = vld [vmem:[#allocation3 + $0x700] sm:$0xff]
    %v404 = vld [vmem:[#allocation3 + $0x708] sm:$0xff]
    %v405 = vld [vmem:[#allocation3 + $0x710] sm:$0xff]
    %v406 = vld [vmem:[#allocation3 + $0x718] sm:$0xff]
    %v407 = vld [vmem:[#allocation3 + $0x720] sm:$0xff]
    %v408 = vld [vmem:[#allocation3 + $0x728] sm:$0xff]
    %v409 = vld [vmem:[#allocation3 + $0x730] sm:$0xff]
    %v410 = vld [vmem:[#allocation3 + $0x738] sm:$0xff]
    %v411 = vld [vmem:[#allocation3 + $0x740] sm:$0xff]
    %v412 = vld [vmem:[#allocation3 + $0x748] sm:$0xff]
    %v413 = vld [vmem:[#allocation3 + $0x750] sm:$0xff]
    %v414 = vld [vmem:[#allocation3 + $0x758] sm:$0xff]
    %v415 = vld [vmem:[#allocation3 + $0x760] sm:$0xff]
    %v416 = vld [vmem:[#allocation3 + $0x768] sm:$0xff]
    %v417 = vld [vmem:[#allocation3 + $0x770] sm:$0xff]
    %v418 = vld [vmem:[#allocation3 + $0x778] sm:$0xff]
    %v419 = vld [vmem:[#allocation3 + $0x780] sm:$0xff]
    %v420 = vld [vmem:[#allocation3 + $0x788] sm:$0xff]
    %v421 = vld [vmem:[#allocation3 + $0x790] sm:$0xff]
    %v422 = vld [vmem:[#allocation3 + $0x798] sm:$0xff]
    %v423 = vld [vmem:[#allocation3 + $0x7a0] sm:$0xff]
    %v424 = vld [vmem:[#allocation3 + $0x7a8] sm:$0xff]
    %v425 = vld [vmem:[#allocation3 + $0x7b0] sm:$0xff]
    %v426 = vld [vmem:[#allocation3 + $0x7b8] sm:$0xff]
    %v427 = vld [vmem:[#allocation3 + $0x7c0] sm:$0xff]
    %v428 = vld [vmem:[#allocation3 + $0x7c8] sm:$0xff]
    %v429 = vld [vmem:[#allocation3 + $0x7d0] sm:$0xff]
    %v430 = vld [vmem:[#allocation3 + $0x7d8] sm:$0xff]
    %v431 = vld [vmem:[#allocation3 + $0x7e0] sm:$0xff]
    %v432 = vld [vmem:[#allocation3 + $0x7e8] sm:$0xff]
    %v433 = vld [vmem:[#allocation3 + $0x7f0] sm:$0xff]
    %v434 = vld [vmem:[#allocation3 + $0x7f8] sm:$0xff]
    %v435 = vld [vmem:[#allocation3 + $0x800] sm:$0xff]
    %v436 = vld [vmem:[#allocation3 + $0x808] sm:$0xff]
    %v437 = vld [vmem:[#allocation3 + $0x810] sm:$0xff]
    %v438 = vld [vmem:[#allocation3 + $0x818] sm:$0xff]
    %v439 = vld [vmem:[#allocation3 + $0x820] sm:$0xff]
    %v440 = vld [vmem:[#allocation3 + $0x828] sm:$0xff]
    %v441 = vld [vmem:[#allocation3 + $0x830] sm:$0xff]
    %v442 = vld [vmem:[#allocation3 + $0x838] sm:$0xff]
    %v443 = vld [vmem:[#allocation3 + $0x840] sm:$0xff]
    %v444 = vld [vmem:[#allocation3 + $0x848] sm:$0xff]
    %v445 = vld [vmem:[#allocation3 + $0x850] sm:$0xff]
    %v446 = vld [vmem:[#allocation3 + $0x858] sm:$0xff]
    %v447 = vld [vmem:[#allocation3 + $0x860] sm:$0xff]
    %v448 = vld [vmem:[#allocation3 + $0x868] sm:$0xff]
    %v449 = vld [vmem:[#allocation3 + $0x870] sm:$0xff]
    %v450 = vld [vmem:[#allocation3 + $0x878] sm:$0xff]
    %v451 = vld [vmem:[#allocation3 + $0x880] sm:$0xff]
    %v452 = vld [vmem:[#allocation3 + $0x888] sm:$0xff]
    %v453 = vld [vmem:[#allocation3 + $0x890] sm:$0xff]
    %v454 = vld [vmem:[#allocation3 + $0x898] sm:$0xff]
    %v455 = vld [vmem:[#allocation3 + $0x8a0] sm:$0xff]
    %v456 = vld [vmem:[#allocation3 + $0x8a8] sm:$0xff]
    %v457 = vld [vmem:[#allocation3 + $0x8b0] sm:$0xff]
    %v458 = vld [vmem:[#allocation3 + $0x8b8] sm:$0xff]
    %v459 = vld [vmem:[#allocation3 + $0x8c0] sm:$0xff]
    %v460 = vld [vmem:[#allocation3 + $0x8c8] sm:$0xff]
    %v461 = vld [vmem:[#allocation3 + $0x8d0] sm:$0xff]
    %v462 = vld [vmem:[#allocation3 + $0x8d8] sm:$0xff]
    %v463 = vld [vmem:[#allocation3 + $0x8e0] sm:$0xff]
    %v464 = vld [vmem:[#allocation3 + $0x8e8] sm:$0xff]
    %v465 = vld [vmem:[#allocation3 + $0x8f0] sm:$0xff]
    %v466 = vld [vmem:[#allocation3 + $0x8f8] sm:$0xff]
    %v467 = vpack.c.bf16 %v197, %v179
    %v468 = vpack.c.bf16 %v198, %v180
    %v469 = vpack.c.bf16 %v199, %v181
    %v470 = vpack.c.bf16 %v200, %v182
    %v471 = vpack.c.bf16 %v201, %v183
    %v472 = vpack.c.bf16 %v202, %v184
    %v473 = vpack.c.bf16 %v203, %v185
    %v474 = vpack.c.bf16 %v204, %v186
    %v475 = vpack.c.bf16 %v205, %v187
    %v476 = vpack.c.bf16 %v206, %v188
    %v477 = vpack.c.bf16 %v207, %v189
    %v478 = vpack.c.bf16 %v208, %v190
    %v479 = vpack.c.bf16 %v209, %v191
    %v480 = vpack.c.bf16 %v210, %v192
    %v481 = vpack.c.bf16 %v211, %v193
    %v482 = vpack.c.bf16 %v212, %v194
    %v483 = vpack.c.bf16 %v213, %v195
    %v484 = vpack.c.bf16 %v214, %v196
    %v485 = vpack.c.bf16 %v233, %v215
    %v486 = vpack.c.bf16 %v234, %v216
    %v487 = vpack.c.bf16 %v235, %v217
    %v488 = vpack.c.bf16 %v236, %v218
    %v489 = vpack.c.bf16 %v237, %v219
    %v490 = vpack.c.bf16 %v238, %v220
    %v491 = vpack.c.bf16 %v239, %v221
    %v492 = vpack.c.bf16 %v240, %v222
    %v493 = vpack.c.bf16 %v241, %v223
    %v494 = vpack.c.bf16 %v242, %v224
    %v495 = vpack.c.bf16 %v243, %v225
    %v496 = vpack.c.bf16 %v244, %v226
    %v497 = vpack.c.bf16 %v245, %v227
    %v498 = vpack.c.bf16 %v246, %v228
    %v499 = vpack.c.bf16 %v247, %v229
    %v500 = vpack.c.bf16 %v248, %v230
    %v501 = vpack.c.bf16 %v249, %v231
    %v502 = vpack.c.bf16 %v250, %v232
    %v503 = vpack.c.bf16 %v269, %v251
    %v504 = vpack.c.bf16 %v270, %v252
    %v505 = vpack.c.bf16 %v271, %v253
    %v506 = vpack.c.bf16 %v272, %v254
    %v507 = vpack.c.bf16 %v273, %v255
    %v508 = vpack.c.bf16 %v274, %v256
    %v509 = vpack.c.bf16 %v275, %v257
    %v510 = vpack.c.bf16 %v276, %v258
    %v511 = vpack.c.bf16 %v277, %v259
    %v512 = vpack.c.bf16 %v278, %v260
    %v513 = vpack.c.bf16 %v279, %v261
    %v514 = vpack.c.bf16 %v280, %v262
    %v515 = vpack.c.bf16 %v281, %v263
    %v516 = vpack.c.bf16 %v282, %v264
    %v517 = vpack.c.bf16 %v283, %v265
    %v518 = vpack.c.bf16 %v284, %v266
    %v519 = vpack.c.bf16 %v285, %v267
    %v520 = vpack.c.bf16 %v286, %v268
    %v521 = vpack.c.bf16 %v305, %v287
    %v522 = vpack.c.bf16 %v306, %v288
    %v523 = vpack.c.bf16 %v307, %v289
    %v524 = vpack.c.bf16 %v308, %v290
    %v525 = vpack.c.bf16 %v309, %v291
    %v526 = vpack.c.bf16 %v310, %v292
    %v527 = vpack.c.bf16 %v311, %v293
    %v528 = vpack.c.bf16 %v312, %v294
    %v529 = vpack.c.bf16 %v313, %v295
    %v530 = vpack.c.bf16 %v314, %v296
    %v531 = vpack.c.bf16 %v315, %v297
    %v532 = vpack.c.bf16 %v316, %v298
    %v533 = vpack.c.bf16 %v317, %v299
    %v534 = vpack.c.bf16 %v318, %v300
    %v535 = vpack.c.bf16 %v319, %v301
    %v536 = vpack.c.bf16 %v320, %v302
    %v537 = vpack.c.bf16 %v321, %v303
    %v538 = vpack.c.bf16 %v322, %v304
    %v539 = vpack.c.bf16 %v341, %v323
    %v540 = vpack.c.bf16 %v342, %v324
    %v541 = vpack.c.bf16 %v343, %v325
    %v542 = vpack.c.bf16 %v344, %v326
    %v543 = vpack.c.bf16 %v345, %v327
    %v544 = vpack.c.bf16 %v346, %v328
    %v545 = vpack.c.bf16 %v347, %v329
    %v546 = vpack.c.bf16 %v348, %v330
    %v547 = vpack.c.bf16 %v349, %v331
    %v548 = vpack.c.bf16 %v350, %v332
    %v549 = vpack.c.bf16 %v351, %v333
    %v550 = vpack.c.bf16 %v352, %v334
    %v551 = vpack.c.bf16 %v353, %v335
    %v552 = vpack.c.bf16 %v354, %v336
    %v553 = vpack.c.bf16 %v355, %v337
    %v554 = vpack.c.bf16 %v356, %v338
    %v555 = vpack.c.bf16 %v357, %v339
    %v556 = vpack.c.bf16 %v358, %v340
    %v557 = vpack.c.bf16 %v377, %v359
    %v558 = vpack.c.bf16 %v378, %v360
    %v559 = vpack.c.bf16 %v379, %v361
    %v560 = vpack.c.bf16 %v380, %v362
    %v561 = vpack.c.bf16 %v381, %v363
    %v562 = vpack.c.bf16 %v382, %v364
    %v563 = vpack.c.bf16 %v383, %v365
    %v564 = vpack.c.bf16 %v384, %v366
    %v565 = vpack.c.bf16 %v385, %v367
    %v566 = vpack.c.bf16 %v386, %v368
    %v567 = vpack.c.bf16 %v387, %v369
    %v568 = vpack.c.bf16 %v388, %v370
    %v569 = vpack.c.bf16 %v389, %v371
    %v570 = vpack.c.bf16 %v390, %v372
    %v571 = vpack.c.bf16 %v391, %v373
    %v572 = vpack.c.bf16 %v392, %v374
    %v573 = vpack.c.bf16 %v393, %v375
    %v574 = vpack.c.bf16 %v394, %v376
    %v575 = vpack.c.bf16 %v413, %v395
    %v576 = vpack.c.bf16 %v414, %v396
    %v577 = vpack.c.bf16 %v415, %v397
    %v578 = vpack.c.bf16 %v416, %v398
    %v579 = vpack.c.bf16 %v417, %v399
    %v580 = vpack.c.bf16 %v418, %v400
    %v581 = vpack.c.bf16 %v419, %v401
    %v582 = vpack.c.bf16 %v420, %v402
    %v583 = vpack.c.bf16 %v421, %v403
    %v584 = vpack.c.bf16 %v422, %v404
    %v585 = vpack.c.bf16 %v423, %v405
    %v586 = vpack.c.bf16 %v424, %v406
    %v587 = vpack.c.bf16 %v425, %v407
    %v588 = vpack.c.bf16 %v426, %v408
    %v589 = vpack.c.bf16 %v427, %v409
    %v590 = vpack.c.bf16 %v428, %v410
    %v591 = vpack.c.bf16 %v429, %v411
    %v592 = vpack.c.bf16 %v430, %v412
    %v593 = vpack.c.bf16 %v449, %v431
    %v594 = vpack.c.bf16 %v450, %v432
    %v595 = vpack.c.bf16 %v451, %v433
    %v596 = vpack.c.bf16 %v452, %v434
    %v597 = vpack.c.bf16 %v453, %v435
    %v598 = vpack.c.bf16 %v454, %v436
    %v599 = vpack.c.bf16 %v455, %v437
    %v600 = vpack.c.bf16 %v456, %v438
    %v601 = vpack.c.bf16 %v457, %v439
    %v602 = vpack.c.bf16 %v458, %v440
    %v603 = vpack.c.bf16 %v459, %v441
    %v604 = vpack.c.bf16 %v460, %v442
    %v605 = vpack.c.bf16 %v461, %v443
    %v606 = vpack.c.bf16 %v462, %v444
    %v607 = vpack.c.bf16 %v463, %v445
    %v608 = vpack.c.bf16 %v464, %v446
    %v609 = vpack.c.bf16 %v465, %v447
    %v610 = vpack.c.bf16 %v466, %v448
    %v611 = vld [vmem:[#allocation6] sm:$0xff]
    %v612 = vld [vmem:[#allocation6 + $0x8] sm:$0xff]
    %v613 = vld [vmem:[#allocation6 + $0x10] sm:$0xff]
    %v614 = vld [vmem:[#allocation6 + $0x18] sm:$0xff]
    %v615 = vld [vmem:[#allocation6 + $0x20] sm:$0xff]
    %v616 = vld [vmem:[#allocation6 + $0x28] sm:$0xff]
    %v617 = vld [vmem:[#allocation6 + $0x30] sm:$0xff]
    %v618 = vld [vmem:[#allocation6 + $0x38] sm:$0xff]
    %v619 = vld [vmem:[#allocation6 + $0x40] sm:$0xff]
    %v620 = vld [vmem:[#allocation6 + $0x48] sm:$0xff]
    %v621 = vld [vmem:[#allocation6 + $0x50] sm:$0xff]
    %v622 = vld [vmem:[#allocation6 + $0x58] sm:$0xff]
    %v623 = vld [vmem:[#allocation6 + $0x60] sm:$0xff]
    %v624 = vld [vmem:[#allocation6 + $0x68] sm:$0xff]
    %v625 = vld [vmem:[#allocation6 + $0x70] sm:$0xff]
    %v626 = vld [vmem:[#allocation6 + $0x78] sm:$0xff]
    %v627 = vld [vmem:[#allocation6 + $0x80] sm:$0xff]
    %v628 = vld [vmem:[#allocation6 + $0x88] sm:$0xff]
    %v629 = vld [vmem:[#allocation6 + $0x90] sm:$0xff]
    %v630 = vld [vmem:[#allocation6 + $0x98] sm:$0xff]
    %v631 = vld [vmem:[#allocation6 + $0xa0] sm:$0xff]
    %v632 = vld [vmem:[#allocation6 + $0xa8] sm:$0xff]
    %v633 = vld [vmem:[#allocation6 + $0xb0] sm:$0xff]
    %v634 = vld [vmem:[#allocation6 + $0xb8] sm:$0xff]
    %v635 = vld [vmem:[#allocation6 + $0xc0] sm:$0xff]
    %v636 = vld [vmem:[#allocation6 + $0xc8] sm:$0xff]
    %v637 = vld [vmem:[#allocation6 + $0xd0] sm:$0xff]
    %v638 = vld [vmem:[#allocation6 + $0xd8] sm:$0xff]
    %v639 = vld [vmem:[#allocation6 + $0xe0] sm:$0xff]
    %v640 = vld [vmem:[#allocation6 + $0xe8] sm:$0xff]
    %v641 = vld [vmem:[#allocation6 + $0xf0] sm:$0xff]
    %v642 = vld [vmem:[#allocation6 + $0xf8] sm:$0xff]
    %v643 = vld [vmem:[#allocation6 + $0x100] sm:$0xff]
    %v644 = vld [vmem:[#allocation6 + $0x108] sm:$0xff]
    %v645 = vld [vmem:[#allocation6 + $0x110] sm:$0xff]
    %v646 = vld [vmem:[#allocation6 + $0x118] sm:$0xff]
    %v647 = vld [vmem:[#allocation6 + $0x120] sm:$0xff]
    %v648 = vld [vmem:[#allocation6 + $0x128] sm:$0xff]
    %v649 = vld [vmem:[#allocation6 + $0x130] sm:$0xff]
    %v650 = vld [vmem:[#allocation6 + $0x138] sm:$0xff]
    %v651 = vld [vmem:[#allocation6 + $0x140] sm:$0xff]
    %v652 = vld [vmem:[#allocation6 + $0x148] sm:$0xff]
    %v653 = vld [vmem:[#allocation6 + $0x150] sm:$0xff]
    %v654 = vld [vmem:[#allocation6 + $0x158] sm:$0xff]
    %v655 = vld [vmem:[#allocation6 + $0x160] sm:$0xff]
    %v656 = vld [vmem:[#allocation6 + $0x168] sm:$0xff]
    %v657 = vld [vmem:[#allocation6 + $0x170] sm:$0xff]
    %v658 = vld [vmem:[#allocation6 + $0x178] sm:$0xff]
    %v659 = vld [vmem:[#allocation6 + $0x180] sm:$0xff]
    %v660 = vld [vmem:[#allocation6 + $0x188] sm:$0xff]
    %v661 = vld [vmem:[#allocation6 + $0x190] sm:$0xff]
    %v662 = vld [vmem:[#allocation6 + $0x198] sm:$0xff]
    %v663 = vld [vmem:[#allocation6 + $0x1a0] sm:$0xff]
    %v664 = vld [vmem:[#allocation6 + $0x1a8] sm:$0xff]
    %v665 = vld [vmem:[#allocation6 + $0x1b0] sm:$0xff]
    %v666 = vld [vmem:[#allocation6 + $0x1b8] sm:$0xff]
    %v667 = vld [vmem:[#allocation6 + $0x1c0] sm:$0xff]
    %v668 = vld [vmem:[#allocation6 + $0x1c8] sm:$0xff]
    %v669 = vld [vmem:[#allocation6 + $0x1d0] sm:$0xff]
    %v670 = vld [vmem:[#allocation6 + $0x1d8] sm:$0xff]
    %v671 = vld [vmem:[#allocation6 + $0x1e0] sm:$0xff]
    %v672 = vld [vmem:[#allocation6 + $0x1e8] sm:$0xff]
    %v673 = vld [vmem:[#allocation6 + $0x1f0] sm:$0xff]
    %v674 = vld [vmem:[#allocation6 + $0x1f8] sm:$0xff]
    %v675 = vld [vmem:[#allocation6 + $0x200] sm:$0xff]
    %v676 = vld [vmem:[#allocation6 + $0x208] sm:$0xff]
    %v677 = vld [vmem:[#allocation6 + $0x210] sm:$0xff]
    %v678 = vld [vmem:[#allocation6 + $0x218] sm:$0xff]
    %v679 = vld [vmem:[#allocation6 + $0x220] sm:$0xff]
    %v680 = vld [vmem:[#allocation6 + $0x228] sm:$0xff]
    %v681 = vld [vmem:[#allocation6 + $0x230] sm:$0xff]
    %v682 = vld [vmem:[#allocation6 + $0x238] sm:$0xff]
    %v683 = vld [vmem:[#allocation6 + $0x240] sm:$0xff]
    %v684 = vld [vmem:[#allocation6 + $0x248] sm:$0xff]
    %v685 = vld [vmem:[#allocation6 + $0x250] sm:$0xff]
    %v686 = vld [vmem:[#allocation6 + $0x258] sm:$0xff]
    %v687 = vld [vmem:[#allocation6 + $0x260] sm:$0xff]
    %v688 = vld [vmem:[#allocation6 + $0x268] sm:$0xff]
    %v689 = vld [vmem:[#allocation6 + $0x270] sm:$0xff]
    %v690 = vld [vmem:[#allocation6 + $0x278] sm:$0xff]
    %v691 = vld [vmem:[#allocation6 + $0x280] sm:$0xff]
    %v692 = vld [vmem:[#allocation6 + $0x288] sm:$0xff]
    %v693 = vld [vmem:[#allocation6 + $0x290] sm:$0xff]
    %v694 = vld [vmem:[#allocation6 + $0x298] sm:$0xff]
    %v695 = vld [vmem:[#allocation6 + $0x2a0] sm:$0xff]
    %v696 = vld [vmem:[#allocation6 + $0x2a8] sm:$0xff]
    %v697 = vld [vmem:[#allocation6 + $0x2b0] sm:$0xff]
    %v698 = vld [vmem:[#allocation6 + $0x2b8] sm:$0xff]
    %v699 = vld [vmem:[#allocation6 + $0x2c0] sm:$0xff]
    %v700 = vld [vmem:[#allocation6 + $0x2c8] sm:$0xff]
    %v701 = vld [vmem:[#allocation6 + $0x2d0] sm:$0xff]
    %v702 = vld [vmem:[#allocation6 + $0x2d8] sm:$0xff]
    %v703 = vld [vmem:[#allocation6 + $0x2e0] sm:$0xff]
    %v704 = vld [vmem:[#allocation6 + $0x2e8] sm:$0xff]
    %v705 = vld [vmem:[#allocation6 + $0x2f0] sm:$0xff]
    %v706 = vld [vmem:[#allocation6 + $0x2f8] sm:$0xff]
    %v707 = vld [vmem:[#allocation6 + $0x300] sm:$0xff]
    %v708 = vld [vmem:[#allocation6 + $0x308] sm:$0xff]
    %v709 = vld [vmem:[#allocation6 + $0x310] sm:$0xff]
    %v710 = vld [vmem:[#allocation6 + $0x318] sm:$0xff]
    %v711 = vld [vmem:[#allocation6 + $0x320] sm:$0xff]
    %v712 = vld [vmem:[#allocation6 + $0x328] sm:$0xff]
    %v713 = vld [vmem:[#allocation6 + $0x330] sm:$0xff]
    %v714 = vld [vmem:[#allocation6 + $0x338] sm:$0xff]
    %v715 = vld [vmem:[#allocation6 + $0x340] sm:$0xff]
    %v716 = vld [vmem:[#allocation6 + $0x348] sm:$0xff]
    %v717 = vld [vmem:[#allocation6 + $0x350] sm:$0xff]
    %v718 = vld [vmem:[#allocation6 + $0x358] sm:$0xff]
    %v719 = vld [vmem:[#allocation6 + $0x360] sm:$0xff]
    %v720 = vld [vmem:[#allocation6 + $0x368] sm:$0xff]
    %v721 = vld [vmem:[#allocation6 + $0x370] sm:$0xff]
    %v722 = vld [vmem:[#allocation6 + $0x378] sm:$0xff]
    %v723 = vld [vmem:[#allocation6 + $0x380] sm:$0xff]
    %v724 = vld [vmem:[#allocation6 + $0x388] sm:$0xff]
    %v725 = vld [vmem:[#allocation6 + $0x390] sm:$0xff]
    %v726 = vld [vmem:[#allocation6 + $0x398] sm:$0xff]
    %v727 = vld [vmem:[#allocation6 + $0x3a0] sm:$0xff]
    %v728 = vld [vmem:[#allocation6 + $0x3a8] sm:$0xff]
    %v729 = vld [vmem:[#allocation6 + $0x3b0] sm:$0xff]
    %v730 = vld [vmem:[#allocation6 + $0x3b8] sm:$0xff]
    %v731 = vld [vmem:[#allocation6 + $0x3c0] sm:$0xff]
    %v732 = vld [vmem:[#allocation6 + $0x3c8] sm:$0xff]
    %v733 = vld [vmem:[#allocation6 + $0x3d0] sm:$0xff]
    %v734 = vld [vmem:[#allocation6 + $0x3d8] sm:$0xff]
    %v735 = vld [vmem:[#allocation6 + $0x3e0] sm:$0xff]
    %v736 = vld [vmem:[#allocation6 + $0x3e8] sm:$0xff]
    %v737 = vld [vmem:[#allocation6 + $0x3f0] sm:$0xff]
    %v738 = vld [vmem:[#allocation6 + $0x3f8] sm:$0xff]
    %v739 = vld [vmem:[#allocation6 + $0x400] sm:$0xff]
    %v740 = vld [vmem:[#allocation6 + $0x408] sm:$0xff]
    %v741 = vld [vmem:[#allocation6 + $0x410] sm:$0xff]
    %v742 = vld [vmem:[#allocation6 + $0x418] sm:$0xff]
    %v743 = vld [vmem:[#allocation6 + $0x420] sm:$0xff]
    %v744 = vld [vmem:[#allocation6 + $0x428] sm:$0xff]
    %v745 = vld [vmem:[#allocation6 + $0x430] sm:$0xff]
    %v746 = vld [vmem:[#allocation6 + $0x438] sm:$0xff]
    %v747 = vld [vmem:[#allocation6 + $0x440] sm:$0xff]
    %v748 = vld [vmem:[#allocation6 + $0x448] sm:$0xff]
    %v749 = vld [vmem:[#allocation6 + $0x450] sm:$0xff]
    %v750 = vld [vmem:[#allocation6 + $0x458] sm:$0xff]
    %v751 = vld [vmem:[#allocation6 + $0x460] sm:$0xff]
    %v752 = vld [vmem:[#allocation6 + $0x468] sm:$0xff]
    %v753 = vld [vmem:[#allocation6 + $0x470] sm:$0xff]
    %v754 = vld [vmem:[#allocation6 + $0x478] sm:$0xff]
    %v755 = vld [vmem:[#allocation6 + $0x480] sm:$0xff]
    %v756 = vld [vmem:[#allocation6 + $0x488] sm:$0xff]
    %v757 = vld [vmem:[#allocation6 + $0x490] sm:$0xff]
    %v758 = vld [vmem:[#allocation6 + $0x498] sm:$0xff]
    %v759 = vld [vmem:[#allocation6 + $0x4a0] sm:$0xff]
    %v760 = vld [vmem:[#allocation6 + $0x4a8] sm:$0xff]
    %v761 = vld [vmem:[#allocation6 + $0x4b0] sm:$0xff]
    %v762 = vld [vmem:[#allocation6 + $0x4b8] sm:$0xff]
    %v763 = vld [vmem:[#allocation6 + $0x4c0] sm:$0xff]
    %v764 = vld [vmem:[#allocation6 + $0x4c8] sm:$0xff]
    %v765 = vld [vmem:[#allocation6 + $0x4d0] sm:$0xff]
    %v766 = vld [vmem:[#allocation6 + $0x4d8] sm:$0xff]
    %v767 = vld [vmem:[#allocation6 + $0x4e0] sm:$0xff]
    %v768 = vld [vmem:[#allocation6 + $0x4e8] sm:$0xff]
    %v769 = vld [vmem:[#allocation6 + $0x4f0] sm:$0xff]
    %v770 = vld [vmem:[#allocation6 + $0x4f8] sm:$0xff]
    %v771 = vld [vmem:[#allocation6 + $0x500] sm:$0xff]
    %v772 = vld [vmem:[#allocation6 + $0x508] sm:$0xff]
    %v773 = vld [vmem:[#allocation6 + $0x510] sm:$0xff]
    %v774 = vld [vmem:[#allocation6 + $0x518] sm:$0xff]
    %v775 = vld [vmem:[#allocation6 + $0x520] sm:$0xff]
    %v776 = vld [vmem:[#allocation6 + $0x528] sm:$0xff]
    %v777 = vld [vmem:[#allocation6 + $0x530] sm:$0xff]
    %v778 = vld [vmem:[#allocation6 + $0x538] sm:$0xff]
    %v779 = vld [vmem:[#allocation6 + $0x540] sm:$0xff]
    %v780 = vld [vmem:[#allocation6 + $0x548] sm:$0xff]
    %v781 = vld [vmem:[#allocation6 + $0x550] sm:$0xff]
    %v782 = vld [vmem:[#allocation6 + $0x558] sm:$0xff]
    %v783 = vld [vmem:[#allocation6 + $0x560] sm:$0xff]
    %v784 = vld [vmem:[#allocation6 + $0x568] sm:$0xff]
    %v785 = vld [vmem:[#allocation6 + $0x570] sm:$0xff]
    %v786 = vld [vmem:[#allocation6 + $0x578] sm:$0xff]
    %v787 = vld [vmem:[#allocation6 + $0x580] sm:$0xff]
    %v788 = vld [vmem:[#allocation6 + $0x588] sm:$0xff]
    %v789 = vld [vmem:[#allocation6 + $0x590] sm:$0xff]
    %v790 = vld [vmem:[#allocation6 + $0x598] sm:$0xff]
    %v791 = vld [vmem:[#allocation6 + $0x5a0] sm:$0xff]
    %v792 = vld [vmem:[#allocation6 + $0x5a8] sm:$0xff]
    %v793 = vld [vmem:[#allocation6 + $0x5b0] sm:$0xff]
    %v794 = vld [vmem:[#allocation6 + $0x5b8] sm:$0xff]
    %v795 = vld [vmem:[#allocation6 + $0x5c0] sm:$0xff]
    %v796 = vld [vmem:[#allocation6 + $0x5c8] sm:$0xff]
    %v797 = vld [vmem:[#allocation6 + $0x5d0] sm:$0xff]
    %v798 = vld [vmem:[#allocation6 + $0x5d8] sm:$0xff]
    %v799 = vld [vmem:[#allocation6 + $0x5e0] sm:$0xff]
    %v800 = vld [vmem:[#allocation6 + $0x5e8] sm:$0xff]
    %v801 = vld [vmem:[#allocation6 + $0x5f0] sm:$0xff]
    %v802 = vld [vmem:[#allocation6 + $0x5f8] sm:$0xff]
    %v803 = vld [vmem:[#allocation6 + $0x600] sm:$0xff]
    %v804 = vld [vmem:[#allocation6 + $0x608] sm:$0xff]
    %v805 = vld [vmem:[#allocation6 + $0x610] sm:$0xff]
    %v806 = vld [vmem:[#allocation6 + $0x618] sm:$0xff]
    %v807 = vld [vmem:[#allocation6 + $0x620] sm:$0xff]
    %v808 = vld [vmem:[#allocation6 + $0x628] sm:$0xff]
    %v809 = vld [vmem:[#allocation6 + $0x630] sm:$0xff]
    %v810 = vld [vmem:[#allocation6 + $0x638] sm:$0xff]
    %v811 = vld [vmem:[#allocation6 + $0x640] sm:$0xff]
    %v812 = vld [vmem:[#allocation6 + $0x648] sm:$0xff]
    %v813 = vld [vmem:[#allocation6 + $0x650] sm:$0xff]
    %v814 = vld [vmem:[#allocation6 + $0x658] sm:$0xff]
    %v815 = vld [vmem:[#allocation6 + $0x660] sm:$0xff]
    %v816 = vld [vmem:[#allocation6 + $0x668] sm:$0xff]
    %v817 = vld [vmem:[#allocation6 + $0x670] sm:$0xff]
    %v818 = vld [vmem:[#allocation6 + $0x678] sm:$0xff]
    %v819 = vld [vmem:[#allocation6 + $0x680] sm:$0xff]
    %v820 = vld [vmem:[#allocation6 + $0x688] sm:$0xff]
    %v821 = vld [vmem:[#allocation6 + $0x690] sm:$0xff]
    %v822 = vld [vmem:[#allocation6 + $0x698] sm:$0xff]
    %v823 = vld [vmem:[#allocation6 + $0x6a0] sm:$0xff]
    %v824 = vld [vmem:[#allocation6 + $0x6a8] sm:$0xff]
    %v825 = vld [vmem:[#allocation6 + $0x6b0] sm:$0xff]
    %v826 = vld [vmem:[#allocation6 + $0x6b8] sm:$0xff]
    %v827 = vld [vmem:[#allocation6 + $0x6c0] sm:$0xff]
    %v828 = vld [vmem:[#allocation6 + $0x6c8] sm:$0xff]
    %v829 = vld [vmem:[#allocation6 + $0x6d0] sm:$0xff]
    %v830 = vld [vmem:[#allocation6 + $0x6d8] sm:$0xff]
    %v831 = vld [vmem:[#allocation6 + $0x6e0] sm:$0xff]
    %v832 = vld [vmem:[#allocation6 + $0x6e8] sm:$0xff]
    %v833 = vld [vmem:[#allocation6 + $0x6f0] sm:$0xff]
    %v834 = vld [vmem:[#allocation6 + $0x6f8] sm:$0xff]
    %v835 = vld [vmem:[#allocation6 + $0x700] sm:$0xff]
    %v836 = vld [vmem:[#allocation6 + $0x708] sm:$0xff]
    %v837 = vld [vmem:[#allocation6 + $0x710] sm:$0xff]
    %v838 = vld [vmem:[#allocation6 + $0x718] sm:$0xff]
    %v839 = vld [vmem:[#allocation6 + $0x720] sm:$0xff]
    %v840 = vld [vmem:[#allocation6 + $0x728] sm:$0xff]
    %v841 = vld [vmem:[#allocation6 + $0x730] sm:$0xff]
    %v842 = vld [vmem:[#allocation6 + $0x738] sm:$0xff]
    %v843 = vld [vmem:[#allocation6 + $0x740] sm:$0xff]
    %v844 = vld [vmem:[#allocation6 + $0x748] sm:$0xff]
    %v845 = vld [vmem:[#allocation6 + $0x750] sm:$0xff]
    %v846 = vld [vmem:[#allocation6 + $0x758] sm:$0xff]
    %v847 = vld [vmem:[#allocation6 + $0x760] sm:$0xff]
    %v848 = vld [vmem:[#allocation6 + $0x768] sm:$0xff]
    %v849 = vld [vmem:[#allocation6 + $0x770] sm:$0xff]
    %v850 = vld [vmem:[#allocation6 + $0x778] sm:$0xff]
    %v851 = vld [vmem:[#allocation6 + $0x780] sm:$0xff]
    %v852 = vld [vmem:[#allocation6 + $0x788] sm:$0xff]
    %v853 = vld [vmem:[#allocation6 + $0x790] sm:$0xff]
    %v854 = vld [vmem:[#allocation6 + $0x798] sm:$0xff]
    %v855 = vld [vmem:[#allocation6 + $0x7a0] sm:$0xff]
    %v856 = vld [vmem:[#allocation6 + $0x7a8] sm:$0xff]
    %v857 = vld [vmem:[#allocation6 + $0x7b0] sm:$0xff]
    %v858 = vld [vmem:[#allocation6 + $0x7b8] sm:$0xff]
    %v859 = vld [vmem:[#allocation6 + $0x7c0] sm:$0xff]
    %v860 = vld [vmem:[#allocation6 + $0x7c8] sm:$0xff]
    %v861 = vld [vmem:[#allocation6 + $0x7d0] sm:$0xff]
    %v862 = vld [vmem:[#allocation6 + $0x7d8] sm:$0xff]
    %v863 = vld [vmem:[#allocation6 + $0x7e0] sm:$0xff]
    %v864 = vld [vmem:[#allocation6 + $0x7e8] sm:$0xff]
    %v865 = vld [vmem:[#allocation6 + $0x7f0] sm:$0xff]
    %v866 = vld [vmem:[#allocation6 + $0x7f8] sm:$0xff]
    %v867 = vld [vmem:[#allocation6 + $0x800] sm:$0xff]
    %v868 = vld [vmem:[#allocation6 + $0x808] sm:$0xff]
    %v869 = vld [vmem:[#allocation6 + $0x810] sm:$0xff]
    %v870 = vld [vmem:[#allocation6 + $0x818] sm:$0xff]
    %v871 = vld [vmem:[#allocation6 + $0x820] sm:$0xff]
    %v872 = vld [vmem:[#allocation6 + $0x828] sm:$0xff]
    %v873 = vld [vmem:[#allocation6 + $0x830] sm:$0xff]
    %v874 = vld [vmem:[#allocation6 + $0x838] sm:$0xff]
    %v875 = vld [vmem:[#allocation6 + $0x840] sm:$0xff]
    %v876 = vld [vmem:[#allocation6 + $0x848] sm:$0xff]
    %v877 = vld [vmem:[#allocation6 + $0x850] sm:$0xff]
    %v878 = vld [vmem:[#allocation6 + $0x858] sm:$0xff]
    %v879 = vld [vmem:[#allocation6 + $0x860] sm:$0xff]
    %v880 = vld [vmem:[#allocation6 + $0x868] sm:$0xff]
    %v881 = vld [vmem:[#allocation6 + $0x870] sm:$0xff]
    %v882 = vld [vmem:[#allocation6 + $0x878] sm:$0xff]
    %v883 = vld [vmem:[#allocation6 + $0x880] sm:$0xff]
    %v884 = vld [vmem:[#allocation6 + $0x888] sm:$0xff]
    %v885 = vld [vmem:[#allocation6 + $0x890] sm:$0xff]
    %v886 = vld [vmem:[#allocation6 + $0x898] sm:$0xff]
    %v887 = vld [vmem:[#allocation6 + $0x8a0] sm:$0xff]
    %v888 = vld [vmem:[#allocation6 + $0x8a8] sm:$0xff]
    %v889 = vld [vmem:[#allocation6 + $0x8b0] sm:$0xff]
    %v890 = vld [vmem:[#allocation6 + $0x8b8] sm:$0xff]
    %v891 = vld [vmem:[#allocation6 + $0x8c0] sm:$0xff]
    %v892 = vld [vmem:[#allocation6 + $0x8c8] sm:$0xff]
    %v893 = vld [vmem:[#allocation6 + $0x8d0] sm:$0xff]
    %v894 = vld [vmem:[#allocation6 + $0x8d8] sm:$0xff]
    %v895 = vld [vmem:[#allocation6 + $0x8e0] sm:$0xff]
    %v896 = vld [vmem:[#allocation6 + $0x8e8] sm:$0xff]
    %v897 = vld [vmem:[#allocation6 + $0x8f0] sm:$0xff]
    %v898 = vld [vmem:[#allocation6 + $0x8f8] sm:$0xff]
    %v899 = vld [vmem:[#allocation6 + $0x900] sm:$0xff]
    %v900 = vld [vmem:[#allocation6 + $0x908] sm:$0xff]
    %v901 = vld [vmem:[#allocation6 + $0x910] sm:$0xff]
    %v902 = vld [vmem:[#allocation6 + $0x918] sm:$0xff]
    %v903 = vld [vmem:[#allocation6 + $0x920] sm:$0xff]
    %v904 = vld [vmem:[#allocation6 + $0x928] sm:$0xff]
    %v905 = vld [vmem:[#allocation6 + $0x930] sm:$0xff]
    %v906 = vld [vmem:[#allocation6 + $0x938] sm:$0xff]
    %v907 = vld [vmem:[#allocation6 + $0x940] sm:$0xff]
    %v908 = vld [vmem:[#allocation6 + $0x948] sm:$0xff]
    %v909 = vld [vmem:[#allocation6 + $0x950] sm:$0xff]
    %v910 = vld [vmem:[#allocation6 + $0x958] sm:$0xff]
    %v911 = vld [vmem:[#allocation6 + $0x960] sm:$0xff]
    %v912 = vld [vmem:[#allocation6 + $0x968] sm:$0xff]
    %v913 = vld [vmem:[#allocation6 + $0x970] sm:$0xff]
    %v914 = vld [vmem:[#allocation6 + $0x978] sm:$0xff]
    %v915 = vld [vmem:[#allocation6 + $0x980] sm:$0xff]
    %v916 = vld [vmem:[#allocation6 + $0x988] sm:$0xff]
    %v917 = vld [vmem:[#allocation6 + $0x990] sm:$0xff]
    %v918 = vld [vmem:[#allocation6 + $0x998] sm:$0xff]
    %v919 = vld [vmem:[#allocation6 + $0x9a0] sm:$0xff]
    %v920 = vld [vmem:[#allocation6 + $0x9a8] sm:$0xff]
    %v921 = vld [vmem:[#allocation6 + $0x9b0] sm:$0xff]
    %v922 = vld [vmem:[#allocation6 + $0x9b8] sm:$0xff]
    %v923 = vld [vmem:[#allocation6 + $0x9c0] sm:$0xff]
    %v924 = vld [vmem:[#allocation6 + $0x9c8] sm:$0xff]
    %v925 = vld [vmem:[#allocation6 + $0x9d0] sm:$0xff]
    %v926 = vld [vmem:[#allocation6 + $0x9d8] sm:$0xff]
    %v927 = vld [vmem:[#allocation6 + $0x9e0] sm:$0xff]
    %v928 = vld [vmem:[#allocation6 + $0x9e8] sm:$0xff]
    %v929 = vld [vmem:[#allocation6 + $0x9f0] sm:$0xff]
    %v930 = vld [vmem:[#allocation6 + $0x9f8] sm:$0xff]
    %v931 = vld [vmem:[#allocation6 + $0xa00] sm:$0xff]
    %v932 = vld [vmem:[#allocation6 + $0xa08] sm:$0xff]
    %v933 = vld [vmem:[#allocation6 + $0xa10] sm:$0xff]
    %v934 = vld [vmem:[#allocation6 + $0xa18] sm:$0xff]
    %v935 = vld [vmem:[#allocation6 + $0xa20] sm:$0xff]
    %v936 = vld [vmem:[#allocation6 + $0xa28] sm:$0xff]
    %v937 = vld [vmem:[#allocation6 + $0xa30] sm:$0xff]
    %v938 = vld [vmem:[#allocation6 + $0xa38] sm:$0xff]
    %v939 = vld [vmem:[#allocation6 + $0xa40] sm:$0xff]
    %v940 = vld [vmem:[#allocation6 + $0xa48] sm:$0xff]
    %v941 = vld [vmem:[#allocation6 + $0xa50] sm:$0xff]
    %v942 = vld [vmem:[#allocation6 + $0xa58] sm:$0xff]
    %v943 = vld [vmem:[#allocation6 + $0xa60] sm:$0xff]
    %v944 = vld [vmem:[#allocation6 + $0xa68] sm:$0xff]
    %v945 = vld [vmem:[#allocation6 + $0xa70] sm:$0xff]
    %v946 = vld [vmem:[#allocation6 + $0xa78] sm:$0xff]
    %v947 = vld [vmem:[#allocation6 + $0xa80] sm:$0xff]
    %v948 = vld [vmem:[#allocation6 + $0xa88] sm:$0xff]
    %v949 = vld [vmem:[#allocation6 + $0xa90] sm:$0xff]
    %v950 = vld [vmem:[#allocation6 + $0xa98] sm:$0xff]
    %v951 = vld [vmem:[#allocation6 + $0xaa0] sm:$0xff]
    %v952 = vld [vmem:[#allocation6 + $0xaa8] sm:$0xff]
    %v953 = vld [vmem:[#allocation6 + $0xab0] sm:$0xff]
    %v954 = vld [vmem:[#allocation6 + $0xab8] sm:$0xff]
    %v955 = vld [vmem:[#allocation6 + $0xac0] sm:$0xff]
    %v956 = vld [vmem:[#allocation6 + $0xac8] sm:$0xff]
    %v957 = vld [vmem:[#allocation6 + $0xad0] sm:$0xff]
    %v958 = vld [vmem:[#allocation6 + $0xad8] sm:$0xff]
    %v959 = vld [vmem:[#allocation6 + $0xae0] sm:$0xff]
    %v960 = vld [vmem:[#allocation6 + $0xae8] sm:$0xff]
    %v961 = vld [vmem:[#allocation6 + $0xaf0] sm:$0xff]
    %v962 = vld [vmem:[#allocation6 + $0xaf8] sm:$0xff]
    %v963 = vld [vmem:[#allocation6 + $0xb00] sm:$0xff]
    %v964 = vld [vmem:[#allocation6 + $0xb08] sm:$0xff]
    %v965 = vld [vmem:[#allocation6 + $0xb10] sm:$0xff]
    %v966 = vld [vmem:[#allocation6 + $0xb18] sm:$0xff]
    %v967 = vld [vmem:[#allocation6 + $0xb20] sm:$0xff]
    %v968 = vld [vmem:[#allocation6 + $0xb28] sm:$0xff]
    %v969 = vld [vmem:[#allocation6 + $0xb30] sm:$0xff]
    %v970 = vld [vmem:[#allocation6 + $0xb38] sm:$0xff]
    %v971 = vld [vmem:[#allocation6 + $0xb40] sm:$0xff]
    %v972 = vld [vmem:[#allocation6 + $0xb48] sm:$0xff]
    %v973 = vld [vmem:[#allocation6 + $0xb50] sm:$0xff]
    %v974 = vld [vmem:[#allocation6 + $0xb58] sm:$0xff]
    %v975 = vld [vmem:[#allocation6 + $0xb60] sm:$0xff]
    %v976 = vld [vmem:[#allocation6 + $0xb68] sm:$0xff]
    %v977 = vld [vmem:[#allocation6 + $0xb70] sm:$0xff]
    %v978 = vld [vmem:[#allocation6 + $0xb78] sm:$0xff]
    %v979 = vld [vmem:[#allocation6 + $0xb80] sm:$0xff]
    %v980 = vld [vmem:[#allocation6 + $0xb88] sm:$0xff]
    %v981 = vld [vmem:[#allocation6 + $0xb90] sm:$0xff]
    %v982 = vld [vmem:[#allocation6 + $0xb98] sm:$0xff]
    %v983 = vld [vmem:[#allocation6 + $0xba0] sm:$0xff]
    %v984 = vld [vmem:[#allocation6 + $0xba8] sm:$0xff]
    %v985 = vld [vmem:[#allocation6 + $0xbb0] sm:$0xff]
    %v986 = vld [vmem:[#allocation6 + $0xbb8] sm:$0xff]
    %v987 = vld [vmem:[#allocation6 + $0xbc0] sm:$0xff]
    %v988 = vld [vmem:[#allocation6 + $0xbc8] sm:$0xff]
    %v989 = vld [vmem:[#allocation6 + $0xbd0] sm:$0xff]
    %v990 = vld [vmem:[#allocation6 + $0xbd8] sm:$0xff]
    %v991 = vld [vmem:[#allocation6 + $0xbe0] sm:$0xff]
    %v992 = vld [vmem:[#allocation6 + $0xbe8] sm:$0xff]
    %v993 = vld [vmem:[#allocation6 + $0xbf0] sm:$0xff]
    %v994 = vld [vmem:[#allocation6 + $0xbf8] sm:$0xff]
    %v995 = vld [vmem:[#allocation6 + $0xc00] sm:$0xff]
    %v996 = vld [vmem:[#allocation6 + $0xc08] sm:$0xff]
    %v997 = vld [vmem:[#allocation6 + $0xc10] sm:$0xff]
    %v998 = vld [vmem:[#allocation6 + $0xc18] sm:$0xff]
    %v999 = vld [vmem:[#allocation6 + $0xc20] sm:$0xff]
    %v1000 = vld [vmem:[#allocation6 + $0xc28] sm:$0xff]
    %v1001 = vld [vmem:[#allocation6 + $0xc30] sm:$0xff]
    %v1002 = vld [vmem:[#allocation6 + $0xc38] sm:$0xff]
    %v1003 = vld [vmem:[#allocation6 + $0xc40] sm:$0xff]
    %v1004 = vld [vmem:[#allocation6 + $0xc48] sm:$0xff]
    %v1005 = vld [vmem:[#allocation6 + $0xc50] sm:$0xff]
    %v1006 = vld [vmem:[#allocation6 + $0xc58] sm:$0xff]
    %v1007 = vld [vmem:[#allocation6 + $0xc60] sm:$0xff]
    %v1008 = vld [vmem:[#allocation6 + $0xc68] sm:$0xff]
    %v1009 = vld [vmem:[#allocation6 + $0xc70] sm:$0xff]
    %v1010 = vld [vmem:[#allocation6 + $0xc78] sm:$0xff]
    %v1011 = vld [vmem:[#allocation6 + $0xc80] sm:$0xff]
    %v1012 = vld [vmem:[#allocation6 + $0xc88] sm:$0xff]
    %v1013 = vld [vmem:[#allocation6 + $0xc90] sm:$0xff]
    %v1014 = vld [vmem:[#allocation6 + $0xc98] sm:$0xff]
    %v1015 = vld [vmem:[#allocation6 + $0xca0] sm:$0xff]
    %v1016 = vld [vmem:[#allocation6 + $0xca8] sm:$0xff]
    %v1017 = vld [vmem:[#allocation6 + $0xcb0] sm:$0xff]
    %v1018 = vld [vmem:[#allocation6 + $0xcb8] sm:$0xff]
    %v1019 = vld [vmem:[#allocation6 + $0xcc0] sm:$0xff]
    %v1020 = vld [vmem:[#allocation6 + $0xcc8] sm:$0xff]
    %v1021 = vld [vmem:[#allocation6 + $0xcd0] sm:$0xff]
    %v1022 = vld [vmem:[#allocation6 + $0xcd8] sm:$0xff]
    %v1023 = vld [vmem:[#allocation6 + $0xce0] sm:$0xff]
    %v1024 = vld [vmem:[#allocation6 + $0xce8] sm:$0xff]
    %v1025 = vld [vmem:[#allocation6 + $0xcf0] sm:$0xff]
    %v1026 = vld [vmem:[#allocation6 + $0xcf8] sm:$0xff]
    %v1027 = vld [vmem:[#allocation6 + $0xd00] sm:$0xff]
    %v1028 = vld [vmem:[#allocation6 + $0xd08] sm:$0xff]
    %v1029 = vld [vmem:[#allocation6 + $0xd10] sm:$0xff]
    %v1030 = vld [vmem:[#allocation6 + $0xd18] sm:$0xff]
    %v1031 = vld [vmem:[#allocation6 + $0xd20] sm:$0xff]
    %v1032 = vld [vmem:[#allocation6 + $0xd28] sm:$0xff]
    %v1033 = vld [vmem:[#allocation6 + $0xd30] sm:$0xff]
    %v1034 = vld [vmem:[#allocation6 + $0xd38] sm:$0xff]
    %v1035 = vld [vmem:[#allocation6 + $0xd40] sm:$0xff]
    %v1036 = vld [vmem:[#allocation6 + $0xd48] sm:$0xff]
    %v1037 = vld [vmem:[#allocation6 + $0xd50] sm:$0xff]
    %v1038 = vld [vmem:[#allocation6 + $0xd58] sm:$0xff]
    %v1039 = vld [vmem:[#allocation6 + $0xd60] sm:$0xff]
    %v1040 = vld [vmem:[#allocation6 + $0xd68] sm:$0xff]
    %v1041 = vld [vmem:[#allocation6 + $0xd70] sm:$0xff]
    %v1042 = vld [vmem:[#allocation6 + $0xd78] sm:$0xff]
    %v1043 = vld [vmem:[#allocation6 + $0xd80] sm:$0xff]
    %v1044 = vld [vmem:[#allocation6 + $0xd88] sm:$0xff]
    %v1045 = vld [vmem:[#allocation6 + $0xd90] sm:$0xff]
    %v1046 = vld [vmem:[#allocation6 + $0xd98] sm:$0xff]
    %v1047 = vld [vmem:[#allocation6 + $0xda0] sm:$0xff]
    %v1048 = vld [vmem:[#allocation6 + $0xda8] sm:$0xff]
    %v1049 = vld [vmem:[#allocation6 + $0xdb0] sm:$0xff]
    %v1050 = vld [vmem:[#allocation6 + $0xdb8] sm:$0xff]
    %v1051 = vld [vmem:[#allocation6 + $0xdc0] sm:$0xff]
    %v1052 = vld [vmem:[#allocation6 + $0xdc8] sm:$0xff]
    %v1053 = vld [vmem:[#allocation6 + $0xdd0] sm:$0xff]
    %v1054 = vld [vmem:[#allocation6 + $0xdd8] sm:$0xff]
    %v1055 = vld [vmem:[#allocation6 + $0xde0] sm:$0xff]
    %v1056 = vld [vmem:[#allocation6 + $0xde8] sm:$0xff]
    %v1057 = vld [vmem:[#allocation6 + $0xdf0] sm:$0xff]
    %v1058 = vld [vmem:[#allocation6 + $0xdf8] sm:$0xff]
    %v1059 = vld [vmem:[#allocation6 + $0xe00] sm:$0xff]
    %v1060 = vld [vmem:[#allocation6 + $0xe08] sm:$0xff]
    %v1061 = vld [vmem:[#allocation6 + $0xe10] sm:$0xff]
    %v1062 = vld [vmem:[#allocation6 + $0xe18] sm:$0xff]
    %v1063 = vld [vmem:[#allocation6 + $0xe20] sm:$0xff]
    %v1064 = vld [vmem:[#allocation6 + $0xe28] sm:$0xff]
    %v1065 = vld [vmem:[#allocation6 + $0xe30] sm:$0xff]
    %v1066 = vld [vmem:[#allocation6 + $0xe38] sm:$0xff]
    %v1067 = vld [vmem:[#allocation6 + $0xe40] sm:$0xff]
    %v1068 = vld [vmem:[#allocation6 + $0xe48] sm:$0xff]
    %v1069 = vld [vmem:[#allocation6 + $0xe50] sm:$0xff]
    %v1070 = vld [vmem:[#allocation6 + $0xe58] sm:$0xff]
    %v1071 = vld [vmem:[#allocation6 + $0xe60] sm:$0xff]
    %v1072 = vld [vmem:[#allocation6 + $0xe68] sm:$0xff]
    %v1073 = vld [vmem:[#allocation6 + $0xe70] sm:$0xff]
    %v1074 = vld [vmem:[#allocation6 + $0xe78] sm:$0xff]
    %v1075 = vld [vmem:[#allocation6 + $0xe80] sm:$0xff]
    %v1076 = vld [vmem:[#allocation6 + $0xe88] sm:$0xff]
    %v1077 = vld [vmem:[#allocation6 + $0xe90] sm:$0xff]
    %v1078 = vld [vmem:[#allocation6 + $0xe98] sm:$0xff]
    %v1079 = vld [vmem:[#allocation6 + $0xea0] sm:$0xff]
    %v1080 = vld [vmem:[#allocation6 + $0xea8] sm:$0xff]
    %v1081 = vld [vmem:[#allocation6 + $0xeb0] sm:$0xff]
    %v1082 = vld [vmem:[#allocation6 + $0xeb8] sm:$0xff]
    %v1083 = vld [vmem:[#allocation6 + $0xec0] sm:$0xff]
    %v1084 = vld [vmem:[#allocation6 + $0xec8] sm:$0xff]
    %v1085 = vld [vmem:[#allocation6 + $0xed0] sm:$0xff]
    %v1086 = vld [vmem:[#allocation6 + $0xed8] sm:$0xff]
    %v1087 = vld [vmem:[#allocation6 + $0xee0] sm:$0xff]
    %v1088 = vld [vmem:[#allocation6 + $0xee8] sm:$0xff]
    %v1089 = vld [vmem:[#allocation6 + $0xef0] sm:$0xff]
    %v1090 = vld [vmem:[#allocation6 + $0xef8] sm:$0xff]
    %v1091 = vld [vmem:[#allocation6 + $0xf00] sm:$0xff]
    %v1092 = vld [vmem:[#allocation6 + $0xf08] sm:$0xff]
    %v1093 = vld [vmem:[#allocation6 + $0xf10] sm:$0xff]
    %v1094 = vld [vmem:[#allocation6 + $0xf18] sm:$0xff]
    %v1095 = vld [vmem:[#allocation6 + $0xf20] sm:$0xff]
    %v1096 = vld [vmem:[#allocation6 + $0xf28] sm:$0xff]
    %v1097 = vld [vmem:[#allocation6 + $0xf30] sm:$0xff]
    %v1098 = vld [vmem:[#allocation6 + $0xf38] sm:$0xff]
    %v1099 = vld [vmem:[#allocation6 + $0xf40] sm:$0xff]
    %v1100 = vld [vmem:[#allocation6 + $0xf48] sm:$0xff]
    %v1101 = vld [vmem:[#allocation6 + $0xf50] sm:$0xff]
    %v1102 = vld [vmem:[#allocation6 + $0xf58] sm:$0xff]
    %v1103 = vld [vmem:[#allocation6 + $0xf60] sm:$0xff]
    %v1104 = vld [vmem:[#allocation6 + $0xf68] sm:$0xff]
    %v1105 = vld [vmem:[#allocation6 + $0xf70] sm:$0xff]
    %v1106 = vld [vmem:[#allocation6 + $0xf78] sm:$0xff]
    %v1107 = vld [vmem:[#allocation6 + $0xf80] sm:$0xff]
    %v1108 = vld [vmem:[#allocation6 + $0xf88] sm:$0xff]
    %v1109 = vld [vmem:[#allocation6 + $0xf90] sm:$0xff]
    %v1110 = vld [vmem:[#allocation6 + $0xf98] sm:$0xff]
    %v1111 = vld [vmem:[#allocation6 + $0xfa0] sm:$0xff]
    %v1112 = vld [vmem:[#allocation6 + $0xfa8] sm:$0xff]
    %v1113 = vld [vmem:[#allocation6 + $0xfb0] sm:$0xff]
    %v1114 = vld [vmem:[#allocation6 + $0xfb8] sm:$0xff]
    %v1115 = vld [vmem:[#allocation6 + $0xfc0] sm:$0xff]
    %v1116 = vld [vmem:[#allocation6 + $0xfc8] sm:$0xff]
    %v1117 = vld [vmem:[#allocation6 + $0xfd0] sm:$0xff]
    %v1118 = vld [vmem:[#allocation6 + $0xfd8] sm:$0xff]
    %v1119 = vld [vmem:[#allocation6 + $0xfe0] sm:$0xff]
    %v1120 = vld [vmem:[#allocation6 + $0xfe8] sm:$0xff]
    %v1121 = vld [vmem:[#allocation6 + $0xff0] sm:$0xff]
    %v1122 = vld [vmem:[#allocation6 + $0xff8] sm:$0xff]
    %v1123 = vld [vmem:[#allocation6 + $0x1000] sm:$0xff]
    %v1124 = vld [vmem:[#allocation6 + $0x1008] sm:$0xff]
    %v1125 = vld [vmem:[#allocation6 + $0x1010] sm:$0xff]
    %v1126 = vld [vmem:[#allocation6 + $0x1018] sm:$0xff]
    %v1127 = vld [vmem:[#allocation6 + $0x1020] sm:$0xff]
    %v1128 = vld [vmem:[#allocation6 + $0x1028] sm:$0xff]
    %v1129 = vld [vmem:[#allocation6 + $0x1030] sm:$0xff]
    %v1130 = vld [vmem:[#allocation6 + $0x1038] sm:$0xff]
    %v1131 = vld [vmem:[#allocation6 + $0x1040] sm:$0xff]
    %v1132 = vld [vmem:[#allocation6 + $0x1048] sm:$0xff]
    %v1133 = vld [vmem:[#allocation6 + $0x1050] sm:$0xff]
    %v1134 = vld [vmem:[#allocation6 + $0x1058] sm:$0xff]
    %v1135 = vld [vmem:[#allocation6 + $0x1060] sm:$0xff]
    %v1136 = vld [vmem:[#allocation6 + $0x1068] sm:$0xff]
    %v1137 = vld [vmem:[#allocation6 + $0x1070] sm:$0xff]
    %v1138 = vld [vmem:[#allocation6 + $0x1078] sm:$0xff]
    %v1139 = vld [vmem:[#allocation6 + $0x1080] sm:$0xff]
    %v1140 = vld [vmem:[#allocation6 + $0x1088] sm:$0xff]
    %v1141 = vld [vmem:[#allocation6 + $0x1090] sm:$0xff]
    %v1142 = vld [vmem:[#allocation6 + $0x1098] sm:$0xff]
    %v1143 = vld [vmem:[#allocation6 + $0x10a0] sm:$0xff]
    %v1144 = vld [vmem:[#allocation6 + $0x10a8] sm:$0xff]
    %v1145 = vld [vmem:[#allocation6 + $0x10b0] sm:$0xff]
    %v1146 = vld [vmem:[#allocation6 + $0x10b8] sm:$0xff]
    %v1147 = vld [vmem:[#allocation6 + $0x10c0] sm:$0xff]
    %v1148 = vld [vmem:[#allocation6 + $0x10c8] sm:$0xff]
    %v1149 = vld [vmem:[#allocation6 + $0x10d0] sm:$0xff]
    %v1150 = vld [vmem:[#allocation6 + $0x10d8] sm:$0xff]
    %v1151 = vld [vmem:[#allocation6 + $0x10e0] sm:$0xff]
    %v1152 = vld [vmem:[#allocation6 + $0x10e8] sm:$0xff]
    %v1153 = vld [vmem:[#allocation6 + $0x10f0] sm:$0xff]
    %v1154 = vld [vmem:[#allocation6 + $0x10f8] sm:$0xff]
    %v1155 = vld [vmem:[#allocation6 + $0x1100] sm:$0xff]
    %v1156 = vld [vmem:[#allocation6 + $0x1108] sm:$0xff]
    %v1157 = vld [vmem:[#allocation6 + $0x1110] sm:$0xff]
    %v1158 = vld [vmem:[#allocation6 + $0x1118] sm:$0xff]
    %v1159 = vld [vmem:[#allocation6 + $0x1120] sm:$0xff]
    %v1160 = vld [vmem:[#allocation6 + $0x1128] sm:$0xff]
    %v1161 = vld [vmem:[#allocation6 + $0x1130] sm:$0xff]
    %v1162 = vld [vmem:[#allocation6 + $0x1138] sm:$0xff]
    %v1163 = vld [vmem:[#allocation6 + $0x1140] sm:$0xff]
    %v1164 = vld [vmem:[#allocation6 + $0x1148] sm:$0xff]
    %v1165 = vld [vmem:[#allocation6 + $0x1150] sm:$0xff]
    %v1166 = vld [vmem:[#allocation6 + $0x1158] sm:$0xff]
    %v1167 = vld [vmem:[#allocation6 + $0x1160] sm:$0xff]
    %v1168 = vld [vmem:[#allocation6 + $0x1168] sm:$0xff]
    %v1169 = vld [vmem:[#allocation6 + $0x1170] sm:$0xff]
    %v1170 = vld [vmem:[#allocation6 + $0x1178] sm:$0xff]
    %v1171 = vld [vmem:[#allocation6 + $0x1180] sm:$0xff]
    %v1172 = vld [vmem:[#allocation6 + $0x1188] sm:$0xff]
    %v1173 = vld [vmem:[#allocation6 + $0x1190] sm:$0xff]
    %v1174 = vld [vmem:[#allocation6 + $0x1198] sm:$0xff]
    %v1175 = vld [vmem:[#allocation6 + $0x11a0] sm:$0xff]
    %v1176 = vld [vmem:[#allocation6 + $0x11a8] sm:$0xff]
    %v1177 = vld [vmem:[#allocation6 + $0x11b0] sm:$0xff]
    %v1178 = vld [vmem:[#allocation6 + $0x11b8] sm:$0xff]
    %v1179 = vld [vmem:[#allocation6 + $0x11c0] sm:$0xff]
    %v1180 = vld [vmem:[#allocation6 + $0x11c8] sm:$0xff]
    %v1181 = vld [vmem:[#allocation6 + $0x11d0] sm:$0xff]
    %v1182 = vld [vmem:[#allocation6 + $0x11d8] sm:$0xff]
    %v1183 = vld [vmem:[#allocation6 + $0x11e0] sm:$0xff]
    %v1184 = vld [vmem:[#allocation6 + $0x11e8] sm:$0xff]
    %v1185 = vld [vmem:[#allocation6 + $0x11f0] sm:$0xff]
    %v1186 = vld [vmem:[#allocation6 + $0x11f8] sm:$0xff]
    %v1763 = vunpack.c.l.b16 %v611
    %v1764 = vunpack.c.h.b16 %v611
    %v1765 = vunpack.c.l.b16 %v612
    %v1766 = vunpack.c.h.b16 %v612
    %v1767 = vunpack.c.l.b16 %v613
    %v1768 = vunpack.c.h.b16 %v613
    %v1769 = vunpack.c.l.b16 %v614
    %v1770 = vunpack.c.h.b16 %v614
    %v1771 = vunpack.c.l.b16 %v615
    %v1772 = vunpack.c.h.b16 %v615
    %v1773 = vunpack.c.l.b16 %v616
    %v1774 = vunpack.c.h.b16 %v616
    %v1775 = vunpack.c.l.b16 %v617
    %v1776 = vunpack.c.h.b16 %v617
    %v1777 = vunpack.c.l.b16 %v618
    %v1778 = vunpack.c.h.b16 %v618
    %v1779 = vunpack.c.l.b16 %v619
    %v1780 = vunpack.c.h.b16 %v619
    %v1781 = vunpack.c.l.b16 %v620
    %v1782 = vunpack.c.h.b16 %v620
    %v1783 = vunpack.c.l.b16 %v621
    %v1784 = vunpack.c.h.b16 %v621
    %v1785 = vunpack.c.l.b16 %v622
    %v1786 = vunpack.c.h.b16 %v622
    %v1787 = vunpack.c.l.b16 %v623
    %v1788 = vunpack.c.h.b16 %v623
    %v1789 = vunpack.c.l.b16 %v624
    %v1790 = vunpack.c.h.b16 %v624
    %v1791 = vunpack.c.l.b16 %v625
    %v1792 = vunpack.c.h.b16 %v625
    %v1793 = vunpack.c.l.b16 %v626
    %v1794 = vunpack.c.h.b16 %v626
    %v1795 = vunpack.c.l.b16 %v627
    %v1796 = vunpack.c.h.b16 %v627
    %v1797 = vunpack.c.l.b16 %v628
    %v1798 = vunpack.c.h.b16 %v628
    %v1799 = vunpack.c.l.b16 %v629
    %v1800 = vunpack.c.h.b16 %v629
    %v1801 = vunpack.c.l.b16 %v630
    %v1802 = vunpack.c.h.b16 %v630
    %v1803 = vunpack.c.l.b16 %v631
    %v1804 = vunpack.c.h.b16 %v631
    %v1805 = vunpack.c.l.b16 %v632
    %v1806 = vunpack.c.h.b16 %v632
    %v1807 = vunpack.c.l.b16 %v633
    %v1808 = vunpack.c.h.b16 %v633
    %v1809 = vunpack.c.l.b16 %v634
    %v1810 = vunpack.c.h.b16 %v634
    %v1811 = vunpack.c.l.b16 %v635
    %v1812 = vunpack.c.h.b16 %v635
    %v1813 = vunpack.c.l.b16 %v636
    %v1814 = vunpack.c.h.b16 %v636
    %v1815 = vunpack.c.l.b16 %v637
    %v1816 = vunpack.c.h.b16 %v637
    %v1817 = vunpack.c.l.b16 %v638
    %v1818 = vunpack.c.h.b16 %v638
    %v1819 = vunpack.c.l.b16 %v639
    %v1820 = vunpack.c.h.b16 %v639
    %v1821 = vunpack.c.l.b16 %v640
    %v1822 = vunpack.c.h.b16 %v640
    %v1823 = vunpack.c.l.b16 %v641
    %v1824 = vunpack.c.h.b16 %v641
    %v1825 = vunpack.c.l.b16 %v642
    %v1826 = vunpack.c.h.b16 %v642
    %v1827 = vunpack.c.l.b16 %v643
    %v1828 = vunpack.c.h.b16 %v643
    %v1829 = vunpack.c.l.b16 %v644
    %v1830 = vunpack.c.h.b16 %v644
    %v1831 = vunpack.c.l.b16 %v645
    %v1832 = vunpack.c.h.b16 %v645
    %v1833 = vunpack.c.l.b16 %v646
    %v1834 = vunpack.c.h.b16 %v646
    %v1835 = vunpack.c.l.b16 %v647
    %v1836 = vunpack.c.h.b16 %v647
    %v1837 = vunpack.c.l.b16 %v648
    %v1838 = vunpack.c.h.b16 %v648
    %v1839 = vunpack.c.l.b16 %v649
    %v1840 = vunpack.c.h.b16 %v649
    %v1841 = vunpack.c.l.b16 %v650
    %v1842 = vunpack.c.h.b16 %v650
    %v1843 = vunpack.c.l.b16 %v651
    %v1844 = vunpack.c.h.b16 %v651
    %v1845 = vunpack.c.l.b16 %v652
    %v1846 = vunpack.c.h.b16 %v652
    %v1847 = vunpack.c.l.b16 %v653
    %v1848 = vunpack.c.h.b16 %v653
    %v1849 = vunpack.c.l.b16 %v654
    %v1850 = vunpack.c.h.b16 %v654
    %v1851 = vunpack.c.l.b16 %v655
    %v1852 = vunpack.c.h.b16 %v655
    %v1853 = vunpack.c.l.b16 %v656
    %v1854 = vunpack.c.h.b16 %v656
    %v1855 = vunpack.c.l.b16 %v657
    %v1856 = vunpack.c.h.b16 %v657
    %v1857 = vunpack.c.l.b16 %v658
    %v1858 = vunpack.c.h.b16 %v658
    %v1859 = vunpack.c.l.b16 %v659
    %v1860 = vunpack.c.h.b16 %v659
    %v1861 = vunpack.c.l.b16 %v660
    %v1862 = vunpack.c.h.b16 %v660
    %v1863 = vunpack.c.l.b16 %v661
    %v1864 = vunpack.c.h.b16 %v661
    %v1865 = vunpack.c.l.b16 %v662
    %v1866 = vunpack.c.h.b16 %v662
    %v1867 = vunpack.c.l.b16 %v663
    %v1868 = vunpack.c.h.b16 %v663
    %v1869 = vunpack.c.l.b16 %v664
    %v1870 = vunpack.c.h.b16 %v664
    %v1871 = vunpack.c.l.b16 %v665
    %v1872 = vunpack.c.h.b16 %v665
    %v1873 = vunpack.c.l.b16 %v666
    %v1874 = vunpack.c.h.b16 %v666
    %v1875 = vunpack.c.l.b16 %v667
    %v1876 = vunpack.c.h.b16 %v667
    %v1877 = vunpack.c.l.b16 %v668
    %v1878 = vunpack.c.h.b16 %v668
    %v1879 = vunpack.c.l.b16 %v669
    %v1880 = vunpack.c.h.b16 %v669
    %v1881 = vunpack.c.l.b16 %v670
    %v1882 = vunpack.c.h.b16 %v670
    %v1883 = vunpack.c.l.b16 %v671
    %v1884 = vunpack.c.h.b16 %v671
    %v1885 = vunpack.c.l.b16 %v672
    %v1886 = vunpack.c.h.b16 %v672
    %v1887 = vunpack.c.l.b16 %v673
    %v1888 = vunpack.c.h.b16 %v673
    %v1889 = vunpack.c.l.b16 %v674
    %v1890 = vunpack.c.h.b16 %v674
    %v1891 = vunpack.c.l.b16 %v675
    %v1892 = vunpack.c.h.b16 %v675
    %v1893 = vunpack.c.l.b16 %v676
    %v1894 = vunpack.c.h.b16 %v676
    %v1895 = vunpack.c.l.b16 %v677
    %v1896 = vunpack.c.h.b16 %v677
    %v1897 = vunpack.c.l.b16 %v678
    %v1898 = vunpack.c.h.b16 %v678
    %v1899 = vunpack.c.l.b16 %v679
    %v1900 = vunpack.c.h.b16 %v679
    %v1901 = vunpack.c.l.b16 %v680
    %v1902 = vunpack.c.h.b16 %v680
    %v1903 = vunpack.c.l.b16 %v681
    %v1904 = vunpack.c.h.b16 %v681
    %v1905 = vunpack.c.l.b16 %v682
    %v1906 = vunpack.c.h.b16 %v682
    %v1907 = vunpack.c.l.b16 %v683
    %v1908 = vunpack.c.h.b16 %v683
    %v1909 = vunpack.c.l.b16 %v684
    %v1910 = vunpack.c.h.b16 %v684
    %v1911 = vunpack.c.l.b16 %v685
    %v1912 = vunpack.c.h.b16 %v685
    %v1913 = vunpack.c.l.b16 %v686
    %v1914 = vunpack.c.h.b16 %v686
    %v1915 = vunpack.c.l.b16 %v687
    %v1916 = vunpack.c.h.b16 %v687
    %v1917 = vunpack.c.l.b16 %v688
    %v1918 = vunpack.c.h.b16 %v688
    %v1919 = vunpack.c.l.b16 %v689
    %v1920 = vunpack.c.h.b16 %v689
    %v1921 = vunpack.c.l.b16 %v690
    %v1922 = vunpack.c.h.b16 %v690
    %v1923 = vunpack.c.l.b16 %v691
    %v1924 = vunpack.c.h.b16 %v691
    %v1925 = vunpack.c.l.b16 %v692
    %v1926 = vunpack.c.h.b16 %v692
    %v1927 = vunpack.c.l.b16 %v693
    %v1928 = vunpack.c.h.b16 %v693
    %v1929 = vunpack.c.l.b16 %v694
    %v1930 = vunpack.c.h.b16 %v694
    %v1931 = vunpack.c.l.b16 %v695
    %v1932 = vunpack.c.h.b16 %v695
    %v1933 = vunpack.c.l.b16 %v696
    %v1934 = vunpack.c.h.b16 %v696
    %v1935 = vunpack.c.l.b16 %v697
    %v1936 = vunpack.c.h.b16 %v697
    %v1937 = vunpack.c.l.b16 %v698
    %v1938 = vunpack.c.h.b16 %v698
    %v1939 = vunpack.c.l.b16 %v699
    %v1940 = vunpack.c.h.b16 %v699
    %v1941 = vunpack.c.l.b16 %v700
    %v1942 = vunpack.c.h.b16 %v700
    %v1943 = vunpack.c.l.b16 %v701
    %v1944 = vunpack.c.h.b16 %v701
    %v1945 = vunpack.c.l.b16 %v702
    %v1946 = vunpack.c.h.b16 %v702
    %v1947 = vunpack.c.l.b16 %v703
    %v1948 = vunpack.c.h.b16 %v703
    %v1949 = vunpack.c.l.b16 %v704
    %v1950 = vunpack.c.h.b16 %v704
    %v1951 = vunpack.c.l.b16 %v705
    %v1952 = vunpack.c.h.b16 %v705
    %v1953 = vunpack.c.l.b16 %v706
    %v1954 = vunpack.c.h.b16 %v706
    %v1955 = vunpack.c.l.b16 %v707
    %v1956 = vunpack.c.h.b16 %v707
    %v1957 = vunpack.c.l.b16 %v708
    %v1958 = vunpack.c.h.b16 %v708
    %v1959 = vunpack.c.l.b16 %v709
    %v1960 = vunpack.c.h.b16 %v709
    %v1961 = vunpack.c.l.b16 %v710
    %v1962 = vunpack.c.h.b16 %v710
    %v1963 = vunpack.c.l.b16 %v711
    %v1964 = vunpack.c.h.b16 %v711
    %v1965 = vunpack.c.l.b16 %v712
    %v1966 = vunpack.c.h.b16 %v712
    %v1967 = vunpack.c.l.b16 %v713
    %v1968 = vunpack.c.h.b16 %v713
    %v1969 = vunpack.c.l.b16 %v714
    %v1970 = vunpack.c.h.b16 %v714
    %v1971 = vunpack.c.l.b16 %v715
    %v1972 = vunpack.c.h.b16 %v715
    %v1973 = vunpack.c.l.b16 %v716
    %v1974 = vunpack.c.h.b16 %v716
    %v1975 = vunpack.c.l.b16 %v717
    %v1976 = vunpack.c.h.b16 %v717
    %v1977 = vunpack.c.l.b16 %v718
    %v1978 = vunpack.c.h.b16 %v718
    %v1979 = vunpack.c.l.b16 %v719
    %v1980 = vunpack.c.h.b16 %v719
    %v1981 = vunpack.c.l.b16 %v720
    %v1982 = vunpack.c.h.b16 %v720
    %v1983 = vunpack.c.l.b16 %v721
    %v1984 = vunpack.c.h.b16 %v721
    %v1985 = vunpack.c.l.b16 %v722
    %v1986 = vunpack.c.h.b16 %v722
    %v1987 = vunpack.c.l.b16 %v723
    %v1988 = vunpack.c.h.b16 %v723
    %v1989 = vunpack.c.l.b16 %v724
    %v1990 = vunpack.c.h.b16 %v724
    %v1991 = vunpack.c.l.b16 %v725
    %v1992 = vunpack.c.h.b16 %v725
    %v1993 = vunpack.c.l.b16 %v726
    %v1994 = vunpack.c.h.b16 %v726
    %v1995 = vunpack.c.l.b16 %v727
    %v1996 = vunpack.c.h.b16 %v727
    %v1997 = vunpack.c.l.b16 %v728
    %v1998 = vunpack.c.h.b16 %v728
    %v1999 = vunpack.c.l.b16 %v729
    %v2000 = vunpack.c.h.b16 %v729
    %v2001 = vunpack.c.l.b16 %v730
    %v2002 = vunpack.c.h.b16 %v730
    %v2003 = vunpack.c.l.b16 %v731
    %v2004 = vunpack.c.h.b16 %v731
    %v2005 = vunpack.c.l.b16 %v732
    %v2006 = vunpack.c.h.b16 %v732
    %v2007 = vunpack.c.l.b16 %v733
    %v2008 = vunpack.c.h.b16 %v733
    %v2009 = vunpack.c.l.b16 %v734
    %v2010 = vunpack.c.h.b16 %v734
    %v2011 = vunpack.c.l.b16 %v735
    %v2012 = vunpack.c.h.b16 %v735
    %v2013 = vunpack.c.l.b16 %v736
    %v2014 = vunpack.c.h.b16 %v736
    %v2015 = vunpack.c.l.b16 %v737
    %v2016 = vunpack.c.h.b16 %v737
    %v2017 = vunpack.c.l.b16 %v738
    %v2018 = vunpack.c.h.b16 %v738
    %v2019 = vunpack.c.l.b16 %v739
    %v2020 = vunpack.c.h.b16 %v739
    %v2021 = vunpack.c.l.b16 %v740
    %v2022 = vunpack.c.h.b16 %v740
    %v2023 = vunpack.c.l.b16 %v741
    %v2024 = vunpack.c.h.b16 %v741
    %v2025 = vunpack.c.l.b16 %v742
    %v2026 = vunpack.c.h.b16 %v742
    %v2027 = vunpack.c.l.b16 %v743
    %v2028 = vunpack.c.h.b16 %v743
    %v2029 = vunpack.c.l.b16 %v744
    %v2030 = vunpack.c.h.b16 %v744
    %v2031 = vunpack.c.l.b16 %v745
    %v2032 = vunpack.c.h.b16 %v745
    %v2033 = vunpack.c.l.b16 %v746
    %v2034 = vunpack.c.h.b16 %v746
    %v2035 = vunpack.c.l.b16 %v747
    %v2036 = vunpack.c.h.b16 %v747
    %v2037 = vunpack.c.l.b16 %v748
    %v2038 = vunpack.c.h.b16 %v748
    %v2039 = vunpack.c.l.b16 %v749
    %v2040 = vunpack.c.h.b16 %v749
    %v2041 = vunpack.c.l.b16 %v750
    %v2042 = vunpack.c.h.b16 %v750
    %v2043 = vunpack.c.l.b16 %v751
    %v2044 = vunpack.c.h.b16 %v751
    %v2045 = vunpack.c.l.b16 %v752
    %v2046 = vunpack.c.h.b16 %v752
    %v2047 = vunpack.c.l.b16 %v753
    %v2048 = vunpack.c.h.b16 %v753
    %v2049 = vunpack.c.l.b16 %v754
    %v2050 = vunpack.c.h.b16 %v754
    %v2051 = vunpack.c.l.b16 %v755
    %v2052 = vunpack.c.h.b16 %v755
    %v2053 = vunpack.c.l.b16 %v756
    %v2054 = vunpack.c.h.b16 %v756
    %v2055 = vunpack.c.l.b16 %v757
    %v2056 = vunpack.c.h.b16 %v757
    %v2057 = vunpack.c.l.b16 %v758
    %v2058 = vunpack.c.h.b16 %v758
    %v2059 = vunpack.c.l.b16 %v759
    %v2060 = vunpack.c.h.b16 %v759
    %v2061 = vunpack.c.l.b16 %v760
    %v2062 = vunpack.c.h.b16 %v760
    %v2063 = vunpack.c.l.b16 %v761
    %v2064 = vunpack.c.h.b16 %v761
    %v2065 = vunpack.c.l.b16 %v762
    %v2066 = vunpack.c.h.b16 %v762
    %v2067 = vunpack.c.l.b16 %v763
    %v2068 = vunpack.c.h.b16 %v763
    %v2069 = vunpack.c.l.b16 %v764
    %v2070 = vunpack.c.h.b16 %v764
    %v2071 = vunpack.c.l.b16 %v765
    %v2072 = vunpack.c.h.b16 %v765
    %v2073 = vunpack.c.l.b16 %v766
    %v2074 = vunpack.c.h.b16 %v766
    %v2075 = vunpack.c.l.b16 %v767
    %v2076 = vunpack.c.h.b16 %v767
    %v2077 = vunpack.c.l.b16 %v768
    %v2078 = vunpack.c.h.b16 %v768
    %v2079 = vunpack.c.l.b16 %v769
    %v2080 = vunpack.c.h.b16 %v769
    %v2081 = vunpack.c.l.b16 %v770
    %v2082 = vunpack.c.h.b16 %v770
    %v2083 = vunpack.c.l.b16 %v771
    %v2084 = vunpack.c.h.b16 %v771
    %v2085 = vunpack.c.l.b16 %v772
    %v2086 = vunpack.c.h.b16 %v772
    %v2087 = vunpack.c.l.b16 %v773
    %v2088 = vunpack.c.h.b16 %v773
    %v2089 = vunpack.c.l.b16 %v774
    %v2090 = vunpack.c.h.b16 %v774
    %v2091 = vunpack.c.l.b16 %v775
    %v2092 = vunpack.c.h.b16 %v775
    %v2093 = vunpack.c.l.b16 %v776
    %v2094 = vunpack.c.h.b16 %v776
    %v2095 = vunpack.c.l.b16 %v777
    %v2096 = vunpack.c.h.b16 %v777
    %v2097 = vunpack.c.l.b16 %v778
    %v2098 = vunpack.c.h.b16 %v778
    %v2099 = vunpack.c.l.b16 %v779
    %v2100 = vunpack.c.h.b16 %v779
    %v2101 = vunpack.c.l.b16 %v780
    %v2102 = vunpack.c.h.b16 %v780
    %v2103 = vunpack.c.l.b16 %v781
    %v2104 = vunpack.c.h.b16 %v781
    %v2105 = vunpack.c.l.b16 %v782
    %v2106 = vunpack.c.h.b16 %v782
    %v2107 = vunpack.c.l.b16 %v783
    %v2108 = vunpack.c.h.b16 %v783
    %v2109 = vunpack.c.l.b16 %v784
    %v2110 = vunpack.c.h.b16 %v784
    %v2111 = vunpack.c.l.b16 %v785
    %v2112 = vunpack.c.h.b16 %v785
    %v2113 = vunpack.c.l.b16 %v786
    %v2114 = vunpack.c.h.b16 %v786
    %v2115 = vunpack.c.l.b16 %v787
    %v2116 = vunpack.c.h.b16 %v787
    %v2117 = vunpack.c.l.b16 %v788
    %v2118 = vunpack.c.h.b16 %v788
    %v2119 = vunpack.c.l.b16 %v789
    %v2120 = vunpack.c.h.b16 %v789
    %v2121 = vunpack.c.l.b16 %v790
    %v2122 = vunpack.c.h.b16 %v790
    %v2123 = vunpack.c.l.b16 %v791
    %v2124 = vunpack.c.h.b16 %v791
    %v2125 = vunpack.c.l.b16 %v792
    %v2126 = vunpack.c.h.b16 %v792
    %v2127 = vunpack.c.l.b16 %v793
    %v2128 = vunpack.c.h.b16 %v793
    %v2129 = vunpack.c.l.b16 %v794
    %v2130 = vunpack.c.h.b16 %v794
    %v2131 = vunpack.c.l.b16 %v795
    %v2132 = vunpack.c.h.b16 %v795
    %v2133 = vunpack.c.l.b16 %v796
    %v2134 = vunpack.c.h.b16 %v796
    %v2135 = vunpack.c.l.b16 %v797
    %v2136 = vunpack.c.h.b16 %v797
    %v2137 = vunpack.c.l.b16 %v798
    %v2138 = vunpack.c.h.b16 %v798
    %v2139 = vunpack.c.l.b16 %v799
    %v2140 = vunpack.c.h.b16 %v799
    %v2141 = vunpack.c.l.b16 %v800
    %v2142 = vunpack.c.h.b16 %v800
    %v2143 = vunpack.c.l.b16 %v801
    %v2144 = vunpack.c.h.b16 %v801
    %v2145 = vunpack.c.l.b16 %v802
    %v2146 = vunpack.c.h.b16 %v802
    %v2147 = vunpack.c.l.b16 %v803
    %v2148 = vunpack.c.h.b16 %v803
    %v2149 = vunpack.c.l.b16 %v804
    %v2150 = vunpack.c.h.b16 %v804
    %v2151 = vunpack.c.l.b16 %v805
    %v2152 = vunpack.c.h.b16 %v805
    %v2153 = vunpack.c.l.b16 %v806
    %v2154 = vunpack.c.h.b16 %v806
    %v2155 = vunpack.c.l.b16 %v807
    %v2156 = vunpack.c.h.b16 %v807
    %v2157 = vunpack.c.l.b16 %v808
    %v2158 = vunpack.c.h.b16 %v808
    %v2159 = vunpack.c.l.b16 %v809
    %v2160 = vunpack.c.h.b16 %v809
    %v2161 = vunpack.c.l.b16 %v810
    %v2162 = vunpack.c.h.b16 %v810
    %v2163 = vunpack.c.l.b16 %v811
    %v2164 = vunpack.c.h.b16 %v811
    %v2165 = vunpack.c.l.b16 %v812
    %v2166 = vunpack.c.h.b16 %v812
    %v2167 = vunpack.c.l.b16 %v813
    %v2168 = vunpack.c.h.b16 %v813
    %v2169 = vunpack.c.l.b16 %v814
    %v2170 = vunpack.c.h.b16 %v814
    %v2171 = vunpack.c.l.b16 %v815
    %v2172 = vunpack.c.h.b16 %v815
    %v2173 = vunpack.c.l.b16 %v816
    %v2174 = vunpack.c.h.b16 %v816
    %v2175 = vunpack.c.l.b16 %v817
    %v2176 = vunpack.c.h.b16 %v817
    %v2177 = vunpack.c.l.b16 %v818
    %v2178 = vunpack.c.h.b16 %v818
    %v2179 = vunpack.c.l.b16 %v819
    %v2180 = vunpack.c.h.b16 %v819
    %v2181 = vunpack.c.l.b16 %v820
    %v2182 = vunpack.c.h.b16 %v820
    %v2183 = vunpack.c.l.b16 %v821
    %v2184 = vunpack.c.h.b16 %v821
    %v2185 = vunpack.c.l.b16 %v822
    %v2186 = vunpack.c.h.b16 %v822
    %v2187 = vunpack.c.l.b16 %v823
    %v2188 = vunpack.c.h.b16 %v823
    %v2189 = vunpack.c.l.b16 %v824
    %v2190 = vunpack.c.h.b16 %v824
    %v2191 = vunpack.c.l.b16 %v825
    %v2192 = vunpack.c.h.b16 %v825
    %v2193 = vunpack.c.l.b16 %v826
    %v2194 = vunpack.c.h.b16 %v826
    %v2195 = vunpack.c.l.b16 %v827
    %v2196 = vunpack.c.h.b16 %v827
    %v2197 = vunpack.c.l.b16 %v828
    %v2198 = vunpack.c.h.b16 %v828
    %v2199 = vunpack.c.l.b16 %v829
    %v2200 = vunpack.c.h.b16 %v829
    %v2201 = vunpack.c.l.b16 %v830
    %v2202 = vunpack.c.h.b16 %v830
    %v2203 = vunpack.c.l.b16 %v831
    %v2204 = vunpack.c.h.b16 %v831
    %v2205 = vunpack.c.l.b16 %v832
    %v2206 = vunpack.c.h.b16 %v832
    %v2207 = vunpack.c.l.b16 %v833
    %v2208 = vunpack.c.h.b16 %v833
    %v2209 = vunpack.c.l.b16 %v834
    %v2210 = vunpack.c.h.b16 %v834
    %v2211 = vunpack.c.l.b16 %v835
    %v2212 = vunpack.c.h.b16 %v835
    %v2213 = vunpack.c.l.b16 %v836
    %v2214 = vunpack.c.h.b16 %v836
    %v2215 = vunpack.c.l.b16 %v837
    %v2216 = vunpack.c.h.b16 %v837
    %v2217 = vunpack.c.l.b16 %v838
    %v2218 = vunpack.c.h.b16 %v838
    %v2219 = vunpack.c.l.b16 %v839
    %v2220 = vunpack.c.h.b16 %v839
    %v2221 = vunpack.c.l.b16 %v840
    %v2222 = vunpack.c.h.b16 %v840
    %v2223 = vunpack.c.l.b16 %v841
    %v2224 = vunpack.c.h.b16 %v841
    %v2225 = vunpack.c.l.b16 %v842
    %v2226 = vunpack.c.h.b16 %v842
    %v2227 = vunpack.c.l.b16 %v843
    %v2228 = vunpack.c.h.b16 %v843
    %v2229 = vunpack.c.l.b16 %v844
    %v2230 = vunpack.c.h.b16 %v844
    %v2231 = vunpack.c.l.b16 %v845
    %v2232 = vunpack.c.h.b16 %v845
    %v2233 = vunpack.c.l.b16 %v846
    %v2234 = vunpack.c.h.b16 %v846
    %v2235 = vunpack.c.l.b16 %v847
    %v2236 = vunpack.c.h.b16 %v847
    %v2237 = vunpack.c.l.b16 %v848
    %v2238 = vunpack.c.h.b16 %v848
    %v2239 = vunpack.c.l.b16 %v849
    %v2240 = vunpack.c.h.b16 %v849
    %v2241 = vunpack.c.l.b16 %v850
    %v2242 = vunpack.c.h.b16 %v850
    %v2243 = vunpack.c.l.b16 %v851
    %v2244 = vunpack.c.h.b16 %v851
    %v2245 = vunpack.c.l.b16 %v852
    %v2246 = vunpack.c.h.b16 %v852
    %v2247 = vunpack.c.l.b16 %v853
    %v2248 = vunpack.c.h.b16 %v853
    %v2249 = vunpack.c.l.b16 %v854
    %v2250 = vunpack.c.h.b16 %v854
    %v2251 = vunpack.c.l.b16 %v855
    %v2252 = vunpack.c.h.b16 %v855
    %v2253 = vunpack.c.l.b16 %v856
    %v2254 = vunpack.c.h.b16 %v856
    %v2255 = vunpack.c.l.b16 %v857
    %v2256 = vunpack.c.h.b16 %v857
    %v2257 = vunpack.c.l.b16 %v858
    %v2258 = vunpack.c.h.b16 %v858
    %v2259 = vunpack.c.l.b16 %v859
    %v2260 = vunpack.c.h.b16 %v859
    %v2261 = vunpack.c.l.b16 %v860
    %v2262 = vunpack.c.h.b16 %v860
    %v2263 = vunpack.c.l.b16 %v861
    %v2264 = vunpack.c.h.b16 %v861
    %v2265 = vunpack.c.l.b16 %v862
    %v2266 = vunpack.c.h.b16 %v862
    %v2267 = vunpack.c.l.b16 %v863
    %v2268 = vunpack.c.h.b16 %v863
    %v2269 = vunpack.c.l.b16 %v864
    %v2270 = vunpack.c.h.b16 %v864
    %v2271 = vunpack.c.l.b16 %v865
    %v2272 = vunpack.c.h.b16 %v865
    %v2273 = vunpack.c.l.b16 %v866
    %v2274 = vunpack.c.h.b16 %v866
    %v2275 = vunpack.c.l.b16 %v867
    %v2276 = vunpack.c.h.b16 %v867
    %v2277 = vunpack.c.l.b16 %v868
    %v2278 = vunpack.c.h.b16 %v868
    %v2279 = vunpack.c.l.b16 %v869
    %v2280 = vunpack.c.h.b16 %v869
    %v2281 = vunpack.c.l.b16 %v870
    %v2282 = vunpack.c.h.b16 %v870
    %v2283 = vunpack.c.l.b16 %v871
    %v2284 = vunpack.c.h.b16 %v871
    %v2285 = vunpack.c.l.b16 %v872
    %v2286 = vunpack.c.h.b16 %v872
    %v2287 = vunpack.c.l.b16 %v873
    %v2288 = vunpack.c.h.b16 %v873
    %v2289 = vunpack.c.l.b16 %v874
    %v2290 = vunpack.c.h.b16 %v874
    %v2291 = vunpack.c.l.b16 %v875
    %v2292 = vunpack.c.h.b16 %v875
    %v2293 = vunpack.c.l.b16 %v876
    %v2294 = vunpack.c.h.b16 %v876
    %v2295 = vunpack.c.l.b16 %v877
    %v2296 = vunpack.c.h.b16 %v877
    %v2297 = vunpack.c.l.b16 %v878
    %v2298 = vunpack.c.h.b16 %v878
    %v2299 = vunpack.c.l.b16 %v879
    %v2300 = vunpack.c.h.b16 %v879
    %v2301 = vunpack.c.l.b16 %v880
    %v2302 = vunpack.c.h.b16 %v880
    %v2303 = vunpack.c.l.b16 %v881
    %v2304 = vunpack.c.h.b16 %v881
    %v2305 = vunpack.c.l.b16 %v882
    %v2306 = vunpack.c.h.b16 %v882
    %v2307 = vunpack.c.l.b16 %v883
    %v2308 = vunpack.c.h.b16 %v883
    %v2309 = vunpack.c.l.b16 %v884
    %v2310 = vunpack.c.h.b16 %v884
    %v2311 = vunpack.c.l.b16 %v885
    %v2312 = vunpack.c.h.b16 %v885
    %v2313 = vunpack.c.l.b16 %v886
    %v2314 = vunpack.c.h.b16 %v886
    %v2315 = vunpack.c.l.b16 %v887
    %v2316 = vunpack.c.h.b16 %v887
    %v2317 = vunpack.c.l.b16 %v888
    %v2318 = vunpack.c.h.b16 %v888
    %v2319 = vunpack.c.l.b16 %v889
    %v2320 = vunpack.c.h.b16 %v889
    %v2321 = vunpack.c.l.b16 %v890
    %v2322 = vunpack.c.h.b16 %v890
    %v2323 = vunpack.c.l.b16 %v891
    %v2324 = vunpack.c.h.b16 %v891
    %v2325 = vunpack.c.l.b16 %v892
    %v2326 = vunpack.c.h.b16 %v892
    %v2327 = vunpack.c.l.b16 %v893
    %v2328 = vunpack.c.h.b16 %v893
    %v2329 = vunpack.c.l.b16 %v894
    %v2330 = vunpack.c.h.b16 %v894
    %v2331 = vunpack.c.l.b16 %v895
    %v2332 = vunpack.c.h.b16 %v895
    %v2333 = vunpack.c.l.b16 %v896
    %v2334 = vunpack.c.h.b16 %v896
    %v2335 = vunpack.c.l.b16 %v897
    %v2336 = vunpack.c.h.b16 %v897
    %v2337 = vunpack.c.l.b16 %v898
    %v2338 = vunpack.c.h.b16 %v898
    %v2339 = vunpack.c.l.b16 %v899
    %v2340 = vunpack.c.h.b16 %v899
    %v2341 = vunpack.c.l.b16 %v900
    %v2342 = vunpack.c.h.b16 %v900
    %v2343 = vunpack.c.l.b16 %v901
    %v2344 = vunpack.c.h.b16 %v901
    %v2345 = vunpack.c.l.b16 %v902
    %v2346 = vunpack.c.h.b16 %v902
    %v2347 = vunpack.c.l.b16 %v903
    %v2348 = vunpack.c.h.b16 %v903
    %v2349 = vunpack.c.l.b16 %v904
    %v2350 = vunpack.c.h.b16 %v904
    %v2351 = vunpack.c.l.b16 %v905
    %v2352 = vunpack.c.h.b16 %v905
    %v2353 = vunpack.c.l.b16 %v906
    %v2354 = vunpack.c.h.b16 %v906
    %v2355 = vunpack.c.l.b16 %v907
    %v2356 = vunpack.c.h.b16 %v907
    %v2357 = vunpack.c.l.b16 %v908
    %v2358 = vunpack.c.h.b16 %v908
    %v2359 = vunpack.c.l.b16 %v909
    %v2360 = vunpack.c.h.b16 %v909
    %v2361 = vunpack.c.l.b16 %v910
    %v2362 = vunpack.c.h.b16 %v910
    %v2363 = vunpack.c.l.b16 %v911
    %v2364 = vunpack.c.h.b16 %v911
    %v2365 = vunpack.c.l.b16 %v912
    %v2366 = vunpack.c.h.b16 %v912
    %v2367 = vunpack.c.l.b16 %v913
    %v2368 = vunpack.c.h.b16 %v913
    %v2369 = vunpack.c.l.b16 %v914
    %v2370 = vunpack.c.h.b16 %v914
    %v2371 = vunpack.c.l.b16 %v915
    %v2372 = vunpack.c.h.b16 %v915
    %v2373 = vunpack.c.l.b16 %v916
    %v2374 = vunpack.c.h.b16 %v916
    %v2375 = vunpack.c.l.b16 %v917
    %v2376 = vunpack.c.h.b16 %v917
    %v2377 = vunpack.c.l.b16 %v918
    %v2378 = vunpack.c.h.b16 %v918
    %v2379 = vunpack.c.l.b16 %v919
    %v2380 = vunpack.c.h.b16 %v919
    %v2381 = vunpack.c.l.b16 %v920
    %v2382 = vunpack.c.h.b16 %v920
    %v2383 = vunpack.c.l.b16 %v921
    %v2384 = vunpack.c.h.b16 %v921
    %v2385 = vunpack.c.l.b16 %v922
    %v2386 = vunpack.c.h.b16 %v922
    %v2387 = vunpack.c.l.b16 %v923
    %v2388 = vunpack.c.h.b16 %v923
    %v2389 = vunpack.c.l.b16 %v924
    %v2390 = vunpack.c.h.b16 %v924
    %v2391 = vunpack.c.l.b16 %v925
    %v2392 = vunpack.c.h.b16 %v925
    %v2393 = vunpack.c.l.b16 %v926
    %v2394 = vunpack.c.h.b16 %v926
    %v2395 = vunpack.c.l.b16 %v927
    %v2396 = vunpack.c.h.b16 %v927
    %v2397 = vunpack.c.l.b16 %v928
    %v2398 = vunpack.c.h.b16 %v928
    %v2399 = vunpack.c.l.b16 %v929
    %v2400 = vunpack.c.h.b16 %v929
    %v2401 = vunpack.c.l.b16 %v930
    %v2402 = vunpack.c.h.b16 %v930
    %v2403 = vunpack.c.l.b16 %v931
    %v2404 = vunpack.c.h.b16 %v931
    %v2405 = vunpack.c.l.b16 %v932
    %v2406 = vunpack.c.h.b16 %v932
    %v2407 = vunpack.c.l.b16 %v933
    %v2408 = vunpack.c.h.b16 %v933
    %v2409 = vunpack.c.l.b16 %v934
    %v2410 = vunpack.c.h.b16 %v934
    %v2411 = vunpack.c.l.b16 %v935
    %v2412 = vunpack.c.h.b16 %v935
    %v2413 = vunpack.c.l.b16 %v936
    %v2414 = vunpack.c.h.b16 %v936
    %v2415 = vunpack.c.l.b16 %v937
    %v2416 = vunpack.c.h.b16 %v937
    %v2417 = vunpack.c.l.b16 %v938
    %v2418 = vunpack.c.h.b16 %v938
    %v2419 = vunpack.c.l.b16 %v939
    %v2420 = vunpack.c.h.b16 %v939
    %v2421 = vunpack.c.l.b16 %v940
    %v2422 = vunpack.c.h.b16 %v940
    %v2423 = vunpack.c.l.b16 %v941
    %v2424 = vunpack.c.h.b16 %v941
    %v2425 = vunpack.c.l.b16 %v942
    %v2426 = vunpack.c.h.b16 %v942
    %v2427 = vunpack.c.l.b16 %v943
    %v2428 = vunpack.c.h.b16 %v943
    %v2429 = vunpack.c.l.b16 %v944
    %v2430 = vunpack.c.h.b16 %v944
    %v2431 = vunpack.c.l.b16 %v945
    %v2432 = vunpack.c.h.b16 %v945
    %v2433 = vunpack.c.l.b16 %v946
    %v2434 = vunpack.c.h.b16 %v946
    %v2435 = vunpack.c.l.b16 %v947
    %v2436 = vunpack.c.h.b16 %v947
    %v2437 = vunpack.c.l.b16 %v948
    %v2438 = vunpack.c.h.b16 %v948
    %v2439 = vunpack.c.l.b16 %v949
    %v2440 = vunpack.c.h.b16 %v949
    %v2441 = vunpack.c.l.b16 %v950
    %v2442 = vunpack.c.h.b16 %v950
    %v2443 = vunpack.c.l.b16 %v951
    %v2444 = vunpack.c.h.b16 %v951
    %v2445 = vunpack.c.l.b16 %v952
    %v2446 = vunpack.c.h.b16 %v952
    %v2447 = vunpack.c.l.b16 %v953
    %v2448 = vunpack.c.h.b16 %v953
    %v2449 = vunpack.c.l.b16 %v954
    %v2450 = vunpack.c.h.b16 %v954
    %v2451 = vunpack.c.l.b16 %v955
    %v2452 = vunpack.c.h.b16 %v955
    %v2453 = vunpack.c.l.b16 %v956
    %v2454 = vunpack.c.h.b16 %v956
    %v2455 = vunpack.c.l.b16 %v957
    %v2456 = vunpack.c.h.b16 %v957
    %v2457 = vunpack.c.l.b16 %v958
    %v2458 = vunpack.c.h.b16 %v958
    %v2459 = vunpack.c.l.b16 %v959
    %v2460 = vunpack.c.h.b16 %v959
    %v2461 = vunpack.c.l.b16 %v960
    %v2462 = vunpack.c.h.b16 %v960
    %v2463 = vunpack.c.l.b16 %v961
    %v2464 = vunpack.c.h.b16 %v961
    %v2465 = vunpack.c.l.b16 %v962
    %v2466 = vunpack.c.h.b16 %v962
    %v2467 = vunpack.c.l.b16 %v963
    %v2468 = vunpack.c.h.b16 %v963
    %v2469 = vunpack.c.l.b16 %v964
    %v2470 = vunpack.c.h.b16 %v964
    %v2471 = vunpack.c.l.b16 %v965
    %v2472 = vunpack.c.h.b16 %v965
    %v2473 = vunpack.c.l.b16 %v966
    %v2474 = vunpack.c.h.b16 %v966
    %v2475 = vunpack.c.l.b16 %v967
    %v2476 = vunpack.c.h.b16 %v967
    %v2477 = vunpack.c.l.b16 %v968
    %v2478 = vunpack.c.h.b16 %v968
    %v2479 = vunpack.c.l.b16 %v969
    %v2480 = vunpack.c.h.b16 %v969
    %v2481 = vunpack.c.l.b16 %v970
    %v2482 = vunpack.c.h.b16 %v970
    %v2483 = vunpack.c.l.b16 %v971
    %v2484 = vunpack.c.h.b16 %v971
    %v2485 = vunpack.c.l.b16 %v972
    %v2486 = vunpack.c.h.b16 %v972
    %v2487 = vunpack.c.l.b16 %v973
    %v2488 = vunpack.c.h.b16 %v973
    %v2489 = vunpack.c.l.b16 %v974
    %v2490 = vunpack.c.h.b16 %v974
    %v2491 = vunpack.c.l.b16 %v975
    %v2492 = vunpack.c.h.b16 %v975
    %v2493 = vunpack.c.l.b16 %v976
    %v2494 = vunpack.c.h.b16 %v976
    %v2495 = vunpack.c.l.b16 %v977
    %v2496 = vunpack.c.h.b16 %v977
    %v2497 = vunpack.c.l.b16 %v978
    %v2498 = vunpack.c.h.b16 %v978
    %v2499 = vunpack.c.l.b16 %v979
    %v2500 = vunpack.c.h.b16 %v979
    %v2501 = vunpack.c.l.b16 %v980
    %v2502 = vunpack.c.h.b16 %v980
    %v2503 = vunpack.c.l.b16 %v981
    %v2504 = vunpack.c.h.b16 %v981
    %v2505 = vunpack.c.l.b16 %v982
    %v2506 = vunpack.c.h.b16 %v982
    %v2507 = vunpack.c.l.b16 %v983
    %v2508 = vunpack.c.h.b16 %v983
    %v2509 = vunpack.c.l.b16 %v984
    %v2510 = vunpack.c.h.b16 %v984
    %v2511 = vunpack.c.l.b16 %v985
    %v2512 = vunpack.c.h.b16 %v985
    %v2513 = vunpack.c.l.b16 %v986
    %v2514 = vunpack.c.h.b16 %v986
    %v2515 = vunpack.c.l.b16 %v987
    %v2516 = vunpack.c.h.b16 %v987
    %v2517 = vunpack.c.l.b16 %v988
    %v2518 = vunpack.c.h.b16 %v988
    %v2519 = vunpack.c.l.b16 %v989
    %v2520 = vunpack.c.h.b16 %v989
    %v2521 = vunpack.c.l.b16 %v990
    %v2522 = vunpack.c.h.b16 %v990
    %v2523 = vunpack.c.l.b16 %v991
    %v2524 = vunpack.c.h.b16 %v991
    %v2525 = vunpack.c.l.b16 %v992
    %v2526 = vunpack.c.h.b16 %v992
    %v2527 = vunpack.c.l.b16 %v993
    %v2528 = vunpack.c.h.b16 %v993
    %v2529 = vunpack.c.l.b16 %v994
    %v2530 = vunpack.c.h.b16 %v994
    %v2531 = vunpack.c.l.b16 %v995
    %v2532 = vunpack.c.h.b16 %v995
    %v2533 = vunpack.c.l.b16 %v996
    %v2534 = vunpack.c.h.b16 %v996
    %v2535 = vunpack.c.l.b16 %v997
    %v2536 = vunpack.c.h.b16 %v997
    %v2537 = vunpack.c.l.b16 %v998
    %v2538 = vunpack.c.h.b16 %v998
    %v2539 = vunpack.c.l.b16 %v999
    %v2540 = vunpack.c.h.b16 %v999
    %v2541 = vunpack.c.l.b16 %v1000
    %v2542 = vunpack.c.h.b16 %v1000
    %v2543 = vunpack.c.l.b16 %v1001
    %v2544 = vunpack.c.h.b16 %v1001
    %v2545 = vunpack.c.l.b16 %v1002
    %v2546 = vunpack.c.h.b16 %v1002
    %v2547 = vunpack.c.l.b16 %v1003
    %v2548 = vunpack.c.h.b16 %v1003
    %v2549 = vunpack.c.l.b16 %v1004
    %v2550 = vunpack.c.h.b16 %v1004
    %v2551 = vunpack.c.l.b16 %v1005
    %v2552 = vunpack.c.h.b16 %v1005
    %v2553 = vunpack.c.l.b16 %v1006
    %v2554 = vunpack.c.h.b16 %v1006
    %v2555 = vunpack.c.l.b16 %v1007
    %v2556 = vunpack.c.h.b16 %v1007
    %v2557 = vunpack.c.l.b16 %v1008
    %v2558 = vunpack.c.h.b16 %v1008
    %v2559 = vunpack.c.l.b16 %v1009
    %v2560 = vunpack.c.h.b16 %v1009
    %v2561 = vunpack.c.l.b16 %v1010
    %v2562 = vunpack.c.h.b16 %v1010
    %v2563 = vunpack.c.l.b16 %v1011
    %v2564 = vunpack.c.h.b16 %v1011
    %v2565 = vunpack.c.l.b16 %v1012
    %v2566 = vunpack.c.h.b16 %v1012
    %v2567 = vunpack.c.l.b16 %v1013
    %v2568 = vunpack.c.h.b16 %v1013
    %v2569 = vunpack.c.l.b16 %v1014
    %v2570 = vunpack.c.h.b16 %v1014
    %v2571 = vunpack.c.l.b16 %v1015
    %v2572 = vunpack.c.h.b16 %v1015
    %v2573 = vunpack.c.l.b16 %v1016
    %v2574 = vunpack.c.h.b16 %v1016
    %v2575 = vunpack.c.l.b16 %v1017
    %v2576 = vunpack.c.h.b16 %v1017
    %v2577 = vunpack.c.l.b16 %v1018
    %v2578 = vunpack.c.h.b16 %v1018
    %v2579 = vunpack.c.l.b16 %v1019
    %v2580 = vunpack.c.h.b16 %v1019
    %v2581 = vunpack.c.l.b16 %v1020
    %v2582 = vunpack.c.h.b16 %v1020
    %v2583 = vunpack.c.l.b16 %v1021
    %v2584 = vunpack.c.h.b16 %v1021
    %v2585 = vunpack.c.l.b16 %v1022
    %v2586 = vunpack.c.h.b16 %v1022
    %v2587 = vunpack.c.l.b16 %v1023
    %v2588 = vunpack.c.h.b16 %v1023
    %v2589 = vunpack.c.l.b16 %v1024
    %v2590 = vunpack.c.h.b16 %v1024
    %v2591 = vunpack.c.l.b16 %v1025
    %v2592 = vunpack.c.h.b16 %v1025
    %v2593 = vunpack.c.l.b16 %v1026
    %v2594 = vunpack.c.h.b16 %v1026
    %v2595 = vunpack.c.l.b16 %v1027
    %v2596 = vunpack.c.h.b16 %v1027
    %v2597 = vunpack.c.l.b16 %v1028
    %v2598 = vunpack.c.h.b16 %v1028
    %v2599 = vunpack.c.l.b16 %v1029
    %v2600 = vunpack.c.h.b16 %v1029
    %v2601 = vunpack.c.l.b16 %v1030
    %v2602 = vunpack.c.h.b16 %v1030
    %v2603 = vunpack.c.l.b16 %v1031
    %v2604 = vunpack.c.h.b16 %v1031
    %v2605 = vunpack.c.l.b16 %v1032
    %v2606 = vunpack.c.h.b16 %v1032
    %v2607 = vunpack.c.l.b16 %v1033
    %v2608 = vunpack.c.h.b16 %v1033
    %v2609 = vunpack.c.l.b16 %v1034
    %v2610 = vunpack.c.h.b16 %v1034
    %v2611 = vunpack.c.l.b16 %v1035
    %v2612 = vunpack.c.h.b16 %v1035
    %v2613 = vunpack.c.l.b16 %v1036
    %v2614 = vunpack.c.h.b16 %v1036
    %v2615 = vunpack.c.l.b16 %v1037
    %v2616 = vunpack.c.h.b16 %v1037
    %v2617 = vunpack.c.l.b16 %v1038
    %v2618 = vunpack.c.h.b16 %v1038
    %v2619 = vunpack.c.l.b16 %v1039
    %v2620 = vunpack.c.h.b16 %v1039
    %v2621 = vunpack.c.l.b16 %v1040
    %v2622 = vunpack.c.h.b16 %v1040
    %v2623 = vunpack.c.l.b16 %v1041
    %v2624 = vunpack.c.h.b16 %v1041
    %v2625 = vunpack.c.l.b16 %v1042
    %v2626 = vunpack.c.h.b16 %v1042
    %v2627 = vunpack.c.l.b16 %v1043
    %v2628 = vunpack.c.h.b16 %v1043
    %v2629 = vunpack.c.l.b16 %v1044
    %v2630 = vunpack.c.h.b16 %v1044
    %v2631 = vunpack.c.l.b16 %v1045
    %v2632 = vunpack.c.h.b16 %v1045
    %v2633 = vunpack.c.l.b16 %v1046
    %v2634 = vunpack.c.h.b16 %v1046
    %v2635 = vunpack.c.l.b16 %v1047
    %v2636 = vunpack.c.h.b16 %v1047
    %v2637 = vunpack.c.l.b16 %v1048
    %v2638 = vunpack.c.h.b16 %v1048
    %v2639 = vunpack.c.l.b16 %v1049
    %v2640 = vunpack.c.h.b16 %v1049
    %v2641 = vunpack.c.l.b16 %v1050
    %v2642 = vunpack.c.h.b16 %v1050
    %v2643 = vunpack.c.l.b16 %v1051
    %v2644 = vunpack.c.h.b16 %v1051
    %v2645 = vunpack.c.l.b16 %v1052
    %v2646 = vunpack.c.h.b16 %v1052
    %v2647 = vunpack.c.l.b16 %v1053
    %v2648 = vunpack.c.h.b16 %v1053
    %v2649 = vunpack.c.l.b16 %v1054
    %v2650 = vunpack.c.h.b16 %v1054
    %v2651 = vunpack.c.l.b16 %v1055
    %v2652 = vunpack.c.h.b16 %v1055
    %v2653 = vunpack.c.l.b16 %v1056
    %v2654 = vunpack.c.h.b16 %v1056
    %v2655 = vunpack.c.l.b16 %v1057
    %v2656 = vunpack.c.h.b16 %v1057
    %v2657 = vunpack.c.l.b16 %v1058
    %v2658 = vunpack.c.h.b16 %v1058
    %v2659 = vunpack.c.l.b16 %v1059
    %v2660 = vunpack.c.h.b16 %v1059
    %v2661 = vunpack.c.l.b16 %v1060
    %v2662 = vunpack.c.h.b16 %v1060
    %v2663 = vunpack.c.l.b16 %v1061
    %v2664 = vunpack.c.h.b16 %v1061
    %v2665 = vunpack.c.l.b16 %v1062
    %v2666 = vunpack.c.h.b16 %v1062
    %v2667 = vunpack.c.l.b16 %v1063
    %v2668 = vunpack.c.h.b16 %v1063
    %v2669 = vunpack.c.l.b16 %v1064
    %v2670 = vunpack.c.h.b16 %v1064
    %v2671 = vunpack.c.l.b16 %v1065
    %v2672 = vunpack.c.h.b16 %v1065
    %v2673 = vunpack.c.l.b16 %v1066
    %v2674 = vunpack.c.h.b16 %v1066
    %v2675 = vunpack.c.l.b16 %v1067
    %v2676 = vunpack.c.h.b16 %v1067
    %v2677 = vunpack.c.l.b16 %v1068
    %v2678 = vunpack.c.h.b16 %v1068
    %v2679 = vunpack.c.l.b16 %v1069
    %v2680 = vunpack.c.h.b16 %v1069
    %v2681 = vunpack.c.l.b16 %v1070
    %v2682 = vunpack.c.h.b16 %v1070
    %v2683 = vunpack.c.l.b16 %v1071
    %v2684 = vunpack.c.h.b16 %v1071
    %v2685 = vunpack.c.l.b16 %v1072
    %v2686 = vunpack.c.h.b16 %v1072
    %v2687 = vunpack.c.l.b16 %v1073
    %v2688 = vunpack.c.h.b16 %v1073
    %v2689 = vunpack.c.l.b16 %v1074
    %v2690 = vunpack.c.h.b16 %v1074
    %v2691 = vunpack.c.l.b16 %v1075
    %v2692 = vunpack.c.h.b16 %v1075
    %v2693 = vunpack.c.l.b16 %v1076
    %v2694 = vunpack.c.h.b16 %v1076
    %v2695 = vunpack.c.l.b16 %v1077
    %v2696 = vunpack.c.h.b16 %v1077
    %v2697 = vunpack.c.l.b16 %v1078
    %v2698 = vunpack.c.h.b16 %v1078
    %v2699 = vunpack.c.l.b16 %v1079
    %v2700 = vunpack.c.h.b16 %v1079
    %v2701 = vunpack.c.l.b16 %v1080
    %v2702 = vunpack.c.h.b16 %v1080
    %v2703 = vunpack.c.l.b16 %v1081
    %v2704 = vunpack.c.h.b16 %v1081
    %v2705 = vunpack.c.l.b16 %v1082
    %v2706 = vunpack.c.h.b16 %v1082
    %v2707 = vunpack.c.l.b16 %v1083
    %v2708 = vunpack.c.h.b16 %v1083
    %v2709 = vunpack.c.l.b16 %v1084
    %v2710 = vunpack.c.h.b16 %v1084
    %v2711 = vunpack.c.l.b16 %v1085
    %v2712 = vunpack.c.h.b16 %v1085
    %v2713 = vunpack.c.l.b16 %v1086
    %v2714 = vunpack.c.h.b16 %v1086
    %v2715 = vunpack.c.l.b16 %v1087
    %v2716 = vunpack.c.h.b16 %v1087
    %v2717 = vunpack.c.l.b16 %v1088
    %v2718 = vunpack.c.h.b16 %v1088
    %v2719 = vunpack.c.l.b16 %v1089
    %v2720 = vunpack.c.h.b16 %v1089
    %v2721 = vunpack.c.l.b16 %v1090
    %v2722 = vunpack.c.h.b16 %v1090
    %v2723 = vunpack.c.l.b16 %v1091
    %v2724 = vunpack.c.h.b16 %v1091
    %v2725 = vunpack.c.l.b16 %v1092
    %v2726 = vunpack.c.h.b16 %v1092
    %v2727 = vunpack.c.l.b16 %v1093
    %v2728 = vunpack.c.h.b16 %v1093
    %v2729 = vunpack.c.l.b16 %v1094
    %v2730 = vunpack.c.h.b16 %v1094
    %v2731 = vunpack.c.l.b16 %v1095
    %v2732 = vunpack.c.h.b16 %v1095
    %v2733 = vunpack.c.l.b16 %v1096
    %v2734 = vunpack.c.h.b16 %v1096
    %v2735 = vunpack.c.l.b16 %v1097
    %v2736 = vunpack.c.h.b16 %v1097
    %v2737 = vunpack.c.l.b16 %v1098
    %v2738 = vunpack.c.h.b16 %v1098
    %v2739 = vunpack.c.l.b16 %v1099
    %v2740 = vunpack.c.h.b16 %v1099
    %v2741 = vunpack.c.l.b16 %v1100
    %v2742 = vunpack.c.h.b16 %v1100
    %v2743 = vunpack.c.l.b16 %v1101
    %v2744 = vunpack.c.h.b16 %v1101
    %v2745 = vunpack.c.l.b16 %v1102
    %v2746 = vunpack.c.h.b16 %v1102
    %v2747 = vunpack.c.l.b16 %v1103
    %v2748 = vunpack.c.h.b16 %v1103
    %v2749 = vunpack.c.l.b16 %v1104
    %v2750 = vunpack.c.h.b16 %v1104
    %v2751 = vunpack.c.l.b16 %v1105
    %v2752 = vunpack.c.h.b16 %v1105
    %v2753 = vunpack.c.l.b16 %v1106
    %v2754 = vunpack.c.h.b16 %v1106
    %v2755 = vunpack.c.l.b16 %v1107
    %v2756 = vunpack.c.h.b16 %v1107
    %v2757 = vunpack.c.l.b16 %v1108
    %v2758 = vunpack.c.h.b16 %v1108
    %v2759 = vunpack.c.l.b16 %v1109
    %v2760 = vunpack.c.h.b16 %v1109
    %v2761 = vunpack.c.l.b16 %v1110
    %v2762 = vunpack.c.h.b16 %v1110
    %v2763 = vunpack.c.l.b16 %v1111
    %v2764 = vunpack.c.h.b16 %v1111
    %v2765 = vunpack.c.l.b16 %v1112
    %v2766 = vunpack.c.h.b16 %v1112
    %v2767 = vunpack.c.l.b16 %v1113
    %v2768 = vunpack.c.h.b16 %v1113
    %v2769 = vunpack.c.l.b16 %v1114
    %v2770 = vunpack.c.h.b16 %v1114
    %v2771 = vunpack.c.l.b16 %v1115
    %v2772 = vunpack.c.h.b16 %v1115
    %v2773 = vunpack.c.l.b16 %v1116
    %v2774 = vunpack.c.h.b16 %v1116
    %v2775 = vunpack.c.l.b16 %v1117
    %v2776 = vunpack.c.h.b16 %v1117
    %v2777 = vunpack.c.l.b16 %v1118
    %v2778 = vunpack.c.h.b16 %v1118
    %v2779 = vunpack.c.l.b16 %v1119
    %v2780 = vunpack.c.h.b16 %v1119
    %v2781 = vunpack.c.l.b16 %v1120
    %v2782 = vunpack.c.h.b16 %v1120
    %v2783 = vunpack.c.l.b16 %v1121
    %v2784 = vunpack.c.h.b16 %v1121
    %v2785 = vunpack.c.l.b16 %v1122
    %v2786 = vunpack.c.h.b16 %v1122
    %v2787 = vunpack.c.l.b16 %v1123
    %v2788 = vunpack.c.h.b16 %v1123
    %v2789 = vunpack.c.l.b16 %v1124
    %v2790 = vunpack.c.h.b16 %v1124
    %v2791 = vunpack.c.l.b16 %v1125
    %v2792 = vunpack.c.h.b16 %v1125
    %v2793 = vunpack.c.l.b16 %v1126
    %v2794 = vunpack.c.h.b16 %v1126
    %v2795 = vunpack.c.l.b16 %v1127
    %v2796 = vunpack.c.h.b16 %v1127
    %v2797 = vunpack.c.l.b16 %v1128
    %v2798 = vunpack.c.h.b16 %v1128
    %v2799 = vunpack.c.l.b16 %v1129
    %v2800 = vunpack.c.h.b16 %v1129
    %v2801 = vunpack.c.l.b16 %v1130
    %v2802 = vunpack.c.h.b16 %v1130
    %v2803 = vunpack.c.l.b16 %v1131
    %v2804 = vunpack.c.h.b16 %v1131
    %v2805 = vunpack.c.l.b16 %v1132
    %v2806 = vunpack.c.h.b16 %v1132
    %v2807 = vunpack.c.l.b16 %v1133
    %v2808 = vunpack.c.h.b16 %v1133
    %v2809 = vunpack.c.l.b16 %v1134
    %v2810 = vunpack.c.h.b16 %v1134
    %v2811 = vunpack.c.l.b16 %v1135
    %v2812 = vunpack.c.h.b16 %v1135
    %v2813 = vunpack.c.l.b16 %v1136
    %v2814 = vunpack.c.h.b16 %v1136
    %v2815 = vunpack.c.l.b16 %v1137
    %v2816 = vunpack.c.h.b16 %v1137
    %v2817 = vunpack.c.l.b16 %v1138
    %v2818 = vunpack.c.h.b16 %v1138
    %v2819 = vunpack.c.l.b16 %v1139
    %v2820 = vunpack.c.h.b16 %v1139
    %v2821 = vunpack.c.l.b16 %v1140
    %v2822 = vunpack.c.h.b16 %v1140
    %v2823 = vunpack.c.l.b16 %v1141
    %v2824 = vunpack.c.h.b16 %v1141
    %v2825 = vunpack.c.l.b16 %v1142
    %v2826 = vunpack.c.h.b16 %v1142
    %v2827 = vunpack.c.l.b16 %v1143
    %v2828 = vunpack.c.h.b16 %v1143
    %v2829 = vunpack.c.l.b16 %v1144
    %v2830 = vunpack.c.h.b16 %v1144
    %v2831 = vunpack.c.l.b16 %v1145
    %v2832 = vunpack.c.h.b16 %v1145
    %v2833 = vunpack.c.l.b16 %v1146
    %v2834 = vunpack.c.h.b16 %v1146
    %v2835 = vunpack.c.l.b16 %v1147
    %v2836 = vunpack.c.h.b16 %v1147
    %v2837 = vunpack.c.l.b16 %v1148
    %v2838 = vunpack.c.h.b16 %v1148
    %v2839 = vunpack.c.l.b16 %v1149
    %v2840 = vunpack.c.h.b16 %v1149
    %v2841 = vunpack.c.l.b16 %v1150
    %v2842 = vunpack.c.h.b16 %v1150
    %v2843 = vunpack.c.l.b16 %v1151
    %v2844 = vunpack.c.h.b16 %v1151
    %v2845 = vunpack.c.l.b16 %v1152
    %v2846 = vunpack.c.h.b16 %v1152
    %v2847 = vunpack.c.l.b16 %v1153
    %v2848 = vunpack.c.h.b16 %v1153
    %v2849 = vunpack.c.l.b16 %v1154
    %v2850 = vunpack.c.h.b16 %v1154
    %v2851 = vunpack.c.l.b16 %v1155
    %v2852 = vunpack.c.h.b16 %v1155
    %v2853 = vunpack.c.l.b16 %v1156
    %v2854 = vunpack.c.h.b16 %v1156
    %v2855 = vunpack.c.l.b16 %v1157
    %v2856 = vunpack.c.h.b16 %v1157
    %v2857 = vunpack.c.l.b16 %v1158
    %v2858 = vunpack.c.h.b16 %v1158
    %v2859 = vunpack.c.l.b16 %v1159
    %v2860 = vunpack.c.h.b16 %v1159
    %v2861 = vunpack.c.l.b16 %v1160
    %v2862 = vunpack.c.h.b16 %v1160
    %v2863 = vunpack.c.l.b16 %v1161
    %v2864 = vunpack.c.h.b16 %v1161
    %v2865 = vunpack.c.l.b16 %v1162
    %v2866 = vunpack.c.h.b16 %v1162
    %v2867 = vunpack.c.l.b16 %v1163
    %v2868 = vunpack.c.h.b16 %v1163
    %v2869 = vunpack.c.l.b16 %v1164
    %v2870 = vunpack.c.h.b16 %v1164
    %v2871 = vunpack.c.l.b16 %v1165
    %v2872 = vunpack.c.h.b16 %v1165
    %v2873 = vunpack.c.l.b16 %v1166
    %v2874 = vunpack.c.h.b16 %v1166
    %v2875 = vunpack.c.l.b16 %v1167
    %v2876 = vunpack.c.h.b16 %v1167
    %v2877 = vunpack.c.l.b16 %v1168
    %v2878 = vunpack.c.h.b16 %v1168
    %v2879 = vunpack.c.l.b16 %v1169
    %v2880 = vunpack.c.h.b16 %v1169
    %v2881 = vunpack.c.l.b16 %v1170
    %v2882 = vunpack.c.h.b16 %v1170
    %v2883 = vunpack.c.l.b16 %v1171
    %v2884 = vunpack.c.h.b16 %v1171
    %v2885 = vunpack.c.l.b16 %v1172
    %v2886 = vunpack.c.h.b16 %v1172
    %v2887 = vunpack.c.l.b16 %v1173
    %v2888 = vunpack.c.h.b16 %v1173
    %v2889 = vunpack.c.l.b16 %v1174
    %v2890 = vunpack.c.h.b16 %v1174
    %v2891 = vunpack.c.l.b16 %v1175
    %v2892 = vunpack.c.h.b16 %v1175
    %v2893 = vunpack.c.l.b16 %v1176
    %v2894 = vunpack.c.h.b16 %v1176
    %v2895 = vunpack.c.l.b16 %v1177
    %v2896 = vunpack.c.h.b16 %v1177
    %v2897 = vunpack.c.l.b16 %v1178
    %v2898 = vunpack.c.h.b16 %v1178
    %v2899 = vunpack.c.l.b16 %v1179
    %v2900 = vunpack.c.h.b16 %v1179
    %v2901 = vunpack.c.l.b16 %v1180
    %v2902 = vunpack.c.h.b16 %v1180
    %v2903 = vunpack.c.l.b16 %v1181
    %v2904 = vunpack.c.h.b16 %v1181
    %v2905 = vunpack.c.l.b16 %v1182
    %v2906 = vunpack.c.h.b16 %v1182
    %v2907 = vunpack.c.l.b16 %v1183
    %v2908 = vunpack.c.h.b16 %v1183
    %v2909 = vunpack.c.l.b16 %v1184
    %v2910 = vunpack.c.h.b16 %v1184
    %v2911 = vunpack.c.l.b16 %v1185
    %v2912 = vunpack.c.h.b16 %v1185
    %v2913 = vunpack.c.l.b16 %v1186
    %v2914 = vunpack.c.h.b16 %v1186
    %v2915 = vpack.c.b16 %v1767, %v1763
    %v2916 = vpack.c.b16 %v1768, %v1764
    %v2917 = vpack.c.b16 %v1769, %v1765
    %v2918 = vpack.c.b16 %v1770, %v1766
    %v2919 = vpack.c.b16 %v1775, %v1771
    %v2920 = vpack.c.b16 %v1776, %v1772
    %v2921 = vpack.c.b16 %v1777, %v1773
    %v2922 = vpack.c.b16 %v1778, %v1774
    %v2923 = vpack.c.b16 %v1783, %v1779
    %v2924 = vpack.c.b16 %v1784, %v1780
    %v2925 = vpack.c.b16 %v1785, %v1781
    %v2926 = vpack.c.b16 %v1786, %v1782
    %v2927 = vpack.c.b16 %v1791, %v1787
    %v2928 = vpack.c.b16 %v1792, %v1788
    %v2929 = vpack.c.b16 %v1793, %v1789
    %v2930 = vpack.c.b16 %v1794, %v1790
    %v2931 = vpack.c.b16 %v1799, %v1795
    %v2932 = vpack.c.b16 %v1800, %v1796
    %v2933 = vpack.c.b16 %v1801, %v1797
    %v2934 = vpack.c.b16 %v1802, %v1798
    %v2935 = vpack.c.b16 %v1807, %v1803
    %v2936 = vpack.c.b16 %v1808, %v1804
    %v2937 = vpack.c.b16 %v1809, %v1805
    %v2938 = vpack.c.b16 %v1810, %v1806
    %v2939 = vpack.c.b16 %v1815, %v1811
    %v2940 = vpack.c.b16 %v1816, %v1812
    %v2941 = vpack.c.b16 %v1817, %v1813
    %v2942 = vpack.c.b16 %v1818, %v1814
    %v2943 = vpack.c.b16 %v1823, %v1819
    %v2944 = vpack.c.b16 %v1824, %v1820
    %v2945 = vpack.c.b16 %v1825, %v1821
    %v2946 = vpack.c.b16 %v1826, %v1822
    %v2947 = vpack.c.b16 %v1831, %v1827
    %v2948 = vpack.c.b16 %v1832, %v1828
    %v2949 = vpack.c.b16 %v1833, %v1829
    %v2950 = vpack.c.b16 %v1834, %v1830
    %v2951 = vpack.c.b16 %v1839, %v1835
    %v2952 = vpack.c.b16 %v1840, %v1836
    %v2953 = vpack.c.b16 %v1841, %v1837
    %v2954 = vpack.c.b16 %v1842, %v1838
    %v2955 = vpack.c.b16 %v1847, %v1843
    %v2956 = vpack.c.b16 %v1848, %v1844
    %v2957 = vpack.c.b16 %v1849, %v1845
    %v2958 = vpack.c.b16 %v1850, %v1846
    %v2959 = vpack.c.b16 %v1855, %v1851
    %v2960 = vpack.c.b16 %v1856, %v1852
    %v2961 = vpack.c.b16 %v1857, %v1853
    %v2962 = vpack.c.b16 %v1858, %v1854
    %v2963 = vpack.c.b16 %v1863, %v1859
    %v2964 = vpack.c.b16 %v1864, %v1860
    %v2965 = vpack.c.b16 %v1865, %v1861
    %v2966 = vpack.c.b16 %v1866, %v1862
    %v2967 = vpack.c.b16 %v1871, %v1867
    %v2968 = vpack.c.b16 %v1872, %v1868
    %v2969 = vpack.c.b16 %v1873, %v1869
    %v2970 = vpack.c.b16 %v1874, %v1870
    %v2971 = vpack.c.b16 %v1879, %v1875
    %v2972 = vpack.c.b16 %v1880, %v1876
    %v2973 = vpack.c.b16 %v1881, %v1877
    %v2974 = vpack.c.b16 %v1882, %v1878
    %v2975 = vpack.c.b16 %v1887, %v1883
    %v2976 = vpack.c.b16 %v1888, %v1884
    %v2977 = vpack.c.b16 %v1889, %v1885
    %v2978 = vpack.c.b16 %v1890, %v1886
    %v2979 = vpack.c.b16 %v1895, %v1891
    %v2980 = vpack.c.b16 %v1896, %v1892
    %v2981 = vpack.c.b16 %v1897, %v1893
    %v2982 = vpack.c.b16 %v1898, %v1894
    %v2983 = vpack.c.b16 %v1903, %v1899
    %v2984 = vpack.c.b16 %v1904, %v1900
    %v2985 = vpack.c.b16 %v1905, %v1901
    %v2986 = vpack.c.b16 %v1906, %v1902
    %v2987 = vpack.c.b16 %v1911, %v1907
    %v2988 = vpack.c.b16 %v1912, %v1908
    %v2989 = vpack.c.b16 %v1913, %v1909
    %v2990 = vpack.c.b16 %v1914, %v1910
    %v2991 = vpack.c.b16 %v1919, %v1915
    %v2992 = vpack.c.b16 %v1920, %v1916
    %v2993 = vpack.c.b16 %v1921, %v1917
    %v2994 = vpack.c.b16 %v1922, %v1918
    %v2995 = vpack.c.b16 %v1927, %v1923
    %v2996 = vpack.c.b16 %v1928, %v1924
    %v2997 = vpack.c.b16 %v1929, %v1925
    %v2998 = vpack.c.b16 %v1930, %v1926
    %v2999 = vpack.c.b16 %v1935, %v1931
    %v3000 = vpack.c.b16 %v1936, %v1932
    %v3001 = vpack.c.b16 %v1937, %v1933
    %v3002 = vpack.c.b16 %v1938, %v1934
    %v3003 = vpack.c.b16 %v1943, %v1939
    %v3004 = vpack.c.b16 %v1944, %v1940
    %v3005 = vpack.c.b16 %v1945, %v1941
    %v3006 = vpack.c.b16 %v1946, %v1942
    %v3007 = vpack.c.b16 %v1951, %v1947
    %v3008 = vpack.c.b16 %v1952, %v1948
    %v3009 = vpack.c.b16 %v1953, %v1949
    %v3010 = vpack.c.b16 %v1954, %v1950
    %v3011 = vpack.c.b16 %v1959, %v1955
    %v3012 = vpack.c.b16 %v1960, %v1956
    %v3013 = vpack.c.b16 %v1961, %v1957
    %v3014 = vpack.c.b16 %v1962, %v1958
    %v3015 = vpack.c.b16 %v1967, %v1963
    %v3016 = vpack.c.b16 %v1968, %v1964
    %v3017 = vpack.c.b16 %v1969, %v1965
    %v3018 = vpack.c.b16 %v1970, %v1966
    %v3019 = vpack.c.b16 %v1975, %v1971
    %v3020 = vpack.c.b16 %v1976, %v1972
    %v3021 = vpack.c.b16 %v1977, %v1973
    %v3022 = vpack.c.b16 %v1978, %v1974
    %v3023 = vpack.c.b16 %v1983, %v1979
    %v3024 = vpack.c.b16 %v1984, %v1980
    %v3025 = vpack.c.b16 %v1985, %v1981
    %v3026 = vpack.c.b16 %v1986, %v1982
    %v3027 = vpack.c.b16 %v1991, %v1987
    %v3028 = vpack.c.b16 %v1992, %v1988
    %v3029 = vpack.c.b16 %v1993, %v1989
    %v3030 = vpack.c.b16 %v1994, %v1990
    %v3031 = vpack.c.b16 %v1999, %v1995
    %v3032 = vpack.c.b16 %v2000, %v1996
    %v3033 = vpack.c.b16 %v2001, %v1997
    %v3034 = vpack.c.b16 %v2002, %v1998
    %v3035 = vpack.c.b16 %v2007, %v2003
    %v3036 = vpack.c.b16 %v2008, %v2004
    %v3037 = vpack.c.b16 %v2009, %v2005
    %v3038 = vpack.c.b16 %v2010, %v2006
    %v3039 = vpack.c.b16 %v2015, %v2011
    %v3040 = vpack.c.b16 %v2016, %v2012
    %v3041 = vpack.c.b16 %v2017, %v2013
    %v3042 = vpack.c.b16 %v2018, %v2014
    %v3043 = vpack.c.b16 %v2023, %v2019
    %v3044 = vpack.c.b16 %v2024, %v2020
    %v3045 = vpack.c.b16 %v2025, %v2021
    %v3046 = vpack.c.b16 %v2026, %v2022
    %v3047 = vpack.c.b16 %v2031, %v2027
    %v3048 = vpack.c.b16 %v2032, %v2028
    %v3049 = vpack.c.b16 %v2033, %v2029
    %v3050 = vpack.c.b16 %v2034, %v2030
    %v3051 = vpack.c.b16 %v2039, %v2035
    %v3052 = vpack.c.b16 %v2040, %v2036
    %v3053 = vpack.c.b16 %v2041, %v2037
    %v3054 = vpack.c.b16 %v2042, %v2038
    %v3055 = vpack.c.b16 %v2047, %v2043
    %v3056 = vpack.c.b16 %v2048, %v2044
    %v3057 = vpack.c.b16 %v2049, %v2045
    %v3058 = vpack.c.b16 %v2050, %v2046
    %v3059 = vpack.c.b16 %v2055, %v2051
    %v3060 = vpack.c.b16 %v2056, %v2052
    %v3061 = vpack.c.b16 %v2057, %v2053
    %v3062 = vpack.c.b16 %v2058, %v2054
    %v3063 = vpack.c.b16 %v2063, %v2059
    %v3064 = vpack.c.b16 %v2064, %v2060
    %v3065 = vpack.c.b16 %v2065, %v2061
    %v3066 = vpack.c.b16 %v2066, %v2062
    %v3067 = vpack.c.b16 %v2071, %v2067
    %v3068 = vpack.c.b16 %v2072, %v2068
    %v3069 = vpack.c.b16 %v2073, %v2069
    %v3070 = vpack.c.b16 %v2074, %v2070
    %v3071 = vpack.c.b16 %v2079, %v2075
    %v3072 = vpack.c.b16 %v2080, %v2076
    %v3073 = vpack.c.b16 %v2081, %v2077
    %v3074 = vpack.c.b16 %v2082, %v2078
    %v3075 = vpack.c.b16 %v2087, %v2083
    %v3076 = vpack.c.b16 %v2088, %v2084
    %v3077 = vpack.c.b16 %v2089, %v2085
    %v3078 = vpack.c.b16 %v2090, %v2086
    %v3079 = vpack.c.b16 %v2095, %v2091
    %v3080 = vpack.c.b16 %v2096, %v2092
    %v3081 = vpack.c.b16 %v2097, %v2093
    %v3082 = vpack.c.b16 %v2098, %v2094
    %v3083 = vpack.c.b16 %v2103, %v2099
    %v3084 = vpack.c.b16 %v2104, %v2100
    %v3085 = vpack.c.b16 %v2105, %v2101
    %v3086 = vpack.c.b16 %v2106, %v2102
    %v3087 = vpack.c.b16 %v2111, %v2107
    %v3088 = vpack.c.b16 %v2112, %v2108
    %v3089 = vpack.c.b16 %v2113, %v2109
    %v3090 = vpack.c.b16 %v2114, %v2110
    %v3091 = vpack.c.b16 %v2119, %v2115
    %v3092 = vpack.c.b16 %v2120, %v2116
    %v3093 = vpack.c.b16 %v2121, %v2117
    %v3094 = vpack.c.b16 %v2122, %v2118
    %v3095 = vpack.c.b16 %v2127, %v2123
    %v3096 = vpack.c.b16 %v2128, %v2124
    %v3097 = vpack.c.b16 %v2129, %v2125
    %v3098 = vpack.c.b16 %v2130, %v2126
    %v3099 = vpack.c.b16 %v2135, %v2131
    %v3100 = vpack.c.b16 %v2136, %v2132
    %v3101 = vpack.c.b16 %v2137, %v2133
    %v3102 = vpack.c.b16 %v2138, %v2134
    %v3103 = vpack.c.b16 %v2143, %v2139
    %v3104 = vpack.c.b16 %v2144, %v2140
    %v3105 = vpack.c.b16 %v2145, %v2141
    %v3106 = vpack.c.b16 %v2146, %v2142
    %v3107 = vpack.c.b16 %v2151, %v2147
    %v3108 = vpack.c.b16 %v2152, %v2148
    %v3109 = vpack.c.b16 %v2153, %v2149
    %v3110 = vpack.c.b16 %v2154, %v2150
    %v3111 = vpack.c.b16 %v2159, %v2155
    %v3112 = vpack.c.b16 %v2160, %v2156
    %v3113 = vpack.c.b16 %v2161, %v2157
    %v3114 = vpack.c.b16 %v2162, %v2158
    %v3115 = vpack.c.b16 %v2167, %v2163
    %v3116 = vpack.c.b16 %v2168, %v2164
    %v3117 = vpack.c.b16 %v2169, %v2165
    %v3118 = vpack.c.b16 %v2170, %v2166
    %v3119 = vpack.c.b16 %v2175, %v2171
    %v3120 = vpack.c.b16 %v2176, %v2172
    %v3121 = vpack.c.b16 %v2177, %v2173
    %v3122 = vpack.c.b16 %v2178, %v2174
    %v3123 = vpack.c.b16 %v2183, %v2179
    %v3124 = vpack.c.b16 %v2184, %v2180
    %v3125 = vpack.c.b16 %v2185, %v2181
    %v3126 = vpack.c.b16 %v2186, %v2182
    %v3127 = vpack.c.b16 %v2191, %v2187
    %v3128 = vpack.c.b16 %v2192, %v2188
    %v3129 = vpack.c.b16 %v2193, %v2189
    %v3130 = vpack.c.b16 %v2194, %v2190
    %v3131 = vpack.c.b16 %v2199, %v2195
    %v3132 = vpack.c.b16 %v2200, %v2196
    %v3133 = vpack.c.b16 %v2201, %v2197
    %v3134 = vpack.c.b16 %v2202, %v2198
    %v3135 = vpack.c.b16 %v2207, %v2203
    %v3136 = vpack.c.b16 %v2208, %v2204
    %v3137 = vpack.c.b16 %v2209, %v2205
    %v3138 = vpack.c.b16 %v2210, %v2206
    %v3139 = vpack.c.b16 %v2215, %v2211
    %v3140 = vpack.c.b16 %v2216, %v2212
    %v3141 = vpack.c.b16 %v2217, %v2213
    %v3142 = vpack.c.b16 %v2218, %v2214
    %v3143 = vpack.c.b16 %v2223, %v2219
    %v3144 = vpack.c.b16 %v2224, %v2220
    %v3145 = vpack.c.b16 %v2225, %v2221
    %v3146 = vpack.c.b16 %v2226, %v2222
    %v3147 = vpack.c.b16 %v2231, %v2227
    %v3148 = vpack.c.b16 %v2232, %v2228
    %v3149 = vpack.c.b16 %v2233, %v2229
    %v3150 = vpack.c.b16 %v2234, %v2230
    %v3151 = vpack.c.b16 %v2239, %v2235
    %v3152 = vpack.c.b16 %v2240, %v2236
    %v3153 = vpack.c.b16 %v2241, %v2237
    %v3154 = vpack.c.b16 %v2242, %v2238
    %v3155 = vpack.c.b16 %v2247, %v2243
    %v3156 = vpack.c.b16 %v2248, %v2244
    %v3157 = vpack.c.b16 %v2249, %v2245
    %v3158 = vpack.c.b16 %v2250, %v2246
    %v3159 = vpack.c.b16 %v2255, %v2251
    %v3160 = vpack.c.b16 %v2256, %v2252
    %v3161 = vpack.c.b16 %v2257, %v2253
    %v3162 = vpack.c.b16 %v2258, %v2254
    %v3163 = vpack.c.b16 %v2263, %v2259
    %v3164 = vpack.c.b16 %v2264, %v2260
    %v3165 = vpack.c.b16 %v2265, %v2261
    %v3166 = vpack.c.b16 %v2266, %v2262
    %v3167 = vpack.c.b16 %v2271, %v2267
    %v3168 = vpack.c.b16 %v2272, %v2268
    %v3169 = vpack.c.b16 %v2273, %v2269
    %v3170 = vpack.c.b16 %v2274, %v2270
    %v3171 = vpack.c.b16 %v2279, %v2275
    %v3172 = vpack.c.b16 %v2280, %v2276
    %v3173 = vpack.c.b16 %v2281, %v2277
    %v3174 = vpack.c.b16 %v2282, %v2278
    %v3175 = vpack.c.b16 %v2287, %v2283
    %v3176 = vpack.c.b16 %v2288, %v2284
    %v3177 = vpack.c.b16 %v2289, %v2285
    %v3178 = vpack.c.b16 %v2290, %v2286
    %v3179 = vpack.c.b16 %v2295, %v2291
    %v3180 = vpack.c.b16 %v2296, %v2292
    %v3181 = vpack.c.b16 %v2297, %v2293
    %v3182 = vpack.c.b16 %v2298, %v2294
    %v3183 = vpack.c.b16 %v2303, %v2299
    %v3184 = vpack.c.b16 %v2304, %v2300
    %v3185 = vpack.c.b16 %v2305, %v2301
    %v3186 = vpack.c.b16 %v2306, %v2302
    %v3187 = vpack.c.b16 %v2311, %v2307
    %v3188 = vpack.c.b16 %v2312, %v2308
    %v3189 = vpack.c.b16 %v2313, %v2309
    %v3190 = vpack.c.b16 %v2314, %v2310
    %v3191 = vpack.c.b16 %v2319, %v2315
    %v3192 = vpack.c.b16 %v2320, %v2316
    %v3193 = vpack.c.b16 %v2321, %v2317
    %v3194 = vpack.c.b16 %v2322, %v2318
    %v3195 = vpack.c.b16 %v2327, %v2323
    %v3196 = vpack.c.b16 %v2328, %v2324
    %v3197 = vpack.c.b16 %v2329, %v2325
    %v3198 = vpack.c.b16 %v2330, %v2326
    %v3199 = vpack.c.b16 %v2335, %v2331
    %v3200 = vpack.c.b16 %v2336, %v2332
    %v3201 = vpack.c.b16 %v2337, %v2333
    %v3202 = vpack.c.b16 %v2338, %v2334
    %v3203 = vpack.c.b16 %v2343, %v2339
    %v3204 = vpack.c.b16 %v2344, %v2340
    %v3205 = vpack.c.b16 %v2345, %v2341
    %v3206 = vpack.c.b16 %v2346, %v2342
    %v3207 = vpack.c.b16 %v2351, %v2347
    %v3208 = vpack.c.b16 %v2352, %v2348
    %v3209 = vpack.c.b16 %v2353, %v2349
    %v3210 = vpack.c.b16 %v2354, %v2350
    %v3211 = vpack.c.b16 %v2359, %v2355
    %v3212 = vpack.c.b16 %v2360, %v2356
    %v3213 = vpack.c.b16 %v2361, %v2357
    %v3214 = vpack.c.b16 %v2362, %v2358
    %v3215 = vpack.c.b16 %v2367, %v2363
    %v3216 = vpack.c.b16 %v2368, %v2364
    %v3217 = vpack.c.b16 %v2369, %v2365
    %v3218 = vpack.c.b16 %v2370, %v2366
    %v3219 = vpack.c.b16 %v2375, %v2371
    %v3220 = vpack.c.b16 %v2376, %v2372
    %v3221 = vpack.c.b16 %v2377, %v2373
    %v3222 = vpack.c.b16 %v2378, %v2374
    %v3223 = vpack.c.b16 %v2383, %v2379
    %v3224 = vpack.c.b16 %v2384, %v2380
    %v3225 = vpack.c.b16 %v2385, %v2381
    %v3226 = vpack.c.b16 %v2386, %v2382
    %v3227 = vpack.c.b16 %v2391, %v2387
    %v3228 = vpack.c.b16 %v2392, %v2388
    %v3229 = vpack.c.b16 %v2393, %v2389
    %v3230 = vpack.c.b16 %v2394, %v2390
    %v3231 = vpack.c.b16 %v2399, %v2395
    %v3232 = vpack.c.b16 %v2400, %v2396
    %v3233 = vpack.c.b16 %v2401, %v2397
    %v3234 = vpack.c.b16 %v2402, %v2398
    %v3235 = vpack.c.b16 %v2407, %v2403
    %v3236 = vpack.c.b16 %v2408, %v2404
    %v3237 = vpack.c.b16 %v2409, %v2405
    %v3238 = vpack.c.b16 %v2410, %v2406
    %v3239 = vpack.c.b16 %v2415, %v2411
    %v3240 = vpack.c.b16 %v2416, %v2412
    %v3241 = vpack.c.b16 %v2417, %v2413
    %v3242 = vpack.c.b16 %v2418, %v2414
    %v3243 = vpack.c.b16 %v2423, %v2419
    %v3244 = vpack.c.b16 %v2424, %v2420
    %v3245 = vpack.c.b16 %v2425, %v2421
    %v3246 = vpack.c.b16 %v2426, %v2422
    %v3247 = vpack.c.b16 %v2431, %v2427
    %v3248 = vpack.c.b16 %v2432, %v2428
    %v3249 = vpack.c.b16 %v2433, %v2429
    %v3250 = vpack.c.b16 %v2434, %v2430
    %v3251 = vpack.c.b16 %v2439, %v2435
    %v3252 = vpack.c.b16 %v2440, %v2436
    %v3253 = vpack.c.b16 %v2441, %v2437
    %v3254 = vpack.c.b16 %v2442, %v2438
    %v3255 = vpack.c.b16 %v2447, %v2443
    %v3256 = vpack.c.b16 %v2448, %v2444
    %v3257 = vpack.c.b16 %v2449, %v2445
    %v3258 = vpack.c.b16 %v2450, %v2446
    %v3259 = vpack.c.b16 %v2455, %v2451
    %v3260 = vpack.c.b16 %v2456, %v2452
    %v3261 = vpack.c.b16 %v2457, %v2453
    %v3262 = vpack.c.b16 %v2458, %v2454
    %v3263 = vpack.c.b16 %v2463, %v2459
    %v3264 = vpack.c.b16 %v2464, %v2460
    %v3265 = vpack.c.b16 %v2465, %v2461
    %v3266 = vpack.c.b16 %v2466, %v2462
    %v3267 = vpack.c.b16 %v2471, %v2467
    %v3268 = vpack.c.b16 %v2472, %v2468
    %v3269 = vpack.c.b16 %v2473, %v2469
    %v3270 = vpack.c.b16 %v2474, %v2470
    %v3271 = vpack.c.b16 %v2479, %v2475
    %v3272 = vpack.c.b16 %v2480, %v2476
    %v3273 = vpack.c.b16 %v2481, %v2477
    %v3274 = vpack.c.b16 %v2482, %v2478
    %v3275 = vpack.c.b16 %v2487, %v2483
    %v3276 = vpack.c.b16 %v2488, %v2484
    %v3277 = vpack.c.b16 %v2489, %v2485
    %v3278 = vpack.c.b16 %v2490, %v2486
    %v3279 = vpack.c.b16 %v2495, %v2491
    %v3280 = vpack.c.b16 %v2496, %v2492
    %v3281 = vpack.c.b16 %v2497, %v2493
    %v3282 = vpack.c.b16 %v2498, %v2494
    %v3283 = vpack.c.b16 %v2503, %v2499
    %v3284 = vpack.c.b16 %v2504, %v2500
    %v3285 = vpack.c.b16 %v2505, %v2501
    %v3286 = vpack.c.b16 %v2506, %v2502
    %v3287 = vpack.c.b16 %v2511, %v2507
    %v3288 = vpack.c.b16 %v2512, %v2508
    %v3289 = vpack.c.b16 %v2513, %v2509
    %v3290 = vpack.c.b16 %v2514, %v2510
    %v3291 = vpack.c.b16 %v2519, %v2515
    %v3292 = vpack.c.b16 %v2520, %v2516
    %v3293 = vpack.c.b16 %v2521, %v2517
    %v3294 = vpack.c.b16 %v2522, %v2518
    %v3295 = vpack.c.b16 %v2527, %v2523
    %v3296 = vpack.c.b16 %v2528, %v2524
    %v3297 = vpack.c.b16 %v2529, %v2525
    %v3298 = vpack.c.b16 %v2530, %v2526
    %v3299 = vpack.c.b16 %v2535, %v2531
    %v3300 = vpack.c.b16 %v2536, %v2532
    %v3301 = vpack.c.b16 %v2537, %v2533
    %v3302 = vpack.c.b16 %v2538, %v2534
    %v3303 = vpack.c.b16 %v2543, %v2539
    %v3304 = vpack.c.b16 %v2544, %v2540
    %v3305 = vpack.c.b16 %v2545, %v2541
    %v3306 = vpack.c.b16 %v2546, %v2542
    %v3307 = vpack.c.b16 %v2551, %v2547
    %v3308 = vpack.c.b16 %v2552, %v2548
    %v3309 = vpack.c.b16 %v2553, %v2549
    %v3310 = vpack.c.b16 %v2554, %v2550
    %v3311 = vpack.c.b16 %v2559, %v2555
    %v3312 = vpack.c.b16 %v2560, %v2556
    %v3313 = vpack.c.b16 %v2561, %v2557
    %v3314 = vpack.c.b16 %v2562, %v2558
    %v3315 = vpack.c.b16 %v2567, %v2563
    %v3316 = vpack.c.b16 %v2568, %v2564
    %v3317 = vpack.c.b16 %v2569, %v2565
    %v3318 = vpack.c.b16 %v2570, %v2566
    %v3319 = vpack.c.b16 %v2575, %v2571
    %v3320 = vpack.c.b16 %v2576, %v2572
    %v3321 = vpack.c.b16 %v2577, %v2573
    %v3322 = vpack.c.b16 %v2578, %v2574
    %v3323 = vpack.c.b16 %v2583, %v2579
    %v3324 = vpack.c.b16 %v2584, %v2580
    %v3325 = vpack.c.b16 %v2585, %v2581
    %v3326 = vpack.c.b16 %v2586, %v2582
    %v3327 = vpack.c.b16 %v2591, %v2587
    %v3328 = vpack.c.b16 %v2592, %v2588
    %v3329 = vpack.c.b16 %v2593, %v2589
    %v3330 = vpack.c.b16 %v2594, %v2590
    %v3331 = vpack.c.b16 %v2599, %v2595
    %v3332 = vpack.c.b16 %v2600, %v2596
    %v3333 = vpack.c.b16 %v2601, %v2597
    %v3334 = vpack.c.b16 %v2602, %v2598
    %v3335 = vpack.c.b16 %v2607, %v2603
    %v3336 = vpack.c.b16 %v2608, %v2604
    %v3337 = vpack.c.b16 %v2609, %v2605
    %v3338 = vpack.c.b16 %v2610, %v2606
    %v3339 = vpack.c.b16 %v2615, %v2611
    %v3340 = vpack.c.b16 %v2616, %v2612
    %v3341 = vpack.c.b16 %v2617, %v2613
    %v3342 = vpack.c.b16 %v2618, %v2614
    %v3343 = vpack.c.b16 %v2623, %v2619
    %v3344 = vpack.c.b16 %v2624, %v2620
    %v3345 = vpack.c.b16 %v2625, %v2621
    %v3346 = vpack.c.b16 %v2626, %v2622
    %v3347 = vpack.c.b16 %v2631, %v2627
    %v3348 = vpack.c.b16 %v2632, %v2628
    %v3349 = vpack.c.b16 %v2633, %v2629
    %v3350 = vpack.c.b16 %v2634, %v2630
    %v3351 = vpack.c.b16 %v2639, %v2635
    %v3352 = vpack.c.b16 %v2640, %v2636
    %v3353 = vpack.c.b16 %v2641, %v2637
    %v3354 = vpack.c.b16 %v2642, %v2638
    %v3355 = vpack.c.b16 %v2647, %v2643
    %v3356 = vpack.c.b16 %v2648, %v2644
    %v3357 = vpack.c.b16 %v2649, %v2645
    %v3358 = vpack.c.b16 %v2650, %v2646
    %v3359 = vpack.c.b16 %v2655, %v2651
    %v3360 = vpack.c.b16 %v2656, %v2652
    %v3361 = vpack.c.b16 %v2657, %v2653
    %v3362 = vpack.c.b16 %v2658, %v2654
    %v3363 = vpack.c.b16 %v2663, %v2659
    %v3364 = vpack.c.b16 %v2664, %v2660
    %v3365 = vpack.c.b16 %v2665, %v2661
    %v3366 = vpack.c.b16 %v2666, %v2662
    %v3367 = vpack.c.b16 %v2671, %v2667
    %v3368 = vpack.c.b16 %v2672, %v2668
    %v3369 = vpack.c.b16 %v2673, %v2669
    %v3370 = vpack.c.b16 %v2674, %v2670
    %v3371 = vpack.c.b16 %v2679, %v2675
    %v3372 = vpack.c.b16 %v2680, %v2676
    %v3373 = vpack.c.b16 %v2681, %v2677
    %v3374 = vpack.c.b16 %v2682, %v2678
    %v3375 = vpack.c.b16 %v2687, %v2683
    %v3376 = vpack.c.b16 %v2688, %v2684
    %v3377 = vpack.c.b16 %v2689, %v2685
    %v3378 = vpack.c.b16 %v2690, %v2686
    %v3379 = vpack.c.b16 %v2695, %v2691
    %v3380 = vpack.c.b16 %v2696, %v2692
    %v3381 = vpack.c.b16 %v2697, %v2693
    %v3382 = vpack.c.b16 %v2698, %v2694
    %v3383 = vpack.c.b16 %v2703, %v2699
    %v3384 = vpack.c.b16 %v2704, %v2700
    %v3385 = vpack.c.b16 %v2705, %v2701
    %v3386 = vpack.c.b16 %v2706, %v2702
    %v3387 = vpack.c.b16 %v2711, %v2707
    %v3388 = vpack.c.b16 %v2712, %v2708
    %v3389 = vpack.c.b16 %v2713, %v2709
    %v3390 = vpack.c.b16 %v2714, %v2710
    %v3391 = vpack.c.b16 %v2719, %v2715
    %v3392 = vpack.c.b16 %v2720, %v2716
    %v3393 = vpack.c.b16 %v2721, %v2717
    %v3394 = vpack.c.b16 %v2722, %v2718
    %v3395 = vpack.c.b16 %v2727, %v2723
    %v3396 = vpack.c.b16 %v2728, %v2724
    %v3397 = vpack.c.b16 %v2729, %v2725
    %v3398 = vpack.c.b16 %v2730, %v2726
    %v3399 = vpack.c.b16 %v2735, %v2731
    %v3400 = vpack.c.b16 %v2736, %v2732
    %v3401 = vpack.c.b16 %v2737, %v2733
    %v3402 = vpack.c.b16 %v2738, %v2734
    %v3403 = vpack.c.b16 %v2743, %v2739
    %v3404 = vpack.c.b16 %v2744, %v2740
    %v3405 = vpack.c.b16 %v2745, %v2741
    %v3406 = vpack.c.b16 %v2746, %v2742
    %v3407 = vpack.c.b16 %v2751, %v2747
    %v3408 = vpack.c.b16 %v2752, %v2748
    %v3409 = vpack.c.b16 %v2753, %v2749
    %v3410 = vpack.c.b16 %v2754, %v2750
    %v3411 = vpack.c.b16 %v2759, %v2755
    %v3412 = vpack.c.b16 %v2760, %v2756
    %v3413 = vpack.c.b16 %v2761, %v2757
    %v3414 = vpack.c.b16 %v2762, %v2758
    %v3415 = vpack.c.b16 %v2767, %v2763
    %v3416 = vpack.c.b16 %v2768, %v2764
    %v3417 = vpack.c.b16 %v2769, %v2765
    %v3418 = vpack.c.b16 %v2770, %v2766
    %v3419 = vpack.c.b16 %v2775, %v2771
    %v3420 = vpack.c.b16 %v2776, %v2772
    %v3421 = vpack.c.b16 %v2777, %v2773
    %v3422 = vpack.c.b16 %v2778, %v2774
    %v3423 = vpack.c.b16 %v2783, %v2779
    %v3424 = vpack.c.b16 %v2784, %v2780
    %v3425 = vpack.c.b16 %v2785, %v2781
    %v3426 = vpack.c.b16 %v2786, %v2782
    %v3427 = vpack.c.b16 %v2791, %v2787
    %v3428 = vpack.c.b16 %v2792, %v2788
    %v3429 = vpack.c.b16 %v2793, %v2789
    %v3430 = vpack.c.b16 %v2794, %v2790
    %v3431 = vpack.c.b16 %v2799, %v2795
    %v3432 = vpack.c.b16 %v2800, %v2796
    %v3433 = vpack.c.b16 %v2801, %v2797
    %v3434 = vpack.c.b16 %v2802, %v2798
    %v3435 = vpack.c.b16 %v2807, %v2803
    %v3436 = vpack.c.b16 %v2808, %v2804
    %v3437 = vpack.c.b16 %v2809, %v2805
    %v3438 = vpack.c.b16 %v2810, %v2806
    %v3439 = vpack.c.b16 %v2815, %v2811
    %v3440 = vpack.c.b16 %v2816, %v2812
    %v3441 = vpack.c.b16 %v2817, %v2813
    %v3442 = vpack.c.b16 %v2818, %v2814
    %v3443 = vpack.c.b16 %v2823, %v2819
    %v3444 = vpack.c.b16 %v2824, %v2820
    %v3445 = vpack.c.b16 %v2825, %v2821
    %v3446 = vpack.c.b16 %v2826, %v2822
    %v3447 = vpack.c.b16 %v2831, %v2827
    %v3448 = vpack.c.b16 %v2832, %v2828
    %v3449 = vpack.c.b16 %v2833, %v2829
    %v3450 = vpack.c.b16 %v2834, %v2830
    %v3451 = vpack.c.b16 %v2839, %v2835
    %v3452 = vpack.c.b16 %v2840, %v2836
    %v3453 = vpack.c.b16 %v2841, %v2837
    %v3454 = vpack.c.b16 %v2842, %v2838
    %v3455 = vpack.c.b16 %v2847, %v2843
    %v3456 = vpack.c.b16 %v2848, %v2844
    %v3457 = vpack.c.b16 %v2849, %v2845
    %v3458 = vpack.c.b16 %v2850, %v2846
    %v3459 = vpack.c.b16 %v2855, %v2851
    %v3460 = vpack.c.b16 %v2856, %v2852
    %v3461 = vpack.c.b16 %v2857, %v2853
    %v3462 = vpack.c.b16 %v2858, %v2854
    %v3463 = vpack.c.b16 %v2863, %v2859
    %v3464 = vpack.c.b16 %v2864, %v2860
    %v3465 = vpack.c.b16 %v2865, %v2861
    %v3466 = vpack.c.b16 %v2866, %v2862
    %v3467 = vpack.c.b16 %v2871, %v2867
    %v3468 = vpack.c.b16 %v2872, %v2868
    %v3469 = vpack.c.b16 %v2873, %v2869
    %v3470 = vpack.c.b16 %v2874, %v2870
    %v3471 = vpack.c.b16 %v2879, %v2875
    %v3472 = vpack.c.b16 %v2880, %v2876
    %v3473 = vpack.c.b16 %v2881, %v2877
    %v3474 = vpack.c.b16 %v2882, %v2878
    %v3475 = vpack.c.b16 %v2887, %v2883
    %v3476 = vpack.c.b16 %v2888, %v2884
    %v3477 = vpack.c.b16 %v2889, %v2885
    %v3478 = vpack.c.b16 %v2890, %v2886
    %v3479 = vpack.c.b16 %v2895, %v2891
    %v3480 = vpack.c.b16 %v2896, %v2892
    %v3481 = vpack.c.b16 %v2897, %v2893
    %v3482 = vpack.c.b16 %v2898, %v2894
    %v3483 = vpack.c.b16 %v2903, %v2899
    %v3484 = vpack.c.b16 %v2904, %v2900
    %v3485 = vpack.c.b16 %v2905, %v2901
    %v3486 = vpack.c.b16 %v2906, %v2902
    %v3487 = vpack.c.b16 %v2911, %v2907
    %v3488 = vpack.c.b16 %v2912, %v2908
    %v3489 = vpack.c.b16 %v2913, %v2909
    %v3490 = vpack.c.b16 %v2914, %v2910
    %4067 = vmatprep.subr.bf16.mxu0 %v2916
    %4068 = vmatpush1.bf16.msra.mxu0 %v2915
    %4069 = vmatprep.subr.bf16.mxu0 %v2920
    %4070 = vmatpush1.bf16.msra.mxu0 %v2919
    %4071 = vmatprep.subr.bf16.mxu0 %v2924
    %4072 = vmatpush1.bf16.msra.mxu0 %v2923
    %4073 = vmatprep.subr.bf16.mxu0 %v2928
    %4074 = vmatpush1.bf16.msra.mxu0 %v2927
    %4075 = vmatprep.subr.bf16.mxu0 %v2932
    %4076 = vmatpush1.bf16.msra.mxu0 %v2931
    %4077 = vmatprep.subr.bf16.mxu0 %v2936
    %4078 = vmatpush1.bf16.msra.mxu0 %v2935
    %4079 = vmatprep.subr.bf16.mxu0 %v2940
    %4080 = vmatpush1.bf16.msra.mxu0 %v2939
    %4081 = vmatprep.subr.bf16.mxu0 %v2944
    %4082 = vmatpush1.bf16.msra.mxu0 %v2943
    %4083 = vmatprep.subr.bf16.mxu0 %v2948
    %4084 = vmatpush1.bf16.msra.mxu0 %v2947
    %4085 = vmatprep.subr.bf16.mxu0 %v2952
    %4086 = vmatpush1.bf16.msra.mxu0 %v2951
    %4087 = vmatprep.subr.bf16.mxu0 %v2956
    %4088 = vmatpush1.bf16.msra.mxu0 %v2955
    %4089 = vmatprep.subr.bf16.mxu0 %v2960
    %4090 = vmatpush1.bf16.msra.mxu0 %v2959
    %4091 = vmatprep.subr.bf16.mxu0 %v2964
    %4092 = vmatpush1.bf16.msra.mxu0 %v2963
    %4093 = vmatprep.subr.bf16.mxu0 %v2968
    %4094 = vmatpush1.bf16.msra.mxu0 %v2967
    %4095 = vmatprep.subr.bf16.mxu0 %v2972
    %4096 = vmatpush1.bf16.msra.mxu0 %v2971
    %4097 = vmatprep.subr.bf16.mxu0 %v2976
    %4098 = vmatpush1.bf16.msra.mxu0 %v2975
    %4099 = vmatprep.mubr.bf16.mxu0 %v468
    %4100 = vmatmul.mubr.bf16.gmra.mrb[0].mxu0 %v467
    %v4101 = vpop.f32.mrb[0].mxu0
    %v4102 = vadd.f32 0.0, %v4101
    %v4103 = vpop.f32.mrb[0].mxu0
    %v4104 = vadd.f32 0.0, %v4103
    %v4105 = vpop.f32.mrb[0].mxu0
    %v4106 = vadd.f32 0.0, %v4105
    %v4107 = vpop.f32.mrb[0].mxu0
    %v4108 = vadd.f32 0.0, %v4107
    %4109 = vmatprep.mubr.bf16.mxu0 %v486
    %4110 = vmatmul.mubr.bf16.gmra.mrb[0].mxu0 %v485
    %v4111 = vpop.f32.mrb[0].mxu0
    %v4112 = vadd.f32 0.0, %v4111
    %v4113 = vpop.f32.mrb[0].mxu0
    %v4114 = vadd.f32 0.0, %v4113
    %v4115 = vpop.f32.mrb[0].mxu0
    %v4116 = vadd.f32 0.0, %v4115
    %v4117 = vpop.f32.mrb[0].mxu0
    %v4118 = vadd.f32 0.0, %v4117
    %4119 = vmatprep.mubr.bf16.mxu0 %v504
    %4120 = vmatmul.mubr.bf16.gmra.mrb[0].mxu0 %v503
    %v4121 = vpop.f32.mrb[0].mxu0
    %v4122 = vadd.f32 0.0, %v4121
    %v4123 = vpop.f32.mrb[0].mxu0
    %v4124 = vadd.f32 0.0, %v4123
    %v4125 = vpop.f32.mrb[0].mxu0
    %v4126 = vadd.f32 0.0, %v4125
    %v4127 = vpop.f32.mrb[0].mxu0
    %v4128 = vadd.f32 0.0, %v4127
    %4129 = vmatprep.mubr.bf16.mxu0 %v522
    %4130 = vmatmul.mubr.bf16.gmra.mrb[0].mxu0 %v521
    %v4131 = vpop.f32.mrb[0].mxu0
    %v4132 = vadd.f32 0.0, %v4131
    %v4133 = vpop.f32.mrb[0].mxu0
    %v4134 = vadd.f32 0.0, %v4133
    %v4135 = vpop.f32.mrb[0].mxu0
    %v4136 = vadd.f32 0.0, %v4135
    %v4137 = vpop.f32.mrb[0].mxu0
    %v4138 = vadd.f32 0.0, %v4137
    %4139 = vmatprep.mubr.bf16.mxu0 %v540
    %4140 = vmatmul.mubr.bf16.gmra.mrb[0].mxu0 %v539
    %v4141 = vpop.f32.mrb[0].mxu0
    %v4142 = vadd.f32 0.0, %v4141
    %v4143 = vpop.f32.mrb[0].mxu0
    %v4144 = vadd.f32 0.0, %v4143
    %v4145 = vpop.f32.mrb[0].mxu0
    %v4146 = vadd.f32 0.0, %v4145
    %v4147 = vpop.f32.mrb[0].mxu0
    %v4148 = vadd.f32 0.0, %v4147
    %4149 = vmatprep.mubr.bf16.mxu0 %v558
    %4150 = vmatmul.mubr.bf16.gmra.mrb[0].mxu0 %v557
    %v4151 = vpop.f32.mrb[0].mxu0
    %v4152 = vadd.f32 0.0, %v4151
    %v4153 = vpop.f32.mrb[0].mxu0
    %v4154 = vadd.f32 0.0, %v4153
    %v4155 = vpop.f32.mrb[0].mxu0
    %v4156 = vadd.f32 0.0, %v4155
    %v4157 = vpop.f32.mrb[0].mxu0
    %v4158 = vadd.f32 0.0, %v4157
    %4159 = vmatprep.mubr.bf16.mxu0 %v576
    %4160 = vmatmul.mubr.bf16.gmra.mrb[0].mxu0 %v575
    %v4161 = vpop.f32.mrb[0].mxu0
    %v4162 = vadd.f32 0.0, %v4161
    %v4163 = vpop.f32.mrb[0].mxu0
    %v4164 = vadd.f32 0.0, %v4163
    %v4165 = vpop.f32.mrb[0].mxu0
    %v4166 = vadd.f32 0.0, %v4165
    %v4167 = vpop.f32.mrb[0].mxu0
    %v4168 = vadd.f32 0.0, %v4167
    %4169 = vmatprep.mubr.bf16.mxu0 %v594
    %4170 = vmatmul.mubr.bf16.gmra.mrb[0].mxu0 %v593
    %v4171 = vpop.f32.mrb[0].mxu0
    %v4172 = vadd.f32 0.0, %v4171
    %v4173 = vpop.f32.mrb[0].mxu0
    %v4174 = vadd.f32 0.0, %v4173
    %v4175 = vpop.f32.mrb[0].mxu0
    %v4176 = vadd.f32 0.0, %v4175
    %v4177 = vpop.f32.mrb[0].mxu0
    %v4178 = vadd.f32 0.0, %v4177
    %4179 = vdwg.mxu0
    %4180 = vmatprep.subr.bf16.mxu0 %v2980
    %4181 = vmatpush1.bf16.msra.mxu0 %v2979
    %4182 = vmatprep.subr.bf16.mxu0 %v2984
    %4183 = vmatpush1.bf16.msra.mxu0 %v2983
    %4184 = vmatprep.subr.bf16.mxu0 %v2988
    %4185 = vmatpush1.bf16.msra.mxu0 %v2987
    %4186 = vmatprep.subr.bf16.mxu0 %v2992
    %4187 = vmatpush1.bf16.msra.mxu0 %v2991
    %4188 = vmatprep.subr.bf16.mxu0 %v2996
    %4189 = vmatpush1.bf16.msra.mxu0 %v2995
    %4190 = vmatprep.subr.bf16.mxu0 %v3000
    %4191 = vmatpush1.bf16.msra.mxu0 %v2999
    %4192 = vmatprep.subr.bf16.mxu0 %v3004
    %4193 = vmatpush1.bf16.msra.mxu0 %v3003
    %4194 = vmatprep.subr.bf16.mxu0 %v3008
    %4195 = vmatpush1.bf16.msra.mxu0 %v3007
    %4196 = vmatprep.subr.bf16.mxu0 %v3012
    %4197 = vmatpush1.bf16.msra.mxu0 %v3011
    %4198 = vmatprep.subr.bf16.mxu0 %v3016
    %4199 = vmatpush1.bf16.msra.mxu0 %v3015
    %4200 = vmatprep.subr.bf16.mxu0 %v3020
    %4201 = vmatpush1.bf16.msra.mxu0 %v3019
    %4202 = vmatprep.subr.bf16.mxu0 %v3024
    %4203 = vmatpush1.bf16.msra.mxu0 %v3023
    %4204 = vmatprep.subr.bf16.mxu0 %v3028
    %4205 = vmatpush1.bf16.msra.mxu0 %v3027
    %4206 = vmatprep.subr.bf16.mxu0 %v3032
    %4207 = vmatpush1.bf16.msra.mxu0 %v3031
    %4208 = vmatprep.subr.bf16.mxu0 %v3036
    %4209 = vmatpush1.bf16.msra.mxu0 %v3035
    %4210 = vmatprep.subr.bf16.mxu0 %v3040
    %4211 = vmatpush1.bf16.msra.mxu0 %v3039
    %4212 = vmatprep.mubr.bf16.mxu0 %v470
    %4213 = vmatmul.mubr.bf16.gmra.mrb[0].mxu0 %v469
    %v4214 = vpop.f32.mrb[0].mxu0
    %v4215 = vadd.f32 %v4102, %v4214
    %v4216 = vpop.f32.mrb[0].mxu0
    %v4217 = vadd.f32 %v4104, %v4216
    %v4218 = vpop.f32.mrb[0].mxu0
    %v4219 = vadd.f32 %v4106, %v4218
    %v4220 = vpop.f32.mrb[0].mxu0
    %v4221 = vadd.f32 %v4108, %v4220
    %4222 = vmatprep.mubr.bf16.mxu0 %v488
    %4223 = vmatmul.mubr.bf16.gmra.mrb[0].mxu0 %v487
    %v4224 = vpop.f32.mrb[0].mxu0
    %v4225 = vadd.f32 %v4112, %v4224
    %v4226 = vpop.f32.mrb[0].mxu0
    %v4227 = vadd.f32 %v4114, %v4226
    %v4228 = vpop.f32.mrb[0].mxu0
    %v4229 = vadd.f32 %v4116, %v4228
    %v4230 = vpop.f32.mrb[0].mxu0
    %v4231 = vadd.f32 %v4118, %v4230
    %4232 = vmatprep.mubr.bf16.mxu0 %v506
    %4233 = vmatmul.mubr.bf16.gmra.mrb[0].mxu0 %v505
    %v4234 = vpop.f32.mrb[0].mxu0
    %v4235 = vadd.f32 %v4122, %v4234
    %v4236 = vpop.f32.mrb[0].mxu0
    %v4237 = vadd.f32 %v4124, %v4236
    %v4238 = vpop.f32.mrb[0].mxu0
    %v4239 = vadd.f32 %v4126, %v4238
    %v4240 = vpop.f32.mrb[0].mxu0
    %v4241 = vadd.f32 %v4128, %v4240
    %4242 = vmatprep.mubr.bf16.mxu0 %v524
    %4243 = vmatmul.mubr.bf16.gmra.mrb[0].mxu0 %v523
    %v4244 = vpop.f32.mrb[0].mxu0
    %v4245 = vadd.f32 %v4132, %v4244
    %v4246 = vpop.f32.mrb[0].mxu0
    %v4247 = vadd.f32 %v4134, %v4246
    %v4248 = vpop.f32.mrb[0].mxu0
    %v4249 = vadd.f32 %v4136, %v4248
    %v4250 = vpop.f32.mrb[0].mxu0
    %v4251 = vadd.f32 %v4138, %v4250
    %4252 = vmatprep.mubr.bf16.mxu0 %v542
    %4253 = vmatmul.mubr.bf16.gmra.mrb[0].mxu0 %v541
    %v4254 = vpop.f32.mrb[0].mxu0
    %v4255 = vadd.f32 %v4142, %v4254
    %v4256 = vpop.f32.mrb[0].mxu0
    %v4257 = vadd.f32 %v4144, %v4256
    %v4258 = vpop.f32.mrb[0].mxu0
    %v4259 = vadd.f32 %v4146, %v4258
    %v4260 = vpop.f32.mrb[0].mxu0
    %v4261 = vadd.f32 %v4148, %v4260
    %4262 = vmatprep.mubr.bf16.mxu0 %v560
    %4263 = vmatmul.mubr.bf16.gmra.mrb[0].mxu0 %v559
    %v4264 = vpop.f32.mrb[0].mxu0
    %v4265 = vadd.f32 %v4152, %v4264
    %v4266 = vpop.f32.mrb[0].mxu0
    %v4267 = vadd.f32 %v4154, %v4266
    %v4268 = vpop.f32.mrb[0].mxu0
    %v4269 = vadd.f32 %v4156, %v4268
    %v4270 = vpop.f32.mrb[0].mxu0
    %v4271 = vadd.f32 %v4158, %v4270
    %4272 = vmatprep.mubr.bf16.mxu0 %v578
    %4273 = vmatmul.mubr.bf16.gmra.mrb[0].mxu0 %v577
    %v4274 = vpop.f32.mrb[0].mxu0
    %v4275 = vadd.f32 %v4162, %v4274
    %v4276 = vpop.f32.mrb[0].mxu0
    %v4277 = vadd.f32 %v4164, %v4276
    %v4278 = vpop.f32.mrb[0].mxu0
    %v4279 = vadd.f32 %v4166, %v4278
    %v4280 = vpop.f32.mrb[0].mxu0
    %v4281 = vadd.f32 %v4168, %v4280
    %4282 = vmatprep.mubr.bf16.mxu0 %v596
    %4283 = vmatmul.mubr.bf16.gmra.mrb[0].mxu0 %v595
    %v4284 = vpop.f32.mrb[0].mxu0
    %v4285 = vadd.f32 %v4172, %v4284
    %v4286 = vpop.f32.mrb[0].mxu0
    %v4287 = vadd.f32 %v4174, %v4286
    %v4288 = vpop.f32.mrb[0].mxu0
    %v4289 = vadd.f32 %v4176, %v4288
    %v4290 = vpop.f32.mrb[0].mxu0
    %v4291 = vadd.f32 %v4178, %v4290
    %4292 = vdwg.mxu0
    %4293 = vmatprep.subr.bf16.mxu0 %v3044
    %4294 = vmatpush1.bf16.msra.mxu0 %v3043
    %4295 = vmatprep.subr.bf16.mxu0 %v3048
    %4296 = vmatpush1.bf16.msra.mxu0 %v3047
    %4297 = vmatprep.subr.bf16.mxu0 %v3052
    %4298 = vmatpush1.bf16.msra.mxu0 %v3051
    %4299 = vmatprep.subr.bf16.mxu0 %v3056
    %4300 = vmatpush1.bf16.msra.mxu0 %v3055
    %4301 = vmatprep.subr.bf16.mxu0 %v3060
    %4302 = vmatpush1.bf16.msra.mxu0 %v3059
    %4303 = vmatprep.subr.bf16.mxu0 %v3064
    %4304 = vmatpush1.bf16.msra.mxu0 %v3063
    %4305 = vmatprep.subr.bf16.mxu0 %v3068
    %4306 = vmatpush1.bf16.msra.mxu0 %v3067
    %4307 = vmatprep.subr.bf16.mxu0 %v3072
    %4308 = vmatpush1.bf16.msra.mxu0 %v3071
    %4309 = vmatprep.subr.bf16.mxu0 %v3076
    %4310 = vmatpush1.bf16.msra.mxu0 %v3075
    %4311 = vmatprep.subr.bf16.mxu0 %v3080
    %4312 = vmatpush1.bf16.msra.mxu0 %v3079
    %4313 = vmatprep.subr.bf16.mxu0 %v3084
    %4314 = vmatpush1.bf16.msra.mxu0 %v3083
    %4315 = vmatprep.subr.bf16.mxu0 %v3088
    %4316 = vmatpush1.bf16.msra.mxu0 %v3087
    %4317 = vmatprep.subr.bf16.mxu0 %v3092
    %4318 = vmatpush1.bf16.msra.mxu0 %v3091
    %4319 = vmatprep.subr.bf16.mxu0 %v3096
    %4320 = vmatpush1.bf16.msra.mxu0 %v3095
    %4321 = vmatprep.subr.bf16.mxu0 %v3100
    %4322 = vmatpush1.bf16.msra.mxu0 %v3099
    %4323 = vmatprep.subr.bf16.mxu0 %v3104
    %4324 = vmatpush1.bf16.msra.mxu0 %v3103
    %4325 = vmatprep.mubr.bf16.mxu0 %v472
    %4326 = vmatmul.mubr.bf16.gmra.mrb[0].mxu0 %v471
    %v4327 = vpop.f32.mrb[0].mxu0
    %v4328 = vadd.f32 %v4215, %v4327
    %v4329 = vpop.f32.mrb[0].mxu0
    %v4330 = vadd.f32 %v4217, %v4329
    %v4331 = vpop.f32.mrb[0].mxu0
    %v4332 = vadd.f32 %v4219, %v4331
    %v4333 = vpop.f32.mrb[0].mxu0
    %v4334 = vadd.f32 %v4221, %v4333
    %4335 = vmatprep.mubr.bf16.mxu0 %v490
    %4336 = vmatmul.mubr.bf16.gmra.mrb[0].mxu0 %v489
    %v4337 = vpop.f32.mrb[0].mxu0
    %v4338 = vadd.f32 %v4225, %v4337
    %v4339 = vpop.f32.mrb[0].mxu0
    %v4340 = vadd.f32 %v4227, %v4339
    %v4341 = vpop.f32.mrb[0].mxu0
    %v4342 = vadd.f32 %v4229, %v4341
    %v4343 = vpop.f32.mrb[0].mxu0
    %v4344 = vadd.f32 %v4231, %v4343
    %4345 = vmatprep.mubr.bf16.mxu0 %v508
    %4346 = vmatmul.mubr.bf16.gmra.mrb[0].mxu0 %v507
    %v4347 = vpop.f32.mrb[0].mxu0
    %v4348 = vadd.f32 %v4235, %v4347
    %v4349 = vpop.f32.mrb[0].mxu0
    %v4350 = vadd.f32 %v4237, %v4349
    %v4351 = vpop.f32.mrb[0].mxu0
    %v4352 = vadd.f32 %v4239, %v4351
    %v4353 = vpop.f32.mrb[0].mxu0
    %v4354 = vadd.f32 %v4241, %v4353
    %4355 = vmatprep.mubr.bf16.mxu0 %v526
    %4356 = vmatmul.mubr.bf16.gmra.mrb[0].mxu0 %v525
    %v4357 = vpop.f32.mrb[0].mxu0
    %v4358 = vadd.f32 %v4245, %v4357
    %v4359 = vpop.f32.mrb[0].mxu0
    %v4360 = vadd.f32 %v4247, %v4359
    %v4361 = vpop.f32.mrb[0].mxu0
    %v4362 = vadd.f32 %v4249, %v4361
    %v4363 = vpop.f32.mrb[0].mxu0
    %v4364 = vadd.f32 %v4251, %v4363
    %4365 = vmatprep.mubr.bf16.mxu0 %v544
    %4366 = vmatmul.mubr.bf16.gmra.mrb[0].mxu0 %v543
    %v4367 = vpop.f32.mrb[0].mxu0
    %v4368 = vadd.f32 %v4255, %v4367
    %v4369 = vpop.f32.mrb[0].mxu0
    %v4370 = vadd.f32 %v4257, %v4369
    %v4371 = vpop.f32.mrb[0].mxu0
    %v4372 = vadd.f32 %v4259, %v4371
    %v4373 = vpop.f32.mrb[0].mxu0
    %v4374 = vadd.f32 %v4261, %v4373
    %4375 = vmatprep.mubr.bf16.mxu0 %v562
    %4376 = vmatmul.mubr.bf16.gmra.mrb[0].mxu0 %v561
    %v4377 = vpop.f32.mrb[0].mxu0
    %v4378 = vadd.f32 %v4265, %v4377
    %v4379 = vpop.f32.mrb[0].mxu0
    %v4380 = vadd.f32 %v4267, %v4379
    %v4381 = vpop.f32.mrb[0].mxu0
    %v4382 = vadd.f32 %v4269, %v4381
    %v4383 = vpop.f32.mrb[0].mxu0
    %v4384 = vadd.f32 %v4271, %v4383
    %4385 = vmatprep.mubr.bf16.mxu0 %v580
    %4386 = vmatmul.mubr.bf16.gmra.mrb[0].mxu0 %v579
    %v4387 = vpop.f32.mrb[0].mxu0
    %v4388 = vadd.f32 %v4275, %v4387
    %v4389 = vpop.f32.mrb[0].mxu0
    %v4390 = vadd.f32 %v4277, %v4389
    %v4391 = vpop.f32.mrb[0].mxu0
    %v4392 = vadd.f32 %v4279, %v4391
    %v4393 = vpop.f32.mrb[0].mxu0
    %v4394 = vadd.f32 %v4281, %v4393
    %4395 = vmatprep.mubr.bf16.mxu0 %v598
    %4396 = vmatmul.mubr.bf16.gmra.mrb[0].mxu0 %v597
    %v4397 = vpop.f32.mrb[0].mxu0
    %v4398 = vadd.f32 %v4285, %v4397
    %v4399 = vpop.f32.mrb[0].mxu0
    %v4400 = vadd.f32 %v4287, %v4399
    %v4401 = vpop.f32.mrb[0].mxu0
    %v4402 = vadd.f32 %v4289, %v4401
    %v4403 = vpop.f32.mrb[0].mxu0
    %v4404 = vadd.f32 %v4291, %v4403
    %4405 = vdwg.mxu0
    %4406 = vmatprep.subr.bf16.mxu0 %v3108
    %4407 = vmatpush1.bf16.msra.mxu0 %v3107
    %4408 = vmatprep.subr.bf16.mxu0 %v3112
    %4409 = vmatpush1.bf16.msra.mxu0 %v3111
    %4410 = vmatprep.subr.bf16.mxu0 %v3116
    %4411 = vmatpush1.bf16.msra.mxu0 %v3115
    %4412 = vmatprep.subr.bf16.mxu0 %v3120
    %4413 = vmatpush1.bf16.msra.mxu0 %v3119
    %4414 = vmatprep.subr.bf16.mxu0 %v3124
    %4415 = vmatpush1.bf16.msra.mxu0 %v3123
    %4416 = vmatprep.subr.bf16.mxu0 %v3128
    %4417 = vmatpush1.bf16.msra.mxu0 %v3127
    %4418 = vmatprep.subr.bf16.mxu0 %v3132
    %4419 = vmatpush1.bf16.msra.mxu0 %v3131
    %4420 = vmatprep.subr.bf16.mxu0 %v3136
    %4421 = vmatpush1.bf16.msra.mxu0 %v3135
    %4422 = vmatprep.subr.bf16.mxu0 %v3140
    %4423 = vmatpush1.bf16.msra.mxu0 %v3139
    %4424 = vmatprep.subr.bf16.mxu0 %v3144
    %4425 = vmatpush1.bf16.msra.mxu0 %v3143
    %4426 = vmatprep.subr.bf16.mxu0 %v3148
    %4427 = vmatpush1.bf16.msra.mxu0 %v3147
    %4428 = vmatprep.subr.bf16.mxu0 %v3152
    %4429 = vmatpush1.bf16.msra.mxu0 %v3151
    %4430 = vmatprep.subr.bf16.mxu0 %v3156
    %4431 = vmatpush1.bf16.msra.mxu0 %v3155
    %4432 = vmatprep.subr.bf16.mxu0 %v3160
    %4433 = vmatpush1.bf16.msra.mxu0 %v3159
    %4434 = vmatprep.subr.bf16.mxu0 %v3164
    %4435 = vmatpush1.bf16.msra.mxu0 %v3163
    %4436 = vmatprep.subr.bf16.mxu0 %v3168
    %4437 = vmatpush1.bf16.msra.mxu0 %v3167
    %4438 = vmatprep.mubr.bf16.mxu0 %v474
    %4439 = vmatmul.mubr.bf16.gmra.mrb[0].mxu0 %v473
    %v4440 = vpop.f32.mrb[0].mxu0
    %v4441 = vadd.f32 %v4328, %v4440
    %v4442 = vpop.f32.mrb[0].mxu0
    %v4443 = vadd.f32 %v4330, %v4442
    %v4444 = vpop.f32.mrb[0].mxu0
    %v4445 = vadd.f32 %v4332, %v4444
    %v4446 = vpop.f32.mrb[0].mxu0
    %v4447 = vadd.f32 %v4334, %v4446
    %4448 = vmatprep.mubr.bf16.mxu0 %v492
    %4449 = vmatmul.mubr.bf16.gmra.mrb[0].mxu0 %v491
    %v4450 = vpop.f32.mrb[0].mxu0
    %v4451 = vadd.f32 %v4338, %v4450
    %v4452 = vpop.f32.mrb[0].mxu0
    %v4453 = vadd.f32 %v4340, %v4452
    %v4454 = vpop.f32.mrb[0].mxu0
    %v4455 = vadd.f32 %v4342, %v4454
    %v4456 = vpop.f32.mrb[0].mxu0
    %v4457 = vadd.f32 %v4344, %v4456
    %4458 = vmatprep.mubr.bf16.mxu0 %v510
    %4459 = vmatmul.mubr.bf16.gmra.mrb[0].mxu0 %v509
    %v4460 = vpop.f32.mrb[0].mxu0
    %v4461 = vadd.f32 %v4348, %v4460
    %v4462 = vpop.f32.mrb[0].mxu0
    %v4463 = vadd.f32 %v4350, %v4462
    %v4464 = vpop.f32.mrb[0].mxu0
    %v4465 = vadd.f32 %v4352, %v4464
    %v4466 = vpop.f32.mrb[0].mxu0
    %v4467 = vadd.f32 %v4354, %v4466
    %4468 = vmatprep.mubr.bf16.mxu0 %v528
    %4469 = vmatmul.mubr.bf16.gmra.mrb[0].mxu0 %v527
    %v4470 = vpop.f32.mrb[0].mxu0
    %v4471 = vadd.f32 %v4358, %v4470
    %v4472 = vpop.f32.mrb[0].mxu0
    %v4473 = vadd.f32 %v4360, %v4472
    %v4474 = vpop.f32.mrb[0].mxu0
    %v4475 = vadd.f32 %v4362, %v4474
    %v4476 = vpop.f32.mrb[0].mxu0
    %v4477 = vadd.f32 %v4364, %v4476
    %4478 = vmatprep.mubr.bf16.mxu0 %v546
    %4479 = vmatmul.mubr.bf16.gmra.mrb[0].mxu0 %v545
    %v4480 = vpop.f32.mrb[0].mxu0
    %v4481 = vadd.f32 %v4368, %v4480
    %v4482 = vpop.f32.mrb[0].mxu0
    %v4483 = vadd.f32 %v4370, %v4482
    %v4484 = vpop.f32.mrb[0].mxu0
    %v4485 = vadd.f32 %v4372, %v4484
    %v4486 = vpop.f32.mrb[0].mxu0
    %v4487 = vadd.f32 %v4374, %v4486
    %4488 = vmatprep.mubr.bf16.mxu0 %v564
    %4489 = vmatmul.mubr.bf16.gmra.mrb[0].mxu0 %v563
    %v4490 = vpop.f32.mrb[0].mxu0
    %v4491 = vadd.f32 %v4378, %v4490
    %v4492 = vpop.f32.mrb[0].mxu0
    %v4493 = vadd.f32 %v4380, %v4492
    %v4494 = vpop.f32.mrb[0].mxu0
    %v4495 = vadd.f32 %v4382, %v4494
    %v4496 = vpop.f32.mrb[0].mxu0
    %v4497 = vadd.f32 %v4384, %v4496
    %4498 = vmatprep.mubr.bf16.mxu0 %v582
    %4499 = vmatmul.mubr.bf16.gmra.mrb[0].mxu0 %v581
    %v4500 = vpop.f32.mrb[0].mxu0
    %v4501 = vadd.f32 %v4388, %v4500
    %v4502 = vpop.f32.mrb[0].mxu0
    %v4503 = vadd.f32 %v4390, %v4502
    %v4504 = vpop.f32.mrb[0].mxu0
    %v4505 = vadd.f32 %v4392, %v4504
    %v4506 = vpop.f32.mrb[0].mxu0
    %v4507 = vadd.f32 %v4394, %v4506
    %4508 = vmatprep.mubr.bf16.mxu0 %v600
    %4509 = vmatmul.mubr.bf16.gmra.mrb[0].mxu0 %v599
    %v4510 = vpop.f32.mrb[0].mxu0
    %v4511 = vadd.f32 %v4398, %v4510
    %v4512 = vpop.f32.mrb[0].mxu0
    %v4513 = vadd.f32 %v4400, %v4512
    %v4514 = vpop.f32.mrb[0].mxu0
    %v4515 = vadd.f32 %v4402, %v4514
    %v4516 = vpop.f32.mrb[0].mxu0
    %v4517 = vadd.f32 %v4404, %v4516
    %4518 = vdwg.mxu0
    %4519 = vmatprep.subr.bf16.mxu0 %v3172
    %4520 = vmatpush1.bf16.msra.mxu0 %v3171
    %4521 = vmatprep.subr.bf16.mxu0 %v3176
    %4522 = vmatpush1.bf16.msra.mxu0 %v3175
    %4523 = vmatprep.subr.bf16.mxu0 %v3180
    %4524 = vmatpush1.bf16.msra.mxu0 %v3179
    %4525 = vmatprep.subr.bf16.mxu0 %v3184
    %4526 = vmatpush1.bf16.msra.mxu0 %v3183
    %4527 = vmatprep.subr.bf16.mxu0 %v3188
    %4528 = vmatpush1.bf16.msra.mxu0 %v3187
    %4529 = vmatprep.subr.bf16.mxu0 %v3192
    %4530 = vmatpush1.bf16.msra.mxu0 %v3191
    %4531 = vmatprep.subr.bf16.mxu0 %v3196
    %4532 = vmatpush1.bf16.msra.mxu0 %v3195
    %4533 = vmatprep.subr.bf16.mxu0 %v3200
    %4534 = vmatpush1.bf16.msra.mxu0 %v3199
    %4535 = vmatprep.subr.bf16.mxu0 %v3204
    %4536 = vmatpush1.bf16.msra.mxu0 %v3203
    %4537 = vmatprep.subr.bf16.mxu0 %v3208
    %4538 = vmatpush1.bf16.msra.mxu0 %v3207
    %4539 = vmatprep.subr.bf16.mxu0 %v3212
    %4540 = vmatpush1.bf16.msra.mxu0 %v3211
    %4541 = vmatprep.subr.bf16.mxu0 %v3216
    %4542 = vmatpush1.bf16.msra.mxu0 %v3215
    %4543 = vmatprep.subr.bf16.mxu0 %v3220
    %4544 = vmatpush1.bf16.msra.mxu0 %v3219
    %4545 = vmatprep.subr.bf16.mxu0 %v3224
    %4546 = vmatpush1.bf16.msra.mxu0 %v3223
    %4547 = vmatprep.subr.bf16.mxu0 %v3228
    %4548 = vmatpush1.bf16.msra.mxu0 %v3227
    %4549 = vmatprep.subr.bf16.mxu0 %v3232
    %4550 = vmatpush1.bf16.msra.mxu0 %v3231
    %4551 = vmatprep.mubr.bf16.mxu0 %v476
    %4552 = vmatmul.mubr.bf16.gmra.mrb[0].mxu0 %v475
    %v4553 = vpop.f32.mrb[0].mxu0
    %v4554 = vadd.f32 %v4441, %v4553
    %v4555 = vpop.f32.mrb[0].mxu0
    %v4556 = vadd.f32 %v4443, %v4555
    %v4557 = vpop.f32.mrb[0].mxu0
    %v4558 = vadd.f32 %v4445, %v4557
    %v4559 = vpop.f32.mrb[0].mxu0
    %v4560 = vadd.f32 %v4447, %v4559
    %4561 = vmatprep.mubr.bf16.mxu0 %v494
    %4562 = vmatmul.mubr.bf16.gmra.mrb[0].mxu0 %v493
    %v4563 = vpop.f32.mrb[0].mxu0
    %v4564 = vadd.f32 %v4451, %v4563
    %v4565 = vpop.f32.mrb[0].mxu0
    %v4566 = vadd.f32 %v4453, %v4565
    %v4567 = vpop.f32.mrb[0].mxu0
    %v4568 = vadd.f32 %v4455, %v4567
    %v4569 = vpop.f32.mrb[0].mxu0
    %v4570 = vadd.f32 %v4457, %v4569
    %4571 = vmatprep.mubr.bf16.mxu0 %v512
    %4572 = vmatmul.mubr.bf16.gmra.mrb[0].mxu0 %v511
    %v4573 = vpop.f32.mrb[0].mxu0
    %v4574 = vadd.f32 %v4461, %v4573
    %v4575 = vpop.f32.mrb[0].mxu0
    %v4576 = vadd.f32 %v4463, %v4575
    %v4577 = vpop.f32.mrb[0].mxu0
    %v4578 = vadd.f32 %v4465, %v4577
    %v4579 = vpop.f32.mrb[0].mxu0
    %v4580 = vadd.f32 %v4467, %v4579
    %4581 = vmatprep.mubr.bf16.mxu0 %v530
    %4582 = vmatmul.mubr.bf16.gmra.mrb[0].mxu0 %v529
    %v4583 = vpop.f32.mrb[0].mxu0
    %v4584 = vadd.f32 %v4471, %v4583
    %v4585 = vpop.f32.mrb[0].mxu0
    %v4586 = vadd.f32 %v4473, %v4585
    %v4587 = vpop.f32.mrb[0].mxu0
    %v4588 = vadd.f32 %v4475, %v4587
    %v4589 = vpop.f32.mrb[0].mxu0
    %v4590 = vadd.f32 %v4477, %v4589
    %4591 = vmatprep.mubr.bf16.mxu0 %v548
    %4592 = vmatmul.mubr.bf16.gmra.mrb[0].mxu0 %v547
    %v4593 = vpop.f32.mrb[0].mxu0
    %v4594 = vadd.f32 %v4481, %v4593
    %v4595 = vpop.f32.mrb[0].mxu0
    %v4596 = vadd.f32 %v4483, %v4595
    %v4597 = vpop.f32.mrb[0].mxu0
    %v4598 = vadd.f32 %v4485, %v4597
    %v4599 = vpop.f32.mrb[0].mxu0
    %v4600 = vadd.f32 %v4487, %v4599
    %4601 = vmatprep.mubr.bf16.mxu0 %v566
    %4602 = vmatmul.mubr.bf16.gmra.mrb[0].mxu0 %v565
    %v4603 = vpop.f32.mrb[0].mxu0
    %v4604 = vadd.f32 %v4491, %v4603
    %v4605 = vpop.f32.mrb[0].mxu0
    %v4606 = vadd.f32 %v4493, %v4605
    %v4607 = vpop.f32.mrb[0].mxu0
    %v4608 = vadd.f32 %v4495, %v4607
    %v4609 = vpop.f32.mrb[0].mxu0
    %v4610 = vadd.f32 %v4497, %v4609
    %4611 = vmatprep.mubr.bf16.mxu0 %v584
    %4612 = vmatmul.mubr.bf16.gmra.mrb[0].mxu0 %v583
    %v4613 = vpop.f32.mrb[0].mxu0
    %v4614 = vadd.f32 %v4501, %v4613
    %v4615 = vpop.f32.mrb[0].mxu0
    %v4616 = vadd.f32 %v4503, %v4615
    %v4617 = vpop.f32.mrb[0].mxu0
    %v4618 = vadd.f32 %v4505, %v4617
    %v4619 = vpop.f32.mrb[0].mxu0
    %v4620 = vadd.f32 %v4507, %v4619
    %4621 = vmatprep.mubr.bf16.mxu0 %v602
    %4622 = vmatmul.mubr.bf16.gmra.mrb[0].mxu0 %v601
    %v4623 = vpop.f32.mrb[0].mxu0
    %v4624 = vadd.f32 %v4511, %v4623
    %v4625 = vpop.f32.mrb[0].mxu0
    %v4626 = vadd.f32 %v4513, %v4625
    %v4627 = vpop.f32.mrb[0].mxu0
    %v4628 = vadd.f32 %v4515, %v4627
    %v4629 = vpop.f32.mrb[0].mxu0
    %v4630 = vadd.f32 %v4517, %v4629
    %4631 = vdwg.mxu0
    %4632 = vmatprep.subr.bf16.mxu0 %v3236
    %4633 = vmatpush1.bf16.msra.mxu0 %v3235
    %4634 = vmatprep.subr.bf16.mxu0 %v3240
    %4635 = vmatpush1.bf16.msra.mxu0 %v3239
    %4636 = vmatprep.subr.bf16.mxu0 %v3244
    %4637 = vmatpush1.bf16.msra.mxu0 %v3243
    %4638 = vmatprep.subr.bf16.mxu0 %v3248
    %4639 = vmatpush1.bf16.msra.mxu0 %v3247
    %4640 = vmatprep.subr.bf16.mxu0 %v3252
    %4641 = vmatpush1.bf16.msra.mxu0 %v3251
    %4642 = vmatprep.subr.bf16.mxu0 %v3256
    %4643 = vmatpush1.bf16.msra.mxu0 %v3255
    %4644 = vmatprep.subr.bf16.mxu0 %v3260
    %4645 = vmatpush1.bf16.msra.mxu0 %v3259
    %4646 = vmatprep.subr.bf16.mxu0 %v3264
    %4647 = vmatpush1.bf16.msra.mxu0 %v3263
    %4648 = vmatprep.subr.bf16.mxu0 %v3268
    %4649 = vmatpush1.bf16.msra.mxu0 %v3267
    %4650 = vmatprep.subr.bf16.mxu0 %v3272
    %4651 = vmatpush1.bf16.msra.mxu0 %v3271
    %4652 = vmatprep.subr.bf16.mxu0 %v3276
    %4653 = vmatpush1.bf16.msra.mxu0 %v3275
    %4654 = vmatprep.subr.bf16.mxu0 %v3280
    %4655 = vmatpush1.bf16.msra.mxu0 %v3279
    %4656 = vmatprep.subr.bf16.mxu0 %v3284
    %4657 = vmatpush1.bf16.msra.mxu0 %v3283
    %4658 = vmatprep.subr.bf16.mxu0 %v3288
    %4659 = vmatpush1.bf16.msra.mxu0 %v3287
    %4660 = vmatprep.subr.bf16.mxu0 %v3292
    %4661 = vmatpush1.bf16.msra.mxu0 %v3291
    %4662 = vmatprep.subr.bf16.mxu0 %v3296
    %4663 = vmatpush1.bf16.msra.mxu0 %v3295
    %4664 = vmatprep.mubr.bf16.mxu0 %v478
    %4665 = vmatmul.mubr.bf16.gmra.mrb[0].mxu0 %v477
    %v4666 = vpop.f32.mrb[0].mxu0
    %v4667 = vadd.f32 %v4554, %v4666
    %v4668 = vpop.f32.mrb[0].mxu0
    %v4669 = vadd.f32 %v4556, %v4668
    %v4670 = vpop.f32.mrb[0].mxu0
    %v4671 = vadd.f32 %v4558, %v4670
    %v4672 = vpop.f32.mrb[0].mxu0
    %v4673 = vadd.f32 %v4560, %v4672
    %4674 = vmatprep.mubr.bf16.mxu0 %v496
    %4675 = vmatmul.mubr.bf16.gmra.mrb[0].mxu0 %v495
    %v4676 = vpop.f32.mrb[0].mxu0
    %v4677 = vadd.f32 %v4564, %v4676
    %v4678 = vpop.f32.mrb[0].mxu0
    %v4679 = vadd.f32 %v4566, %v4678
    %v4680 = vpop.f32.mrb[0].mxu0
    %v4681 = vadd.f32 %v4568, %v4680
    %v4682 = vpop.f32.mrb[0].mxu0
    %v4683 = vadd.f32 %v4570, %v4682
    %4684 = vmatprep.mubr.bf16.mxu0 %v514
    %4685 = vmatmul.mubr.bf16.gmra.mrb[0].mxu0 %v513
    %v4686 = vpop.f32.mrb[0].mxu0
    %v4687 = vadd.f32 %v4574, %v4686
    %v4688 = vpop.f32.mrb[0].mxu0
    %v4689 = vadd.f32 %v4576, %v4688
    %v4690 = vpop.f32.mrb[0].mxu0
    %v4691 = vadd.f32 %v4578, %v4690
    %v4692 = vpop.f32.mrb[0].mxu0
    %v4693 = vadd.f32 %v4580, %v4692
    %4694 = vmatprep.mubr.bf16.mxu0 %v532
    %4695 = vmatmul.mubr.bf16.gmra.mrb[0].mxu0 %v531
    %v4696 = vpop.f32.mrb[0].mxu0
    %v4697 = vadd.f32 %v4584, %v4696
    %v4698 = vpop.f32.mrb[0].mxu0
    %v4699 = vadd.f32 %v4586, %v4698
    %v4700 = vpop.f32.mrb[0].mxu0
    %v4701 = vadd.f32 %v4588, %v4700
    %v4702 = vpop.f32.mrb[0].mxu0
    %v4703 = vadd.f32 %v4590, %v4702
    %4704 = vmatprep.mubr.bf16.mxu0 %v550
    %4705 = vmatmul.mubr.bf16.gmra.mrb[0].mxu0 %v549
    %v4706 = vpop.f32.mrb[0].mxu0
    %v4707 = vadd.f32 %v4594, %v4706
    %v4708 = vpop.f32.mrb[0].mxu0
    %v4709 = vadd.f32 %v4596, %v4708
    %v4710 = vpop.f32.mrb[0].mxu0
    %v4711 = vadd.f32 %v4598, %v4710
    %v4712 = vpop.f32.mrb[0].mxu0
    %v4713 = vadd.f32 %v4600, %v4712
    %4714 = vmatprep.mubr.bf16.mxu0 %v568
    %4715 = vmatmul.mubr.bf16.gmra.mrb[0].mxu0 %v567
    %v4716 = vpop.f32.mrb[0].mxu0
    %v4717 = vadd.f32 %v4604, %v4716
    %v4718 = vpop.f32.mrb[0].mxu0
    %v4719 = vadd.f32 %v4606, %v4718
    %v4720 = vpop.f32.mrb[0].mxu0
    %v4721 = vadd.f32 %v4608, %v4720
    %v4722 = vpop.f32.mrb[0].mxu0
    %v4723 = vadd.f32 %v4610, %v4722
    %4724 = vmatprep.mubr.bf16.mxu0 %v586
    %4725 = vmatmul.mubr.bf16.gmra.mrb[0].mxu0 %v585
    %v4726 = vpop.f32.mrb[0].mxu0
    %v4727 = vadd.f32 %v4614, %v4726
    %v4728 = vpop.f32.mrb[0].mxu0
    %v4729 = vadd.f32 %v4616, %v4728
    %v4730 = vpop.f32.mrb[0].mxu0
    %v4731 = vadd.f32 %v4618, %v4730
    %v4732 = vpop.f32.mrb[0].mxu0
    %v4733 = vadd.f32 %v4620, %v4732
    %4734 = vmatprep.mubr.bf16.mxu0 %v604
    %4735 = vmatmul.mubr.bf16.gmra.mrb[0].mxu0 %v603
    %v4736 = vpop.f32.mrb[0].mxu0
    %v4737 = vadd.f32 %v4624, %v4736
    %v4738 = vpop.f32.mrb[0].mxu0
    %v4739 = vadd.f32 %v4626, %v4738
    %v4740 = vpop.f32.mrb[0].mxu0
    %v4741 = vadd.f32 %v4628, %v4740
    %v4742 = vpop.f32.mrb[0].mxu0
    %v4743 = vadd.f32 %v4630, %v4742
    %4744 = vdwg.mxu0
    %4745 = vmatprep.subr.bf16.mxu0 %v3300
    %4746 = vmatpush1.bf16.msra.mxu0 %v3299
    %4747 = vmatprep.subr.bf16.mxu0 %v3304
    %4748 = vmatpush1.bf16.msra.mxu0 %v3303
    %4749 = vmatprep.subr.bf16.mxu0 %v3308
    %4750 = vmatpush1.bf16.msra.mxu0 %v3307
    %4751 = vmatprep.subr.bf16.mxu0 %v3312
    %4752 = vmatpush1.bf16.msra.mxu0 %v3311
    %4753 = vmatprep.subr.bf16.mxu0 %v3316
    %4754 = vmatpush1.bf16.msra.mxu0 %v3315
    %4755 = vmatprep.subr.bf16.mxu0 %v3320
    %4756 = vmatpush1.bf16.msra.mxu0 %v3319
    %4757 = vmatprep.subr.bf16.mxu0 %v3324
    %4758 = vmatpush1.bf16.msra.mxu0 %v3323
    %4759 = vmatprep.subr.bf16.mxu0 %v3328
    %4760 = vmatpush1.bf16.msra.mxu0 %v3327
    %4761 = vmatprep.subr.bf16.mxu0 %v3332
    %4762 = vmatpush1.bf16.msra.mxu0 %v3331
    %4763 = vmatprep.subr.bf16.mxu0 %v3336
    %4764 = vmatpush1.bf16.msra.mxu0 %v3335
    %4765 = vmatprep.subr.bf16.mxu0 %v3340
    %4766 = vmatpush1.bf16.msra.mxu0 %v3339
    %4767 = vmatprep.subr.bf16.mxu0 %v3344
    %4768 = vmatpush1.bf16.msra.mxu0 %v3343
    %4769 = vmatprep.subr.bf16.mxu0 %v3348
    %4770 = vmatpush1.bf16.msra.mxu0 %v3347
    %4771 = vmatprep.subr.bf16.mxu0 %v3352
    %4772 = vmatpush1.bf16.msra.mxu0 %v3351
    %4773 = vmatprep.subr.bf16.mxu0 %v3356
    %4774 = vmatpush1.bf16.msra.mxu0 %v3355
    %4775 = vmatprep.subr.bf16.mxu0 %v3360
    %4776 = vmatpush1.bf16.msra.mxu0 %v3359
    %4777 = vmatprep.mubr.bf16.mxu0 %v480
    %4778 = vmatmul.mubr.bf16.gmra.mrb[0].mxu0 %v479
    %v4779 = vpop.f32.mrb[0].mxu0
    %v4780 = vadd.f32 %v4667, %v4779
    %v4781 = vpop.f32.mrb[0].mxu0
    %v4782 = vadd.f32 %v4669, %v4781
    %v4783 = vpop.f32.mrb[0].mxu0
    %v4784 = vadd.f32 %v4671, %v4783
    %v4785 = vpop.f32.mrb[0].mxu0
    %v4786 = vadd.f32 %v4673, %v4785
    %4787 = vmatprep.mubr.bf16.mxu0 %v498
    %4788 = vmatmul.mubr.bf16.gmra.mrb[0].mxu0 %v497
    %v4789 = vpop.f32.mrb[0].mxu0
    %v4790 = vadd.f32 %v4677, %v4789
    %v4791 = vpop.f32.mrb[0].mxu0
    %v4792 = vadd.f32 %v4679, %v4791
    %v4793 = vpop.f32.mrb[0].mxu0
    %v4794 = vadd.f32 %v4681, %v4793
    %v4795 = vpop.f32.mrb[0].mxu0
    %v4796 = vadd.f32 %v4683, %v4795
    %4797 = vmatprep.mubr.bf16.mxu0 %v516
    %4798 = vmatmul.mubr.bf16.gmra.mrb[0].mxu0 %v515
    %v4799 = vpop.f32.mrb[0].mxu0
    %v4800 = vadd.f32 %v4687, %v4799
    %v4801 = vpop.f32.mrb[0].mxu0
    %v4802 = vadd.f32 %v4689, %v4801
    %v4803 = vpop.f32.mrb[0].mxu0
    %v4804 = vadd.f32 %v4691, %v4803
    %v4805 = vpop.f32.mrb[0].mxu0
    %v4806 = vadd.f32 %v4693, %v4805
    %4807 = vmatprep.mubr.bf16.mxu0 %v534
    %4808 = vmatmul.mubr.bf16.gmra.mrb[0].mxu0 %v533
    %v4809 = vpop.f32.mrb[0].mxu0
    %v4810 = vadd.f32 %v4697, %v4809
    %v4811 = vpop.f32.mrb[0].mxu0
    %v4812 = vadd.f32 %v4699, %v4811
    %v4813 = vpop.f32.mrb[0].mxu0
    %v4814 = vadd.f32 %v4701, %v4813
    %v4815 = vpop.f32.mrb[0].mxu0
    %v4816 = vadd.f32 %v4703, %v4815
    %4817 = vmatprep.mubr.bf16.mxu0 %v552
    %4818 = vmatmul.mubr.bf16.gmra.mrb[0].mxu0 %v551
    %v4819 = vpop.f32.mrb[0].mxu0
    %v4820 = vadd.f32 %v4707, %v4819
    %v4821 = vpop.f32.mrb[0].mxu0
    %v4822 = vadd.f32 %v4709, %v4821
    %v4823 = vpop.f32.mrb[0].mxu0
    %v4824 = vadd.f32 %v4711, %v4823
    %v4825 = vpop.f32.mrb[0].mxu0
    %v4826 = vadd.f32 %v4713, %v4825
    %4827 = vmatprep.mubr.bf16.mxu0 %v570
    %4828 = vmatmul.mubr.bf16.gmra.mrb[0].mxu0 %v569
    %v4829 = vpop.f32.mrb[0].mxu0
    %v4830 = vadd.f32 %v4717, %v4829
    %v4831 = vpop.f32.mrb[0].mxu0
    %v4832 = vadd.f32 %v4719, %v4831
    %v4833 = vpop.f32.mrb[0].mxu0
    %v4834 = vadd.f32 %v4721, %v4833
    %v4835 = vpop.f32.mrb[0].mxu0
    %v4836 = vadd.f32 %v4723, %v4835
    %4837 = vmatprep.mubr.bf16.mxu0 %v588
    %4838 = vmatmul.mubr.bf16.gmra.mrb[0].mxu0 %v587
    %v4839 = vpop.f32.mrb[0].mxu0
    %v4840 = vadd.f32 %v4727, %v4839
    %v4841 = vpop.f32.mrb[0].mxu0
    %v4842 = vadd.f32 %v4729, %v4841
    %v4843 = vpop.f32.mrb[0].mxu0
    %v4844 = vadd.f32 %v4731, %v4843
    %v4845 = vpop.f32.mrb[0].mxu0
    %v4846 = vadd.f32 %v4733, %v4845
    %4847 = vmatprep.mubr.bf16.mxu0 %v606
    %4848 = vmatmul.mubr.bf16.gmra.mrb[0].mxu0 %v605
    %v4849 = vpop.f32.mrb[0].mxu0
    %v4850 = vadd.f32 %v4737, %v4849
    %v4851 = vpop.f32.mrb[0].mxu0
    %v4852 = vadd.f32 %v4739, %v4851
    %v4853 = vpop.f32.mrb[0].mxu0
    %v4854 = vadd.f32 %v4741, %v4853
    %v4855 = vpop.f32.mrb[0].mxu0
    %v4856 = vadd.f32 %v4743, %v4855
    %4857 = vdwg.mxu0
    %4858 = vmatprep.subr.bf16.mxu0 %v3364
    %4859 = vmatpush1.bf16.msra.mxu0 %v3363
    %4860 = vmatprep.subr.bf16.mxu0 %v3368
    %4861 = vmatpush1.bf16.msra.mxu0 %v3367
    %4862 = vmatprep.subr.bf16.mxu0 %v3372
    %4863 = vmatpush1.bf16.msra.mxu0 %v3371
    %4864 = vmatprep.subr.bf16.mxu0 %v3376
    %4865 = vmatpush1.bf16.msra.mxu0 %v3375
    %4866 = vmatprep.subr.bf16.mxu0 %v3380
    %4867 = vmatpush1.bf16.msra.mxu0 %v3379
    %4868 = vmatprep.subr.bf16.mxu0 %v3384
    %4869 = vmatpush1.bf16.msra.mxu0 %v3383
    %4870 = vmatprep.subr.bf16.mxu0 %v3388
    %4871 = vmatpush1.bf16.msra.mxu0 %v3387
    %4872 = vmatprep.subr.bf16.mxu0 %v3392
    %4873 = vmatpush1.bf16.msra.mxu0 %v3391
    %4874 = vmatprep.subr.bf16.mxu0 %v3396
    %4875 = vmatpush1.bf16.msra.mxu0 %v3395
    %4876 = vmatprep.subr.bf16.mxu0 %v3400
    %4877 = vmatpush1.bf16.msra.mxu0 %v3399
    %4878 = vmatprep.subr.bf16.mxu0 %v3404
    %4879 = vmatpush1.bf16.msra.mxu0 %v3403
    %4880 = vmatprep.subr.bf16.mxu0 %v3408
    %4881 = vmatpush1.bf16.msra.mxu0 %v3407
    %4882 = vmatprep.subr.bf16.mxu0 %v3412
    %4883 = vmatpush1.bf16.msra.mxu0 %v3411
    %4884 = vmatprep.subr.bf16.mxu0 %v3416
    %4885 = vmatpush1.bf16.msra.mxu0 %v3415
    %4886 = vmatprep.subr.bf16.mxu0 %v3420
    %4887 = vmatpush1.bf16.msra.mxu0 %v3419
    %4888 = vmatprep.subr.bf16.mxu0 %v3424
    %4889 = vmatpush1.bf16.msra.mxu0 %v3423
    %4890 = vmatprep.mubr.bf16.mxu0 %v482
    %4891 = vmatmul.mubr.bf16.gmra.mrb[0].mxu0 %v481
    %v4892 = vpop.f32.mrb[0].mxu0
    %v4893 = vadd.f32 %v4780, %v4892
    %v4894 = vpop.f32.mrb[0].mxu0
    %v4895 = vadd.f32 %v4782, %v4894
    %v4896 = vpop.f32.mrb[0].mxu0
    %v4897 = vadd.f32 %v4784, %v4896
    %v4898 = vpop.f32.mrb[0].mxu0
    %v4899 = vadd.f32 %v4786, %v4898
    %4900 = vmatprep.mubr.bf16.mxu0 %v500
    %4901 = vmatmul.mubr.bf16.gmra.mrb[0].mxu0 %v499
    %v4902 = vpop.f32.mrb[0].mxu0
    %v4903 = vadd.f32 %v4790, %v4902
    %v4904 = vpop.f32.mrb[0].mxu0
    %v4905 = vadd.f32 %v4792, %v4904
    %v4906 = vpop.f32.mrb[0].mxu0
    %v4907 = vadd.f32 %v4794, %v4906
    %v4908 = vpop.f32.mrb[0].mxu0
    %v4909 = vadd.f32 %v4796, %v4908
    %4910 = vmatprep.mubr.bf16.mxu0 %v518
    %4911 = vmatmul.mubr.bf16.gmra.mrb[0].mxu0 %v517
    %v4912 = vpop.f32.mrb[0].mxu0
    %v4913 = vadd.f32 %v4800, %v4912
    %v4914 = vpop.f32.mrb[0].mxu0
    %v4915 = vadd.f32 %v4802, %v4914
    %v4916 = vpop.f32.mrb[0].mxu0
    %v4917 = vadd.f32 %v4804, %v4916
    %v4918 = vpop.f32.mrb[0].mxu0
    %v4919 = vadd.f32 %v4806, %v4918
    %4920 = vmatprep.mubr.bf16.mxu0 %v536
    %4921 = vmatmul.mubr.bf16.gmra.mrb[0].mxu0 %v535
    %v4922 = vpop.f32.mrb[0].mxu0
    %v4923 = vadd.f32 %v4810, %v4922
    %v4924 = vpop.f32.mrb[0].mxu0
    %v4925 = vadd.f32 %v4812, %v4924
    %v4926 = vpop.f32.mrb[0].mxu0
    %v4927 = vadd.f32 %v4814, %v4926
    %v4928 = vpop.f32.mrb[0].mxu0
    %v4929 = vadd.f32 %v4816, %v4928
    %4930 = vmatprep.mubr.bf16.mxu0 %v554
    %4931 = vmatmul.mubr.bf16.gmra.mrb[0].mxu0 %v553
    %v4932 = vpop.f32.mrb[0].mxu0
    %v4933 = vadd.f32 %v4820, %v4932
    %v4934 = vpop.f32.mrb[0].mxu0
    %v4935 = vadd.f32 %v4822, %v4934
    %v4936 = vpop.f32.mrb[0].mxu0
    %v4937 = vadd.f32 %v4824, %v4936
    %v4938 = vpop.f32.mrb[0].mxu0
    %v4939 = vadd.f32 %v4826, %v4938
    %4940 = vmatprep.mubr.bf16.mxu0 %v572
    %4941 = vmatmul.mubr.bf16.gmra.mrb[0].mxu0 %v571
    %v4942 = vpop.f32.mrb[0].mxu0
    %v4943 = vadd.f32 %v4830, %v4942
    %v4944 = vpop.f32.mrb[0].mxu0
    %v4945 = vadd.f32 %v4832, %v4944
    %v4946 = vpop.f32.mrb[0].mxu0
    %v4947 = vadd.f32 %v4834, %v4946
    %v4948 = vpop.f32.mrb[0].mxu0
    %v4949 = vadd.f32 %v4836, %v4948
    %4950 = vmatprep.mubr.bf16.mxu0 %v590
    %4951 = vmatmul.mubr.bf16.gmra.mrb[0].mxu0 %v589
    %v4952 = vpop.f32.mrb[0].mxu0
    %v4953 = vadd.f32 %v4840, %v4952
    %v4954 = vpop.f32.mrb[0].mxu0
    %v4955 = vadd.f32 %v4842, %v4954
    %v4956 = vpop.f32.mrb[0].mxu0
    %v4957 = vadd.f32 %v4844, %v4956
    %v4958 = vpop.f32.mrb[0].mxu0
    %v4959 = vadd.f32 %v4846, %v4958
    %4960 = vmatprep.mubr.bf16.mxu0 %v608
    %4961 = vmatmul.mubr.bf16.gmra.mrb[0].mxu0 %v607
    %v4962 = vpop.f32.mrb[0].mxu0
    %v4963 = vadd.f32 %v4850, %v4962
    %v4964 = vpop.f32.mrb[0].mxu0
    %v4965 = vadd.f32 %v4852, %v4964
    %v4966 = vpop.f32.mrb[0].mxu0
    %v4967 = vadd.f32 %v4854, %v4966
    %v4968 = vpop.f32.mrb[0].mxu0
    %v4969 = vadd.f32 %v4856, %v4968
    %4970 = vdwg.mxu0
    %4971 = vmatprep.subr.bf16.mxu0 %v3428
    %4972 = vmatpush1.bf16.msra.mxu0 %v3427
    %4973 = vmatprep.subr.bf16.mxu0 %v3432
    %4974 = vmatpush1.bf16.msra.mxu0 %v3431
    %4975 = vmatprep.subr.bf16.mxu0 %v3436
    %4976 = vmatpush1.bf16.msra.mxu0 %v3435
    %4977 = vmatprep.subr.bf16.mxu0 %v3440
    %4978 = vmatpush1.bf16.msra.mxu0 %v3439
    %4979 = vmatprep.subr.bf16.mxu0 %v3444
    %4980 = vmatpush1.bf16.msra.mxu0 %v3443
    %4981 = vmatprep.subr.bf16.mxu0 %v3448
    %4982 = vmatpush1.bf16.msra.mxu0 %v3447
    %4983 = vmatprep.subr.bf16.mxu0 %v3452
    %4984 = vmatpush1.bf16.msra.mxu0 %v3451
    %4985 = vmatprep.subr.bf16.mxu0 %v3456
    %4986 = vmatpush1.bf16.msra.mxu0 %v3455
    %4987 = vmatprep.subr.bf16.mxu0 %v3460
    %4988 = vmatpush1.bf16.msra.mxu0 %v3459
    %4989 = vmatprep.subr.bf16.mxu0 %v3464
    %4990 = vmatpush1.bf16.msra.mxu0 %v3463
    %4991 = vmatprep.subr.bf16.mxu0 %v3468
    %4992 = vmatpush1.bf16.msra.mxu0 %v3467
    %4993 = vmatprep.subr.bf16.mxu0 %v3472
    %4994 = vmatpush1.bf16.msra.mxu0 %v3471
    %4995 = vmatprep.subr.bf16.mxu0 %v3476
    %4996 = vmatpush1.bf16.msra.mxu0 %v3475
    %4997 = vmatprep.subr.bf16.mxu0 %v3480
    %4998 = vmatpush1.bf16.msra.mxu0 %v3479
    %4999 = vmatprep.subr.bf16.mxu0 %v3484
    %5000 = vmatpush1.bf16.msra.mxu0 %v3483
    %5001 = vmatprep.subr.bf16.mxu0 %v3488
    %5002 = vmatpush1.bf16.msra.mxu0 %v3487
    %5003 = vmatprep.mubr.bf16.mxu0 %v484
    %5004 = vmatmul.mubr.bf16.gmra.mrb[0].mxu0 %v483
    %v5005 = vpop.f32.mrb[0].mxu0
    %v5006 = vadd.f32 %v4893, %v5005
    %v5007 = vpop.f32.mrb[0].mxu0
    %v5008 = vadd.f32 %v4895, %v5007
    %v5009 = vpop.f32.mrb[0].mxu0
    %v5010 = vadd.f32 %v4897, %v5009
    %v5011 = vpop.f32.mrb[0].mxu0
    %v5012 = vadd.f32 %v4899, %v5011
    %5013 = vmatprep.mubr.bf16.mxu0 %v502
    %5014 = vmatmul.mubr.bf16.gmra.mrb[0].mxu0 %v501
    %v5015 = vpop.f32.mrb[0].mxu0
    %v5016 = vadd.f32 %v4903, %v5015
    %v5017 = vpop.f32.mrb[0].mxu0
    %v5018 = vadd.f32 %v4905, %v5017
    %v5019 = vpop.f32.mrb[0].mxu0
    %v5020 = vadd.f32 %v4907, %v5019
    %v5021 = vpop.f32.mrb[0].mxu0
    %v5022 = vadd.f32 %v4909, %v5021
    %5023 = vmatprep.mubr.bf16.mxu0 %v520
    %5024 = vmatmul.mubr.bf16.gmra.mrb[0].mxu0 %v519
    %v5025 = vpop.f32.mrb[0].mxu0
    %v5026 = vadd.f32 %v4913, %v5025
    %v5027 = vpop.f32.mrb[0].mxu0
    %v5028 = vadd.f32 %v4915, %v5027
    %v5029 = vpop.f32.mrb[0].mxu0
    %v5030 = vadd.f32 %v4917, %v5029
    %v5031 = vpop.f32.mrb[0].mxu0
    %v5032 = vadd.f32 %v4919, %v5031
    %5033 = vmatprep.mubr.bf16.mxu0 %v538
    %5034 = vmatmul.mubr.bf16.gmra.mrb[0].mxu0 %v537
    %v5035 = vpop.f32.mrb[0].mxu0
    %v5036 = vadd.f32 %v4923, %v5035
    %v5037 = vpop.f32.mrb[0].mxu0
    %v5038 = vadd.f32 %v4925, %v5037
    %v5039 = vpop.f32.mrb[0].mxu0
    %v5040 = vadd.f32 %v4927, %v5039
    %v5041 = vpop.f32.mrb[0].mxu0
    %v5042 = vadd.f32 %v4929, %v5041
    %5043 = vmatprep.mubr.bf16.mxu0 %v556
    %5044 = vmatmul.mubr.bf16.gmra.mrb[0].mxu0 %v555
    %v5045 = vpop.f32.mrb[0].mxu0
    %v5046 = vadd.f32 %v4933, %v5045
    %v5047 = vpop.f32.mrb[0].mxu0
    %v5048 = vadd.f32 %v4935, %v5047
    %v5049 = vpop.f32.mrb[0].mxu0
    %v5050 = vadd.f32 %v4937, %v5049
    %v5051 = vpop.f32.mrb[0].mxu0
    %v5052 = vadd.f32 %v4939, %v5051
    %5053 = vmatprep.mubr.bf16.mxu0 %v574
    %5054 = vmatmul.mubr.bf16.gmra.mrb[0].mxu0 %v573
    %v5055 = vpop.f32.mrb[0].mxu0
    %v5056 = vadd.f32 %v4943, %v5055
    %v5057 = vpop.f32.mrb[0].mxu0
    %v5058 = vadd.f32 %v4945, %v5057
    %v5059 = vpop.f32.mrb[0].mxu0
    %v5060 = vadd.f32 %v4947, %v5059
    %v5061 = vpop.f32.mrb[0].mxu0
    %v5062 = vadd.f32 %v4949, %v5061
    %5063 = vmatprep.mubr.bf16.mxu0 %v592
    %5064 = vmatmul.mubr.bf16.gmra.mrb[0].mxu0 %v591
    %v5065 = vpop.f32.mrb[0].mxu0
    %v5066 = vadd.f32 %v4953, %v5065
    %v5067 = vpop.f32.mrb[0].mxu0
    %v5068 = vadd.f32 %v4955, %v5067
    %v5069 = vpop.f32.mrb[0].mxu0
    %v5070 = vadd.f32 %v4957, %v5069
    %v5071 = vpop.f32.mrb[0].mxu0
    %v5072 = vadd.f32 %v4959, %v5071
    %5073 = vmatprep.mubr.bf16.mxu0 %v610
    %5074 = vmatmul.mubr.bf16.gmra.mrb[0].mxu0 %v609
    %v5075 = vpop.f32.mrb[0].mxu0
    %v5076 = vadd.f32 %v4963, %v5075
    %v5077 = vpop.f32.mrb[0].mxu0
    %v5078 = vadd.f32 %v4965, %v5077
    %v5079 = vpop.f32.mrb[0].mxu0
    %v5080 = vadd.f32 %v4967, %v5079
    %v5081 = vpop.f32.mrb[0].mxu0
    %v5082 = vadd.f32 %v4969, %v5081
    %5083 = vdwg.mxu0
    %5084 = vmatprep.subr.bf16.mxu0 %v2918
    %5085 = vmatpush1.bf16.msra.mxu0 %v2917
    %5086 = vmatprep.subr.bf16.mxu0 %v2922
    %5087 = vmatpush1.bf16.msra.mxu0 %v2921
    %5088 = vmatprep.subr.bf16.mxu0 %v2926
    %5089 = vmatpush1.bf16.msra.mxu0 %v2925
    %5090 = vmatprep.subr.bf16.mxu0 %v2930
    %5091 = vmatpush1.bf16.msra.mxu0 %v2929
    %5092 = vmatprep.subr.bf16.mxu0 %v2934
    %5093 = vmatpush1.bf16.msra.mxu0 %v2933
    %5094 = vmatprep.subr.bf16.mxu0 %v2938
    %5095 = vmatpush1.bf16.msra.mxu0 %v2937
    %5096 = vmatprep.subr.bf16.mxu0 %v2942
    %5097 = vmatpush1.bf16.msra.mxu0 %v2941
    %5098 = vmatprep.subr.bf16.mxu0 %v2946
    %5099 = vmatpush1.bf16.msra.mxu0 %v2945
    %5100 = vmatprep.subr.bf16.mxu0 %v2950
    %5101 = vmatpush1.bf16.msra.mxu0 %v2949
    %5102 = vmatprep.subr.bf16.mxu0 %v2954
    %5103 = vmatpush1.bf16.msra.mxu0 %v2953
    %5104 = vmatprep.subr.bf16.mxu0 %v2958
    %5105 = vmatpush1.bf16.msra.mxu0 %v2957
    %5106 = vmatprep.subr.bf16.mxu0 %v2962
    %5107 = vmatpush1.bf16.msra.mxu0 %v2961
    %5108 = vmatprep.subr.bf16.mxu0 %v2966
    %5109 = vmatpush1.bf16.msra.mxu0 %v2965
    %5110 = vmatprep.subr.bf16.mxu0 %v2970
    %5111 = vmatpush1.bf16.msra.mxu0 %v2969
    %5112 = vmatprep.subr.bf16.mxu0 %v2974
    %5113 = vmatpush1.bf16.msra.mxu0 %v2973
    %5114 = vmatprep.subr.bf16.mxu0 %v2978
    %5115 = vmatpush1.bf16.msra.mxu0 %v2977
    %5116 = vmatprep.mubr.bf16.mxu0 %v468
    %5117 = vmatmul.mubr.bf16.gmra.mrb[0].mxu0 %v467
    %v5118 = vpop.f32.mrb[0].mxu0
    %v5119 = vadd.f32 0.0, %v5118
    %v5120 = vpop.f32.mrb[0].mxu0
    %v5121 = vadd.f32 0.0, %v5120
    %v5122 = vpop.f32.mrb[0].mxu0
    %v5123 = vadd.f32 0.0, %v5122
    %v5124 = vpop.f32.mrb[0].mxu0
    %v5125 = vadd.f32 0.0, %v5124
    %5126 = vmatprep.mubr.bf16.mxu0 %v486
    %5127 = vmatmul.mubr.bf16.gmra.mrb[0].mxu0 %v485
    %v5128 = vpop.f32.mrb[0].mxu0
    %v5129 = vadd.f32 0.0, %v5128
    %v5130 = vpop.f32.mrb[0].mxu0
    %v5131 = vadd.f32 0.0, %v5130
    %v5132 = vpop.f32.mrb[0].mxu0
    %v5133 = vadd.f32 0.0, %v5132
    %v5134 = vpop.f32.mrb[0].mxu0
    %v5135 = vadd.f32 0.0, %v5134
    %5136 = vmatprep.mubr.bf16.mxu0 %v504
    %5137 = vmatmul.mubr.bf16.gmra.mrb[0].mxu0 %v503
    %v5138 = vpop.f32.mrb[0].mxu0
    %v5139 = vadd.f32 0.0, %v5138
    %v5140 = vpop.f32.mrb[0].mxu0
    %v5141 = vadd.f32 0.0, %v5140
    %v5142 = vpop.f32.mrb[0].mxu0
    %v5143 = vadd.f32 0.0, %v5142
    %v5144 = vpop.f32.mrb[0].mxu0
    %v5145 = vadd.f32 0.0, %v5144
    %5146 = vmatprep.mubr.bf16.mxu0 %v522
    %5147 = vmatmul.mubr.bf16.gmra.mrb[0].mxu0 %v521
    %v5148 = vpop.f32.mrb[0].mxu0
    %v5149 = vadd.f32 0.0, %v5148
    %v5150 = vpop.f32.mrb[0].mxu0
    %v5151 = vadd.f32 0.0, %v5150
    %v5152 = vpop.f32.mrb[0].mxu0
    %v5153 = vadd.f32 0.0, %v5152
    %v5154 = vpop.f32.mrb[0].mxu0
    %v5155 = vadd.f32 0.0, %v5154
    %5156 = vmatprep.mubr.bf16.mxu0 %v540
    %5157 = vmatmul.mubr.bf16.gmra.mrb[0].mxu0 %v539
    %v5158 = vpop.f32.mrb[0].mxu0
    %v5159 = vadd.f32 0.0, %v5158
    %v5160 = vpop.f32.mrb[0].mxu0
    %v5161 = vadd.f32 0.0, %v5160
    %v5162 = vpop.f32.mrb[0].mxu0
    %v5163 = vadd.f32 0.0, %v5162
    %v5164 = vpop.f32.mrb[0].mxu0
    %v5165 = vadd.f32 0.0, %v5164
    %5166 = vmatprep.mubr.bf16.mxu0 %v558
    %5167 = vmatmul.mubr.bf16.gmra.mrb[0].mxu0 %v557
    %v5168 = vpop.f32.mrb[0].mxu0
    %v5169 = vadd.f32 0.0, %v5168
    %v5170 = vpop.f32.mrb[0].mxu0
    %v5171 = vadd.f32 0.0, %v5170
    %v5172 = vpop.f32.mrb[0].mxu0
    %v5173 = vadd.f32 0.0, %v5172
    %v5174 = vpop.f32.mrb[0].mxu0
    %v5175 = vadd.f32 0.0, %v5174
    %5176 = vmatprep.mubr.bf16.mxu0 %v576
    %5177 = vmatmul.mubr.bf16.gmra.mrb[0].mxu0 %v575
    %v5178 = vpop.f32.mrb[0].mxu0
    %v5179 = vadd.f32 0.0, %v5178
    %v5180 = vpop.f32.mrb[0].mxu0
    %v5181 = vadd.f32 0.0, %v5180
    %v5182 = vpop.f32.mrb[0].mxu0
    %v5183 = vadd.f32 0.0, %v5182
    %v5184 = vpop.f32.mrb[0].mxu0
    %v5185 = vadd.f32 0.0, %v5184
    %5186 = vmatprep.mubr.bf16.mxu0 %v594
    %5187 = vmatmul.mubr.bf16.gmra.mrb[0].mxu0 %v593
    %v5188 = vpop.f32.mrb[0].mxu0
    %v5189 = vadd.f32 0.0, %v5188
    %v5190 = vpop.f32.mrb[0].mxu0
    %v5191 = vadd.f32 0.0, %v5190
    %v5192 = vpop.f32.mrb[0].mxu0
    %v5193 = vadd.f32 0.0, %v5192
    %v5194 = vpop.f32.mrb[0].mxu0
    %v5195 = vadd.f32 0.0, %v5194
    %5196 = vdwg.mxu0
    %5197 = vmatprep.subr.bf16.mxu0 %v2982
    %5198 = vmatpush1.bf16.msra.mxu0 %v2981
    %5199 = vmatprep.subr.bf16.mxu0 %v2986
    %5200 = vmatpush1.bf16.msra.mxu0 %v2985
    %5201 = vmatprep.subr.bf16.mxu0 %v2990
    %5202 = vmatpush1.bf16.msra.mxu0 %v2989
    %5203 = vmatprep.subr.bf16.mxu0 %v2994
    %5204 = vmatpush1.bf16.msra.mxu0 %v2993
    %5205 = vmatprep.subr.bf16.mxu0 %v2998
    %5206 = vmatpush1.bf16.msra.mxu0 %v2997
    %5207 = vmatprep.subr.bf16.mxu0 %v3002
    %5208 = vmatpush1.bf16.msra.mxu0 %v3001
    %5209 = vmatprep.subr.bf16.mxu0 %v3006
    %5210 = vmatpush1.bf16.msra.mxu0 %v3005
    %5211 = vmatprep.subr.bf16.mxu0 %v3010
    %5212 = vmatpush1.bf16.msra.mxu0 %v3009
    %5213 = vmatprep.subr.bf16.mxu0 %v3014
    %5214 = vmatpush1.bf16.msra.mxu0 %v3013
    %5215 = vmatprep.subr.bf16.mxu0 %v3018
    %5216 = vmatpush1.bf16.msra.mxu0 %v3017
    %5217 = vmatprep.subr.bf16.mxu0 %v3022
    %5218 = vmatpush1.bf16.msra.mxu0 %v3021
    %5219 = vmatprep.subr.bf16.mxu0 %v3026
    %5220 = vmatpush1.bf16.msra.mxu0 %v3025
    %5221 = vmatprep.subr.bf16.mxu0 %v3030
    %5222 = vmatpush1.bf16.msra.mxu0 %v3029
    %5223 = vmatprep.subr.bf16.mxu0 %v3034
    %5224 = vmatpush1.bf16.msra.mxu0 %v3033
    %5225 = vmatprep.subr.bf16.mxu0 %v3038
    %5226 = vmatpush1.bf16.msra.mxu0 %v3037
    %5227 = vmatprep.subr.bf16.mxu0 %v3042
    %5228 = vmatpush1.bf16.msra.mxu0 %v3041
    %5229 = vmatprep.mubr.bf16.mxu0 %v470
    %5230 = vmatmul.mubr.bf16.gmra.mrb[0].mxu0 %v469
    %v5231 = vpop.f32.mrb[0].mxu0
    %v5232 = vadd.f32 %v5119, %v5231
    %v5233 = vpop.f32.mrb[0].mxu0
    %v5234 = vadd.f32 %v5121, %v5233
    %v5235 = vpop.f32.mrb[0].mxu0
    %v5236 = vadd.f32 %v5123, %v5235
    %v5237 = vpop.f32.mrb[0].mxu0
    %v5238 = vadd.f32 %v5125, %v5237
    %5239 = vmatprep.mubr.bf16.mxu0 %v488
    %5240 = vmatmul.mubr.bf16.gmra.mrb[0].mxu0 %v487
    %v5241 = vpop.f32.mrb[0].mxu0
    %v5242 = vadd.f32 %v5129, %v5241
    %v5243 = vpop.f32.mrb[0].mxu0
    %v5244 = vadd.f32 %v5131, %v5243
    %v5245 = vpop.f32.mrb[0].mxu0
    %v5246 = vadd.f32 %v5133, %v5245
    %v5247 = vpop.f32.mrb[0].mxu0
    %v5248 = vadd.f32 %v5135, %v5247
    %5249 = vmatprep.mubr.bf16.mxu0 %v506
    %5250 = vmatmul.mubr.bf16.gmra.mrb[0].mxu0 %v505
    %v5251 = vpop.f32.mrb[0].mxu0
    %v5252 = vadd.f32 %v5139, %v5251
    %v5253 = vpop.f32.mrb[0].mxu0
    %v5254 = vadd.f32 %v5141, %v5253
    %v5255 = vpop.f32.mrb[0].mxu0
    %v5256 = vadd.f32 %v5143, %v5255
    %v5257 = vpop.f32.mrb[0].mxu0
    %v5258 = vadd.f32 %v5145, %v5257
    %5259 = vmatprep.mubr.bf16.mxu0 %v524
    %5260 = vmatmul.mubr.bf16.gmra.mrb[0].mxu0 %v523
    %v5261 = vpop.f32.mrb[0].mxu0
    %v5262 = vadd.f32 %v5149, %v5261
    %v5263 = vpop.f32.mrb[0].mxu0
    %v5264 = vadd.f32 %v5151, %v5263
    %v5265 = vpop.f32.mrb[0].mxu0
    %v5266 = vadd.f32 %v5153, %v5265
    %v5267 = vpop.f32.mrb[0].mxu0
    %v5268 = vadd.f32 %v5155, %v5267
    %5269 = vmatprep.mubr.bf16.mxu0 %v542
    %5270 = vmatmul.mubr.bf16.gmra.mrb[0].mxu0 %v541
    %v5271 = vpop.f32.mrb[0].mxu0
    %v5272 = vadd.f32 %v5159, %v5271
    %v5273 = vpop.f32.mrb[0].mxu0
    %v5274 = vadd.f32 %v5161, %v5273
    %v5275 = vpop.f32.mrb[0].mxu0
    %v5276 = vadd.f32 %v5163, %v5275
    %v5277 = vpop.f32.mrb[0].mxu0
    %v5278 = vadd.f32 %v5165, %v5277
    %5279 = vmatprep.mubr.bf16.mxu0 %v560
    %5280 = vmatmul.mubr.bf16.gmra.mrb[0].mxu0 %v559
    %v5281 = vpop.f32.mrb[0].mxu0
    %v5282 = vadd.f32 %v5169, %v5281
    %v5283 = vpop.f32.mrb[0].mxu0
    %v5284 = vadd.f32 %v5171, %v5283
    %v5285 = vpop.f32.mrb[0].mxu0
    %v5286 = vadd.f32 %v5173, %v5285
    %v5287 = vpop.f32.mrb[0].mxu0
    %v5288 = vadd.f32 %v5175, %v5287
    %5289 = vmatprep.mubr.bf16.mxu0 %v578
    %5290 = vmatmul.mubr.bf16.gmra.mrb[0].mxu0 %v577
    %v5291 = vpop.f32.mrb[0].mxu0
    %v5292 = vadd.f32 %v5179, %v5291
    %v5293 = vpop.f32.mrb[0].mxu0
    %v5294 = vadd.f32 %v5181, %v5293
    %v5295 = vpop.f32.mrb[0].mxu0
    %v5296 = vadd.f32 %v5183, %v5295
    %v5297 = vpop.f32.mrb[0].mxu0
    %v5298 = vadd.f32 %v5185, %v5297
    %5299 = vmatprep.mubr.bf16.mxu0 %v596
    %5300 = vmatmul.mubr.bf16.gmra.mrb[0].mxu0 %v595
    %v5301 = vpop.f32.mrb[0].mxu0
    %v5302 = vadd.f32 %v5189, %v5301
    %v5303 = vpop.f32.mrb[0].mxu0
    %v5304 = vadd.f32 %v5191, %v5303
    %v5305 = vpop.f32.mrb[0].mxu0
    %v5306 = vadd.f32 %v5193, %v5305
    %v5307 = vpop.f32.mrb[0].mxu0
    %v5308 = vadd.f32 %v5195, %v5307
    %5309 = vdwg.mxu0
    %5310 = vmatprep.subr.bf16.mxu0 %v3046
    %5311 = vmatpush1.bf16.msra.mxu0 %v3045
    %5312 = vmatprep.subr.bf16.mxu0 %v3050
    %5313 = vmatpush1.bf16.msra.mxu0 %v3049
    %5314 = vmatprep.subr.bf16.mxu0 %v3054
    %5315 = vmatpush1.bf16.msra.mxu0 %v3053
    %5316 = vmatprep.subr.bf16.mxu0 %v3058
    %5317 = vmatpush1.bf16.msra.mxu0 %v3057
    %5318 = vmatprep.subr.bf16.mxu0 %v3062
    %5319 = vmatpush1.bf16.msra.mxu0 %v3061
    %5320 = vmatprep.subr.bf16.mxu0 %v3066
    %5321 = vmatpush1.bf16.msra.mxu0 %v3065
    %5322 = vmatprep.subr.bf16.mxu0 %v3070
    %5323 = vmatpush1.bf16.msra.mxu0 %v3069
    %5324 = vmatprep.subr.bf16.mxu0 %v3074
    %5325 = vmatpush1.bf16.msra.mxu0 %v3073
    %5326 = vmatprep.subr.bf16.mxu0 %v3078
    %5327 = vmatpush1.bf16.msra.mxu0 %v3077
    %5328 = vmatprep.subr.bf16.mxu0 %v3082
    %5329 = vmatpush1.bf16.msra.mxu0 %v3081
    %5330 = vmatprep.subr.bf16.mxu0 %v3086
    %5331 = vmatpush1.bf16.msra.mxu0 %v3085
    %5332 = vmatprep.subr.bf16.mxu0 %v3090
    %5333 = vmatpush1.bf16.msra.mxu0 %v3089
    %5334 = vmatprep.subr.bf16.mxu0 %v3094
    %5335 = vmatpush1.bf16.msra.mxu0 %v3093
    %5336 = vmatprep.subr.bf16.mxu0 %v3098
    %5337 = vmatpush1.bf16.msra.mxu0 %v3097
    %5338 = vmatprep.subr.bf16.mxu0 %v3102
    %5339 = vmatpush1.bf16.msra.mxu0 %v3101
    %5340 = vmatprep.subr.bf16.mxu0 %v3106
    %5341 = vmatpush1.bf16.msra.mxu0 %v3105
    %5342 = vmatprep.mubr.bf16.mxu0 %v472
    %5343 = vmatmul.mubr.bf16.gmra.mrb[0].mxu0 %v471
    %v5344 = vpop.f32.mrb[0].mxu0
    %v5345 = vadd.f32 %v5232, %v5344
    %v5346 = vpop.f32.mrb[0].mxu0
    %v5347 = vadd.f32 %v5234, %v5346
    %v5348 = vpop.f32.mrb[0].mxu0
    %v5349 = vadd.f32 %v5236, %v5348
    %v5350 = vpop.f32.mrb[0].mxu0
    %v5351 = vadd.f32 %v5238, %v5350
    %5352 = vmatprep.mubr.bf16.mxu0 %v490
    %5353 = vmatmul.mubr.bf16.gmra.mrb[0].mxu0 %v489
    %v5354 = vpop.f32.mrb[0].mxu0
    %v5355 = vadd.f32 %v5242, %v5354
    %v5356 = vpop.f32.mrb[0].mxu0
    %v5357 = vadd.f32 %v5244, %v5356
    %v5358 = vpop.f32.mrb[0].mxu0
    %v5359 = vadd.f32 %v5246, %v5358
    %v5360 = vpop.f32.mrb[0].mxu0
    %v5361 = vadd.f32 %v5248, %v5360
    %5362 = vmatprep.mubr.bf16.mxu0 %v508
    %5363 = vmatmul.mubr.bf16.gmra.mrb[0].mxu0 %v507
    %v5364 = vpop.f32.mrb[0].mxu0
    %v5365 = vadd.f32 %v5252, %v5364
    %v5366 = vpop.f32.mrb[0].mxu0
    %v5367 = vadd.f32 %v5254, %v5366
    %v5368 = vpop.f32.mrb[0].mxu0
    %v5369 = vadd.f32 %v5256, %v5368
    %v5370 = vpop.f32.mrb[0].mxu0
    %v5371 = vadd.f32 %v5258, %v5370
    %5372 = vmatprep.mubr.bf16.mxu0 %v526
    %5373 = vmatmul.mubr.bf16.gmra.mrb[0].mxu0 %v525
    %v5374 = vpop.f32.mrb[0].mxu0
    %v5375 = vadd.f32 %v5262, %v5374
    %v5376 = vpop.f32.mrb[0].mxu0
    %v5377 = vadd.f32 %v5264, %v5376
    %v5378 = vpop.f32.mrb[0].mxu0
    %v5379 = vadd.f32 %v5266, %v5378
    %v5380 = vpop.f32.mrb[0].mxu0
    %v5381 = vadd.f32 %v5268, %v5380
    %5382 = vmatprep.mubr.bf16.mxu0 %v544
    %5383 = vmatmul.mubr.bf16.gmra.mrb[0].mxu0 %v543
    %v5384 = vpop.f32.mrb[0].mxu0
    %v5385 = vadd.f32 %v5272, %v5384
    %v5386 = vpop.f32.mrb[0].mxu0
    %v5387 = vadd.f32 %v5274, %v5386
    %v5388 = vpop.f32.mrb[0].mxu0
    %v5389 = vadd.f32 %v5276, %v5388
    %v5390 = vpop.f32.mrb[0].mxu0
    %v5391 = vadd.f32 %v5278, %v5390
    %5392 = vmatprep.mubr.bf16.mxu0 %v562
    %5393 = vmatmul.mubr.bf16.gmra.mrb[0].mxu0 %v561
    %v5394 = vpop.f32.mrb[0].mxu0
    %v5395 = vadd.f32 %v5282, %v5394
    %v5396 = vpop.f32.mrb[0].mxu0
    %v5397 = vadd.f32 %v5284, %v5396
    %v5398 = vpop.f32.mrb[0].mxu0
    %v5399 = vadd.f32 %v5286, %v5398
    %v5400 = vpop.f32.mrb[0].mxu0
    %v5401 = vadd.f32 %v5288, %v5400
    %5402 = vmatprep.mubr.bf16.mxu0 %v580
    %5403 = vmatmul.mubr.bf16.gmra.mrb[0].mxu0 %v579
    %v5404 = vpop.f32.mrb[0].mxu0
    %v5405 = vadd.f32 %v5292, %v5404
    %v5406 = vpop.f32.mrb[0].mxu0
    %v5407 = vadd.f32 %v5294, %v5406
    %v5408 = vpop.f32.mrb[0].mxu0
    %v5409 = vadd.f32 %v5296, %v5408
    %v5410 = vpop.f32.mrb[0].mxu0
    %v5411 = vadd.f32 %v5298, %v5410
    %5412 = vmatprep.mubr.bf16.mxu0 %v598
    %5413 = vmatmul.mubr.bf16.gmra.mrb[0].mxu0 %v597
    %v5414 = vpop.f32.mrb[0].mxu0
    %v5415 = vadd.f32 %v5302, %v5414
    %v5416 = vpop.f32.mrb[0].mxu0
    %v5417 = vadd.f32 %v5304, %v5416
    %v5418 = vpop.f32.mrb[0].mxu0
    %v5419 = vadd.f32 %v5306, %v5418
    %v5420 = vpop.f32.mrb[0].mxu0
    %v5421 = vadd.f32 %v5308, %v5420
    %5422 = vdwg.mxu0
    %5423 = vmatprep.subr.bf16.mxu0 %v3110
    %5424 = vmatpush1.bf16.msra.mxu0 %v3109
    %5425 = vmatprep.subr.bf16.mxu0 %v3114
    %5426 = vmatpush1.bf16.msra.mxu0 %v3113
    %5427 = vmatprep.subr.bf16.mxu0 %v3118
    %5428 = vmatpush1.bf16.msra.mxu0 %v3117
    %5429 = vmatprep.subr.bf16.mxu0 %v3122
    %5430 = vmatpush1.bf16.msra.mxu0 %v3121
    %5431 = vmatprep.subr.bf16.mxu0 %v3126
    %5432 = vmatpush1.bf16.msra.mxu0 %v3125
    %5433 = vmatprep.subr.bf16.mxu0 %v3130
    %5434 = vmatpush1.bf16.msra.mxu0 %v3129
    %5435 = vmatprep.subr.bf16.mxu0 %v3134
    %5436 = vmatpush1.bf16.msra.mxu0 %v3133
    %5437 = vmatprep.subr.bf16.mxu0 %v3138
    %5438 = vmatpush1.bf16.msra.mxu0 %v3137
    %5439 = vmatprep.subr.bf16.mxu0 %v3142
    %5440 = vmatpush1.bf16.msra.mxu0 %v3141
    %5441 = vmatprep.subr.bf16.mxu0 %v3146
    %5442 = vmatpush1.bf16.msra.mxu0 %v3145
    %5443 = vmatprep.subr.bf16.mxu0 %v3150
    %5444 = vmatpush1.bf16.msra.mxu0 %v3149
    %5445 = vmatprep.subr.bf16.mxu0 %v3154
    %5446 = vmatpush1.bf16.msra.mxu0 %v3153
    %5447 = vmatprep.subr.bf16.mxu0 %v3158
    %5448 = vmatpush1.bf16.msra.mxu0 %v3157
    %5449 = vmatprep.subr.bf16.mxu0 %v3162
    %5450 = vmatpush1.bf16.msra.mxu0 %v3161
    %5451 = vmatprep.subr.bf16.mxu0 %v3166
    %5452 = vmatpush1.bf16.msra.mxu0 %v3165
    %5453 = vmatprep.subr.bf16.mxu0 %v3170
    %5454 = vmatpush1.bf16.msra.mxu0 %v3169
    %5455 = vmatprep.mubr.bf16.mxu0 %v474
    %5456 = vmatmul.mubr.bf16.gmra.mrb[0].mxu0 %v473
    %v5457 = vpop.f32.mrb[0].mxu0
    %v5458 = vadd.f32 %v5345, %v5457
    %v5459 = vpop.f32.mrb[0].mxu0
    %v5460 = vadd.f32 %v5347, %v5459
    %v5461 = vpop.f32.mrb[0].mxu0
    %v5462 = vadd.f32 %v5349, %v5461
    %v5463 = vpop.f32.mrb[0].mxu0
    %v5464 = vadd.f32 %v5351, %v5463
    %5465 = vmatprep.mubr.bf16.mxu0 %v492
    %5466 = vmatmul.mubr.bf16.gmra.mrb[0].mxu0 %v491
    %v5467 = vpop.f32.mrb[0].mxu0
    %v5468 = vadd.f32 %v5355, %v5467
    %v5469 = vpop.f32.mrb[0].mxu0
    %v5470 = vadd.f32 %v5357, %v5469
    %v5471 = vpop.f32.mrb[0].mxu0
    %v5472 = vadd.f32 %v5359, %v5471
    %v5473 = vpop.f32.mrb[0].mxu0
    %v5474 = vadd.f32 %v5361, %v5473
    %5475 = vmatprep.mubr.bf16.mxu0 %v510
    %5476 = vmatmul.mubr.bf16.gmra.mrb[0].mxu0 %v509
    %v5477 = vpop.f32.mrb[0].mxu0
    %v5478 = vadd.f32 %v5365, %v5477
    %v5479 = vpop.f32.mrb[0].mxu0
    %v5480 = vadd.f32 %v5367, %v5479
    %v5481 = vpop.f32.mrb[0].mxu0
    %v5482 = vadd.f32 %v5369, %v5481
    %v5483 = vpop.f32.mrb[0].mxu0
    %v5484 = vadd.f32 %v5371, %v5483
    %5485 = vmatprep.mubr.bf16.mxu0 %v528
    %5486 = vmatmul.mubr.bf16.gmra.mrb[0].mxu0 %v527
    %v5487 = vpop.f32.mrb[0].mxu0
    %v5488 = vadd.f32 %v5375, %v5487
    %v5489 = vpop.f32.mrb[0].mxu0
    %v5490 = vadd.f32 %v5377, %v5489
    %v5491 = vpop.f32.mrb[0].mxu0
    %v5492 = vadd.f32 %v5379, %v5491
    %v5493 = vpop.f32.mrb[0].mxu0
    %v5494 = vadd.f32 %v5381, %v5493
    %5495 = vmatprep.mubr.bf16.mxu0 %v546
    %5496 = vmatmul.mubr.bf16.gmra.mrb[0].mxu0 %v545
    %v5497 = vpop.f32.mrb[0].mxu0
    %v5498 = vadd.f32 %v5385, %v5497
    %v5499 = vpop.f32.mrb[0].mxu0
    %v5500 = vadd.f32 %v5387, %v5499
    %v5501 = vpop.f32.mrb[0].mxu0
    %v5502 = vadd.f32 %v5389, %v5501
    %v5503 = vpop.f32.mrb[0].mxu0
    %v5504 = vadd.f32 %v5391, %v5503
    %5505 = vmatprep.mubr.bf16.mxu0 %v564
    %5506 = vmatmul.mubr.bf16.gmra.mrb[0].mxu0 %v563
    %v5507 = vpop.f32.mrb[0].mxu0
    %v5508 = vadd.f32 %v5395, %v5507
    %v5509 = vpop.f32.mrb[0].mxu0
    %v5510 = vadd.f32 %v5397, %v5509
    %v5511 = vpop.f32.mrb[0].mxu0
    %v5512 = vadd.f32 %v5399, %v5511
    %v5513 = vpop.f32.mrb[0].mxu0
    %v5514 = vadd.f32 %v5401, %v5513
    %5515 = vmatprep.mubr.bf16.mxu0 %v582
    %5516 = vmatmul.mubr.bf16.gmra.mrb[0].mxu0 %v581
    %v5517 = vpop.f32.mrb[0].mxu0
    %v5518 = vadd.f32 %v5405, %v5517
    %v5519 = vpop.f32.mrb[0].mxu0
    %v5520 = vadd.f32 %v5407, %v5519
    %v5521 = vpop.f32.mrb[0].mxu0
    %v5522 = vadd.f32 %v5409, %v5521
    %v5523 = vpop.f32.mrb[0].mxu0
    %v5524 = vadd.f32 %v5411, %v5523
    %5525 = vmatprep.mubr.bf16.mxu0 %v600
    %5526 = vmatmul.mubr.bf16.gmra.mrb[0].mxu0 %v599
    %v5527 = vpop.f32.mrb[0].mxu0
    %v5528 = vadd.f32 %v5415, %v5527
    %v5529 = vpop.f32.mrb[0].mxu0
    %v5530 = vadd.f32 %v5417, %v5529
    %v5531 = vpop.f32.mrb[0].mxu0
    %v5532 = vadd.f32 %v5419, %v5531
    %v5533 = vpop.f32.mrb[0].mxu0
    %v5534 = vadd.f32 %v5421, %v5533
    %5535 = vdwg.mxu0
    %5536 = vmatprep.subr.bf16.mxu0 %v3174
    %5537 = vmatpush1.bf16.msra.mxu0 %v3173
    %5538 = vmatprep.subr.bf16.mxu0 %v3178
    %5539 = vmatpush1.bf16.msra.mxu0 %v3177
    %5540 = vmatprep.subr.bf16.mxu0 %v3182
    %5541 = vmatpush1.bf16.msra.mxu0 %v3181
    %5542 = vmatprep.subr.bf16.mxu0 %v3186
    %5543 = vmatpush1.bf16.msra.mxu0 %v3185
    %5544 = vmatprep.subr.bf16.mxu0 %v3190
    %5545 = vmatpush1.bf16.msra.mxu0 %v3189
    %5546 = vmatprep.subr.bf16.mxu0 %v3194
    %5547 = vmatpush1.bf16.msra.mxu0 %v3193
    %5548 = vmatprep.subr.bf16.mxu0 %v3198
    %5549 = vmatpush1.bf16.msra.mxu0 %v3197
    %5550 = vmatprep.subr.bf16.mxu0 %v3202
    %5551 = vmatpush1.bf16.msra.mxu0 %v3201
    %5552 = vmatprep.subr.bf16.mxu0 %v3206
    %5553 = vmatpush1.bf16.msra.mxu0 %v3205
    %5554 = vmatprep.subr.bf16.mxu0 %v3210
    %5555 = vmatpush1.bf16.msra.mxu0 %v3209
    %5556 = vmatprep.subr.bf16.mxu0 %v3214
    %5557 = vmatpush1.bf16.msra.mxu0 %v3213
    %5558 = vmatprep.subr.bf16.mxu0 %v3218
    %5559 = vmatpush1.bf16.msra.mxu0 %v3217
    %5560 = vmatprep.subr.bf16.mxu0 %v3222
    %5561 = vmatpush1.bf16.msra.mxu0 %v3221
    %5562 = vmatprep.subr.bf16.mxu0 %v3226
    %5563 = vmatpush1.bf16.msra.mxu0 %v3225
    %5564 = vmatprep.subr.bf16.mxu0 %v3230
    %5565 = vmatpush1.bf16.msra.mxu0 %v3229
    %5566 = vmatprep.subr.bf16.mxu0 %v3234
    %5567 = vmatpush1.bf16.msra.mxu0 %v3233
    %5568 = vmatprep.mubr.bf16.mxu0 %v476
    %5569 = vmatmul.mubr.bf16.gmra.mrb[0].mxu0 %v475
    %v5570 = vpop.f32.mrb[0].mxu0
    %v5571 = vadd.f32 %v5458, %v5570
    %v5572 = vpop.f32.mrb[0].mxu0
    %v5573 = vadd.f32 %v5460, %v5572
    %v5574 = vpop.f32.mrb[0].mxu0
    %v5575 = vadd.f32 %v5462, %v5574
    %v5576 = vpop.f32.mrb[0].mxu0
    %v5577 = vadd.f32 %v5464, %v5576
    %5578 = vmatprep.mubr.bf16.mxu0 %v494
    %5579 = vmatmul.mubr.bf16.gmra.mrb[0].mxu0 %v493
    %v5580 = vpop.f32.mrb[0].mxu0
    %v5581 = vadd.f32 %v5468, %v5580
    %v5582 = vpop.f32.mrb[0].mxu0
    %v5583 = vadd.f32 %v5470, %v5582
    %v5584 = vpop.f32.mrb[0].mxu0
    %v5585 = vadd.f32 %v5472, %v5584
    %v5586 = vpop.f32.mrb[0].mxu0
    %v5587 = vadd.f32 %v5474, %v5586
    %5588 = vmatprep.mubr.bf16.mxu0 %v512
    %5589 = vmatmul.mubr.bf16.gmra.mrb[0].mxu0 %v511
    %v5590 = vpop.f32.mrb[0].mxu0
    %v5591 = vadd.f32 %v5478, %v5590
    %v5592 = vpop.f32.mrb[0].mxu0
    %v5593 = vadd.f32 %v5480, %v5592
    %v5594 = vpop.f32.mrb[0].mxu0
    %v5595 = vadd.f32 %v5482, %v5594
    %v5596 = vpop.f32.mrb[0].mxu0
    %v5597 = vadd.f32 %v5484, %v5596
    %5598 = vmatprep.mubr.bf16.mxu0 %v530
    %5599 = vmatmul.mubr.bf16.gmra.mrb[0].mxu0 %v529
    %v5600 = vpop.f32.mrb[0].mxu0
    %v5601 = vadd.f32 %v5488, %v5600
    %v5602 = vpop.f32.mrb[0].mxu0
    %v5603 = vadd.f32 %v5490, %v5602
    %v5604 = vpop.f32.mrb[0].mxu0
    %v5605 = vadd.f32 %v5492, %v5604
    %v5606 = vpop.f32.mrb[0].mxu0
    %v5607 = vadd.f32 %v5494, %v5606
    %5608 = vmatprep.mubr.bf16.mxu0 %v548
    %5609 = vmatmul.mubr.bf16.gmra.mrb[0].mxu0 %v547
    %v5610 = vpop.f32.mrb[0].mxu0
    %v5611 = vadd.f32 %v5498, %v5610
    %v5612 = vpop.f32.mrb[0].mxu0
    %v5613 = vadd.f32 %v5500, %v5612
    %v5614 = vpop.f32.mrb[0].mxu0
    %v5615 = vadd.f32 %v5502, %v5614
    %v5616 = vpop.f32.mrb[0].mxu0
    %v5617 = vadd.f32 %v5504, %v5616
    %5618 = vmatprep.mubr.bf16.mxu0 %v566
    %5619 = vmatmul.mubr.bf16.gmra.mrb[0].mxu0 %v565
    %v5620 = vpop.f32.mrb[0].mxu0
    %v5621 = vadd.f32 %v5508, %v5620
    %v5622 = vpop.f32.mrb[0].mxu0
    %v5623 = vadd.f32 %v5510, %v5622
    %v5624 = vpop.f32.mrb[0].mxu0
    %v5625 = vadd.f32 %v5512, %v5624
    %v5626 = vpop.f32.mrb[0].mxu0
    %v5627 = vadd.f32 %v5514, %v5626
    %5628 = vmatprep.mubr.bf16.mxu0 %v584
    %5629 = vmatmul.mubr.bf16.gmra.mrb[0].mxu0 %v583
    %v5630 = vpop.f32.mrb[0].mxu0
    %v5631 = vadd.f32 %v5518, %v5630
    %v5632 = vpop.f32.mrb[0].mxu0
    %v5633 = vadd.f32 %v5520, %v5632
    %v5634 = vpop.f32.mrb[0].mxu0
    %v5635 = vadd.f32 %v5522, %v5634
    %v5636 = vpop.f32.mrb[0].mxu0
    %v5637 = vadd.f32 %v5524, %v5636
    %5638 = vmatprep.mubr.bf16.mxu0 %v602
    %5639 = vmatmul.mubr.bf16.gmra.mrb[0].mxu0 %v601
    %v5640 = vpop.f32.mrb[0].mxu0
    %v5641 = vadd.f32 %v5528, %v5640
    %v5642 = vpop.f32.mrb[0].mxu0
    %v5643 = vadd.f32 %v5530, %v5642
    %v5644 = vpop.f32.mrb[0].mxu0
    %v5645 = vadd.f32 %v5532, %v5644
    %v5646 = vpop.f32.mrb[0].mxu0
    %v5647 = vadd.f32 %v5534, %v5646
    %5648 = vdwg.mxu0
    %5649 = vmatprep.subr.bf16.mxu0 %v3238
    %5650 = vmatpush1.bf16.msra.mxu0 %v3237
    %5651 = vmatprep.subr.bf16.mxu0 %v3242
    %5652 = vmatpush1.bf16.msra.mxu0 %v3241
    %5653 = vmatprep.subr.bf16.mxu0 %v3246
    %5654 = vmatpush1.bf16.msra.mxu0 %v3245
    %5655 = vmatprep.subr.bf16.mxu0 %v3250
    %5656 = vmatpush1.bf16.msra.mxu0 %v3249
    %5657 = vmatprep.subr.bf16.mxu0 %v3254
    %5658 = vmatpush1.bf16.msra.mxu0 %v3253
    %5659 = vmatprep.subr.bf16.mxu0 %v3258
    %5660 = vmatpush1.bf16.msra.mxu0 %v3257
    %5661 = vmatprep.subr.bf16.mxu0 %v3262
    %5662 = vmatpush1.bf16.msra.mxu0 %v3261
    %5663 = vmatprep.subr.bf16.mxu0 %v3266
    %5664 = vmatpush1.bf16.msra.mxu0 %v3265
    %5665 = vmatprep.subr.bf16.mxu0 %v3270
    %5666 = vmatpush1.bf16.msra.mxu0 %v3269
    %5667 = vmatprep.subr.bf16.mxu0 %v3274
    %5668 = vmatpush1.bf16.msra.mxu0 %v3273
    %5669 = vmatprep.subr.bf16.mxu0 %v3278
    %5670 = vmatpush1.bf16.msra.mxu0 %v3277
    %5671 = vmatprep.subr.bf16.mxu0 %v3282
    %5672 = vmatpush1.bf16.msra.mxu0 %v3281
    %5673 = vmatprep.subr.bf16.mxu0 %v3286
    %5674 = vmatpush1.bf16.msra.mxu0 %v3285
    %5675 = vmatprep.subr.bf16.mxu0 %v3290
    %5676 = vmatpush1.bf16.msra.mxu0 %v3289
    %5677 = vmatprep.subr.bf16.mxu0 %v3294
    %5678 = vmatpush1.bf16.msra.mxu0 %v3293
    %5679 = vmatprep.subr.bf16.mxu0 %v3298
    %5680 = vmatpush1.bf16.msra.mxu0 %v3297
    %5681 = vmatprep.mubr.bf16.mxu0 %v478
    %5682 = vmatmul.mubr.bf16.gmra.mrb[0].mxu0 %v477
    %v5683 = vpop.f32.mrb[0].mxu0
    %v5684 = vadd.f32 %v5571, %v5683
    %v5685 = vpop.f32.mrb[0].mxu0
    %v5686 = vadd.f32 %v5573, %v5685
    %v5687 = vpop.f32.mrb[0].mxu0
    %v5688 = vadd.f32 %v5575, %v5687
    %v5689 = vpop.f32.mrb[0].mxu0
    %v5690 = vadd.f32 %v5577, %v5689
    %5691 = vmatprep.mubr.bf16.mxu0 %v496
    %5692 = vmatmul.mubr.bf16.gmra.mrb[0].mxu0 %v495
    %v5693 = vpop.f32.mrb[0].mxu0
    %v5694 = vadd.f32 %v5581, %v5693
    %v5695 = vpop.f32.mrb[0].mxu0
    %v5696 = vadd.f32 %v5583, %v5695
    %v5697 = vpop.f32.mrb[0].mxu0
    %v5698 = vadd.f32 %v5585, %v5697
    %v5699 = vpop.f32.mrb[0].mxu0
    %v5700 = vadd.f32 %v5587, %v5699
    %5701 = vmatprep.mubr.bf16.mxu0 %v514
    %5702 = vmatmul.mubr.bf16.gmra.mrb[0].mxu0 %v513
    %v5703 = vpop.f32.mrb[0].mxu0
    %v5704 = vadd.f32 %v5591, %v5703
    %v5705 = vpop.f32.mrb[0].mxu0
    %v5706 = vadd.f32 %v5593, %v5705
    %v5707 = vpop.f32.mrb[0].mxu0
    %v5708 = vadd.f32 %v5595, %v5707
    %v5709 = vpop.f32.mrb[0].mxu0
    %v5710 = vadd.f32 %v5597, %v5709
    %5711 = vmatprep.mubr.bf16.mxu0 %v532
    %5712 = vmatmul.mubr.bf16.gmra.mrb[0].mxu0 %v531
    %v5713 = vpop.f32.mrb[0].mxu0
    %v5714 = vadd.f32 %v5601, %v5713
    %v5715 = vpop.f32.mrb[0].mxu0
    %v5716 = vadd.f32 %v5603, %v5715
    %v5717 = vpop.f32.mrb[0].mxu0
    %v5718 = vadd.f32 %v5605, %v5717
    %v5719 = vpop.f32.mrb[0].mxu0
    %v5720 = vadd.f32 %v5607, %v5719
    %5721 = vmatprep.mubr.bf16.mxu0 %v550
    %5722 = vmatmul.mubr.bf16.gmra.mrb[0].mxu0 %v549
    %v5723 = vpop.f32.mrb[0].mxu0
    %v5724 = vadd.f32 %v5611, %v5723
    %v5725 = vpop.f32.mrb[0].mxu0
    %v5726 = vadd.f32 %v5613, %v5725
    %v5727 = vpop.f32.mrb[0].mxu0
    %v5728 = vadd.f32 %v5615, %v5727
    %v5729 = vpop.f32.mrb[0].mxu0
    %v5730 = vadd.f32 %v5617, %v5729
    %5731 = vmatprep.mubr.bf16.mxu0 %v568
    %5732 = vmatmul.mubr.bf16.gmra.mrb[0].mxu0 %v567
    %v5733 = vpop.f32.mrb[0].mxu0
    %v5734 = vadd.f32 %v5621, %v5733
    %v5735 = vpop.f32.mrb[0].mxu0
    %v5736 = vadd.f32 %v5623, %v5735
    %v5737 = vpop.f32.mrb[0].mxu0
    %v5738 = vadd.f32 %v5625, %v5737
    %v5739 = vpop.f32.mrb[0].mxu0
    %v5740 = vadd.f32 %v5627, %v5739
    %5741 = vmatprep.mubr.bf16.mxu0 %v586
    %5742 = vmatmul.mubr.bf16.gmra.mrb[0].mxu0 %v585
    %v5743 = vpop.f32.mrb[0].mxu0
    %v5744 = vadd.f32 %v5631, %v5743
    %v5745 = vpop.f32.mrb[0].mxu0
    %v5746 = vadd.f32 %v5633, %v5745
    %v5747 = vpop.f32.mrb[0].mxu0
    %v5748 = vadd.f32 %v5635, %v5747
    %v5749 = vpop.f32.mrb[0].mxu0
    %v5750 = vadd.f32 %v5637, %v5749
    %5751 = vmatprep.mubr.bf16.mxu0 %v604
    %5752 = vmatmul.mubr.bf16.gmra.mrb[0].mxu0 %v603
    %v5753 = vpop.f32.mrb[0].mxu0
    %v5754 = vadd.f32 %v5641, %v5753
    %v5755 = vpop.f32.mrb[0].mxu0
    %v5756 = vadd.f32 %v5643, %v5755
    %v5757 = vpop.f32.mrb[0].mxu0
    %v5758 = vadd.f32 %v5645, %v5757
    %v5759 = vpop.f32.mrb[0].mxu0
    %v5760 = vadd.f32 %v5647, %v5759
    %5761 = vdwg.mxu0
    %5762 = vmatprep.subr.bf16.mxu0 %v3302
    %5763 = vmatpush1.bf16.msra.mxu0 %v3301
    %5764 = vmatprep.subr.bf16.mxu0 %v3306
    %5765 = vmatpush1.bf16.msra.mxu0 %v3305
    %5766 = vmatprep.subr.bf16.mxu0 %v3310
    %5767 = vmatpush1.bf16.msra.mxu0 %v3309
    %5768 = vmatprep.subr.bf16.mxu0 %v3314
    %5769 = vmatpush1.bf16.msra.mxu0 %v3313
    %5770 = vmatprep.subr.bf16.mxu0 %v3318
    %5771 = vmatpush1.bf16.msra.mxu0 %v3317
    %5772 = vmatprep.subr.bf16.mxu0 %v3322
    %5773 = vmatpush1.bf16.msra.mxu0 %v3321
    %5774 = vmatprep.subr.bf16.mxu0 %v3326
    %5775 = vmatpush1.bf16.msra.mxu0 %v3325
    %5776 = vmatprep.subr.bf16.mxu0 %v3330
    %5777 = vmatpush1.bf16.msra.mxu0 %v3329
    %5778 = vmatprep.subr.bf16.mxu0 %v3334
    %5779 = vmatpush1.bf16.msra.mxu0 %v3333
    %5780 = vmatprep.subr.bf16.mxu0 %v3338
    %5781 = vmatpush1.bf16.msra.mxu0 %v3337
    %5782 = vmatprep.subr.bf16.mxu0 %v3342
    %5783 = vmatpush1.bf16.msra.mxu0 %v3341
    %5784 = vmatprep.subr.bf16.mxu0 %v3346
    %5785 = vmatpush1.bf16.msra.mxu0 %v3345
    %5786 = vmatprep.subr.bf16.mxu0 %v3350
    %5787 = vmatpush1.bf16.msra.mxu0 %v3349
    %5788 = vmatprep.subr.bf16.mxu0 %v3354
    %5789 = vmatpush1.bf16.msra.mxu0 %v3353
    %5790 = vmatprep.subr.bf16.mxu0 %v3358
    %5791 = vmatpush1.bf16.msra.mxu0 %v3357
    %5792 = vmatprep.subr.bf16.mxu0 %v3362
    %5793 = vmatpush1.bf16.msra.mxu0 %v3361
    %5794 = vmatprep.mubr.bf16.mxu0 %v480
    %5795 = vmatmul.mubr.bf16.gmra.mrb[0].mxu0 %v479
    %v5796 = vpop.f32.mrb[0].mxu0
    %v5797 = vadd.f32 %v5684, %v5796
    %v5798 = vpop.f32.mrb[0].mxu0
    %v5799 = vadd.f32 %v5686, %v5798
    %v5800 = vpop.f32.mrb[0].mxu0
    %v5801 = vadd.f32 %v5688, %v5800
    %v5802 = vpop.f32.mrb[0].mxu0
    %v5803 = vadd.f32 %v5690, %v5802
    %5804 = vmatprep.mubr.bf16.mxu0 %v498
    %5805 = vmatmul.mubr.bf16.gmra.mrb[0].mxu0 %v497
    %v5806 = vpop.f32.mrb[0].mxu0
    %v5807 = vadd.f32 %v5694, %v5806
    %v5808 = vpop.f32.mrb[0].mxu0
    %v5809 = vadd.f32 %v5696, %v5808
    %v5810 = vpop.f32.mrb[0].mxu0
    %v5811 = vadd.f32 %v5698, %v5810
    %v5812 = vpop.f32.mrb[0].mxu0
    %v5813 = vadd.f32 %v5700, %v5812
    %5814 = vmatprep.mubr.bf16.mxu0 %v516
    %5815 = vmatmul.mubr.bf16.gmra.mrb[0].mxu0 %v515
    %v5816 = vpop.f32.mrb[0].mxu0
    %v5817 = vadd.f32 %v5704, %v5816
    %v5818 = vpop.f32.mrb[0].mxu0
    %v5819 = vadd.f32 %v5706, %v5818
    %v5820 = vpop.f32.mrb[0].mxu0
    %v5821 = vadd.f32 %v5708, %v5820
    %v5822 = vpop.f32.mrb[0].mxu0
    %v5823 = vadd.f32 %v5710, %v5822
    %5824 = vmatprep.mubr.bf16.mxu0 %v534
    %5825 = vmatmul.mubr.bf16.gmra.mrb[0].mxu0 %v533
    %v5826 = vpop.f32.mrb[0].mxu0
    %v5827 = vadd.f32 %v5714, %v5826
    %v5828 = vpop.f32.mrb[0].mxu0
    %v5829 = vadd.f32 %v5716, %v5828
    %v5830 = vpop.f32.mrb[0].mxu0
    %v5831 = vadd.f32 %v5718, %v5830
    %v5832 = vpop.f32.mrb[0].mxu0
    %v5833 = vadd.f32 %v5720, %v5832
    %5834 = vmatprep.mubr.bf16.mxu0 %v552
    %5835 = vmatmul.mubr.bf16.gmra.mrb[0].mxu0 %v551
    %v5836 = vpop.f32.mrb[0].mxu0
    %v5837 = vadd.f32 %v5724, %v5836
    %v5838 = vpop.f32.mrb[0].mxu0
    %v5839 = vadd.f32 %v5726, %v5838
    %v5840 = vpop.f32.mrb[0].mxu0
    %v5841 = vadd.f32 %v5728, %v5840
    %v5842 = vpop.f32.mrb[0].mxu0
    %v5843 = vadd.f32 %v5730, %v5842
    %5844 = vmatprep.mubr.bf16.mxu0 %v570
    %5845 = vmatmul.mubr.bf16.gmra.mrb[0].mxu0 %v569
    %v5846 = vpop.f32.mrb[0].mxu0
    %v5847 = vadd.f32 %v5734, %v5846
    %v5848 = vpop.f32.mrb[0].mxu0
    %v5849 = vadd.f32 %v5736, %v5848
    %v5850 = vpop.f32.mrb[0].mxu0
    %v5851 = vadd.f32 %v5738, %v5850
    %v5852 = vpop.f32.mrb[0].mxu0
    %v5853 = vadd.f32 %v5740, %v5852
    %5854 = vmatprep.mubr.bf16.mxu0 %v588
    %5855 = vmatmul.mubr.bf16.gmra.mrb[0].mxu0 %v587
    %v5856 = vpop.f32.mrb[0].mxu0
    %v5857 = vadd.f32 %v5744, %v5856
    %v5858 = vpop.f32.mrb[0].mxu0
    %v5859 = vadd.f32 %v5746, %v5858
    %v5860 = vpop.f32.mrb[0].mxu0
    %v5861 = vadd.f32 %v5748, %v5860
    %v5862 = vpop.f32.mrb[0].mxu0
    %v5863 = vadd.f32 %v5750, %v5862
    %5864 = vmatprep.mubr.bf16.mxu0 %v606
    %5865 = vmatmul.mubr.bf16.gmra.mrb[0].mxu0 %v605
    %v5866 = vpop.f32.mrb[0].mxu0
    %v5867 = vadd.f32 %v5754, %v5866
    %v5868 = vpop.f32.mrb[0].mxu0
    %v5869 = vadd.f32 %v5756, %v5868
    %v5870 = vpop.f32.mrb[0].mxu0
    %v5871 = vadd.f32 %v5758, %v5870
    %v5872 = vpop.f32.mrb[0].mxu0
    %v5873 = vadd.f32 %v5760, %v5872
    %5874 = vdwg.mxu0
    %5875 = vmatprep.subr.bf16.mxu0 %v3366
    %5876 = vmatpush1.bf16.msra.mxu0 %v3365
    %5877 = vmatprep.subr.bf16.mxu0 %v3370
    %5878 = vmatpush1.bf16.msra.mxu0 %v3369
    %5879 = vmatprep.subr.bf16.mxu0 %v3374
    %5880 = vmatpush1.bf16.msra.mxu0 %v3373
    %5881 = vmatprep.subr.bf16.mxu0 %v3378
    %5882 = vmatpush1.bf16.msra.mxu0 %v3377
    %5883 = vmatprep.subr.bf16.mxu0 %v3382
    %5884 = vmatpush1.bf16.msra.mxu0 %v3381
    %5885 = vmatprep.subr.bf16.mxu0 %v3386
    %5886 = vmatpush1.bf16.msra.mxu0 %v3385
    %5887 = vmatprep.subr.bf16.mxu0 %v3390
    %5888 = vmatpush1.bf16.msra.mxu0 %v3389
    %5889 = vmatprep.subr.bf16.mxu0 %v3394
    %5890 = vmatpush1.bf16.msra.mxu0 %v3393
    %5891 = vmatprep.subr.bf16.mxu0 %v3398
    %5892 = vmatpush1.bf16.msra.mxu0 %v3397
    %5893 = vmatprep.subr.bf16.mxu0 %v3402
    %5894 = vmatpush1.bf16.msra.mxu0 %v3401
    %5895 = vmatprep.subr.bf16.mxu0 %v3406
    %5896 = vmatpush1.bf16.msra.mxu0 %v3405
    %5897 = vmatprep.subr.bf16.mxu0 %v3410
    %5898 = vmatpush1.bf16.msra.mxu0 %v3409
    %5899 = vmatprep.subr.bf16.mxu0 %v3414
    %5900 = vmatpush1.bf16.msra.mxu0 %v3413
    %5901 = vmatprep.subr.bf16.mxu0 %v3418
    %5902 = vmatpush1.bf16.msra.mxu0 %v3417
    %5903 = vmatprep.subr.bf16.mxu0 %v3422
    %5904 = vmatpush1.bf16.msra.mxu0 %v3421
    %5905 = vmatprep.subr.bf16.mxu0 %v3426
    %5906 = vmatpush1.bf16.msra.mxu0 %v3425
    %5907 = vmatprep.mubr.bf16.mxu0 %v482
    %5908 = vmatmul.mubr.bf16.gmra.mrb[0].mxu0 %v481
    %v5909 = vpop.f32.mrb[0].mxu0
    %v5910 = vadd.f32 %v5797, %v5909
    %v5911 = vpop.f32.mrb[0].mxu0
    %v5912 = vadd.f32 %v5799, %v5911
    %v5913 = vpop.f32.mrb[0].mxu0
    %v5914 = vadd.f32 %v5801, %v5913
    %v5915 = vpop.f32.mrb[0].mxu0
    %v5916 = vadd.f32 %v5803, %v5915
    %5917 = vmatprep.mubr.bf16.mxu0 %v500
    %5918 = vmatmul.mubr.bf16.gmra.mrb[0].mxu0 %v499
    %v5919 = vpop.f32.mrb[0].mxu0
    %v5920 = vadd.f32 %v5807, %v5919
    %v5921 = vpop.f32.mrb[0].mxu0
    %v5922 = vadd.f32 %v5809, %v5921
    %v5923 = vpop.f32.mrb[0].mxu0
    %v5924 = vadd.f32 %v5811, %v5923
    %v5925 = vpop.f32.mrb[0].mxu0
    %v5926 = vadd.f32 %v5813, %v5925
    %5927 = vmatprep.mubr.bf16.mxu0 %v518
    %5928 = vmatmul.mubr.bf16.gmra.mrb[0].mxu0 %v517
    %v5929 = vpop.f32.mrb[0].mxu0
    %v5930 = vadd.f32 %v5817, %v5929
    %v5931 = vpop.f32.mrb[0].mxu0
    %v5932 = vadd.f32 %v5819, %v5931
    %v5933 = vpop.f32.mrb[0].mxu0
    %v5934 = vadd.f32 %v5821, %v5933
    %v5935 = vpop.f32.mrb[0].mxu0
    %v5936 = vadd.f32 %v5823, %v5935
    %5937 = vmatprep.mubr.bf16.mxu0 %v536
    %5938 = vmatmul.mubr.bf16.gmra.mrb[0].mxu0 %v535
    %v5939 = vpop.f32.mrb[0].mxu0
    %v5940 = vadd.f32 %v5827, %v5939
    %v5941 = vpop.f32.mrb[0].mxu0
    %v5942 = vadd.f32 %v5829, %v5941
    %v5943 = vpop.f32.mrb[0].mxu0
    %v5944 = vadd.f32 %v5831, %v5943
    %v5945 = vpop.f32.mrb[0].mxu0
    %v5946 = vadd.f32 %v5833, %v5945
    %5947 = vmatprep.mubr.bf16.mxu0 %v554
    %5948 = vmatmul.mubr.bf16.gmra.mrb[0].mxu0 %v553
    %v5949 = vpop.f32.mrb[0].mxu0
    %v5950 = vadd.f32 %v5837, %v5949
    %v5951 = vpop.f32.mrb[0].mxu0
    %v5952 = vadd.f32 %v5839, %v5951
    %v5953 = vpop.f32.mrb[0].mxu0
    %v5954 = vadd.f32 %v5841, %v5953
    %v5955 = vpop.f32.mrb[0].mxu0
    %v5956 = vadd.f32 %v5843, %v5955
    %5957 = vmatprep.mubr.bf16.mxu0 %v572
    %5958 = vmatmul.mubr.bf16.gmra.mrb[0].mxu0 %v571
    %v5959 = vpop.f32.mrb[0].mxu0
    %v5960 = vadd.f32 %v5847, %v5959
    %v5961 = vpop.f32.mrb[0].mxu0
    %v5962 = vadd.f32 %v5849, %v5961
    %v5963 = vpop.f32.mrb[0].mxu0
    %v5964 = vadd.f32 %v5851, %v5963
    %v5965 = vpop.f32.mrb[0].mxu0
    %v5966 = vadd.f32 %v5853, %v5965
    %5967 = vmatprep.mubr.bf16.mxu0 %v590
    %5968 = vmatmul.mubr.bf16.gmra.mrb[0].mxu0 %v589
    %v5969 = vpop.f32.mrb[0].mxu0
    %v5970 = vadd.f32 %v5857, %v5969
    %v5971 = vpop.f32.mrb[0].mxu0
    %v5972 = vadd.f32 %v5859, %v5971
    %v5973 = vpop.f32.mrb[0].mxu0
    %v5974 = vadd.f32 %v5861, %v5973
    %v5975 = vpop.f32.mrb[0].mxu0
    %v5976 = vadd.f32 %v5863, %v5975
    %5977 = vmatprep.mubr.bf16.mxu0 %v608
    %5978 = vmatmul.mubr.bf16.gmra.mrb[0].mxu0 %v607
    %v5979 = vpop.f32.mrb[0].mxu0
    %v5980 = vadd.f32 %v5867, %v5979
    %v5981 = vpop.f32.mrb[0].mxu0
    %v5982 = vadd.f32 %v5869, %v5981
    %v5983 = vpop.f32.mrb[0].mxu0
    %v5984 = vadd.f32 %v5871, %v5983
    %v5985 = vpop.f32.mrb[0].mxu0
    %v5986 = vadd.f32 %v5873, %v5985
    %5987 = vdwg.mxu0
    %5988 = vmatprep.subr.bf16.mxu0 %v3430
    %5989 = vmatpush1.bf16.msra.mxu0 %v3429
    %5990 = vmatprep.subr.bf16.mxu0 %v3434
    %5991 = vmatpush1.bf16.msra.mxu0 %v3433
    %5992 = vmatprep.subr.bf16.mxu0 %v3438
    %5993 = vmatpush1.bf16.msra.mxu0 %v3437
    %5994 = vmatprep.subr.bf16.mxu0 %v3442
    %5995 = vmatpush1.bf16.msra.mxu0 %v3441
    %5996 = vmatprep.subr.bf16.mxu0 %v3446
    %5997 = vmatpush1.bf16.msra.mxu0 %v3445
    %5998 = vmatprep.subr.bf16.mxu0 %v3450
    %5999 = vmatpush1.bf16.msra.mxu0 %v3449
    %6000 = vmatprep.subr.bf16.mxu0 %v3454
    %6001 = vmatpush1.bf16.msra.mxu0 %v3453
    %6002 = vmatprep.subr.bf16.mxu0 %v3458
    %6003 = vmatpush1.bf16.msra.mxu0 %v3457
    %6004 = vmatprep.subr.bf16.mxu0 %v3462
    %6005 = vmatpush1.bf16.msra.mxu0 %v3461
    %6006 = vmatprep.subr.bf16.mxu0 %v3466
    %6007 = vmatpush1.bf16.msra.mxu0 %v3465
    %6008 = vmatprep.subr.bf16.mxu0 %v3470
    %6009 = vmatpush1.bf16.msra.mxu0 %v3469
    %6010 = vmatprep.subr.bf16.mxu0 %v3474
    %6011 = vmatpush1.bf16.msra.mxu0 %v3473
    %6012 = vmatprep.subr.bf16.mxu0 %v3478
    %6013 = vmatpush1.bf16.msra.mxu0 %v3477
    %6014 = vmatprep.subr.bf16.mxu0 %v3482
    %6015 = vmatpush1.bf16.msra.mxu0 %v3481
    %6016 = vmatprep.subr.bf16.mxu0 %v3486
    %6017 = vmatpush1.bf16.msra.mxu0 %v3485
    %6018 = vmatprep.subr.bf16.mxu0 %v3490
    %6019 = vmatpush1.bf16.msra.mxu0 %v3489
    %6020 = vmatprep.mubr.bf16.mxu0 %v484
    %6021 = vmatmul.mubr.bf16.gmra.mrb[0].mxu0 %v483
    %v6022 = vpop.f32.mrb[0].mxu0
    %v6023 = vadd.f32 %v5910, %v6022
    %v6024 = vpop.f32.mrb[0].mxu0
    %v6025 = vadd.f32 %v5912, %v6024
    %v6026 = vpop.f32.mrb[0].mxu0
    %v6027 = vadd.f32 %v5914, %v6026
    %v6028 = vpop.f32.mrb[0].mxu0
    %v6029 = vadd.f32 %v5916, %v6028
    %6030 = vmatprep.mubr.bf16.mxu0 %v502
    %6031 = vmatmul.mubr.bf16.gmra.mrb[0].mxu0 %v501
    %v6032 = vpop.f32.mrb[0].mxu0
    %v6033 = vadd.f32 %v5920, %v6032
    %v6034 = vpop.f32.mrb[0].mxu0
    %v6035 = vadd.f32 %v5922, %v6034
    %v6036 = vpop.f32.mrb[0].mxu0
    %v6037 = vadd.f32 %v5924, %v6036
    %v6038 = vpop.f32.mrb[0].mxu0
    %v6039 = vadd.f32 %v5926, %v6038
    %6040 = vmatprep.mubr.bf16.mxu0 %v520
    %6041 = vmatmul.mubr.bf16.gmra.mrb[0].mxu0 %v519
    %v6042 = vpop.f32.mrb[0].mxu0
    %v6043 = vadd.f32 %v5930, %v6042
    %v6044 = vpop.f32.mrb[0].mxu0
    %v6045 = vadd.f32 %v5932, %v6044
    %v6046 = vpop.f32.mrb[0].mxu0
    %v6047 = vadd.f32 %v5934, %v6046
    %v6048 = vpop.f32.mrb[0].mxu0
    %v6049 = vadd.f32 %v5936, %v6048
    %6050 = vmatprep.mubr.bf16.mxu0 %v538
    %6051 = vmatmul.mubr.bf16.gmra.mrb[0].mxu0 %v537
    %v6052 = vpop.f32.mrb[0].mxu0
    %v6053 = vadd.f32 %v5940, %v6052
    %v6054 = vpop.f32.mrb[0].mxu0
    %v6055 = vadd.f32 %v5942, %v6054
    %v6056 = vpop.f32.mrb[0].mxu0
    %v6057 = vadd.f32 %v5944, %v6056
    %v6058 = vpop.f32.mrb[0].mxu0
    %v6059 = vadd.f32 %v5946, %v6058
    %6060 = vmatprep.mubr.bf16.mxu0 %v556
    %6061 = vmatmul.mubr.bf16.gmra.mrb[0].mxu0 %v555
    %v6062 = vpop.f32.mrb[0].mxu0
    %v6063 = vadd.f32 %v5950, %v6062
    %v6064 = vpop.f32.mrb[0].mxu0
    %v6065 = vadd.f32 %v5952, %v6064
    %v6066 = vpop.f32.mrb[0].mxu0
    %v6067 = vadd.f32 %v5954, %v6066
    %v6068 = vpop.f32.mrb[0].mxu0
    %v6069 = vadd.f32 %v5956, %v6068
    %6070 = vmatprep.mubr.bf16.mxu0 %v574
    %6071 = vmatmul.mubr.bf16.gmra.mrb[0].mxu0 %v573
    %v6072 = vpop.f32.mrb[0].mxu0
    %v6073 = vadd.f32 %v5960, %v6072
    %v6074 = vpop.f32.mrb[0].mxu0
    %v6075 = vadd.f32 %v5962, %v6074
    %v6076 = vpop.f32.mrb[0].mxu0
    %v6077 = vadd.f32 %v5964, %v6076
    %v6078 = vpop.f32.mrb[0].mxu0
    %v6079 = vadd.f32 %v5966, %v6078
    %6080 = vmatprep.mubr.bf16.mxu0 %v592
    %6081 = vmatmul.mubr.bf16.gmra.mrb[0].mxu0 %v591
    %v6082 = vpop.f32.mrb[0].mxu0
    %v6083 = vadd.f32 %v5970, %v6082
    %v6084 = vpop.f32.mrb[0].mxu0
    %v6085 = vadd.f32 %v5972, %v6084
    %v6086 = vpop.f32.mrb[0].mxu0
    %v6087 = vadd.f32 %v5974, %v6086
    %v6088 = vpop.f32.mrb[0].mxu0
    %v6089 = vadd.f32 %v5976, %v6088
    %6090 = vmatprep.mubr.bf16.mxu0 %v610
    %6091 = vmatmul.mubr.bf16.gmra.mrb[0].mxu0 %v609
    %v6092 = vpop.f32.mrb[0].mxu0
    %v6093 = vadd.f32 %v5980, %v6092
    %v6094 = vpop.f32.mrb[0].mxu0
    %v6095 = vadd.f32 %v5982, %v6094
    %v6096 = vpop.f32.mrb[0].mxu0
    %v6097 = vadd.f32 %v5984, %v6096
    %v6098 = vpop.f32.mrb[0].mxu0
    %v6099 = vadd.f32 %v5986, %v6098
    %6100 = vdwg.mxu0
    %v6101 = vmul.f32 %v5006, 0.5
    %v6102 = vmul.f32 %v5008, 0.5
    %v6103 = vmul.f32 %v6023, 0.5
    %v6104 = vmul.f32 %v6025, 0.5
    %v6105 = vmul.f32 %v5010, 0.5
    %v6106 = vmul.f32 %v5012, 0.5
    %v6107 = vmul.f32 %v6027, 0.5
    %v6108 = vmul.f32 %v6029, 0.5
    %v6109 = vmul.f32 %v5016, 0.5
    %v6110 = vmul.f32 %v5018, 0.5
    %v6111 = vmul.f32 %v6033, 0.5
    %v6112 = vmul.f32 %v6035, 0.5
    %v6113 = vmul.f32 %v5020, 0.5
    %v6114 = vmul.f32 %v5022, 0.5
    %v6115 = vmul.f32 %v6037, 0.5
    %v6116 = vmul.f32 %v6039, 0.5
    %v6117 = vmul.f32 %v5026, 0.5
    %v6118 = vmul.f32 %v5028, 0.5
    %v6119 = vmul.f32 %v6043, 0.5
    %v6120 = vmul.f32 %v6045, 0.5
    %v6121 = vmul.f32 %v5030, 0.5
    %v6122 = vmul.f32 %v5032, 0.5
    %v6123 = vmul.f32 %v6047, 0.5
    %v6124 = vmul.f32 %v6049, 0.5
    %v6125 = vmul.f32 %v5036, 0.5
    %v6126 = vmul.f32 %v5038, 0.5
    %v6127 = vmul.f32 %v6053, 0.5
    %v6128 = vmul.f32 %v6055, 0.5
    %v6129 = vmul.f32 %v5040, 0.5
    %v6130 = vmul.f32 %v5042, 0.5
    %v6131 = vmul.f32 %v6057, 0.5
    %v6132 = vmul.f32 %v6059, 0.5
    %v6133 = vmul.f32 %v5046, 0.5
    %v6134 = vmul.f32 %v5048, 0.5
    %v6135 = vmul.f32 %v6063, 0.5
    %v6136 = vmul.f32 %v6065, 0.5
    %v6137 = vmul.f32 %v5050, 0.5
    %v6138 = vmul.f32 %v5052, 0.5
    %v6139 = vmul.f32 %v6067, 0.5
    %v6140 = vmul.f32 %v6069, 0.5
    %v6141 = vmul.f32 %v5056, 0.5
    %v6142 = vmul.f32 %v5058, 0.5
    %v6143 = vmul.f32 %v6073, 0.5
    %v6144 = vmul.f32 %v6075, 0.5
    %v6145 = vmul.f32 %v5060, 0.5
    %v6146 = vmul.f32 %v5062, 0.5
    %v6147 = vmul.f32 %v6077, 0.5
    %v6148 = vmul.f32 %v6079, 0.5
    %v6149 = vmul.f32 %v5066, 0.5
    %v6150 = vmul.f32 %v5068, 0.5
    %v6151 = vmul.f32 %v6083, 0.5
    %v6152 = vmul.f32 %v6085, 0.5
    %v6153 = vmul.f32 %v5070, 0.5
    %v6154 = vmul.f32 %v5072, 0.5
    %v6155 = vmul.f32 %v6087, 0.5
    %v6156 = vmul.f32 %v6089, 0.5
    %v6157 = vmul.f32 %v5076, 0.5
    %v6158 = vmul.f32 %v5078, 0.5
    %v6159 = vmul.f32 %v6093, 0.5
    %v6160 = vmul.f32 %v6095, 0.5
    %v6161 = vmul.f32 %v5080, 0.5
    %v6162 = vmul.f32 %v5082, 0.5
    %v6163 = vmul.f32 %v6097, 0.5
    %v6164 = vmul.f32 %v6099, 0.5
    %v6165 = vmul.f32 %v5006, 0.70710677
    %v6166 = vmul.f32 %v5008, 0.70710677
    %v6167 = vmul.f32 %v6023, 0.70710677
    %v6168 = vmul.f32 %v6025, 0.70710677
    %v6169 = vmul.f32 %v5010, 0.70710677
    %v6170 = vmul.f32 %v5012, 0.70710677
    %v6171 = vmul.f32 %v6027, 0.70710677
    %v6172 = vmul.f32 %v6029, 0.70710677
    %v6173 = vmul.f32 %v5016, 0.70710677
    %v6174 = vmul.f32 %v5018, 0.70710677
    %v6175 = vmul.f32 %v6033, 0.70710677
    %v6176 = vmul.f32 %v6035, 0.70710677
    %v6177 = vmul.f32 %v5020, 0.70710677
    %v6178 = vmul.f32 %v5022, 0.70710677
    %v6179 = vmul.f32 %v6037, 0.70710677
    %v6180 = vmul.f32 %v6039, 0.70710677
    %v6181 = vmul.f32 %v5026, 0.70710677
    %v6182 = vmul.f32 %v5028, 0.70710677
    %v6183 = vmul.f32 %v6043, 0.70710677
    %v6184 = vmul.f32 %v6045, 0.70710677
    %v6185 = vmul.f32 %v5030, 0.70710677
    %v6186 = vmul.f32 %v5032, 0.70710677
    %v6187 = vmul.f32 %v6047, 0.70710677
    %v6188 = vmul.f32 %v6049, 0.70710677
    %v6189 = vmul.f32 %v5036, 0.70710677
    %v6190 = vmul.f32 %v5038, 0.70710677
    %v6191 = vmul.f32 %v6053, 0.70710677
    %v6192 = vmul.f32 %v6055, 0.70710677
    %v6193 = vmul.f32 %v5040, 0.70710677
    %v6194 = vmul.f32 %v5042, 0.70710677
    %v6195 = vmul.f32 %v6057, 0.70710677
    %v6196 = vmul.f32 %v6059, 0.70710677
    %v6197 = vmul.f32 %v5046, 0.70710677
    %v6198 = vmul.f32 %v5048, 0.70710677
    %v6199 = vmul.f32 %v6063, 0.70710677
    %v6200 = vmul.f32 %v6065, 0.70710677
    %v6201 = vmul.f32 %v5050, 0.70710677
    %v6202 = vmul.f32 %v5052, 0.70710677
    %v6203 = vmul.f32 %v6067, 0.70710677
    %v6204 = vmul.f32 %v6069, 0.70710677
    %v6205 = vmul.f32 %v5056, 0.70710677
    %v6206 = vmul.f32 %v5058, 0.70710677
    %v6207 = vmul.f32 %v6073, 0.70710677
    %v6208 = vmul.f32 %v6075, 0.70710677
    %v6209 = vmul.f32 %v5060, 0.70710677
    %v6210 = vmul.f32 %v5062, 0.70710677
    %v6211 = vmul.f32 %v6077, 0.70710677
    %v6212 = vmul.f32 %v6079, 0.70710677
    %v6213 = vmul.f32 %v5066, 0.70710677
    %v6214 = vmul.f32 %v5068, 0.70710677
    %v6215 = vmul.f32 %v6083, 0.70710677
    %v6216 = vmul.f32 %v6085, 0.70710677
    %v6217 = vmul.f32 %v5070, 0.70710677
    %v6218 = vmul.f32 %v5072, 0.70710677
    %v6219 = vmul.f32 %v6087, 0.70710677
    %v6220 = vmul.f32 %v6089, 0.70710677
    %v6221 = vmul.f32 %v5076, 0.70710677
    %v6222 = vmul.f32 %v5078, 0.70710677
    %v6223 = vmul.f32 %v6093, 0.70710677
    %v6224 = vmul.f32 %v6095, 0.70710677
    %v6225 = vmul.f32 %v5080, 0.70710677
    %v6226 = vmul.f32 %v5082, 0.70710677
    %v6227 = vmul.f32 %v6097, 0.70710677
    %v6228 = vmul.f32 %v6099, 0.70710677
    %v6229 = verf.f32.pop %v6165
    %v6230 = verf.f32.pop %v6166
    %v6231 = verf.f32.pop %v6167
    %v6232 = verf.f32.pop %v6168
    %v6233 = verf.f32.pop %v6169
    %v6234 = verf.f32.pop %v6170
    %v6235 = verf.f32.pop %v6171
    %v6236 = verf.f32.pop %v6172
    %v6237 = verf.f32.pop %v6173
    %v6238 = verf.f32.pop %v6174
    %v6239 = verf.f32.pop %v6175
    %v6240 = verf.f32.pop %v6176
    %v6241 = verf.f32.pop %v6177
    %v6242 = verf.f32.pop %v6178
    %v6243 = verf.f32.pop %v6179
    %v6244 = verf.f32.pop %v6180
    %v6245 = verf.f32.pop %v6181
    %v6246 = verf.f32.pop %v6182
    %v6247 = verf.f32.pop %v6183
    %v6248 = verf.f32.pop %v6184
    %v6249 = verf.f32.pop %v6185
    %v6250 = verf.f32.pop %v6186
    %v6251 = verf.f32.pop %v6187
    %v6252 = verf.f32.pop %v6188
    %v6253 = verf.f32.pop %v6189
    %v6254 = verf.f32.pop %v6190
    %v6255 = verf.f32.pop %v6191
    %v6256 = verf.f32.pop %v6192
    %v6257 = verf.f32.pop %v6193
    %v6258 = verf.f32.pop %v6194
    %v6259 = verf.f32.pop %v6195
    %v6260 = verf.f32.pop %v6196
    %v6261 = verf.f32.pop %v6197
    %v6262 = verf.f32.pop %v6198
    %v6263 = verf.f32.pop %v6199
    %v6264 = verf.f32.pop %v6200
    %v6265 = verf.f32.pop %v6201
    %v6266 = verf.f32.pop %v6202
    %v6267 = verf.f32.pop %v6203
    %v6268 = verf.f32.pop %v6204
    %v6269 = verf.f32.pop %v6205
    %v6270 = verf.f32.pop %v6206
    %v6271 = verf.f32.pop %v6207
    %v6272 = verf.f32.pop %v6208
    %v6273 = verf.f32.pop %v6209
    %v6274 = verf.f32.pop %v6210
    %v6275 = verf.f32.pop %v6211
    %v6276 = verf.f32.pop %v6212
    %v6277 = verf.f32.pop %v6213
    %v6278 = verf.f32.pop %v6214
    %v6279 = verf.f32.pop %v6215
    %v6280 = verf.f32.pop %v6216
    %v6281 = verf.f32.pop %v6217
    %v6282 = verf.f32.pop %v6218
    %v6283 = verf.f32.pop %v6219
    %v6284 = verf.f32.pop %v6220
    %v6285 = verf.f32.pop %v6221
    %v6286 = verf.f32.pop %v6222
    %v6287 = verf.f32.pop %v6223
    %v6288 = verf.f32.pop %v6224
    %v6289 = verf.f32.pop %v6225
    %v6290 = verf.f32.pop %v6226
    %v6291 = verf.f32.pop %v6227
    %v6292 = verf.f32.pop %v6228
    %v6293 = vadd.f32 %v6229, 1.0
    %v6294 = vadd.f32 %v6230, 1.0
    %v6295 = vadd.f32 %v6231, 1.0
    %v6296 = vadd.f32 %v6232, 1.0
    %v6297 = vadd.f32 %v6233, 1.0
    %v6298 = vadd.f32 %v6234, 1.0
    %v6299 = vadd.f32 %v6235, 1.0
    %v6300 = vadd.f32 %v6236, 1.0
    %v6301 = vadd.f32 %v6237, 1.0
    %v6302 = vadd.f32 %v6238, 1.0
    %v6303 = vadd.f32 %v6239, 1.0
    %v6304 = vadd.f32 %v6240, 1.0
    %v6305 = vadd.f32 %v6241, 1.0
    %v6306 = vadd.f32 %v6242, 1.0
    %v6307 = vadd.f32 %v6243, 1.0
    %v6308 = vadd.f32 %v6244, 1.0
    %v6309 = vadd.f32 %v6245, 1.0
    %v6310 = vadd.f32 %v6246, 1.0
    %v6311 = vadd.f32 %v6247, 1.0
    %v6312 = vadd.f32 %v6248, 1.0
    %v6313 = vadd.f32 %v6249, 1.0
    %v6314 = vadd.f32 %v6250, 1.0
    %v6315 = vadd.f32 %v6251, 1.0
    %v6316 = vadd.f32 %v6252, 1.0
    %v6317 = vadd.f32 %v6253, 1.0
    %v6318 = vadd.f32 %v6254, 1.0
    %v6319 = vadd.f32 %v6255, 1.0
    %v6320 = vadd.f32 %v6256, 1.0
    %v6321 = vadd.f32 %v6257, 1.0
    %v6322 = vadd.f32 %v6258, 1.0
    %v6323 = vadd.f32 %v6259, 1.0
    %v6324 = vadd.f32 %v6260, 1.0
    %v6325 = vadd.f32 %v6261, 1.0
    %v6326 = vadd.f32 %v6262, 1.0
    %v6327 = vadd.f32 %v6263, 1.0
    %v6328 = vadd.f32 %v6264, 1.0
    %v6329 = vadd.f32 %v6265, 1.0
    %v6330 = vadd.f32 %v6266, 1.0
    %v6331 = vadd.f32 %v6267, 1.0
    %v6332 = vadd.f32 %v6268, 1.0
    %v6333 = vadd.f32 %v6269, 1.0
    %v6334 = vadd.f32 %v6270, 1.0
    %v6335 = vadd.f32 %v6271, 1.0
    %v6336 = vadd.f32 %v6272, 1.0
    %v6337 = vadd.f32 %v6273, 1.0
    %v6338 = vadd.f32 %v6274, 1.0
    %v6339 = vadd.f32 %v6275, 1.0
    %v6340 = vadd.f32 %v6276, 1.0
    %v6341 = vadd.f32 %v6277, 1.0
    %v6342 = vadd.f32 %v6278, 1.0
    %v6343 = vadd.f32 %v6279, 1.0
    %v6344 = vadd.f32 %v6280, 1.0
    %v6345 = vadd.f32 %v6281, 1.0
    %v6346 = vadd.f32 %v6282, 1.0
    %v6347 = vadd.f32 %v6283, 1.0
    %v6348 = vadd.f32 %v6284, 1.0
    %v6349 = vadd.f32 %v6285, 1.0
    %v6350 = vadd.f32 %v6286, 1.0
    %v6351 = vadd.f32 %v6287, 1.0
    %v6352 = vadd.f32 %v6288, 1.0
    %v6353 = vadd.f32 %v6289, 1.0
    %v6354 = vadd.f32 %v6290, 1.0
    %v6355 = vadd.f32 %v6291, 1.0
    %v6356 = vadd.f32 %v6292, 1.0
    %v6357 = vmul.f32 %v6101, %v6293
    %v6358 = vmul.f32 %v6102, %v6294
    %v6359 = vmul.f32 %v6103, %v6295
    %v6360 = vmul.f32 %v6104, %v6296
    %v6361 = vmul.f32 %v6105, %v6297
    %v6362 = vmul.f32 %v6106, %v6298
    %v6363 = vmul.f32 %v6107, %v6299
    %v6364 = vmul.f32 %v6108, %v6300
    %v6365 = vmul.f32 %v6109, %v6301
    %v6366 = vmul.f32 %v6110, %v6302
    %v6367 = vmul.f32 %v6111, %v6303
    %v6368 = vmul.f32 %v6112, %v6304
    %v6369 = vmul.f32 %v6113, %v6305
    %v6370 = vmul.f32 %v6114, %v6306
    %v6371 = vmul.f32 %v6115, %v6307
    %v6372 = vmul.f32 %v6116, %v6308
    %v6373 = vmul.f32 %v6117, %v6309
    %v6374 = vmul.f32 %v6118, %v6310
    %v6375 = vmul.f32 %v6119, %v6311
    %v6376 = vmul.f32 %v6120, %v6312
    %v6377 = vmul.f32 %v6121, %v6313
    %v6378 = vmul.f32 %v6122, %v6314
    %v6379 = vmul.f32 %v6123, %v6315
    %v6380 = vmul.f32 %v6124, %v6316
    %v6381 = vmul.f32 %v6125, %v6317
    %v6382 = vmul.f32 %v6126, %v6318
    %v6383 = vmul.f32 %v6127, %v6319
    %v6384 = vmul.f32 %v6128, %v6320
    %v6385 = vmul.f32 %v6129, %v6321
    %v6386 = vmul.f32 %v6130, %v6322
    %v6387 = vmul.f32 %v6131, %v6323
    %v6388 = vmul.f32 %v6132, %v6324
    %v6389 = vmul.f32 %v6133, %v6325
    %v6390 = vmul.f32 %v6134, %v6326
    %v6391 = vmul.f32 %v6135, %v6327
    %v6392 = vmul.f32 %v6136, %v6328
    %v6393 = vmul.f32 %v6137, %v6329
    %v6394 = vmul.f32 %v6138, %v6330
    %v6395 = vmul.f32 %v6139, %v6331
    %v6396 = vmul.f32 %v6140, %v6332
    %v6397 = vmul.f32 %v6141, %v6333
    %v6398 = vmul.f32 %v6142, %v6334
    %v6399 = vmul.f32 %v6143, %v6335
    %v6400 = vmul.f32 %v6144, %v6336
    %v6401 = vmul.f32 %v6145, %v6337
    %v6402 = vmul.f32 %v6146, %v6338
    %v6403 = vmul.f32 %v6147, %v6339
    %v6404 = vmul.f32 %v6148, %v6340
    %v6405 = vmul.f32 %v6149, %v6341
    %v6406 = vmul.f32 %v6150, %v6342
    %v6407 = vmul.f32 %v6151, %v6343
    %v6408 = vmul.f32 %v6152, %v6344
    %v6409 = vmul.f32 %v6153, %v6345
    %v6410 = vmul.f32 %v6154, %v6346
    %v6411 = vmul.f32 %v6155, %v6347
    %v6412 = vmul.f32 %v6156, %v6348
    %v6413 = vmul.f32 %v6157, %v6349
    %v6414 = vmul.f32 %v6158, %v6350
    %v6415 = vmul.f32 %v6159, %v6351
    %v6416 = vmul.f32 %v6160, %v6352
    %v6417 = vmul.f32 %v6161, %v6353
    %v6418 = vmul.f32 %v6162, %v6354
    %v6419 = vmul.f32 %v6163, %v6355
    %v6420 = vmul.f32 %v6164, %v6356
    %v6421 = vld [vmem:[#allocation8] sm:$0xf]
    %v6422 = vld [vmem:[#allocation9] sm:$0xf]
    %v6423 = vadd.f32 %v6357, %v6358
    %v6424 = vadd.f32 %v6423, %v6359
    %v6425 = vadd.f32 %v6424, %v6360
    %6426 = vadd.xlane.f32.xlu0 %v6425
    %v6427 = vpop.xlane.xlu0 %6426
    %v6428 = vadd.f32 %v6361, %v6362
    %v6429 = vadd.f32 %v6428, %v6363
    %v6430 = vadd.f32 %v6429, %v6364
    %6431 = vadd.xlane.f32.xlu0 %v6430
    %v6432 = vpop.xlane.xlu0 %6431
    %v6433 = vadd.f32 %v6365, %v6366
    %v6434 = vadd.f32 %v6433, %v6367
    %v6435 = vadd.f32 %v6434, %v6368
    %6436 = vadd.xlane.f32.xlu0 %v6435
    %v6437 = vpop.xlane.xlu0 %6436
    %v6438 = vadd.f32 %v6369, %v6370
    %v6439 = vadd.f32 %v6438, %v6371
    %v6440 = vadd.f32 %v6439, %v6372
    %6441 = vadd.xlane.f32.xlu0 %v6440
    %v6442 = vpop.xlane.xlu0 %6441
    %v6443 = vadd.f32 %v6373, %v6374
    %v6444 = vadd.f32 %v6443, %v6375
    %v6445 = vadd.f32 %v6444, %v6376
    %6446 = vadd.xlane.f32.xlu0 %v6445
    %v6447 = vpop.xlane.xlu0 %6446
    %v6448 = vadd.f32 %v6377, %v6378
    %v6449 = vadd.f32 %v6448, %v6379
    %v6450 = vadd.f32 %v6449, %v6380
    %6451 = vadd.xlane.f32.xlu0 %v6450
    %v6452 = vpop.xlane.xlu0 %6451
    %v6453 = vadd.f32 %v6381, %v6382
    %v6454 = vadd.f32 %v6453, %v6383
    %v6455 = vadd.f32 %v6454, %v6384
    %6456 = vadd.xlane.f32.xlu0 %v6455
    %v6457 = vpop.xlane.xlu0 %6456
    %v6458 = vadd.f32 %v6385, %v6386
    %v6459 = vadd.f32 %v6458, %v6387
    %v6460 = vadd.f32 %v6459, %v6388
    %6461 = vadd.xlane.f32.xlu0 %v6460
    %v6462 = vpop.xlane.xlu0 %6461
    %v6463 = vadd.f32 %v6389, %v6390
    %v6464 = vadd.f32 %v6463, %v6391
    %v6465 = vadd.f32 %v6464, %v6392
    %6466 = vadd.xlane.f32.xlu0 %v6465
    %v6467 = vpop.xlane.xlu0 %6466
    %v6468 = vadd.f32 %v6393, %v6394
    %v6469 = vadd.f32 %v6468, %v6395
    %v6470 = vadd.f32 %v6469, %v6396
    %6471 = vadd.xlane.f32.xlu0 %v6470
    %v6472 = vpop.xlane.xlu0 %6471
    %v6473 = vadd.f32 %v6397, %v6398
    %v6474 = vadd.f32 %v6473, %v6399
    %v6475 = vadd.f32 %v6474, %v6400
    %6476 = vadd.xlane.f32.xlu0 %v6475
    %v6477 = vpop.xlane.xlu0 %6476
    %v6478 = vadd.f32 %v6401, %v6402
    %v6479 = vadd.f32 %v6478, %v6403
    %v6480 = vadd.f32 %v6479, %v6404
    %6481 = vadd.xlane.f32.xlu0 %v6480
    %v6482 = vpop.xlane.xlu0 %6481
    %v6483 = vadd.f32 %v6405, %v6406
    %v6484 = vadd.f32 %v6483, %v6407
    %v6485 = vadd.f32 %v6484, %v6408
    %6486 = vadd.xlane.f32.xlu0 %v6485
    %v6487 = vpop.xlane.xlu0 %6486
    %v6488 = vadd.f32 %v6409, %v6410
    %v6489 = vadd.f32 %v6488, %v6411
    %v6490 = vadd.f32 %v6489, %v6412
    %6491 = vadd.xlane.f32.xlu0 %v6490
    %v6492 = vpop.xlane.xlu0 %6491
    %v6493 = vadd.f32 %v6413, %v6414
    %v6494 = vadd.f32 %v6493, %v6415
    %v6495 = vadd.f32 %v6494, %v6416
    %6496 = vadd.xlane.f32.xlu0 %v6495
    %v6497 = vpop.xlane.xlu0 %6496
    %v6498 = vadd.f32 %v6417, %v6418
    %v6499 = vadd.f32 %v6498, %v6419
    %v6500 = vadd.f32 %v6499, %v6420
    %6501 = vadd.xlane.f32.xlu0 %v6500
    %v6502 = vpop.xlane.xlu0 %6501
    %v6503 = vrcp.pop 512.0
    %v6504 = vmul.f32 %v6427, %v6503
    %v6505 = vmul.f32 %v6432, %v6503
    %v6506 = vmul.f32 %v6437, %v6503
    %v6507 = vmul.f32 %v6442, %v6503
    %v6508 = vmul.f32 %v6447, %v6503
    %v6509 = vmul.f32 %v6452, %v6503
    %v6510 = vmul.f32 %v6457, %v6503
    %v6511 = vmul.f32 %v6462, %v6503
    %v6512 = vmul.f32 %v6467, %v6503
    %v6513 = vmul.f32 %v6472, %v6503
    %v6514 = vmul.f32 %v6477, %v6503
    %v6515 = vmul.f32 %v6482, %v6503
    %v6516 = vmul.f32 %v6487, %v6503
    %v6517 = vmul.f32 %v6492, %v6503
    %v6518 = vmul.f32 %v6497, %v6503
    %v6519 = vmul.f32 %v6502, %v6503
    %v6520 = vsub.f32 %v6357, %v6504
    %v6521 = vsub.f32 %v6358, %v6504
    %v6522 = vsub.f32 %v6359, %v6504
    %v6523 = vsub.f32 %v6360, %v6504
    %v6524 = vsub.f32 %v6361, %v6505
    %v6525 = vsub.f32 %v6362, %v6505
    %v6526 = vsub.f32 %v6363, %v6505
    %v6527 = vsub.f32 %v6364, %v6505
    %v6528 = vsub.f32 %v6365, %v6506
    %v6529 = vsub.f32 %v6366, %v6506
    %v6530 = vsub.f32 %v6367, %v6506
    %v6531 = vsub.f32 %v6368, %v6506
    %v6532 = vsub.f32 %v6369, %v6507
    %v6533 = vsub.f32 %v6370, %v6507
    %v6534 = vsub.f32 %v6371, %v6507
    %v6535 = vsub.f32 %v6372, %v6507
    %v6536 = vsub.f32 %v6373, %v6508
    %v6537 = vsub.f32 %v6374, %v6508
    %v6538 = vsub.f32 %v6375, %v6508
    %v6539 = vsub.f32 %v6376, %v6508
    %v6540 = vsub.f32 %v6377, %v6509
    %v6541 = vsub.f32 %v6378, %v6509
    %v6542 = vsub.f32 %v6379, %v6509
    %v6543 = vsub.f32 %v6380, %v6509
    %v6544 = vsub.f32 %v6381, %v6510
    %v6545 = vsub.f32 %v6382, %v6510
    %v6546 = vsub.f32 %v6383, %v6510
    %v6547 = vsub.f32 %v6384, %v6510
    %v6548 = vsub.f32 %v6385, %v6511
    %v6549 = vsub.f32 %v6386, %v6511
    %v6550 = vsub.f32 %v6387, %v6511
    %v6551 = vsub.f32 %v6388, %v6511
    %v6552 = vsub.f32 %v6389, %v6512
    %v6553 = vsub.f32 %v6390, %v6512
    %v6554 = vsub.f32 %v6391, %v6512
    %v6555 = vsub.f32 %v6392, %v6512
    %v6556 = vsub.f32 %v6393, %v6513
    %v6557 = vsub.f32 %v6394, %v6513
    %v6558 = vsub.f32 %v6395, %v6513
    %v6559 = vsub.f32 %v6396, %v6513
    %v6560 = vsub.f32 %v6397, %v6514
    %v6561 = vsub.f32 %v6398, %v6514
    %v6562 = vsub.f32 %v6399, %v6514
    %v6563 = vsub.f32 %v6400, %v6514
    %v6564 = vsub.f32 %v6401, %v6515
    %v6565 = vsub.f32 %v6402, %v6515
    %v6566 = vsub.f32 %v6403, %v6515
    %v6567 = vsub.f32 %v6404, %v6515
    %v6568 = vsub.f32 %v6405, %v6516
    %v6569 = vsub.f32 %v6406, %v6516
    %v6570 = vsub.f32 %v6407, %v6516
    %v6571 = vsub.f32 %v6408, %v6516
    %v6572 = vsub.f32 %v6409, %v6517
    %v6573 = vsub.f32 %v6410, %v6517
    %v6574 = vsub.f32 %v6411, %v6517
    %v6575 = vsub.f32 %v6412, %v6517
    %v6576 = vsub.f32 %v6413, %v6518
    %v6577 = vsub.f32 %v6414, %v6518
    %v6578 = vsub.f32 %v6415, %v6518
    %v6579 = vsub.f32 %v6416, %v6518
    %v6580 = vsub.f32 %v6417, %v6519
    %v6581 = vsub.f32 %v6418, %v6519
    %v6582 = vsub.f32 %v6419, %v6519
    %v6583 = vsub.f32 %v6420, %v6519
    %v6584 = vmul.f32 %v6520, %v6520
    %v6585 = vmul.f32 %v6521, %v6521
    %v6586 = vmul.f32 %v6522, %v6522
    %v6587 = vmul.f32 %v6523, %v6523
    %v6588 = vmul.f32 %v6524, %v6524
    %v6589 = vmul.f32 %v6525, %v6525
    %v6590 = vmul.f32 %v6526, %v6526
    %v6591 = vmul.f32 %v6527, %v6527
    %v6592 = vmul.f32 %v6528, %v6528
    %v6593 = vmul.f32 %v6529, %v6529
    %v6594 = vmul.f32 %v6530, %v6530
    %v6595 = vmul.f32 %v6531, %v6531
    %v6596 = vmul.f32 %v6532, %v6532
    %v6597 = vmul.f32 %v6533, %v6533
    %v6598 = vmul.f32 %v6534, %v6534
    %v6599 = vmul.f32 %v6535, %v6535
    %v6600 = vmul.f32 %v6536, %v6536
    %v6601 = vmul.f32 %v6537, %v6537
    %v6602 = vmul.f32 %v6538, %v6538
    %v6603 = vmul.f32 %v6539, %v6539
    %v6604 = vmul.f32 %v6540, %v6540
    %v6605 = vmul.f32 %v6541, %v6541
    %v6606 = vmul.f32 %v6542, %v6542
    %v6607 = vmul.f32 %v6543, %v6543
    %v6608 = vmul.f32 %v6544, %v6544
    %v6609 = vmul.f32 %v6545, %v6545
    %v6610 = vmul.f32 %v6546, %v6546
    %v6611 = vmul.f32 %v6547, %v6547
    %v6612 = vmul.f32 %v6548, %v6548
    %v6613 = vmul.f32 %v6549, %v6549
    %v6614 = vmul.f32 %v6550, %v6550
    %v6615 = vmul.f32 %v6551, %v6551
    %v6616 = vmul.f32 %v6552, %v6552
    %v6617 = vmul.f32 %v6553, %v6553
    %v6618 = vmul.f32 %v6554, %v6554
    %v6619 = vmul.f32 %v6555, %v6555
    %v6620 = vmul.f32 %v6556, %v6556
    %v6621 = vmul.f32 %v6557, %v6557
    %v6622 = vmul.f32 %v6558, %v6558
    %v6623 = vmul.f32 %v6559, %v6559
    %v6624 = vmul.f32 %v6560, %v6560
    %v6625 = vmul.f32 %v6561, %v6561
    %v6626 = vmul.f32 %v6562, %v6562
    %v6627 = vmul.f32 %v6563, %v6563
    %v6628 = vmul.f32 %v6564, %v6564
    %v6629 = vmul.f32 %v6565, %v6565
    %v6630 = vmul.f32 %v6566, %v6566
    %v6631 = vmul.f32 %v6567, %v6567
    %v6632 = vmul.f32 %v6568, %v6568
    %v6633 = vmul.f32 %v6569, %v6569
    %v6634 = vmul.f32 %v6570, %v6570
    %v6635 = vmul.f32 %v6571, %v6571
    %v6636 = vmul.f32 %v6572, %v6572
    %v6637 = vmul.f32 %v6573, %v6573
    %v6638 = vmul.f32 %v6574, %v6574
    %v6639 = vmul.f32 %v6575, %v6575
    %v6640 = vmul.f32 %v6576, %v6576
    %v6641 = vmul.f32 %v6577, %v6577
    %v6642 = vmul.f32 %v6578, %v6578
    %v6643 = vmul.f32 %v6579, %v6579
    %v6644 = vmul.f32 %v6580, %v6580
    %v6645 = vmul.f32 %v6581, %v6581
    %v6646 = vmul.f32 %v6582, %v6582
    %v6647 = vmul.f32 %v6583, %v6583
    %v6648 = vadd.f32 %v6584, %v6585
    %v6649 = vadd.f32 %v6648, %v6586
    %v6650 = vadd.f32 %v6649, %v6587
    %6651 = vadd.xlane.f32.xlu0 %v6650
    %v6652 = vpop.xlane.xlu0 %6651
    %v6653 = vadd.f32 %v6588, %v6589
    %v6654 = vadd.f32 %v6653, %v6590
    %v6655 = vadd.f32 %v6654, %v6591
    %6656 = vadd.xlane.f32.xlu0 %v6655
    %v6657 = vpop.xlane.xlu0 %6656
    %v6658 = vadd.f32 %v6592, %v6593
    %v6659 = vadd.f32 %v6658, %v6594
    %v6660 = vadd.f32 %v6659, %v6595
    %6661 = vadd.xlane.f32.xlu0 %v6660
    %v6662 = vpop.xlane.xlu0 %6661
    %v6663 = vadd.f32 %v6596, %v6597
    %v6664 = vadd.f32 %v6663, %v6598
    %v6665 = vadd.f32 %v6664, %v6599
    %6666 = vadd.xlane.f32.xlu0 %v6665
    %v6667 = vpop.xlane.xlu0 %6666
    %v6668 = vadd.f32 %v6600, %v6601
    %v6669 = vadd.f32 %v6668, %v6602
    %v6670 = vadd.f32 %v6669, %v6603
    %6671 = vadd.xlane.f32.xlu0 %v6670
    %v6672 = vpop.xlane.xlu0 %6671
    %v6673 = vadd.f32 %v6604, %v6605
    %v6674 = vadd.f32 %v6673, %v6606
    %v6675 = vadd.f32 %v6674, %v6607
    %6676 = vadd.xlane.f32.xlu0 %v6675
    %v6677 = vpop.xlane.xlu0 %6676
    %v6678 = vadd.f32 %v6608, %v6609
    %v6679 = vadd.f32 %v6678, %v6610
    %v6680 = vadd.f32 %v6679, %v6611
    %6681 = vadd.xlane.f32.xlu0 %v6680
    %v6682 = vpop.xlane.xlu0 %6681
    %v6683 = vadd.f32 %v6612, %v6613
    %v6684 = vadd.f32 %v6683, %v6614
    %v6685 = vadd.f32 %v6684, %v6615
    %6686 = vadd.xlane.f32.xlu0 %v6685
    %v6687 = vpop.xlane.xlu0 %6686
    %v6688 = vadd.f32 %v6616, %v6617
    %v6689 = vadd.f32 %v6688, %v6618
    %v6690 = vadd.f32 %v6689, %v6619
    %6691 = vadd.xlane.f32.xlu0 %v6690
    %v6692 = vpop.xlane.xlu0 %6691
    %v6693 = vadd.f32 %v6620, %v6621
    %v6694 = vadd.f32 %v6693, %v6622
    %v6695 = vadd.f32 %v6694, %v6623
    %6696 = vadd.xlane.f32.xlu0 %v6695
    %v6697 = vpop.xlane.xlu0 %6696
    %v6698 = vadd.f32 %v6624, %v6625
    %v6699 = vadd.f32 %v6698, %v6626
    %v6700 = vadd.f32 %v6699, %v6627
    %6701 = vadd.xlane.f32.xlu0 %v6700
    %v6702 = vpop.xlane.xlu0 %6701
    %v6703 = vadd.f32 %v6628, %v6629
    %v6704 = vadd.f32 %v6703, %v6630
    %v6705 = vadd.f32 %v6704, %v6631
    %6706 = vadd.xlane.f32.xlu0 %v6705
    %v6707 = vpop.xlane.xlu0 %6706
    %v6708 = vadd.f32 %v6632, %v6633
    %v6709 = vadd.f32 %v6708, %v6634
    %v6710 = vadd.f32 %v6709, %v6635
    %6711 = vadd.xlane.f32.xlu0 %v6710
    %v6712 = vpop.xlane.xlu0 %6711
    %v6713 = vadd.f32 %v6636, %v6637
    %v6714 = vadd.f32 %v6713, %v6638
    %v6715 = vadd.f32 %v6714, %v6639
    %6716 = vadd.xlane.f32.xlu0 %v6715
    %v6717 = vpop.xlane.xlu0 %6716
    %v6718 = vadd.f32 %v6640, %v6641
    %v6719 = vadd.f32 %v6718, %v6642
    %v6720 = vadd.f32 %v6719, %v6643
    %6721 = vadd.xlane.f32.xlu0 %v6720
    %v6722 = vpop.xlane.xlu0 %6721
    %v6723 = vadd.f32 %v6644, %v6645
    %v6724 = vadd.f32 %v6723, %v6646
    %v6725 = vadd.f32 %v6724, %v6647
    %6726 = vadd.xlane.f32.xlu0 %v6725
    %v6727 = vpop.xlane.xlu0 %6726
    %v6728 = vmul.f32 %v6652, %v6503
    %v6729 = vmul.f32 %v6657, %v6503
    %v6730 = vmul.f32 %v6662, %v6503
    %v6731 = vmul.f32 %v6667, %v6503
    %v6732 = vmul.f32 %v6672, %v6503
    %v6733 = vmul.f32 %v6677, %v6503
    %v6734 = vmul.f32 %v6682, %v6503
    %v6735 = vmul.f32 %v6687, %v6503
    %v6736 = vmul.f32 %v6692, %v6503
    %v6737 = vmul.f32 %v6697, %v6503
    %v6738 = vmul.f32 %v6702, %v6503
    %v6739 = vmul.f32 %v6707, %v6503
    %v6740 = vmul.f32 %v6712, %v6503
    %v6741 = vmul.f32 %v6717, %v6503
    %v6742 = vmul.f32 %v6722, %v6503
    %v6743 = vmul.f32 %v6727, %v6503
    %v6744 = vadd.f32 %v6728, 1e-05
    %v6745 = vadd.f32 %v6729, 1e-05
    %v6746 = vadd.f32 %v6730, 1e-05
    %v6747 = vadd.f32 %v6731, 1e-05
    %v6748 = vadd.f32 %v6732, 1e-05
    %v6749 = vadd.f32 %v6733, 1e-05
    %v6750 = vadd.f32 %v6734, 1e-05
    %v6751 = vadd.f32 %v6735, 1e-05
    %v6752 = vadd.f32 %v6736, 1e-05
    %v6753 = vadd.f32 %v6737, 1e-05
    %v6754 = vadd.f32 %v6738, 1e-05
    %v6755 = vadd.f32 %v6739, 1e-05
    %v6756 = vadd.f32 %v6740, 1e-05
    %v6757 = vadd.f32 %v6741, 1e-05
    %v6758 = vadd.f32 %v6742, 1e-05
    %v6759 = vadd.f32 %v6743, 1e-05
    %v6760 = vrsqrt.pop %v6744
    %v6761 = vrsqrt.pop %v6745
    %v6762 = vrsqrt.pop %v6746
    %v6763 = vrsqrt.pop %v6747
    %v6764 = vrsqrt.pop %v6748
    %v6765 = vrsqrt.pop %v6749
    %v6766 = vrsqrt.pop %v6750
    %v6767 = vrsqrt.pop %v6751
    %v6768 = vrsqrt.pop %v6752
    %v6769 = vrsqrt.pop %v6753
    %v6770 = vrsqrt.pop %v6754
    %v6771 = vrsqrt.pop %v6755
    %v6772 = vrsqrt.pop %v6756
    %v6773 = vrsqrt.pop %v6757
    %v6774 = vrsqrt.pop %v6758
    %v6775 = vrsqrt.pop %v6759
    %v6776 = vmul.f32 %v6520, %v6760
    %v6777 = vmul.f32 %v6521, %v6760
    %v6778 = vmul.f32 %v6522, %v6760
    %v6779 = vmul.f32 %v6523, %v6760
    %v6780 = vmul.f32 %v6524, %v6761
    %v6781 = vmul.f32 %v6525, %v6761
    %v6782 = vmul.f32 %v6526, %v6761
    %v6783 = vmul.f32 %v6527, %v6761
    %v6784 = vmul.f32 %v6528, %v6762
    %v6785 = vmul.f32 %v6529, %v6762
    %v6786 = vmul.f32 %v6530, %v6762
    %v6787 = vmul.f32 %v6531, %v6762
    %v6788 = vmul.f32 %v6532, %v6763
    %v6789 = vmul.f32 %v6533, %v6763
    %v6790 = vmul.f32 %v6534, %v6763
    %v6791 = vmul.f32 %v6535, %v6763
    %v6792 = vmul.f32 %v6536, %v6764
    %v6793 = vmul.f32 %v6537, %v6764
    %v6794 = vmul.f32 %v6538, %v6764
    %v6795 = vmul.f32 %v6539, %v6764
    %v6796 = vmul.f32 %v6540, %v6765
    %v6797 = vmul.f32 %v6541, %v6765
    %v6798 = vmul.f32 %v6542, %v6765
    %v6799 = vmul.f32 %v6543, %v6765
    %v6800 = vmul.f32 %v6544, %v6766
    %v6801 = vmul.f32 %v6545, %v6766
    %v6802 = vmul.f32 %v6546, %v6766
    %v6803 = vmul.f32 %v6547, %v6766
    %v6804 = vmul.f32 %v6548, %v6767
    %v6805 = vmul.f32 %v6549, %v6767
    %v6806 = vmul.f32 %v6550, %v6767
    %v6807 = vmul.f32 %v6551, %v6767
    %v6808 = vmul.f32 %v6552, %v6768
    %v6809 = vmul.f32 %v6553, %v6768
    %v6810 = vmul.f32 %v6554, %v6768
    %v6811 = vmul.f32 %v6555, %v6768
    %v6812 = vmul.f32 %v6556, %v6769
    %v6813 = vmul.f32 %v6557, %v6769
    %v6814 = vmul.f32 %v6558, %v6769
    %v6815 = vmul.f32 %v6559, %v6769
    %v6816 = vmul.f32 %v6560, %v6770
    %v6817 = vmul.f32 %v6561, %v6770
    %v6818 = vmul.f32 %v6562, %v6770
    %v6819 = vmul.f32 %v6563, %v6770
    %v6820 = vmul.f32 %v6564, %v6771
    %v6821 = vmul.f32 %v6565, %v6771
    %v6822 = vmul.f32 %v6566, %v6771
    %v6823 = vmul.f32 %v6567, %v6771
    %v6824 = vmul.f32 %v6568, %v6772
    %v6825 = vmul.f32 %v6569, %v6772
    %v6826 = vmul.f32 %v6570, %v6772
    %v6827 = vmul.f32 %v6571, %v6772
    %v6828 = vmul.f32 %v6572, %v6773
    %v6829 = vmul.f32 %v6573, %v6773
    %v6830 = vmul.f32 %v6574, %v6773
    %v6831 = vmul.f32 %v6575, %v6773
    %v6832 = vmul.f32 %v6576, %v6774
    %v6833 = vmul.f32 %v6577, %v6774
    %v6834 = vmul.f32 %v6578, %v6774
    %v6835 = vmul.f32 %v6579, %v6774
    %v6836 = vmul.f32 %v6580, %v6775
    %v6837 = vmul.f32 %v6581, %v6775
    %v6838 = vmul.f32 %v6582, %v6775
    %v6839 = vmul.f32 %v6583, %v6775
    %v6841 = vlaneseq
    %v6842 = vshrl.u32 %v6841, 7
    %v6843 = vsub.s32 0, %v6842
    %v6844 = vrot.slane %v6421, %v6843
    %v6845 = vlaneseq
    %v6846 = vshrl.u32 %v6845, 7
    %v6847 = vsub.s32 1, %v6846
    %v6848 = vrot.slane %v6421, %v6847
    %v6849 = vlaneseq
    %v6850 = vshrl.u32 %v6849, 7
    %v6851 = vsub.s32 2, %v6850
    %v6852 = vrot.slane %v6421, %v6851
    %v6853 = vlaneseq
    %v6854 = vshrl.u32 %v6853, 7
    %v6855 = vsub.s32 3, %v6854
    %v6856 = vrot.slane %v6421, %v6855
    %v6861 = vmul.f32 %v6776, %v6844
    %v6862 = vmul.f32 %v6777, %v6848
    %v6863 = vmul.f32 %v6778, %v6852
    %v6864 = vmul.f32 %v6779, %v6856
    %v6865 = vmul.f32 %v6780, %v6844
    %v6866 = vmul.f32 %v6781, %v6848
    %v6867 = vmul.f32 %v6782, %v6852
    %v6868 = vmul.f32 %v6783, %v6856
    %v6869 = vmul.f32 %v6784, %v6844
    %v6870 = vmul.f32 %v6785, %v6848
    %v6871 = vmul.f32 %v6786, %v6852
    %v6872 = vmul.f32 %v6787, %v6856
    %v6873 = vmul.f32 %v6788, %v6844
    %v6874 = vmul.f32 %v6789, %v6848
    %v6875 = vmul.f32 %v6790, %v6852
    %v6876 = vmul.f32 %v6791, %v6856
    %v6877 = vmul.f32 %v6792, %v6844
    %v6878 = vmul.f32 %v6793, %v6848
    %v6879 = vmul.f32 %v6794, %v6852
    %v6880 = vmul.f32 %v6795, %v6856
    %v6881 = vmul.f32 %v6796, %v6844
    %v6882 = vmul.f32 %v6797, %v6848
    %v6883 = vmul.f32 %v6798, %v6852
    %v6884 = vmul.f32 %v6799, %v6856
    %v6885 = vmul.f32 %v6800, %v6844
    %v6886 = vmul.f32 %v6801, %v6848
    %v6887 = vmul.f32 %v6802, %v6852
    %v6888 = vmul.f32 %v6803, %v6856
    %v6889 = vmul.f32 %v6804, %v6844
    %v6890 = vmul.f32 %v6805, %v6848
    %v6891 = vmul.f32 %v6806, %v6852
    %v6892 = vmul.f32 %v6807, %v6856
    %v6893 = vmul.f32 %v6808, %v6844
    %v6894 = vmul.f32 %v6809, %v6848
    %v6895 = vmul.f32 %v6810, %v6852
    %v6896 = vmul.f32 %v6811, %v6856
    %v6897 = vmul.f32 %v6812, %v6844
    %v6898 = vmul.f32 %v6813, %v6848
    %v6899 = vmul.f32 %v6814, %v6852
    %v6900 = vmul.f32 %v6815, %v6856
    %v6901 = vmul.f32 %v6816, %v6844
    %v6902 = vmul.f32 %v6817, %v6848
    %v6903 = vmul.f32 %v6818, %v6852
    %v6904 = vmul.f32 %v6819, %v6856
    %v6905 = vmul.f32 %v6820, %v6844
    %v6906 = vmul.f32 %v6821, %v6848
    %v6907 = vmul.f32 %v6822, %v6852
    %v6908 = vmul.f32 %v6823, %v6856
    %v6909 = vmul.f32 %v6824, %v6844
    %v6910 = vmul.f32 %v6825, %v6848
    %v6911 = vmul.f32 %v6826, %v6852
    %v6912 = vmul.f32 %v6827, %v6856
    %v6913 = vmul.f32 %v6828, %v6844
    %v6914 = vmul.f32 %v6829, %v6848
    %v6915 = vmul.f32 %v6830, %v6852
    %v6916 = vmul.f32 %v6831, %v6856
    %v6917 = vmul.f32 %v6832, %v6844
    %v6918 = vmul.f32 %v6833, %v6848
    %v6919 = vmul.f32 %v6834, %v6852
    %v6920 = vmul.f32 %v6835, %v6856
    %v6921 = vmul.f32 %v6836, %v6844
    %v6922 = vmul.f32 %v6837, %v6848
    %v6923 = vmul.f32 %v6838, %v6852
    %v6924 = vmul.f32 %v6839, %v6856
    %v6926 = vlaneseq
    %v6927 = vshrl.u32 %v6926, 7
    %v6928 = vsub.s32 0, %v6927
    %v6929 = vrot.slane %v6422, %v6928
    %v6930 = vlaneseq
    %v6931 = vshrl.u32 %v6930, 7
    %v6932 = vsub.s32 1, %v6931
    %v6933 = vrot.slane %v6422, %v6932
    %v6934 = vlaneseq
    %v6935 = vshrl.u32 %v6934, 7
    %v6936 = vsub.s32 2, %v6935
    %v6937 = vrot.slane %v6422, %v6936
    %v6938 = vlaneseq
    %v6939 = vshrl.u32 %v6938, 7
    %v6940 = vsub.s32 3, %v6939
    %v6941 = vrot.slane %v6422, %v6940
    %v6946 = vadd.f32 %v6861, %v6929
    %v6947 = vadd.f32 %v6862, %v6933
    %v6948 = vadd.f32 %v6863, %v6937
    %v6949 = vadd.f32 %v6864, %v6941
    %v6950 = vadd.f32 %v6865, %v6929
    %v6951 = vadd.f32 %v6866, %v6933
    %v6952 = vadd.f32 %v6867, %v6937
    %v6953 = vadd.f32 %v6868, %v6941
    %v6954 = vadd.f32 %v6869, %v6929
    %v6955 = vadd.f32 %v6870, %v6933
    %v6956 = vadd.f32 %v6871, %v6937
    %v6957 = vadd.f32 %v6872, %v6941
    %v6958 = vadd.f32 %v6873, %v6929
    %v6959 = vadd.f32 %v6874, %v6933
    %v6960 = vadd.f32 %v6875, %v6937
    %v6961 = vadd.f32 %v6876, %v6941
    %v6962 = vadd.f32 %v6877, %v6929
    %v6963 = vadd.f32 %v6878, %v6933
    %v6964 = vadd.f32 %v6879, %v6937
    %v6965 = vadd.f32 %v6880, %v6941
    %v6966 = vadd.f32 %v6881, %v6929
    %v6967 = vadd.f32 %v6882, %v6933
    %v6968 = vadd.f32 %v6883, %v6937
    %v6969 = vadd.f32 %v6884, %v6941
    %v6970 = vadd.f32 %v6885, %v6929
    %v6971 = vadd.f32 %v6886, %v6933
    %v6972 = vadd.f32 %v6887, %v6937
    %v6973 = vadd.f32 %v6888, %v6941
    %v6974 = vadd.f32 %v6889, %v6929
    %v6975 = vadd.f32 %v6890, %v6933
    %v6976 = vadd.f32 %v6891, %v6937
    %v6977 = vadd.f32 %v6892, %v6941
    %v6978 = vadd.f32 %v6893, %v6929
    %v6979 = vadd.f32 %v6894, %v6933
    %v6980 = vadd.f32 %v6895, %v6937
    %v6981 = vadd.f32 %v6896, %v6941
    %v6982 = vadd.f32 %v6897, %v6929
    %v6983 = vadd.f32 %v6898, %v6933
    %v6984 = vadd.f32 %v6899, %v6937
    %v6985 = vadd.f32 %v6900, %v6941
    %v6986 = vadd.f32 %v6901, %v6929
    %v6987 = vadd.f32 %v6902, %v6933
    %v6988 = vadd.f32 %v6903, %v6937
    %v6989 = vadd.f32 %v6904, %v6941
    %v6990 = vadd.f32 %v6905, %v6929
    %v6991 = vadd.f32 %v6906, %v6933
    %v6992 = vadd.f32 %v6907, %v6937
    %v6993 = vadd.f32 %v6908, %v6941
    %v6994 = vadd.f32 %v6909, %v6929
    %v6995 = vadd.f32 %v6910, %v6933
    %v6996 = vadd.f32 %v6911, %v6937
    %v6997 = vadd.f32 %v6912, %v6941
    %v6998 = vadd.f32 %v6913, %v6929
    %v6999 = vadd.f32 %v6914, %v6933
    %v7000 = vadd.f32 %v6915, %v6937
    %v7001 = vadd.f32 %v6916, %v6941
    %v7002 = vadd.f32 %v6917, %v6929
    %v7003 = vadd.f32 %v6918, %v6933
    %v7004 = vadd.f32 %v6919, %v6937
    %v7005 = vadd.f32 %v6920, %v6941
    %v7006 = vadd.f32 %v6921, %v6929
    %v7007 = vadd.f32 %v6922, %v6933
    %v7008 = vadd.f32 %v6923, %v6937
    %v7009 = vadd.f32 %v6924, %v6941
    %v7010 = vpack.c.bf16 %v6950, %v6946
    %v7011 = vpack.c.bf16 %v6951, %v6947
    %v7012 = vpack.c.bf16 %v6952, %v6948
    %v7013 = vpack.c.bf16 %v6953, %v6949
    %v7014 = vpack.c.bf16 %v6958, %v6954
    %v7015 = vpack.c.bf16 %v6959, %v6955
    %v7016 = vpack.c.bf16 %v6960, %v6956
    %v7017 = vpack.c.bf16 %v6961, %v6957
    %v7018 = vpack.c.bf16 %v6966, %v6962
    %v7019 = vpack.c.bf16 %v6967, %v6963
    %v7020 = vpack.c.bf16 %v6968, %v6964
    %v7021 = vpack.c.bf16 %v6969, %v6965
    %v7022 = vpack.c.bf16 %v6974, %v6970
    %v7023 = vpack.c.bf16 %v6975, %v6971
    %v7024 = vpack.c.bf16 %v6976, %v6972
    %v7025 = vpack.c.bf16 %v6977, %v6973
    %v7026 = vpack.c.bf16 %v6982, %v6978
    %v7027 = vpack.c.bf16 %v6983, %v6979
    %v7028 = vpack.c.bf16 %v6984, %v6980
    %v7029 = vpack.c.bf16 %v6985, %v6981
    %v7030 = vpack.c.bf16 %v6990, %v6986
    %v7031 = vpack.c.bf16 %v6991, %v6987
    %v7032 = vpack.c.bf16 %v6992, %v6988
    %v7033 = vpack.c.bf16 %v6993, %v6989
    %v7034 = vpack.c.bf16 %v6998, %v6994
    %v7035 = vpack.c.bf16 %v6999, %v6995
    %v7036 = vpack.c.bf16 %v7000, %v6996
    %v7037 = vpack.c.bf16 %v7001, %v6997
    %v7038 = vpack.c.bf16 %v7006, %v7002
    %v7039 = vpack.c.bf16 %v7007, %v7003
    %v7040 = vpack.c.bf16 %v7008, %v7004
    %v7041 = vpack.c.bf16 %v7009, %v7005
    %v7042 = vld [vmem:[#allocation11] sm:$0xff]
    %v7043 = vld [vmem:[#allocation11 + $0x8] sm:$0xff]
    %v7044 = vld [vmem:[#allocation11 + $0x10] sm:$0xff]
    %v7045 = vld [vmem:[#allocation11 + $0x18] sm:$0xff]
    %v7046 = vld [vmem:[#allocation11 + $0x20] sm:$0xff]
    %v7047 = vld [vmem:[#allocation11 + $0x28] sm:$0xff]
    %v7048 = vld [vmem:[#allocation11 + $0x30] sm:$0xff]
    %v7049 = vld [vmem:[#allocation11 + $0x38] sm:$0xff]
    %v7050 = vld [vmem:[#allocation11 + $0x40] sm:$0xff]
    %v7051 = vld [vmem:[#allocation11 + $0x48] sm:$0xff]
    %v7052 = vld [vmem:[#allocation11 + $0x50] sm:$0xff]
    %v7053 = vld [vmem:[#allocation11 + $0x58] sm:$0xff]
    %v7054 = vld [vmem:[#allocation11 + $0x60] sm:$0xff]
    %v7055 = vld [vmem:[#allocation11 + $0x68] sm:$0xff]
    %v7056 = vld [vmem:[#allocation11 + $0x70] sm:$0xff]
    %v7057 = vld [vmem:[#allocation11 + $0x78] sm:$0xff]
    %v7058 = vld [vmem:[#allocation11 + $0x80] sm:$0xff]
    %v7059 = vld [vmem:[#allocation11 + $0x88] sm:$0xff]
    %v7060 = vld [vmem:[#allocation11 + $0x90] sm:$0xff]
    %v7061 = vld [vmem:[#allocation11 + $0x98] sm:$0xff]
    %v7062 = vld [vmem:[#allocation11 + $0xa0] sm:$0xff]
    %v7063 = vld [vmem:[#allocation11 + $0xa8] sm:$0xff]
    %v7064 = vld [vmem:[#allocation11 + $0xb0] sm:$0xff]
    %v7065 = vld [vmem:[#allocation11 + $0xb8] sm:$0xff]
    %v7066 = vld [vmem:[#allocation11 + $0xc0] sm:$0xff]
    %v7067 = vld [vmem:[#allocation11 + $0xc8] sm:$0xff]
    %v7068 = vld [vmem:[#allocation11 + $0xd0] sm:$0xff]
    %v7069 = vld [vmem:[#allocation11 + $0xd8] sm:$0xff]
    %v7070 = vld [vmem:[#allocation11 + $0xe0] sm:$0xff]
    %v7071 = vld [vmem:[#allocation11 + $0xe8] sm:$0xff]
    %v7072 = vld [vmem:[#allocation11 + $0xf0] sm:$0xff]
    %v7073 = vld [vmem:[#allocation11 + $0xf8] sm:$0xff]
    %v7074 = vld [vmem:[#allocation11 + $0x100] sm:$0xff]
    %v7075 = vld [vmem:[#allocation11 + $0x108] sm:$0xff]
    %v7076 = vld [vmem:[#allocation11 + $0x110] sm:$0xff]
    %v7077 = vld [vmem:[#allocation11 + $0x118] sm:$0xff]
    %v7078 = vld [vmem:[#allocation11 + $0x120] sm:$0xff]
    %v7079 = vld [vmem:[#allocation11 + $0x128] sm:$0xff]
    %v7080 = vld [vmem:[#allocation11 + $0x130] sm:$0xff]
    %v7081 = vld [vmem:[#allocation11 + $0x138] sm:$0xff]
    %v7082 = vld [vmem:[#allocation11 + $0x140] sm:$0xff]
    %v7083 = vld [vmem:[#allocation11 + $0x148] sm:$0xff]
    %v7084 = vld [vmem:[#allocation11 + $0x150] sm:$0xff]
    %v7085 = vld [vmem:[#allocation11 + $0x158] sm:$0xff]
    %v7086 = vld [vmem:[#allocation11 + $0x160] sm:$0xff]
    %v7087 = vld [vmem:[#allocation11 + $0x168] sm:$0xff]
    %v7088 = vld [vmem:[#allocation11 + $0x170] sm:$0xff]
    %v7089 = vld [vmem:[#allocation11 + $0x178] sm:$0xff]
    %v7090 = vld [vmem:[#allocation11 + $0x180] sm:$0xff]
    %v7091 = vld [vmem:[#allocation11 + $0x188] sm:$0xff]
    %v7092 = vld [vmem:[#allocation11 + $0x190] sm:$0xff]
    %v7093 = vld [vmem:[#allocation11 + $0x198] sm:$0xff]
    %v7094 = vld [vmem:[#allocation11 + $0x1a0] sm:$0xff]
    %v7095 = vld [vmem:[#allocation11 + $0x1a8] sm:$0xff]
    %v7096 = vld [vmem:[#allocation11 + $0x1b0] sm:$0xff]
    %v7097 = vld [vmem:[#allocation11 + $0x1b8] sm:$0xff]
    %v7098 = vld [vmem:[#allocation11 + $0x1c0] sm:$0xff]
    %v7099 = vld [vmem:[#allocation11 + $0x1c8] sm:$0xff]
    %v7100 = vld [vmem:[#allocation11 + $0x1d0] sm:$0xff]
    %v7101 = vld [vmem:[#allocation11 + $0x1d8] sm:$0xff]
    %v7102 = vld [vmem:[#allocation11 + $0x1e0] sm:$0xff]
    %v7103 = vld [vmem:[#allocation11 + $0x1e8] sm:$0xff]
    %v7104 = vld [vmem:[#allocation11 + $0x1f0] sm:$0xff]
    %v7105 = vld [vmem:[#allocation11 + $0x1f8] sm:$0xff]
    %v7170 = vunpack.c.l.b16 %v7042
    %v7171 = vunpack.c.h.b16 %v7042
    %v7172 = vunpack.c.l.b16 %v7043
    %v7173 = vunpack.c.h.b16 %v7043
    %v7174 = vunpack.c.l.b16 %v7044
    %v7175 = vunpack.c.h.b16 %v7044
    %v7176 = vunpack.c.l.b16 %v7045
    %v7177 = vunpack.c.h.b16 %v7045
    %v7178 = vunpack.c.l.b16 %v7046
    %v7179 = vunpack.c.h.b16 %v7046
    %v7180 = vunpack.c.l.b16 %v7047
    %v7181 = vunpack.c.h.b16 %v7047
    %v7182 = vunpack.c.l.b16 %v7048
    %v7183 = vunpack.c.h.b16 %v7048
    %v7184 = vunpack.c.l.b16 %v7049
    %v7185 = vunpack.c.h.b16 %v7049
    %v7186 = vunpack.c.l.b16 %v7050
    %v7187 = vunpack.c.h.b16 %v7050
    %v7188 = vunpack.c.l.b16 %v7051
    %v7189 = vunpack.c.h.b16 %v7051
    %v7190 = vunpack.c.l.b16 %v7052
    %v7191 = vunpack.c.h.b16 %v7052
    %v7192 = vunpack.c.l.b16 %v7053
    %v7193 = vunpack.c.h.b16 %v7053
    %v7194 = vunpack.c.l.b16 %v7054
    %v7195 = vunpack.c.h.b16 %v7054
    %v7196 = vunpack.c.l.b16 %v7055
    %v7197 = vunpack.c.h.b16 %v7055
    %v7198 = vunpack.c.l.b16 %v7056
    %v7199 = vunpack.c.h.b16 %v7056
    %v7200 = vunpack.c.l.b16 %v7057
    %v7201 = vunpack.c.h.b16 %v7057
    %v7202 = vunpack.c.l.b16 %v7058
    %v7203 = vunpack.c.h.b16 %v7058
    %v7204 = vunpack.c.l.b16 %v7059
    %v7205 = vunpack.c.h.b16 %v7059
    %v7206 = vunpack.c.l.b16 %v7060
    %v7207 = vunpack.c.h.b16 %v7060
    %v7208 = vunpack.c.l.b16 %v7061
    %v7209 = vunpack.c.h.b16 %v7061
    %v7210 = vunpack.c.l.b16 %v7062
    %v7211 = vunpack.c.h.b16 %v7062
    %v7212 = vunpack.c.l.b16 %v7063
    %v7213 = vunpack.c.h.b16 %v7063
    %v7214 = vunpack.c.l.b16 %v7064
    %v7215 = vunpack.c.h.b16 %v7064
    %v7216 = vunpack.c.l.b16 %v7065
    %v7217 = vunpack.c.h.b16 %v7065
    %v7218 = vunpack.c.l.b16 %v7066
    %v7219 = vunpack.c.h.b16 %v7066
    %v7220 = vunpack.c.l.b16 %v7067
    %v7221 = vunpack.c.h.b16 %v7067
    %v7222 = vunpack.c.l.b16 %v7068
    %v7223 = vunpack.c.h.b16 %v7068
    %v7224 = vunpack.c.l.b16 %v7069
    %v7225 = vunpack.c.h.b16 %v7069
    %v7226 = vunpack.c.l.b16 %v7070
    %v7227 = vunpack.c.h.b16 %v7070
    %v7228 = vunpack.c.l.b16 %v7071
    %v7229 = vunpack.c.h.b16 %v7071
    %v7230 = vunpack.c.l.b16 %v7072
    %v7231 = vunpack.c.h.b16 %v7072
    %v7232 = vunpack.c.l.b16 %v7073
    %v7233 = vunpack.c.h.b16 %v7073
    %v7234 = vunpack.c.l.b16 %v7074
    %v7235 = vunpack.c.h.b16 %v7074
    %v7236 = vunpack.c.l.b16 %v7075
    %v7237 = vunpack.c.h.b16 %v7075
    %v7238 = vunpack.c.l.b16 %v7076
    %v7239 = vunpack.c.h.b16 %v7076
    %v7240 = vunpack.c.l.b16 %v7077
    %v7241 = vunpack.c.h.b16 %v7077
    %v7242 = vunpack.c.l.b16 %v7078
    %v7243 = vunpack.c.h.b16 %v7078
    %v7244 = vunpack.c.l.b16 %v7079
    %v7245 = vunpack.c.h.b16 %v7079
    %v7246 = vunpack.c.l.b16 %v7080
    %v7247 = vunpack.c.h.b16 %v7080
    %v7248 = vunpack.c.l.b16 %v7081
    %v7249 = vunpack.c.h.b16 %v7081
    %v7250 = vunpack.c.l.b16 %v7082
    %v7251 = vunpack.c.h.b16 %v7082
    %v7252 = vunpack.c.l.b16 %v7083
    %v7253 = vunpack.c.h.b16 %v7083
    %v7254 = vunpack.c.l.b16 %v7084
    %v7255 = vunpack.c.h.b16 %v7084
    %v7256 = vunpack.c.l.b16 %v7085
    %v7257 = vunpack.c.h.b16 %v7085
    %v7258 = vunpack.c.l.b16 %v7086
    %v7259 = vunpack.c.h.b16 %v7086
    %v7260 = vunpack.c.l.b16 %v7087
    %v7261 = vunpack.c.h.b16 %v7087
    %v7262 = vunpack.c.l.b16 %v7088
    %v7263 = vunpack.c.h.b16 %v7088
    %v7264 = vunpack.c.l.b16 %v7089
    %v7265 = vunpack.c.h.b16 %v7089
    %v7266 = vunpack.c.l.b16 %v7090
    %v7267 = vunpack.c.h.b16 %v7090
    %v7268 = vunpack.c.l.b16 %v7091
    %v7269 = vunpack.c.h.b16 %v7091
    %v7270 = vunpack.c.l.b16 %v7092
    %v7271 = vunpack.c.h.b16 %v7092
    %v7272 = vunpack.c.l.b16 %v7093
    %v7273 = vunpack.c.h.b16 %v7093
    %v7274 = vunpack.c.l.b16 %v7094
    %v7275 = vunpack.c.h.b16 %v7094
    %v7276 = vunpack.c.l.b16 %v7095
    %v7277 = vunpack.c.h.b16 %v7095
    %v7278 = vunpack.c.l.b16 %v7096
    %v7279 = vunpack.c.h.b16 %v7096
    %v7280 = vunpack.c.l.b16 %v7097
    %v7281 = vunpack.c.h.b16 %v7097
    %v7282 = vunpack.c.l.b16 %v7098
    %v7283 = vunpack.c.h.b16 %v7098
    %v7284 = vunpack.c.l.b16 %v7099
    %v7285 = vunpack.c.h.b16 %v7099
    %v7286 = vunpack.c.l.b16 %v7100
    %v7287 = vunpack.c.h.b16 %v7100
    %v7288 = vunpack.c.l.b16 %v7101
    %v7289 = vunpack.c.h.b16 %v7101
    %v7290 = vunpack.c.l.b16 %v7102
    %v7291 = vunpack.c.h.b16 %v7102
    %v7292 = vunpack.c.l.b16 %v7103
    %v7293 = vunpack.c.h.b16 %v7103
    %v7294 = vunpack.c.l.b16 %v7104
    %v7295 = vunpack.c.h.b16 %v7104
    %v7296 = vunpack.c.l.b16 %v7105
    %v7297 = vunpack.c.h.b16 %v7105
    %v7298 = vpack.c.b16 %v7172, %v7170
    %v7299 = vpack.c.b16 %v7173, %v7171
    %v7300 = vpack.c.b16 %v7176, %v7174
    %v7301 = vpack.c.b16 %v7177, %v7175
    %v7302 = vpack.c.b16 %v7180, %v7178
    %v7303 = vpack.c.b16 %v7181, %v7179
    %v7304 = vpack.c.b16 %v7184, %v7182
    %v7305 = vpack.c.b16 %v7185, %v7183
    %v7306 = vpack.c.b16 %v7188, %v7186
    %v7307 = vpack.c.b16 %v7189, %v7187
    %v7308 = vpack.c.b16 %v7192, %v7190
    %v7309 = vpack.c.b16 %v7193, %v7191
    %v7310 = vpack.c.b16 %v7196, %v7194
    %v7311 = vpack.c.b16 %v7197, %v7195
    %v7312 = vpack.c.b16 %v7200, %v7198
    %v7313 = vpack.c.b16 %v7201, %v7199
    %v7314 = vpack.c.b16 %v7204, %v7202
    %v7315 = vpack.c.b16 %v7205, %v7203
    %v7316 = vpack.c.b16 %v7208, %v7206
    %v7317 = vpack.c.b16 %v7209, %v7207
    %v7318 = vpack.c.b16 %v7212, %v7210
    %v7319 = vpack.c.b16 %v7213, %v7211
    %v7320 = vpack.c.b16 %v7216, %v7214
    %v7321 = vpack.c.b16 %v7217, %v7215
    %v7322 = vpack.c.b16 %v7220, %v7218
    %v7323 = vpack.c.b16 %v7221, %v7219
    %v7324 = vpack.c.b16 %v7224, %v7222
    %v7325 = vpack.c.b16 %v7225, %v7223
    %v7326 = vpack.c.b16 %v7228, %v7226
    %v7327 = vpack.c.b16 %v7229, %v7227
    %v7328 = vpack.c.b16 %v7232, %v7230
    %v7329 = vpack.c.b16 %v7233, %v7231
    %v7330 = vpack.c.b16 %v7236, %v7234
    %v7331 = vpack.c.b16 %v7237, %v7235
    %v7332 = vpack.c.b16 %v7240, %v7238
    %v7333 = vpack.c.b16 %v7241, %v7239
    %v7334 = vpack.c.b16 %v7244, %v7242
    %v7335 = vpack.c.b16 %v7245, %v7243
    %v7336 = vpack.c.b16 %v7248, %v7246
    %v7337 = vpack.c.b16 %v7249, %v7247
    %v7338 = vpack.c.b16 %v7252, %v7250
    %v7339 = vpack.c.b16 %v7253, %v7251
    %v7340 = vpack.c.b16 %v7256, %v7254
    %v7341 = vpack.c.b16 %v7257, %v7255
    %v7342 = vpack.c.b16 %v7260, %v7258
    %v7343 = vpack.c.b16 %v7261, %v7259
    %v7344 = vpack.c.b16 %v7264, %v7262
    %v7345 = vpack.c.b16 %v7265, %v7263
    %v7346 = vpack.c.b16 %v7268, %v7266
    %v7347 = vpack.c.b16 %v7269, %v7267
    %v7348 = vpack.c.b16 %v7272, %v7270
    %v7349 = vpack.c.b16 %v7273, %v7271
    %v7350 = vpack.c.b16 %v7276, %v7274
    %v7351 = vpack.c.b16 %v7277, %v7275
    %v7352 = vpack.c.b16 %v7280, %v7278
    %v7353 = vpack.c.b16 %v7281, %v7279
    %v7354 = vpack.c.b16 %v7284, %v7282
    %v7355 = vpack.c.b16 %v7285, %v7283
    %v7356 = vpack.c.b16 %v7288, %v7286
    %v7357 = vpack.c.b16 %v7289, %v7287
    %v7358 = vpack.c.b16 %v7292, %v7290
    %v7359 = vpack.c.b16 %v7293, %v7291
    %v7360 = vpack.c.b16 %v7296, %v7294
    %v7361 = vpack.c.b16 %v7297, %v7295
    %7426 = vmatprep.subr.bf16.mxu0 %v7299
    %7427 = vmatpush1.bf16.msra.mxu0 %v7298
    %7428 = vmatprep.subr.bf16.mxu0 %v7301
    %7429 = vmatpush1.bf16.msra.mxu0 %v7300
    %7430 = vmatprep.subr.bf16.mxu0 %v7303
    %7431 = vmatpush1.bf16.msra.mxu0 %v7302
    %7432 = vmatprep.subr.bf16.mxu0 %v7305
    %7433 = vmatpush1.bf16.msra.mxu0 %v7304
    %7434 = vmatprep.subr.bf16.mxu0 %v7307
    %7435 = vmatpush1.bf16.msra.mxu0 %v7306
    %7436 = vmatprep.subr.bf16.mxu0 %v7309
    %7437 = vmatpush1.bf16.msra.mxu0 %v7308
    %7438 = vmatprep.subr.bf16.mxu0 %v7311
    %7439 = vmatpush1.bf16.msra.mxu0 %v7310
    %7440 = vmatprep.subr.bf16.mxu0 %v7313
    %7441 = vmatpush1.bf16.msra.mxu0 %v7312
    %7442 = vmatprep.subr.bf16.mxu0 %v7315
    %7443 = vmatpush1.bf16.msra.mxu0 %v7314
    %7444 = vmatprep.subr.bf16.mxu0 %v7317
    %7445 = vmatpush1.bf16.msra.mxu0 %v7316
    %7446 = vmatprep.subr.bf16.mxu0 %v7319
    %7447 = vmatpush1.bf16.msra.mxu0 %v7318
    %7448 = vmatprep.subr.bf16.mxu0 %v7321
    %7449 = vmatpush1.bf16.msra.mxu0 %v7320
    %7450 = vmatprep.subr.bf16.mxu0 %v7323
    %7451 = vmatpush1.bf16.msra.mxu0 %v7322
    %7452 = vmatprep.subr.bf16.mxu0 %v7325
    %7453 = vmatpush1.bf16.msra.mxu0 %v7324
    %7454 = vmatprep.subr.bf16.mxu0 %v7327
    %7455 = vmatpush1.bf16.msra.mxu0 %v7326
    %7456 = vmatprep.subr.bf16.mxu0 %v7329
    %7457 = vmatpush1.bf16.msra.mxu0 %v7328
    %7458 = vmatprep.mubr.bf16.mxu0 %v7011
    %7459 = vmatmul.mubr.bf16.gmra.mrb[0].mxu0 %v7010
    %v7460 = vpop.f32.mrb[0].mxu0
    %v7461 = vadd.f32 0.0, %v7460
    %v7462 = vpop.f32.mrb[0].mxu0
    %v7463 = vadd.f32 0.0, %v7462
    %v7464 = vpop.f32.mrb[0].mxu0
    %v7465 = vadd.f32 0.0, %v7464
    %v7466 = vpop.f32.mrb[0].mxu0
    %v7467 = vadd.f32 0.0, %v7466
    %7468 = vmatprep.mubr.bf16.mxu0 %v7015
    %7469 = vmatmul.mubr.bf16.gmra.mrb[0].mxu0 %v7014
    %v7470 = vpop.f32.mrb[0].mxu0
    %v7471 = vadd.f32 0.0, %v7470
    %v7472 = vpop.f32.mrb[0].mxu0
    %v7473 = vadd.f32 0.0, %v7472
    %v7474 = vpop.f32.mrb[0].mxu0
    %v7475 = vadd.f32 0.0, %v7474
    %v7476 = vpop.f32.mrb[0].mxu0
    %v7477 = vadd.f32 0.0, %v7476
    %7478 = vmatprep.mubr.bf16.mxu0 %v7019
    %7479 = vmatmul.mubr.bf16.gmra.mrb[0].mxu0 %v7018
    %v7480 = vpop.f32.mrb[0].mxu0
    %v7481 = vadd.f32 0.0, %v7480
    %v7482 = vpop.f32.mrb[0].mxu0
    %v7483 = vadd.f32 0.0, %v7482
    %v7484 = vpop.f32.mrb[0].mxu0
    %v7485 = vadd.f32 0.0, %v7484
    %v7486 = vpop.f32.mrb[0].mxu0
    %v7487 = vadd.f32 0.0, %v7486
    %7488 = vmatprep.mubr.bf16.mxu0 %v7023
    %7489 = vmatmul.mubr.bf16.gmra.mrb[0].mxu0 %v7022
    %v7490 = vpop.f32.mrb[0].mxu0
    %v7491 = vadd.f32 0.0, %v7490
    %v7492 = vpop.f32.mrb[0].mxu0
    %v7493 = vadd.f32 0.0, %v7492
    %v7494 = vpop.f32.mrb[0].mxu0
    %v7495 = vadd.f32 0.0, %v7494
    %v7496 = vpop.f32.mrb[0].mxu0
    %v7497 = vadd.f32 0.0, %v7496
    %7498 = vmatprep.mubr.bf16.mxu0 %v7027
    %7499 = vmatmul.mubr.bf16.gmra.mrb[0].mxu0 %v7026
    %v7500 = vpop.f32.mrb[0].mxu0
    %v7501 = vadd.f32 0.0, %v7500
    %v7502 = vpop.f32.mrb[0].mxu0
    %v7503 = vadd.f32 0.0, %v7502
    %v7504 = vpop.f32.mrb[0].mxu0
    %v7505 = vadd.f32 0.0, %v7504
    %v7506 = vpop.f32.mrb[0].mxu0
    %v7507 = vadd.f32 0.0, %v7506
    %7508 = vmatprep.mubr.bf16.mxu0 %v7031
    %7509 = vmatmul.mubr.bf16.gmra.mrb[0].mxu0 %v7030
    %v7510 = vpop.f32.mrb[0].mxu0
    %v7511 = vadd.f32 0.0, %v7510
    %v7512 = vpop.f32.mrb[0].mxu0
    %v7513 = vadd.f32 0.0, %v7512
    %v7514 = vpop.f32.mrb[0].mxu0
    %v7515 = vadd.f32 0.0, %v7514
    %v7516 = vpop.f32.mrb[0].mxu0
    %v7517 = vadd.f32 0.0, %v7516
    %7518 = vmatprep.mubr.bf16.mxu0 %v7035
    %7519 = vmatmul.mubr.bf16.gmra.mrb[0].mxu0 %v7034
    %v7520 = vpop.f32.mrb[0].mxu0
    %v7521 = vadd.f32 0.0, %v7520
    %v7522 = vpop.f32.mrb[0].mxu0
    %v7523 = vadd.f32 0.0, %v7522
    %v7524 = vpop.f32.mrb[0].mxu0
    %v7525 = vadd.f32 0.0, %v7524
    %v7526 = vpop.f32.mrb[0].mxu0
    %v7527 = vadd.f32 0.0, %v7526
    %7528 = vmatprep.mubr.bf16.mxu0 %v7039
    %7529 = vmatmul.mubr.bf16.gmra.mrb[0].mxu0 %v7038
    %v7530 = vpop.f32.mrb[0].mxu0
    %v7531 = vadd.f32 0.0, %v7530
    %v7532 = vpop.f32.mrb[0].mxu0
    %v7533 = vadd.f32 0.0, %v7532
    %v7534 = vpop.f32.mrb[0].mxu0
    %v7535 = vadd.f32 0.0, %v7534
    %v7536 = vpop.f32.mrb[0].mxu0
    %v7537 = vadd.f32 0.0, %v7536
    %7538 = vdwg.mxu0
    %7539 = vmatprep.subr.bf16.mxu0 %v7331
    %7540 = vmatpush1.bf16.msra.mxu0 %v7330
    %7541 = vmatprep.subr.bf16.mxu0 %v7333
    %7542 = vmatpush1.bf16.msra.mxu0 %v7332
    %7543 = vmatprep.subr.bf16.mxu0 %v7335
    %7544 = vmatpush1.bf16.msra.mxu0 %v7334
    %7545 = vmatprep.subr.bf16.mxu0 %v7337
    %7546 = vmatpush1.bf16.msra.mxu0 %v7336
    %7547 = vmatprep.subr.bf16.mxu0 %v7339
    %7548 = vmatpush1.bf16.msra.mxu0 %v7338
    %7549 = vmatprep.subr.bf16.mxu0 %v7341
    %7550 = vmatpush1.bf16.msra.mxu0 %v7340
    %7551 = vmatprep.subr.bf16.mxu0 %v7343
    %7552 = vmatpush1.bf16.msra.mxu0 %v7342
    %7553 = vmatprep.subr.bf16.mxu0 %v7345
    %7554 = vmatpush1.bf16.msra.mxu0 %v7344
    %7555 = vmatprep.subr.bf16.mxu0 %v7347
    %7556 = vmatpush1.bf16.msra.mxu0 %v7346
    %7557 = vmatprep.subr.bf16.mxu0 %v7349
    %7558 = vmatpush1.bf16.msra.mxu0 %v7348
    %7559 = vmatprep.subr.bf16.mxu0 %v7351
    %7560 = vmatpush1.bf16.msra.mxu0 %v7350
    %7561 = vmatprep.subr.bf16.mxu0 %v7353
    %7562 = vmatpush1.bf16.msra.mxu0 %v7352
    %7563 = vmatprep.subr.bf16.mxu0 %v7355
    %7564 = vmatpush1.bf16.msra.mxu0 %v7354
    %7565 = vmatprep.subr.bf16.mxu0 %v7357
    %7566 = vmatpush1.bf16.msra.mxu0 %v7356
    %7567 = vmatprep.subr.bf16.mxu0 %v7359
    %7568 = vmatpush1.bf16.msra.mxu0 %v7358
    %7569 = vmatprep.subr.bf16.mxu0 %v7361
    %7570 = vmatpush1.bf16.msra.mxu0 %v7360
    %7571 = vmatprep.mubr.bf16.mxu0 %v7013
    %7572 = vmatmul.mubr.bf16.gmra.mrb[0].mxu0 %v7012
    %v7573 = vpop.f32.mrb[0].mxu0
    %v7574 = vadd.f32 %v7461, %v7573
    %v7575 = vpop.f32.mrb[0].mxu0
    %v7576 = vadd.f32 %v7463, %v7575
    %v7577 = vpop.f32.mrb[0].mxu0
    %v7578 = vadd.f32 %v7465, %v7577
    %v7579 = vpop.f32.mrb[0].mxu0
    %v7580 = vadd.f32 %v7467, %v7579
    %7581 = vmatprep.mubr.bf16.mxu0 %v7017
    %7582 = vmatmul.mubr.bf16.gmra.mrb[0].mxu0 %v7016
    %v7583 = vpop.f32.mrb[0].mxu0
    %v7584 = vadd.f32 %v7471, %v7583
    %v7585 = vpop.f32.mrb[0].mxu0
    %v7586 = vadd.f32 %v7473, %v7585
    %v7587 = vpop.f32.mrb[0].mxu0
    %v7588 = vadd.f32 %v7475, %v7587
    %v7589 = vpop.f32.mrb[0].mxu0
    %v7590 = vadd.f32 %v7477, %v7589
    %7591 = vmatprep.mubr.bf16.mxu0 %v7021
    %7592 = vmatmul.mubr.bf16.gmra.mrb[0].mxu0 %v7020
    %v7593 = vpop.f32.mrb[0].mxu0
    %v7594 = vadd.f32 %v7481, %v7593
    %v7595 = vpop.f32.mrb[0].mxu0
    %v7596 = vadd.f32 %v7483, %v7595
    %v7597 = vpop.f32.mrb[0].mxu0
    %v7598 = vadd.f32 %v7485, %v7597
    %v7599 = vpop.f32.mrb[0].mxu0
    %v7600 = vadd.f32 %v7487, %v7599
    %7601 = vmatprep.mubr.bf16.mxu0 %v7025
    %7602 = vmatmul.mubr.bf16.gmra.mrb[0].mxu0 %v7024
    %v7603 = vpop.f32.mrb[0].mxu0
    %v7604 = vadd.f32 %v7491, %v7603
    %v7605 = vpop.f32.mrb[0].mxu0
    %v7606 = vadd.f32 %v7493, %v7605
    %v7607 = vpop.f32.mrb[0].mxu0
    %v7608 = vadd.f32 %v7495, %v7607
    %v7609 = vpop.f32.mrb[0].mxu0
    %v7610 = vadd.f32 %v7497, %v7609
    %7611 = vmatprep.mubr.bf16.mxu0 %v7029
    %7612 = vmatmul.mubr.bf16.gmra.mrb[0].mxu0 %v7028
    %v7613 = vpop.f32.mrb[0].mxu0
    %v7614 = vadd.f32 %v7501, %v7613
    %v7615 = vpop.f32.mrb[0].mxu0
    %v7616 = vadd.f32 %v7503, %v7615
    %v7617 = vpop.f32.mrb[0].mxu0
    %v7618 = vadd.f32 %v7505, %v7617
    %v7619 = vpop.f32.mrb[0].mxu0
    %v7620 = vadd.f32 %v7507, %v7619
    %7621 = vmatprep.mubr.bf16.mxu0 %v7033
    %7622 = vmatmul.mubr.bf16.gmra.mrb[0].mxu0 %v7032
    %v7623 = vpop.f32.mrb[0].mxu0
    %v7624 = vadd.f32 %v7511, %v7623
    %v7625 = vpop.f32.mrb[0].mxu0
    %v7626 = vadd.f32 %v7513, %v7625
    %v7627 = vpop.f32.mrb[0].mxu0
    %v7628 = vadd.f32 %v7515, %v7627
    %v7629 = vpop.f32.mrb[0].mxu0
    %v7630 = vadd.f32 %v7517, %v7629
    %7631 = vmatprep.mubr.bf16.mxu0 %v7037
    %7632 = vmatmul.mubr.bf16.gmra.mrb[0].mxu0 %v7036
    %v7633 = vpop.f32.mrb[0].mxu0
    %v7634 = vadd.f32 %v7521, %v7633
    %v7635 = vpop.f32.mrb[0].mxu0
    %v7636 = vadd.f32 %v7523, %v7635
    %v7637 = vpop.f32.mrb[0].mxu0
    %v7638 = vadd.f32 %v7525, %v7637
    %v7639 = vpop.f32.mrb[0].mxu0
    %v7640 = vadd.f32 %v7527, %v7639
    %7641 = vmatprep.mubr.bf16.mxu0 %v7041
    %7642 = vmatmul.mubr.bf16.gmra.mrb[0].mxu0 %v7040
    %v7643 = vpop.f32.mrb[0].mxu0
    %v7644 = vadd.f32 %v7531, %v7643
    %v7645 = vpop.f32.mrb[0].mxu0
    %v7646 = vadd.f32 %v7533, %v7645
    %v7647 = vpop.f32.mrb[0].mxu0
    %v7648 = vadd.f32 %v7535, %v7647
    %v7649 = vpop.f32.mrb[0].mxu0
    %v7650 = vadd.f32 %v7537, %v7649
    %7651 = vdwg.mxu0
    %v7652 = vmul.f32 %v7574, 0.5
    %v7653 = vmul.f32 %v7576, 0.5
    %v7654 = vmul.f32 %v7578, 0.5
    %v7655 = vmul.f32 %v7580, 0.5
    %v7656 = vmul.f32 %v7584, 0.5
    %v7657 = vmul.f32 %v7586, 0.5
    %v7658 = vmul.f32 %v7588, 0.5
    %v7659 = vmul.f32 %v7590, 0.5
    %v7660 = vmul.f32 %v7594, 0.5
    %v7661 = vmul.f32 %v7596, 0.5
    %v7662 = vmul.f32 %v7598, 0.5
    %v7663 = vmul.f32 %v7600, 0.5
    %v7664 = vmul.f32 %v7604, 0.5
    %v7665 = vmul.f32 %v7606, 0.5
    %v7666 = vmul.f32 %v7608, 0.5
    %v7667 = vmul.f32 %v7610, 0.5
    %v7668 = vmul.f32 %v7614, 0.5
    %v7669 = vmul.f32 %v7616, 0.5
    %v7670 = vmul.f32 %v7618, 0.5
    %v7671 = vmul.f32 %v7620, 0.5
    %v7672 = vmul.f32 %v7624, 0.5
    %v7673 = vmul.f32 %v7626, 0.5
    %v7674 = vmul.f32 %v7628, 0.5
    %v7675 = vmul.f32 %v7630, 0.5
    %v7676 = vmul.f32 %v7634, 0.5
    %v7677 = vmul.f32 %v7636, 0.5
    %v7678 = vmul.f32 %v7638, 0.5
    %v7679 = vmul.f32 %v7640, 0.5
    %v7680 = vmul.f32 %v7644, 0.5
    %v7681 = vmul.f32 %v7646, 0.5
    %v7682 = vmul.f32 %v7648, 0.5
    %v7683 = vmul.f32 %v7650, 0.5
    %v7684 = vmul.f32 %v7574, 0.70710677
    %v7685 = vmul.f32 %v7576, 0.70710677
    %v7686 = vmul.f32 %v7578, 0.70710677
    %v7687 = vmul.f32 %v7580, 0.70710677
    %v7688 = vmul.f32 %v7584, 0.70710677
    %v7689 = vmul.f32 %v7586, 0.70710677
    %v7690 = vmul.f32 %v7588, 0.70710677
    %v7691 = vmul.f32 %v7590, 0.70710677
    %v7692 = vmul.f32 %v7594, 0.70710677
    %v7693 = vmul.f32 %v7596, 0.70710677
    %v7694 = vmul.f32 %v7598, 0.70710677
    %v7695 = vmul.f32 %v7600, 0.70710677
    %v7696 = vmul.f32 %v7604, 0.70710677
    %v7697 = vmul.f32 %v7606, 0.70710677
    %v7698 = vmul.f32 %v7608, 0.70710677
    %v7699 = vmul.f32 %v7610, 0.70710677
    %v7700 = vmul.f32 %v7614, 0.70710677
    %v7701 = vmul.f32 %v7616, 0.70710677
    %v7702 = vmul.f32 %v7618, 0.70710677
    %v7703 = vmul.f32 %v7620, 0.70710677
    %v7704 = vmul.f32 %v7624, 0.70710677
    %v7705 = vmul.f32 %v7626, 0.70710677
    %v7706 = vmul.f32 %v7628, 0.70710677
    %v7707 = vmul.f32 %v7630, 0.70710677
    %v7708 = vmul.f32 %v7634, 0.70710677
    %v7709 = vmul.f32 %v7636, 0.70710677
    %v7710 = vmul.f32 %v7638, 0.70710677
    %v7711 = vmul.f32 %v7640, 0.70710677
    %v7712 = vmul.f32 %v7644, 0.70710677
    %v7713 = vmul.f32 %v7646, 0.70710677
    %v7714 = vmul.f32 %v7648, 0.70710677
    %v7715 = vmul.f32 %v7650, 0.70710677
    %v7716 = verf.f32.pop %v7684
    %v7717 = verf.f32.pop %v7685
    %v7718 = verf.f32.pop %v7686
    %v7719 = verf.f32.pop %v7687
    %v7720 = verf.f32.pop %v7688
    %v7721 = verf.f32.pop %v7689
    %v7722 = verf.f32.pop %v7690
    %v7723 = verf.f32.pop %v7691
    %v7724 = verf.f32.pop %v7692
    %v7725 = verf.f32.pop %v7693
    %v7726 = verf.f32.pop %v7694
    %v7727 = verf.f32.pop %v7695
    %v7728 = verf.f32.pop %v7696
    %v7729 = verf.f32.pop %v7697
    %v7730 = verf.f32.pop %v7698
    %v7731 = verf.f32.pop %v7699
    %v7732 = verf.f32.pop %v7700
    %v7733 = verf.f32.pop %v7701
    %v7734 = verf.f32.pop %v7702
    %v7735 = verf.f32.pop %v7703
    %v7736 = verf.f32.pop %v7704
    %v7737 = verf.f32.pop %v7705
    %v7738 = verf.f32.pop %v7706
    %v7739 = verf.f32.pop %v7707
    %v7740 = verf.f32.pop %v7708
    %v7741 = verf.f32.pop %v7709
    %v7742 = verf.f32.pop %v7710
    %v7743 = verf.f32.pop %v7711
    %v7744 = verf.f32.pop %v7712
    %v7745 = verf.f32.pop %v7713
    %v7746 = verf.f32.pop %v7714
    %v7747 = verf.f32.pop %v7715
    %v7748 = vadd.f32 %v7716, 1.0
    %v7749 = vadd.f32 %v7717, 1.0
    %v7750 = vadd.f32 %v7718, 1.0
    %v7751 = vadd.f32 %v7719, 1.0
    %v7752 = vadd.f32 %v7720, 1.0
    %v7753 = vadd.f32 %v7721, 1.0
    %v7754 = vadd.f32 %v7722, 1.0
    %v7755 = vadd.f32 %v7723, 1.0
    %v7756 = vadd.f32 %v7724, 1.0
    %v7757 = vadd.f32 %v7725, 1.0
    %v7758 = vadd.f32 %v7726, 1.0
    %v7759 = vadd.f32 %v7727, 1.0
    %v7760 = vadd.f32 %v7728, 1.0
    %v7761 = vadd.f32 %v7729, 1.0
    %v7762 = vadd.f32 %v7730, 1.0
    %v7763 = vadd.f32 %v7731, 1.0
    %v7764 = vadd.f32 %v7732, 1.0
    %v7765 = vadd.f32 %v7733, 1.0
    %v7766 = vadd.f32 %v7734, 1.0
    %v7767 = vadd.f32 %v7735, 1.0
    %v7768 = vadd.f32 %v7736, 1.0
    %v7769 = vadd.f32 %v7737, 1.0
    %v7770 = vadd.f32 %v7738, 1.0
    %v7771 = vadd.f32 %v7739, 1.0
    %v7772 = vadd.f32 %v7740, 1.0
    %v7773 = vadd.f32 %v7741, 1.0
    %v7774 = vadd.f32 %v7742, 1.0
    %v7775 = vadd.f32 %v7743, 1.0
    %v7776 = vadd.f32 %v7744, 1.0
    %v7777 = vadd.f32 %v7745, 1.0
    %v7778 = vadd.f32 %v7746, 1.0
    %v7779 = vadd.f32 %v7747, 1.0
    %v7780 = vmul.f32 %v7652, %v7748
    %v7781 = vmul.f32 %v7653, %v7749
    %v7782 = vmul.f32 %v7654, %v7750
    %v7783 = vmul.f32 %v7655, %v7751
    %v7784 = vmul.f32 %v7656, %v7752
    %v7785 = vmul.f32 %v7657, %v7753
    %v7786 = vmul.f32 %v7658, %v7754
    %v7787 = vmul.f32 %v7659, %v7755
    %v7788 = vmul.f32 %v7660, %v7756
    %v7789 = vmul.f32 %v7661, %v7757
    %v7790 = vmul.f32 %v7662, %v7758
    %v7791 = vmul.f32 %v7663, %v7759
    %v7792 = vmul.f32 %v7664, %v7760
    %v7793 = vmul.f32 %v7665, %v7761
    %v7794 = vmul.f32 %v7666, %v7762
    %v7795 = vmul.f32 %v7667, %v7763
    %v7796 = vmul.f32 %v7668, %v7764
    %v7797 = vmul.f32 %v7669, %v7765
    %v7798 = vmul.f32 %v7670, %v7766
    %v7799 = vmul.f32 %v7671, %v7767
    %v7800 = vmul.f32 %v7672, %v7768
    %v7801 = vmul.f32 %v7673, %v7769
    %v7802 = vmul.f32 %v7674, %v7770
    %v7803 = vmul.f32 %v7675, %v7771
    %v7804 = vmul.f32 %v7676, %v7772
    %v7805 = vmul.f32 %v7677, %v7773
    %v7806 = vmul.f32 %v7678, %v7774
    %v7807 = vmul.f32 %v7679, %v7775
    %v7808 = vmul.f32 %v7680, %v7776
    %v7809 = vmul.f32 %v7681, %v7777
    %v7810 = vmul.f32 %v7682, %v7778
    %v7811 = vmul.f32 %v7683, %v7779
    %v7812 = vld [vmem:[#allocation12] sm:$0x3]
    %v7813 = vld [vmem:[#allocation14] sm:$0x3]
    %v7814 = vadd.f32 %v7780, %v7781
    %7815 = vadd.xlane.f32.xlu0 %v7814
    %v7816 = vpop.xlane.xlu0 %7815
    %v7817 = vadd.f32 %v7782, %v7783
    %7818 = vadd.xlane.f32.xlu0 %v7817
    %v7819 = vpop.xlane.xlu0 %7818
    %v7820 = vadd.f32 %v7784, %v7785
    %7821 = vadd.xlane.f32.xlu0 %v7820
    %v7822 = vpop.xlane.xlu0 %7821
    %v7823 = vadd.f32 %v7786, %v7787
    %7824 = vadd.xlane.f32.xlu0 %v7823
    %v7825 = vpop.xlane.xlu0 %7824
    %v7826 = vadd.f32 %v7788, %v7789
    %7827 = vadd.xlane.f32.xlu0 %v7826
    %v7828 = vpop.xlane.xlu0 %7827
    %v7829 = vadd.f32 %v7790, %v7791
    %7830 = vadd.xlane.f32.xlu0 %v7829
    %v7831 = vpop.xlane.xlu0 %7830
    %v7832 = vadd.f32 %v7792, %v7793
    %7833 = vadd.xlane.f32.xlu0 %v7832
    %v7834 = vpop.xlane.xlu0 %7833
    %v7835 = vadd.f32 %v7794, %v7795
    %7836 = vadd.xlane.f32.xlu0 %v7835
    %v7837 = vpop.xlane.xlu0 %7836
    %v7838 = vadd.f32 %v7796, %v7797
    %7839 = vadd.xlane.f32.xlu0 %v7838
    %v7840 = vpop.xlane.xlu0 %7839
    %v7841 = vadd.f32 %v7798, %v7799
    %7842 = vadd.xlane.f32.xlu0 %v7841
    %v7843 = vpop.xlane.xlu0 %7842
    %v7844 = vadd.f32 %v7800, %v7801
    %7845 = vadd.xlane.f32.xlu0 %v7844
    %v7846 = vpop.xlane.xlu0 %7845
    %v7847 = vadd.f32 %v7802, %v7803
    %7848 = vadd.xlane.f32.xlu0 %v7847
    %v7849 = vpop.xlane.xlu0 %7848
    %v7850 = vadd.f32 %v7804, %v7805
    %7851 = vadd.xlane.f32.xlu0 %v7850
    %v7852 = vpop.xlane.xlu0 %7851
    %v7853 = vadd.f32 %v7806, %v7807
    %7854 = vadd.xlane.f32.xlu0 %v7853
    %v7855 = vpop.xlane.xlu0 %7854
    %v7856 = vadd.f32 %v7808, %v7809
    %7857 = vadd.xlane.f32.xlu0 %v7856
    %v7858 = vpop.xlane.xlu0 %7857
    %v7859 = vadd.f32 %v7810, %v7811
    %7860 = vadd.xlane.f32.xlu0 %v7859
    %v7861 = vpop.xlane.xlu0 %7860
    %v7862 = vrcp.pop 256.0
    %v7863 = vmul.f32 %v7816, %v7862
    %v7864 = vmul.f32 %v7819, %v7862
    %v7865 = vmul.f32 %v7822, %v7862
    %v7866 = vmul.f32 %v7825, %v7862
    %v7867 = vmul.f32 %v7828, %v7862
    %v7868 = vmul.f32 %v7831, %v7862
    %v7869 = vmul.f32 %v7834, %v7862
    %v7870 = vmul.f32 %v7837, %v7862
    %v7871 = vmul.f32 %v7840, %v7862
    %v7872 = vmul.f32 %v7843, %v7862
    %v7873 = vmul.f32 %v7846, %v7862
    %v7874 = vmul.f32 %v7849, %v7862
    %v7875 = vmul.f32 %v7852, %v7862
    %v7876 = vmul.f32 %v7855, %v7862
    %v7877 = vmul.f32 %v7858, %v7862
    %v7878 = vmul.f32 %v7861, %v7862
    %v7879 = vsub.f32 %v7780, %v7863
    %v7880 = vsub.f32 %v7781, %v7863
    %v7881 = vsub.f32 %v7782, %v7864
    %v7882 = vsub.f32 %v7783, %v7864
    %v7883 = vsub.f32 %v7784, %v7865
    %v7884 = vsub.f32 %v7785, %v7865
    %v7885 = vsub.f32 %v7786, %v7866
    %v7886 = vsub.f32 %v7787, %v7866
    %v7887 = vsub.f32 %v7788, %v7867
    %v7888 = vsub.f32 %v7789, %v7867
    %v7889 = vsub.f32 %v7790, %v7868
    %v7890 = vsub.f32 %v7791, %v7868
    %v7891 = vsub.f32 %v7792, %v7869
    %v7892 = vsub.f32 %v7793, %v7869
    %v7893 = vsub.f32 %v7794, %v7870
    %v7894 = vsub.f32 %v7795, %v7870
    %v7895 = vsub.f32 %v7796, %v7871
    %v7896 = vsub.f32 %v7797, %v7871
    %v7897 = vsub.f32 %v7798, %v7872
    %v7898 = vsub.f32 %v7799, %v7872
    %v7899 = vsub.f32 %v7800, %v7873
    %v7900 = vsub.f32 %v7801, %v7873
    %v7901 = vsub.f32 %v7802, %v7874
    %v7902 = vsub.f32 %v7803, %v7874
    %v7903 = vsub.f32 %v7804, %v7875
    %v7904 = vsub.f32 %v7805, %v7875
    %v7905 = vsub.f32 %v7806, %v7876
    %v7906 = vsub.f32 %v7807, %v7876
    %v7907 = vsub.f32 %v7808, %v7877
    %v7908 = vsub.f32 %v7809, %v7877
    %v7909 = vsub.f32 %v7810, %v7878
    %v7910 = vsub.f32 %v7811, %v7878
    %v7911 = vmul.f32 %v7879, %v7879
    %v7912 = vmul.f32 %v7880, %v7880
    %v7913 = vmul.f32 %v7881, %v7881
    %v7914 = vmul.f32 %v7882, %v7882
    %v7915 = vmul.f32 %v7883, %v7883
    %v7916 = vmul.f32 %v7884, %v7884
    %v7917 = vmul.f32 %v7885, %v7885
    %v7918 = vmul.f32 %v7886, %v7886
    %v7919 = vmul.f32 %v7887, %v7887
    %v7920 = vmul.f32 %v7888, %v7888
    %v7921 = vmul.f32 %v7889, %v7889
    %v7922 = vmul.f32 %v7890, %v7890
    %v7923 = vmul.f32 %v7891, %v7891
    %v7924 = vmul.f32 %v7892, %v7892
    %v7925 = vmul.f32 %v7893, %v7893
    %v7926 = vmul.f32 %v7894, %v7894
    %v7927 = vmul.f32 %v7895, %v7895
    %v7928 = vmul.f32 %v7896, %v7896
    %v7929 = vmul.f32 %v7897, %v7897
    %v7930 = vmul.f32 %v7898, %v7898
    %v7931 = vmul.f32 %v7899, %v7899
    %v7932 = vmul.f32 %v7900, %v7900
    %v7933 = vmul.f32 %v7901, %v7901
    %v7934 = vmul.f32 %v7902, %v7902
    %v7935 = vmul.f32 %v7903, %v7903
    %v7936 = vmul.f32 %v7904, %v7904
    %v7937 = vmul.f32 %v7905, %v7905
    %v7938 = vmul.f32 %v7906, %v7906
    %v7939 = vmul.f32 %v7907, %v7907
    %v7940 = vmul.f32 %v7908, %v7908
    %v7941 = vmul.f32 %v7909, %v7909
    %v7942 = vmul.f32 %v7910, %v7910
    %v7943 = vadd.f32 %v7911, %v7912
    %7944 = vadd.xlane.f32.xlu0 %v7943
    %v7945 = vpop.xlane.xlu0 %7944
    %v7946 = vadd.f32 %v7913, %v7914
    %7947 = vadd.xlane.f32.xlu0 %v7946
    %v7948 = vpop.xlane.xlu0 %7947
    %v7949 = vadd.f32 %v7915, %v7916
    %7950 = vadd.xlane.f32.xlu0 %v7949
    %v7951 = vpop.xlane.xlu0 %7950
    %v7952 = vadd.f32 %v7917, %v7918
    %7953 = vadd.xlane.f32.xlu0 %v7952
    %v7954 = vpop.xlane.xlu0 %7953
    %v7955 = vadd.f32 %v7919, %v7920
    %7956 = vadd.xlane.f32.xlu0 %v7955
    %v7957 = vpop.xlane.xlu0 %7956
    %v7958 = vadd.f32 %v7921, %v7922
    %7959 = vadd.xlane.f32.xlu0 %v7958
    %v7960 = vpop.xlane.xlu0 %7959
    %v7961 = vadd.f32 %v7923, %v7924
    %7962 = vadd.xlane.f32.xlu0 %v7961
    %v7963 = vpop.xlane.xlu0 %7962
    %v7964 = vadd.f32 %v7925, %v7926
    %7965 = vadd.xlane.f32.xlu0 %v7964
    %v7966 = vpop.xlane.xlu0 %7965
    %v7967 = vadd.f32 %v7927, %v7928
    %7968 = vadd.xlane.f32.xlu0 %v7967
    %v7969 = vpop.xlane.xlu0 %7968
    %v7970 = vadd.f32 %v7929, %v7930
    %7971 = vadd.xlane.f32.xlu0 %v7970
    %v7972 = vpop.xlane.xlu0 %7971
    %v7973 = vadd.f32 %v7931, %v7932
    %7974 = vadd.xlane.f32.xlu0 %v7973
    %v7975 = vpop.xlane.xlu0 %7974
    %v7976 = vadd.f32 %v7933, %v7934
    %7977 = vadd.xlane.f32.xlu0 %v7976
    %v7978 = vpop.xlane.xlu0 %7977
    %v7979 = vadd.f32 %v7935, %v7936
    %7980 = vadd.xlane.f32.xlu0 %v7979
    %v7981 = vpop.xlane.xlu0 %7980
    %v7982 = vadd.f32 %v7937, %v7938
    %7983 = vadd.xlane.f32.xlu0 %v7982
    %v7984 = vpop.xlane.xlu0 %7983
    %v7985 = vadd.f32 %v7939, %v7940
    %7986 = vadd.xlane.f32.xlu0 %v7985
    %v7987 = vpop.xlane.xlu0 %7986
    %v7988 = vadd.f32 %v7941, %v7942
    %7989 = vadd.xlane.f32.xlu0 %v7988
    %v7990 = vpop.xlane.xlu0 %7989
    %v7991 = vmul.f32 %v7945, %v7862
    %v7992 = vmul.f32 %v7948, %v7862
    %v7993 = vmul.f32 %v7951, %v7862
    %v7994 = vmul.f32 %v7954, %v7862
    %v7995 = vmul.f32 %v7957, %v7862
    %v7996 = vmul.f32 %v7960, %v7862
    %v7997 = vmul.f32 %v7963, %v7862
    %v7998 = vmul.f32 %v7966, %v7862
    %v7999 = vmul.f32 %v7969, %v7862
    %v8000 = vmul.f32 %v7972, %v7862
    %v8001 = vmul.f32 %v7975, %v7862
    %v8002 = vmul.f32 %v7978, %v7862
    %v8003 = vmul.f32 %v7981, %v7862
    %v8004 = vmul.f32 %v7984, %v7862
    %v8005 = vmul.f32 %v7987, %v7862
    %v8006 = vmul.f32 %v7990, %v7862
    %v8007 = vadd.f32 %v7991, 1e-05
    %v8008 = vadd.f32 %v7992, 1e-05
    %v8009 = vadd.f32 %v7993, 1e-05
    %v8010 = vadd.f32 %v7994, 1e-05
    %v8011 = vadd.f32 %v7995, 1e-05
    %v8012 = vadd.f32 %v7996, 1e-05
    %v8013 = vadd.f32 %v7997, 1e-05
    %v8014 = vadd.f32 %v7998, 1e-05
    %v8015 = vadd.f32 %v7999, 1e-05
    %v8016 = vadd.f32 %v8000, 1e-05
    %v8017 = vadd.f32 %v8001, 1e-05
    %v8018 = vadd.f32 %v8002, 1e-05
    %v8019 = vadd.f32 %v8003, 1e-05
    %v8020 = vadd.f32 %v8004, 1e-05
    %v8021 = vadd.f32 %v8005, 1e-05
    %v8022 = vadd.f32 %v8006, 1e-05
    %v8023 = vrsqrt.pop %v8007
    %v8024 = vrsqrt.pop %v8008
    %v8025 = vrsqrt.pop %v8009
    %v8026 = vrsqrt.pop %v8010
    %v8027 = vrsqrt.pop %v8011
    %v8028 = vrsqrt.pop %v8012
    %v8029 = vrsqrt.pop %v8013
    %v8030 = vrsqrt.pop %v8014
    %v8031 = vrsqrt.pop %v8015
    %v8032 = vrsqrt.pop %v8016
    %v8033 = vrsqrt.pop %v8017
    %v8034 = vrsqrt.pop %v8018
    %v8035 = vrsqrt.pop %v8019
    %v8036 = vrsqrt.pop %v8020
    %v8037 = vrsqrt.pop %v8021
    %v8038 = vrsqrt.pop %v8022
    %v8039 = vmul.f32 %v7879, %v8023
    %v8040 = vmul.f32 %v7880, %v8023
    %v8041 = vmul.f32 %v7881, %v8024
    %v8042 = vmul.f32 %v7882, %v8024
    %v8043 = vmul.f32 %v7883, %v8025
    %v8044 = vmul.f32 %v7884, %v8025
    %v8045 = vmul.f32 %v7885, %v8026
    %v8046 = vmul.f32 %v7886, %v8026
    %v8047 = vmul.f32 %v7887, %v8027
    %v8048 = vmul.f32 %v7888, %v8027
    %v8049 = vmul.f32 %v7889, %v8028
    %v8050 = vmul.f32 %v7890, %v8028
    %v8051 = vmul.f32 %v7891, %v8029
    %v8052 = vmul.f32 %v7892, %v8029
    %v8053 = vmul.f32 %v7893, %v8030
    %v8054 = vmul.f32 %v7894, %v8030
    %v8055 = vmul.f32 %v7895, %v8031
    %v8056 = vmul.f32 %v7896, %v8031
    %v8057 = vmul.f32 %v7897, %v8032
    %v8058 = vmul.f32 %v7898, %v8032
    %v8059 = vmul.f32 %v7899, %v8033
    %v8060 = vmul.f32 %v7900, %v8033
    %v8061 = vmul.f32 %v7901, %v8034
    %v8062 = vmul.f32 %v7902, %v8034
    %v8063 = vmul.f32 %v7903, %v8035
    %v8064 = vmul.f32 %v7904, %v8035
    %v8065 = vmul.f32 %v7905, %v8036
    %v8066 = vmul.f32 %v7906, %v8036
    %v8067 = vmul.f32 %v7907, %v8037
    %v8068 = vmul.f32 %v7908, %v8037
    %v8069 = vmul.f32 %v7909, %v8038
    %v8070 = vmul.f32 %v7910, %v8038
    %v8072 = vlaneseq
    %v8073 = vshrl.u32 %v8072, 7
    %v8074 = vsub.s32 0, %v8073
    %v8075 = vrot.slane %v7812, %v8074
    %v8076 = vlaneseq
    %v8077 = vshrl.u32 %v8076, 7
    %v8078 = vsub.s32 1, %v8077
    %v8079 = vrot.slane %v7812, %v8078
    %v8082 = vmul.f32 %v8039, %v8075
    %v8083 = vmul.f32 %v8040, %v8079
    %v8084 = vmul.f32 %v8041, %v8075
    %v8085 = vmul.f32 %v8042, %v8079
    %v8086 = vmul.f32 %v8043, %v8075
    %v8087 = vmul.f32 %v8044, %v8079
    %v8088 = vmul.f32 %v8045, %v8075
    %v8089 = vmul.f32 %v8046, %v8079
    %v8090 = vmul.f32 %v8047, %v8075
    %v8091 = vmul.f32 %v8048, %v8079
    %v8092 = vmul.f32 %v8049, %v8075
    %v8093 = vmul.f32 %v8050, %v8079
    %v8094 = vmul.f32 %v8051, %v8075
    %v8095 = vmul.f32 %v8052, %v8079
    %v8096 = vmul.f32 %v8053, %v8075
    %v8097 = vmul.f32 %v8054, %v8079
    %v8098 = vmul.f32 %v8055, %v8075
    %v8099 = vmul.f32 %v8056, %v8079
    %v8100 = vmul.f32 %v8057, %v8075
    %v8101 = vmul.f32 %v8058, %v8079
    %v8102 = vmul.f32 %v8059, %v8075
    %v8103 = vmul.f32 %v8060, %v8079
    %v8104 = vmul.f32 %v8061, %v8075
    %v8105 = vmul.f32 %v8062, %v8079
    %v8106 = vmul.f32 %v8063, %v8075
    %v8107 = vmul.f32 %v8064, %v8079
    %v8108 = vmul.f32 %v8065, %v8075
    %v8109 = vmul.f32 %v8066, %v8079
    %v8110 = vmul.f32 %v8067, %v8075
    %v8111 = vmul.f32 %v8068, %v8079
    %v8112 = vmul.f32 %v8069, %v8075
    %v8113 = vmul.f32 %v8070, %v8079
    %v8115 = vlaneseq
    %v8116 = vshrl.u32 %v8115, 7
    %v8117 = vsub.s32 0, %v8116
    %v8118 = vrot.slane %v7813, %v8117
    %v8119 = vlaneseq
    %v8120 = vshrl.u32 %v8119, 7
    %v8121 = vsub.s32 1, %v8120
    %v8122 = vrot.slane %v7813, %v8121
    %v8125 = vadd.f32 %v8082, %v8118
    %v8126 = vadd.f32 %v8083, %v8122
    %v8127 = vadd.f32 %v8084, %v8118
    %v8128 = vadd.f32 %v8085, %v8122
    %v8129 = vadd.f32 %v8086, %v8118
    %v8130 = vadd.f32 %v8087, %v8122
    %v8131 = vadd.f32 %v8088, %v8118
    %v8132 = vadd.f32 %v8089, %v8122
    %v8133 = vadd.f32 %v8090, %v8118
    %v8134 = vadd.f32 %v8091, %v8122
    %v8135 = vadd.f32 %v8092, %v8118
    %v8136 = vadd.f32 %v8093, %v8122
    %v8137 = vadd.f32 %v8094, %v8118
    %v8138 = vadd.f32 %v8095, %v8122
    %v8139 = vadd.f32 %v8096, %v8118
    %v8140 = vadd.f32 %v8097, %v8122
    %v8141 = vadd.f32 %v8098, %v8118
    %v8142 = vadd.f32 %v8099, %v8122
    %v8143 = vadd.f32 %v8100, %v8118
    %v8144 = vadd.f32 %v8101, %v8122
    %v8145 = vadd.f32 %v8102, %v8118
    %v8146 = vadd.f32 %v8103, %v8122
    %v8147 = vadd.f32 %v8104, %v8118
    %v8148 = vadd.f32 %v8105, %v8122
    %v8149 = vadd.f32 %v8106, %v8118
    %v8150 = vadd.f32 %v8107, %v8122
    %v8151 = vadd.f32 %v8108, %v8118
    %v8152 = vadd.f32 %v8109, %v8122
    %v8153 = vadd.f32 %v8110, %v8118
    %v8154 = vadd.f32 %v8111, %v8122
    %v8155 = vadd.f32 %v8112, %v8118
    %v8156 = vadd.f32 %v8113, %v8122
    %v8157 = vpack.c.bf16 %v8127, %v8125
    %v8158 = vpack.c.bf16 %v8128, %v8126
    %v8159 = vpack.c.bf16 %v8131, %v8129
    %v8160 = vpack.c.bf16 %v8132, %v8130
    %v8161 = vpack.c.bf16 %v8135, %v8133
    %v8162 = vpack.c.bf16 %v8136, %v8134
    %v8163 = vpack.c.bf16 %v8139, %v8137
    %v8164 = vpack.c.bf16 %v8140, %v8138
    %v8165 = vpack.c.bf16 %v8143, %v8141
    %v8166 = vpack.c.bf16 %v8144, %v8142
    %v8167 = vpack.c.bf16 %v8147, %v8145
    %v8168 = vpack.c.bf16 %v8148, %v8146
    %v8169 = vpack.c.bf16 %v8151, %v8149
    %v8170 = vpack.c.bf16 %v8152, %v8150
    %v8171 = vpack.c.bf16 %v8155, %v8153
    %v8172 = vpack.c.bf16 %v8156, %v8154
    %v8173 = vld [vmem:[#allocation15] sm:$0xf]
    %v8174 = vld [vmem:[#allocation15 + $0x4] sm:$0xf]
    %v8175 = vld [vmem:[#allocation15 + $0x8] sm:$0xf]
    %v8176 = vld [vmem:[#allocation15 + $0xc] sm:$0xf]
    %v8177 = vld [vmem:[#allocation15 + $0x10] sm:$0xf]
    %v8178 = vld [vmem:[#allocation15 + $0x14] sm:$0xf]
    %v8179 = vld [vmem:[#allocation15 + $0x18] sm:$0xf]
    %v8180 = vld [vmem:[#allocation15 + $0x1c] sm:$0xf]
    %v8181 = vld [vmem:[#allocation15 + $0x20] sm:$0xf]
    %v8182 = vld [vmem:[#allocation15 + $0x24] sm:$0xf]
    %v8183 = vld [vmem:[#allocation15 + $0x28] sm:$0xf]
    %v8184 = vld [vmem:[#allocation15 + $0x2c] sm:$0xf]
    %v8185 = vld [vmem:[#allocation15 + $0x30] sm:$0xf]
    %v8186 = vld [vmem:[#allocation15 + $0x34] sm:$0xf]
    %v8187 = vld [vmem:[#allocation15 + $0x38] sm:$0xf]
    %v8188 = vld [vmem:[#allocation15 + $0x3c] sm:$0xf]
    %v8189 = vld [vmem:[#allocation15 + $0x40] sm:$0xf]
    %v8190 = vld [vmem:[#allocation15 + $0x44] sm:$0xf]
    %v8191 = vld [vmem:[#allocation15 + $0x48] sm:$0xf]
    %v8192 = vld [vmem:[#allocation15 + $0x4c] sm:$0xf]
    %v8193 = vld [vmem:[#allocation15 + $0x50] sm:$0xf]
    %v8194 = vld [vmem:[#allocation15 + $0x54] sm:$0xf]
    %v8195 = vld [vmem:[#allocation15 + $0x58] sm:$0xf]
    %v8196 = vld [vmem:[#allocation15 + $0x5c] sm:$0xf]
    %v8197 = vld [vmem:[#allocation15 + $0x60] sm:$0xf]
    %v8198 = vld [vmem:[#allocation15 + $0x64] sm:$0xf]
    %v8199 = vld [vmem:[#allocation15 + $0x68] sm:$0xf]
    %v8200 = vld [vmem:[#allocation15 + $0x6c] sm:$0xf]
    %v8201 = vld [vmem:[#allocation15 + $0x70] sm:$0xf]
    %v8202 = vld [vmem:[#allocation15 + $0x74] sm:$0xf]
    %v8203 = vld [vmem:[#allocation15 + $0x78] sm:$0xf]
    %v8204 = vld [vmem:[#allocation15 + $0x7c] sm:$0xf]
    %v8237 = vunpack.c.l.b16 %v8173
    %v8238 = vunpack.c.l.b16 %v8174
    %v8239 = vunpack.c.l.b16 %v8175
    %v8240 = vunpack.c.l.b16 %v8176
    %v8241 = vunpack.c.l.b16 %v8177
    %v8242 = vunpack.c.l.b16 %v8178
    %v8243 = vunpack.c.l.b16 %v8179
    %v8244 = vunpack.c.l.b16 %v8180
    %v8245 = vunpack.c.l.b16 %v8181
    %v8246 = vunpack.c.l.b16 %v8182
    %v8247 = vunpack.c.l.b16 %v8183
    %v8248 = vunpack.c.l.b16 %v8184
    %v8249 = vunpack.c.l.b16 %v8185
    %v8250 = vunpack.c.l.b16 %v8186
    %v8251 = vunpack.c.l.b16 %v8187
    %v8252 = vunpack.c.l.b16 %v8188
    %v8253 = vunpack.c.l.b16 %v8189
    %v8254 = vunpack.c.l.b16 %v8190
    %v8255 = vunpack.c.l.b16 %v8191
    %v8256 = vunpack.c.l.b16 %v8192
    %v8257 = vunpack.c.l.b16 %v8193
    %v8258 = vunpack.c.l.b16 %v8194
    %v8259 = vunpack.c.l.b16 %v8195
    %v8260 = vunpack.c.l.b16 %v8196
    %v8261 = vunpack.c.l.b16 %v8197
    %v8262 = vunpack.c.l.b16 %v8198
    %v8263 = vunpack.c.l.b16 %v8199
    %v8264 = vunpack.c.l.b16 %v8200
    %v8265 = vunpack.c.l.b16 %v8201
    %v8266 = vunpack.c.l.b16 %v8202
    %v8267 = vunpack.c.l.b16 %v8203
    %v8268 = vunpack.c.l.b16 %v8204
    %v8269 = vpack.c.b16 %v8238, %v8237
    %v8270 = vpack.c.b16 %v8240, %v8239
    %v8271 = vpack.c.b16 %v8242, %v8241
    %v8272 = vpack.c.b16 %v8244, %v8243
    %v8273 = vpack.c.b16 %v8246, %v8245
    %v8274 = vpack.c.b16 %v8248, %v8247
    %v8275 = vpack.c.b16 %v8250, %v8249
    %v8276 = vpack.c.b16 %v8252, %v8251
    %v8277 = vpack.c.b16 %v8254, %v8253
    %v8278 = vpack.c.b16 %v8256, %v8255
    %v8279 = vpack.c.b16 %v8258, %v8257
    %v8280 = vpack.c.b16 %v8260, %v8259
    %v8281 = vpack.c.b16 %v8262, %v8261
    %v8282 = vpack.c.b16 %v8264, %v8263
    %v8283 = vpack.c.b16 %v8266, %v8265
    %v8284 = vpack.c.b16 %v8268, %v8267
    %8301 = vmatprep.subr.bf16.mxu0 0
    %8302 = vmatpush1.bf16.msra.mxu0 %v8269
    %8303 = vmatprep.subr.bf16.mxu0 0
    %8304 = vmatpush1.bf16.msra.mxu0 %v8270
    %8305 = vmatprep.subr.bf16.mxu0 0
    %8306 = vmatpush1.bf16.msra.mxu0 %v8271
    %8307 = vmatprep.subr.bf16.mxu0 0
    %8308 = vmatpush1.bf16.msra.mxu0 %v8272
    %8309 = vmatprep.subr.bf16.mxu0 0
    %8310 = vmatpush1.bf16.msra.mxu0 %v8273
    %8311 = vmatprep.subr.bf16.mxu0 0
    %8312 = vmatpush1.bf16.msra.mxu0 %v8274
    %8313 = vmatprep.subr.bf16.mxu0 0
    %8314 = vmatpush1.bf16.msra.mxu0 %v8275
    %8315 = vmatprep.subr.bf16.mxu0 0
    %8316 = vmatpush1.bf16.msra.mxu0 %v8276
    %8317 = vmatprep.subr.bf16.mxu0 0
    %8318 = vmatpush1.bf16.msra.mxu0 %v8277
    %8319 = vmatprep.subr.bf16.mxu0 0
    %8320 = vmatpush1.bf16.msra.mxu0 %v8278
    %8321 = vmatprep.subr.bf16.mxu0 0
    %8322 = vmatpush1.bf16.msra.mxu0 %v8279
    %8323 = vmatprep.subr.bf16.mxu0 0
    %8324 = vmatpush1.bf16.msra.mxu0 %v8280
    %8325 = vmatprep.subr.bf16.mxu0 0
    %8326 = vmatpush1.bf16.msra.mxu0 %v8281
    %8327 = vmatprep.subr.bf16.mxu0 0
    %8328 = vmatpush1.bf16.msra.mxu0 %v8282
    %8329 = vmatprep.subr.bf16.mxu0 0
    %8330 = vmatpush1.bf16.msra.mxu0 %v8283
    %8331 = vmatprep.subr.bf16.mxu0 0
    %8332 = vmatpush1.bf16.msra.mxu0 %v8284
    %8333 = vmatprep.mubr.bf16.mxu0 %v8158
    %8334 = vmatmul.mubr.bf16.gmra.mrb[0].mxu0 %v8157
    %v8335 = vpop.f32.mrb[0].mxu0
    %v8336 = vadd.f32 0.0, %v8335
    %v8337 = vpop.f32.mrb[0].mxu0
    %v8338 = vpop.f32.mrb[0].mxu0
    %v8339 = vadd.f32 0.0, %v8338
    %v8340 = vpop.f32.mrb[0].mxu0
    %8341 = vmatprep.mubr.bf16.mxu0 %v8160
    %8342 = vmatmul.mubr.bf16.gmra.mrb[0].mxu0 %v8159
    %v8343 = vpop.f32.mrb[0].mxu0
    %v8344 = vadd.f32 0.0, %v8343
    %v8345 = vpop.f32.mrb[0].mxu0
    %v8346 = vpop.f32.mrb[0].mxu0
    %v8347 = vadd.f32 0.0, %v8346
    %v8348 = vpop.f32.mrb[0].mxu0
    %8349 = vmatprep.mubr.bf16.mxu0 %v8162
    %8350 = vmatmul.mubr.bf16.gmra.mrb[0].mxu0 %v8161
    %v8351 = vpop.f32.mrb[0].mxu0
    %v8352 = vadd.f32 0.0, %v8351
    %v8353 = vpop.f32.mrb[0].mxu0
    %v8354 = vpop.f32.mrb[0].mxu0
    %v8355 = vadd.f32 0.0, %v8354
    %v8356 = vpop.f32.mrb[0].mxu0
    %8357 = vmatprep.mubr.bf16.mxu0 %v8164
    %8358 = vmatmul.mubr.bf16.gmra.mrb[0].mxu0 %v8163
    %v8359 = vpop.f32.mrb[0].mxu0
    %v8360 = vadd.f32 0.0, %v8359
    %v8361 = vpop.f32.mrb[0].mxu0
    %v8362 = vpop.f32.mrb[0].mxu0
    %v8363 = vadd.f32 0.0, %v8362
    %v8364 = vpop.f32.mrb[0].mxu0
    %8365 = vmatprep.mubr.bf16.mxu0 %v8166
    %8366 = vmatmul.mubr.bf16.gmra.mrb[0].mxu0 %v8165
    %v8367 = vpop.f32.mrb[0].mxu0
    %v8368 = vadd.f32 0.0, %v8367
    %v8369 = vpop.f32.mrb[0].mxu0
    %v8370 = vpop.f32.mrb[0].mxu0
    %v8371 = vadd.f32 0.0, %v8370
    %v8372 = vpop.f32.mrb[0].mxu0
    %8373 = vmatprep.mubr.bf16.mxu0 %v8168
    %8374 = vmatmul.mubr.bf16.gmra.mrb[0].mxu0 %v8167
    %v8375 = vpop.f32.mrb[0].mxu0
    %v8376 = vadd.f32 0.0, %v8375
    %v8377 = vpop.f32.mrb[0].mxu0
    %v8378 = vpop.f32.mrb[0].mxu0
    %v8379 = vadd.f32 0.0, %v8378
    %v8380 = vpop.f32.mrb[0].mxu0
    %8381 = vmatprep.mubr.bf16.mxu0 %v8170
    %8382 = vmatmul.mubr.bf16.gmra.mrb[0].mxu0 %v8169
    %v8383 = vpop.f32.mrb[0].mxu0
    %v8384 = vadd.f32 0.0, %v8383
    %v8385 = vpop.f32.mrb[0].mxu0
    %v8386 = vpop.f32.mrb[0].mxu0
    %v8387 = vadd.f32 0.0, %v8386
    %v8388 = vpop.f32.mrb[0].mxu0
    %8389 = vmatprep.mubr.bf16.mxu0 %v8172
    %8390 = vmatmul.mubr.bf16.gmra.mrb[0].mxu0 %v8171
    %v8391 = vpop.f32.mrb[0].mxu0
    %v8392 = vadd.f32 0.0, %v8391
    %v8393 = vpop.f32.mrb[0].mxu0
    %v8394 = vpop.f32.mrb[0].mxu0
    %v8395 = vadd.f32 0.0, %v8394
    %v8396 = vpop.f32.mrb[0].mxu0
    %8397 = vdwg.mxu0
    %v8398 = vmul.f32 %v8336, 0.5
    %v8399 = vmul.f32 %v8339, 0.5
    %v8400 = vmul.f32 %v8344, 0.5
    %v8401 = vmul.f32 %v8347, 0.5
    %v8402 = vmul.f32 %v8352, 0.5
    %v8403 = vmul.f32 %v8355, 0.5
    %v8404 = vmul.f32 %v8360, 0.5
    %v8405 = vmul.f32 %v8363, 0.5
    %v8406 = vmul.f32 %v8368, 0.5
    %v8407 = vmul.f32 %v8371, 0.5
    %v8408 = vmul.f32 %v8376, 0.5
    %v8409 = vmul.f32 %v8379, 0.5
    %v8410 = vmul.f32 %v8384, 0.5
    %v8411 = vmul.f32 %v8387, 0.5
    %v8412 = vmul.f32 %v8392, 0.5
    %v8413 = vmul.f32 %v8395, 0.5
    %v8414 = vmul.f32 %v8336, 0.70710677
    %v8415 = vmul.f32 %v8339, 0.70710677
    %v8416 = vmul.f32 %v8344, 0.70710677
    %v8417 = vmul.f32 %v8347, 0.70710677
    %v8418 = vmul.f32 %v8352, 0.70710677
    %v8419 = vmul.f32 %v8355, 0.70710677
    %v8420 = vmul.f32 %v8360, 0.70710677
    %v8421 = vmul.f32 %v8363, 0.70710677
    %v8422 = vmul.f32 %v8368, 0.70710677
    %v8423 = vmul.f32 %v8371, 0.70710677
    %v8424 = vmul.f32 %v8376, 0.70710677
    %v8425 = vmul.f32 %v8379, 0.70710677
    %v8426 = vmul.f32 %v8384, 0.70710677
    %v8427 = vmul.f32 %v8387, 0.70710677
    %v8428 = vmul.f32 %v8392, 0.70710677
    %v8429 = vmul.f32 %v8395, 0.70710677
    %v8430 = verf.f32.pop %v8414
    %v8431 = verf.f32.pop %v8415
    %v8432 = verf.f32.pop %v8416
    %v8433 = verf.f32.pop %v8417
    %v8434 = verf.f32.pop %v8418
    %v8435 = verf.f32.pop %v8419
    %v8436 = verf.f32.pop %v8420
    %v8437 = verf.f32.pop %v8421
    %v8438 = verf.f32.pop %v8422
    %v8439 = verf.f32.pop %v8423
    %v8440 = verf.f32.pop %v8424
    %v8441 = verf.f32.pop %v8425
    %v8442 = verf.f32.pop %v8426
    %v8443 = verf.f32.pop %v8427
    %v8444 = verf.f32.pop %v8428
    %v8445 = verf.f32.pop %v8429
    %v8446 = vadd.f32 %v8430, 1.0
    %v8447 = vadd.f32 %v8431, 1.0
    %v8448 = vadd.f32 %v8432, 1.0
    %v8449 = vadd.f32 %v8433, 1.0
    %v8450 = vadd.f32 %v8434, 1.0
    %v8451 = vadd.f32 %v8435, 1.0
    %v8452 = vadd.f32 %v8436, 1.0
    %v8453 = vadd.f32 %v8437, 1.0
    %v8454 = vadd.f32 %v8438, 1.0
    %v8455 = vadd.f32 %v8439, 1.0
    %v8456 = vadd.f32 %v8440, 1.0
    %v8457 = vadd.f32 %v8441, 1.0
    %v8458 = vadd.f32 %v8442, 1.0
    %v8459 = vadd.f32 %v8443, 1.0
    %v8460 = vadd.f32 %v8444, 1.0
    %v8461 = vadd.f32 %v8445, 1.0
    %v8462 = vmul.f32 %v8398, %v8446
    %v8463 = vmul.f32 %v8399, %v8447
    %v8464 = vmul.f32 %v8400, %v8448
    %v8465 = vmul.f32 %v8401, %v8449
    %v8466 = vmul.f32 %v8402, %v8450
    %v8467 = vmul.f32 %v8403, %v8451
    %v8468 = vmul.f32 %v8404, %v8452
    %v8469 = vmul.f32 %v8405, %v8453
    %v8470 = vmul.f32 %v8406, %v8454
    %v8471 = vmul.f32 %v8407, %v8455
    %v8472 = vmul.f32 %v8408, %v8456
    %v8473 = vmul.f32 %v8409, %v8457
    %v8474 = vmul.f32 %v8410, %v8458
    %v8475 = vmul.f32 %v8411, %v8459
    %v8476 = vmul.f32 %v8412, %v8460
    %v8477 = vmul.f32 %v8413, %v8461
    %v8478 = vld [vmem:[#allocation17] sm:$0x1]
    %v8479 = vld [vmem:[#allocation18] sm:$0x1]
    %8480 = vadd.xlane.f32.xlu0 %v8462
    %v8481 = vpop.xlane.xlu0 %8480
    %8482 = vadd.xlane.f32.xlu0 %v8463
    %v8483 = vpop.xlane.xlu0 %8482
    %8484 = vadd.xlane.f32.xlu0 %v8464
    %v8485 = vpop.xlane.xlu0 %8484
    %8486 = vadd.xlane.f32.xlu0 %v8465
    %v8487 = vpop.xlane.xlu0 %8486
    %8488 = vadd.xlane.f32.xlu0 %v8466
    %v8489 = vpop.xlane.xlu0 %8488
    %8490 = vadd.xlane.f32.xlu0 %v8467
    %v8491 = vpop.xlane.xlu0 %8490
    %8492 = vadd.xlane.f32.xlu0 %v8468
    %v8493 = vpop.xlane.xlu0 %8492
    %8494 = vadd.xlane.f32.xlu0 %v8469
    %v8495 = vpop.xlane.xlu0 %8494
    %8496 = vadd.xlane.f32.xlu0 %v8470
    %v8497 = vpop.xlane.xlu0 %8496
    %8498 = vadd.xlane.f32.xlu0 %v8471
    %v8499 = vpop.xlane.xlu0 %8498
    %8500 = vadd.xlane.f32.xlu0 %v8472
    %v8501 = vpop.xlane.xlu0 %8500
    %8502 = vadd.xlane.f32.xlu0 %v8473
    %v8503 = vpop.xlane.xlu0 %8502
    %8504 = vadd.xlane.f32.xlu0 %v8474
    %v8505 = vpop.xlane.xlu0 %8504
    %8506 = vadd.xlane.f32.xlu0 %v8475
    %v8507 = vpop.xlane.xlu0 %8506
    %8508 = vadd.xlane.f32.xlu0 %v8476
    %v8509 = vpop.xlane.xlu0 %8508
    %8510 = vadd.xlane.f32.xlu0 %v8477
    %v8511 = vpop.xlane.xlu0 %8510
    %v8512 = vrcp.pop 128.0
    %v8513 = vmul.f32 %v8481, %v8512
    %v8514 = vmul.f32 %v8483, %v8512
    %v8515 = vmul.f32 %v8485, %v8512
    %v8516 = vmul.f32 %v8487, %v8512
    %v8517 = vmul.f32 %v8489, %v8512
    %v8518 = vmul.f32 %v8491, %v8512
    %v8519 = vmul.f32 %v8493, %v8512
    %v8520 = vmul.f32 %v8495, %v8512
    %v8521 = vmul.f32 %v8497, %v8512
    %v8522 = vmul.f32 %v8499, %v8512
    %v8523 = vmul.f32 %v8501, %v8512
    %v8524 = vmul.f32 %v8503, %v8512
    %v8525 = vmul.f32 %v8505, %v8512
    %v8526 = vmul.f32 %v8507, %v8512
    %v8527 = vmul.f32 %v8509, %v8512
    %v8528 = vmul.f32 %v8511, %v8512
    %v8529 = vsub.f32 %v8462, %v8513
    %v8530 = vsub.f32 %v8463, %v8514
    %v8531 = vsub.f32 %v8464, %v8515
    %v8532 = vsub.f32 %v8465, %v8516
    %v8533 = vsub.f32 %v8466, %v8517
    %v8534 = vsub.f32 %v8467, %v8518
    %v8535 = vsub.f32 %v8468, %v8519
    %v8536 = vsub.f32 %v8469, %v8520
    %v8537 = vsub.f32 %v8470, %v8521
    %v8538 = vsub.f32 %v8471, %v8522
    %v8539 = vsub.f32 %v8472, %v8523
    %v8540 = vsub.f32 %v8473, %v8524
    %v8541 = vsub.f32 %v8474, %v8525
    %v8542 = vsub.f32 %v8475, %v8526
    %v8543 = vsub.f32 %v8476, %v8527
    %v8544 = vsub.f32 %v8477, %v8528
    %v8545 = vmul.f32 %v8529, %v8529
    %v8546 = vmul.f32 %v8530, %v8530
    %v8547 = vmul.f32 %v8531, %v8531
    %v8548 = vmul.f32 %v8532, %v8532
    %v8549 = vmul.f32 %v8533, %v8533
    %v8550 = vmul.f32 %v8534, %v8534
    %v8551 = vmul.f32 %v8535, %v8535
    %v8552 = vmul.f32 %v8536, %v8536
    %v8553 = vmul.f32 %v8537, %v8537
    %v8554 = vmul.f32 %v8538, %v8538
    %v8555 = vmul.f32 %v8539, %v8539
    %v8556 = vmul.f32 %v8540, %v8540
    %v8557 = vmul.f32 %v8541, %v8541
    %v8558 = vmul.f32 %v8542, %v8542
    %v8559 = vmul.f32 %v8543, %v8543
    %v8560 = vmul.f32 %v8544, %v8544
    %8561 = vadd.xlane.f32.xlu0 %v8545
    %v8562 = vpop.xlane.xlu0 %8561
    %8563 = vadd.xlane.f32.xlu0 %v8546
    %v8564 = vpop.xlane.xlu0 %8563
    %8565 = vadd.xlane.f32.xlu0 %v8547
    %v8566 = vpop.xlane.xlu0 %8565
    %8567 = vadd.xlane.f32.xlu0 %v8548
    %v8568 = vpop.xlane.xlu0 %8567
    %8569 = vadd.xlane.f32.xlu0 %v8549
    %v8570 = vpop.xlane.xlu0 %8569
    %8571 = vadd.xlane.f32.xlu0 %v8550
    %v8572 = vpop.xlane.xlu0 %8571
    %8573 = vadd.xlane.f32.xlu0 %v8551
    %v8574 = vpop.xlane.xlu0 %8573
    %8575 = vadd.xlane.f32.xlu0 %v8552
    %v8576 = vpop.xlane.xlu0 %8575
    %8577 = vadd.xlane.f32.xlu0 %v8553
    %v8578 = vpop.xlane.xlu0 %8577
    %8579 = vadd.xlane.f32.xlu0 %v8554
    %v8580 = vpop.xlane.xlu0 %8579
    %8581 = vadd.xlane.f32.xlu0 %v8555
    %v8582 = vpop.xlane.xlu0 %8581
    %8583 = vadd.xlane.f32.xlu0 %v8556
    %v8584 = vpop.xlane.xlu0 %8583
    %8585 = vadd.xlane.f32.xlu0 %v8557
    %v8586 = vpop.xlane.xlu0 %8585
    %8587 = vadd.xlane.f32.xlu0 %v8558
    %v8588 = vpop.xlane.xlu0 %8587
    %8589 = vadd.xlane.f32.xlu0 %v8559
    %v8590 = vpop.xlane.xlu0 %8589
    %8591 = vadd.xlane.f32.xlu0 %v8560
    %v8592 = vpop.xlane.xlu0 %8591
    %v8593 = vmul.f32 %v8562, %v8512
    %v8594 = vmul.f32 %v8564, %v8512
    %v8595 = vmul.f32 %v8566, %v8512
    %v8596 = vmul.f32 %v8568, %v8512
    %v8597 = vmul.f32 %v8570, %v8512
    %v8598 = vmul.f32 %v8572, %v8512
    %v8599 = vmul.f32 %v8574, %v8512
    %v8600 = vmul.f32 %v8576, %v8512
    %v8601 = vmul.f32 %v8578, %v8512
    %v8602 = vmul.f32 %v8580, %v8512
    %v8603 = vmul.f32 %v8582, %v8512
    %v8604 = vmul.f32 %v8584, %v8512
    %v8605 = vmul.f32 %v8586, %v8512
    %v8606 = vmul.f32 %v8588, %v8512
    %v8607 = vmul.f32 %v8590, %v8512
    %v8608 = vmul.f32 %v8592, %v8512
    %v8609 = vadd.f32 %v8593, 1e-05
    %v8610 = vadd.f32 %v8594, 1e-05
    %v8611 = vadd.f32 %v8595, 1e-05
    %v8612 = vadd.f32 %v8596, 1e-05
    %v8613 = vadd.f32 %v8597, 1e-05
    %v8614 = vadd.f32 %v8598, 1e-05
    %v8615 = vadd.f32 %v8599, 1e-05
    %v8616 = vadd.f32 %v8600, 1e-05
    %v8617 = vadd.f32 %v8601, 1e-05
    %v8618 = vadd.f32 %v8602, 1e-05
    %v8619 = vadd.f32 %v8603, 1e-05
    %v8620 = vadd.f32 %v8604, 1e-05
    %v8621 = vadd.f32 %v8605, 1e-05
    %v8622 = vadd.f32 %v8606, 1e-05
    %v8623 = vadd.f32 %v8607, 1e-05
    %v8624 = vadd.f32 %v8608, 1e-05
    %v8625 = vrsqrt.pop %v8609
    %v8626 = vrsqrt.pop %v8610
    %v8627 = vrsqrt.pop %v8611
    %v8628 = vrsqrt.pop %v8612
    %v8629 = vrsqrt.pop %v8613
    %v8630 = vrsqrt.pop %v8614
    %v8631 = vrsqrt.pop %v8615
    %v8632 = vrsqrt.pop %v8616
    %v8633 = vrsqrt.pop %v8617
    %v8634 = vrsqrt.pop %v8618
    %v8635 = vrsqrt.pop %v8619
    %v8636 = vrsqrt.pop %v8620
    %v8637 = vrsqrt.pop %v8621
    %v8638 = vrsqrt.pop %v8622
    %v8639 = vrsqrt.pop %v8623
    %v8640 = vrsqrt.pop %v8624
    %v8641 = vmul.f32 %v8529, %v8625
    %v8642 = vmul.f32 %v8530, %v8626
    %v8643 = vmul.f32 %v8531, %v8627
    %v8644 = vmul.f32 %v8532, %v8628
    %v8645 = vmul.f32 %v8533, %v8629
    %v8646 = vmul.f32 %v8534, %v8630
    %v8647 = vmul.f32 %v8535, %v8631
    %v8648 = vmul.f32 %v8536, %v8632
    %v8649 = vmul.f32 %v8537, %v8633
    %v8650 = vmul.f32 %v8538, %v8634
    %v8651 = vmul.f32 %v8539, %v8635
    %v8652 = vmul.f32 %v8540, %v8636
    %v8653 = vmul.f32 %v8541, %v8637
    %v8654 = vmul.f32 %v8542, %v8638
    %v8655 = vmul.f32 %v8543, %v8639
    %v8656 = vmul.f32 %v8544, %v8640
    %v8658 = vlaneseq
    %v8659 = vshrl.u32 %v8658, 7
    %v8660 = vsub.s32 0, %v8659
    %v8661 = vrot.slane %v8478, %v8660
    %v8663 = vmul.f32 %v8641, %v8661
    %v8664 = vmul.f32 %v8642, %v8661
    %v8665 = vmul.f32 %v8643, %v8661
    %v8666 = vmul.f32 %v8644, %v8661
    %v8667 = vmul.f32 %v8645, %v8661
    %v8668 = vmul.f32 %v8646, %v8661
    %v8669 = vmul.f32 %v8647, %v8661
    %v8670 = vmul.f32 %v8648, %v8661
    %v8671 = vmul.f32 %v8649, %v8661
    %v8672 = vmul.f32 %v8650, %v8661
    %v8673 = vmul.f32 %v8651, %v8661
    %v8674 = vmul.f32 %v8652, %v8661
    %v8675 = vmul.f32 %v8653, %v8661
    %v8676 = vmul.f32 %v8654, %v8661
    %v8677 = vmul.f32 %v8655, %v8661
    %v8678 = vmul.f32 %v8656, %v8661
    %v8680 = vlaneseq
    %v8681 = vshrl.u32 %v8680, 7
    %v8682 = vsub.s32 0, %v8681
    %v8683 = vrot.slane %v8479, %v8682
    %v8685 = vadd.f32 %v8663, %v8683
    %v8686 = vadd.f32 %v8664, %v8683
    %v8687 = vadd.f32 %v8665, %v8683
    %v8688 = vadd.f32 %v8666, %v8683
    %v8689 = vadd.f32 %v8667, %v8683
    %v8690 = vadd.f32 %v8668, %v8683
    %v8691 = vadd.f32 %v8669, %v8683
    %v8692 = vadd.f32 %v8670, %v8683
    %v8693 = vadd.f32 %v8671, %v8683
    %v8694 = vadd.f32 %v8672, %v8683
    %v8695 = vadd.f32 %v8673, %v8683
    %v8696 = vadd.f32 %v8674, %v8683
    %v8697 = vadd.f32 %v8675, %v8683
    %v8698 = vadd.f32 %v8676, %v8683
    %v8699 = vadd.f32 %v8677, %v8683
    %v8700 = vadd.f32 %v8678, %v8683
    %v8701 = vld [vmem:[#allocation20] sm:$0x1]
    %v8702 = vpack.c.bf16 %v8686, %v8685
    %v8703 = vpack.c.bf16 %v8688, %v8687
    %v8704 = vpack.c.bf16 %v8690, %v8689
    %v8705 = vpack.c.bf16 %v8692, %v8691
    %v8706 = vpack.c.bf16 %v8694, %v8693
    %v8707 = vpack.c.bf16 %v8696, %v8695
    %v8708 = vpack.c.bf16 %v8698, %v8697
    %v8709 = vpack.c.bf16 %v8700, %v8699
    %s8710 = sld [smem:[#allocation2]]
    %v8711 = vstv %s8710
    %8712 = vmatprep.subr.bf16.mxu0 0
    %8713 = vmatpush1.bf16.xpose.msra.mxu0 %v8702
    %8714 = vmatprep.subr.bf16.mxu0 0
    %8715 = vmatpush1.bf16.xpose.msra.mxu0 %v8703
    %8716 = vmatprep.subr.bf16.mxu0 0
    %8717 = vmatpush1.bf16.xpose.msra.mxu0 %v8704
    %8718 = vmatprep.subr.bf16.mxu0 0
    %8719 = vmatpush1.bf16.xpose.msra.mxu0 %v8705
    %8720 = vmatprep.subr.bf16.mxu0 0
    %8721 = vmatpush1.bf16.xpose.msra.mxu0 %v8706
    %8722 = vmatprep.subr.bf16.mxu0 0
    %8723 = vmatpush1.bf16.xpose.msra.mxu0 %v8707
    %8724 = vmatprep.subr.bf16.mxu0 0
    %8725 = vmatpush1.bf16.xpose.msra.mxu0 %v8708
    %8726 = vmatprep.subr.bf16.mxu0 0
    %8727 = vmatpush1.bf16.xpose.msra.mxu0 %v8709
    %8728 = vmatprep.subr.bf16.mxu0 0
    %8729 = vmatpush1.bf16.xpose.msra.mxu0 0
    %8730 = vmatprep.subr.bf16.mxu0 0
    %8731 = vmatpush1.bf16.xpose.msra.mxu0 0
    %8732 = vmatprep.subr.bf16.mxu0 0
    %8733 = vmatpush1.bf16.xpose.msra.mxu0 0
    %8734 = vmatprep.subr.bf16.mxu0 0
    %8735 = vmatpush1.bf16.xpose.msra.mxu0 0
    %8736 = vmatprep.subr.bf16.mxu0 0
    %8737 = vmatpush1.bf16.xpose.msra.mxu0 0
    %8738 = vmatprep.subr.bf16.mxu0 0
    %8739 = vmatpush1.bf16.xpose.msra.mxu0 0
    %8740 = vmatprep.subr.bf16.mxu0 0
    %8741 = vmatpush1.bf16.xpose.msra.mxu0 0
    %8742 = vmatprep.subr.bf16.mxu0 0
    %8743 = vmatpush1.bf16.xpose.msra.mxu0 0
    %8744 = vmatprep.mubr.bf16.mxu0 0
    %8745 = vmatmul.mubr.bf16.gmra.mrb[0].mxu0 %v8701
    %v8746 = vpop.f32.mrb[0].mxu0
    %v8747 = vadd.f32 %v8711, %v8746
    %v8748 = vpop.f32.mrb[0].mxu0
    %v8749 = vpop.f32.mrb[0].mxu0
    %v8750 = vpop.f32.mrb[0].mxu0
    %8751 = vdwg.mxu0
    %8752 = vst [vmem:[#allocation21] sm:$0x1] %v8747
    // Predicated region
    $region94: #{tpu_custom_call.1} parent=1 // pred_check
      _
    $region95: #{tpu_custom_call.1} parent=1 // pred_check_branch
      %8754 = sbr.rel (0) target = $region97
    $region96: #{tpu_custom_call.1} parent=1 // pred_region
      %s8756 = ssub.s32 16, 16
      %8757 = vsyncadd [#allocation5], %s8756
      %s8759 = sshll.u32 [#allocation21], 4
      %s8760 = int_to_ptr.vmem [resolvable:$true] %s8759
      %8762 = dma.vmem_to_hbm [thread:$0]  %s8760, 16, %s12, [#allocation5]
    $region97: #{tpu_custom_call.1} parent=1 // pred_fallthru
      _
    // Predicated region
    $region98: #{tpu_custom_call.1} parent=1 // pred_check
      _
    $region99: #{tpu_custom_call.1} parent=1 // pred_check_branch
      %8764 = sbr.rel (0) target = $region101
    $region100: #{tpu_custom_call.1} parent=1 // pred_region
      %8765 = dma.done [#allocation5], 16
    $region101: #{tpu_custom_call.1} parent=1 // pred_fallthru
      _
    %8766 = vsyncpa [#allocation4], 1
    %8767 = vsyncpa [#allocation7], 1
    %8768 = vsyncpa [#allocation10], 1
    %8769 = vsyncpa [#allocation13], 1
    %8770 = vsyncpa [#allocation16], 1
    %8771 = vsyncpa [#allocation19], 1
    %8772 = vsyncpa [#allocation5], 1

</llo_original>
